<compile_context>
chip_gen: v7x
topology: tpu7x:2x2x1
jax: 0.10.0
libtpu: 0.0.40
codegen_flags: <defaults>
</compile_context>

<pallas_src>
import jax
import jax.numpy as jnp
from jax.experimental import pallas as pl
from jax.experimental.pallas import tpu as pltpu


def _round_up(v, m):
    return ((v + m - 1) // m) * m


def _mlp_kernel(x_ref, w1_ref, b1_ref, w2_ref, b2_ref, w3_ref, b3_ref, o_ref):
    # Layer 1: Linear(in -> 1024) + ReLU.  bf16 x bf16 on the MXU, f32 accum.
    h1 = jnp.dot(x_ref[...], w1_ref[...], preferred_element_type=jnp.float32)
    h1 = jnp.maximum(h1 + b1_ref[...], 0.0)
    # Layer 2: Linear(1024 -> 1024) + ReLU.
    h2 = jnp.dot(h1.astype(jnp.bfloat16), w2_ref[...],
                 preferred_element_type=jnp.float32)
    h2 = jnp.maximum(h2 + b2_ref[...], 0.0)
    # Layer 3: Linear(1024 -> num_class); output lanes zero-padded to 128.
    out = jnp.dot(h2.astype(jnp.bfloat16), w3_ref[...],
                  preferred_element_type=jnp.float32)
    o_ref[...] = (out + b3_ref[...]).astype(o_ref.dtype)


def new_alexnet_classifier(x, w1, b1, w2, b2, w3p, b3p, *, num_class,
                           block_b=512):
    """Fused 3-layer MLP forward.

    x: (B, in_features) float32.  w*: (in, out) bf16 (w3p lane-padded to 128).
    b*: (1, out) float32 (b3p lane-padded to 128).
    Returns (B, num_class) float32.
    """
    B, in_features = x.shape
    n_pad = w3p.shape[1]
    assert n_pad % 128 == 0 and in_features % 128 == 0

    # bf16 activations in the wrapper: halves the dominant streamed-x HBM
    # bytes and removes the per-step in-kernel pack pass.
    x = x.astype(jnp.bfloat16)

    # Batch tiling; tm is a multiple of 16 (bf16 sublane packing).
    b16 = _round_up(B, 16)
    tm = min(block_b, b16)
    # If the whole batch fits a single tile but is big enough, split into two
    # tiles so both TensorCores get work on megacore parts (v7x).
    if b16 >= 32 and tm == b16:
        tm = _round_up((b16 + 1) // 2, 16)

    if B < tm:
        # Tiny batch: pad up to one tile (< 16..tm rows, negligible cost).
        x = jnp.pad(x, ((0, tm - B), (0, 0)))
    rows = x.shape[0]
    grid = (pl.cdiv(rows, tm),)

    def resident(a):
        # Constant block index -> stays VMEM-resident across all grid steps;
        # single-buffered since it never changes (no point double-buffering).
        return pl.BlockSpec(a.shape, lambda *_: (0,) * a.ndim,
                            pipeline_mode=pl.Buffered(1))

    out = pl.pallas_call(
        _mlp_kernel,
        out_shape=jax.ShapeDtypeStruct((rows, n_pad), jnp.float32),
        grid=grid,
        in_specs=[
            pl.BlockSpec((tm, in_features), lambda i: (i, 0)),
            resident(w1), resident(b1),
            resident(w2), resident(b2),
            resident(w3p), resident(b3p),
        ],
        out_specs=pl.BlockSpec((tm, n_pad), lambda i: (i, 0)),
        compiler_params=pltpu.CompilerParams(
            dimension_semantics=("parallel",),
            # Fits under v7x's 64 MiB physical VMEM; mandatory on v5e where the
            # scoped default (16 MiB) is below this kernel's footprint.
            vmem_limit_bytes=48 << 20,
        ),
    )(x, w1, b1, w2, b2, w3p, b3p)

    return out[:B, :num_class]


def init_params(key, in_features=2048, hidden=1024, num_class=2):
    """Deterministic parameter init (synthetic; mirrors nn.Linear shapes).

    Weights stored in bf16 (HBM byte reduction for the DMA-bound kernel);
    biases stay f32.  The classifier weight/bias are zero-padded to a full
    128-lane tile HERE, once, instead of per forward call.
    """
    ks = jax.random.split(key, 6)
    s1 = 1.0 / jnp.sqrt(in_features)
    s2 = 1.0 / jnp.sqrt(hidden)
    w1 = jax.random.uniform(ks[0], (in_features, hidden), jnp.float32, -s1, s1
                            ).astype(jnp.bfloat16)
    b1 = jax.random.uniform(ks[1], (1, hidden), jnp.float32, -s1, s1)
    w2 = jax.random.uniform(ks[2], (hidden, hidden), jnp.float32, -s2, s2
                            ).astype(jnp.bfloat16)
    b2 = jax.random.uniform(ks[3], (1, hidden), jnp.float32, -s2, s2)
    w3 = jax.random.uniform(ks[4], (hidden, num_class), jnp.float32, -s2, s2
                            ).astype(jnp.bfloat16)
    b3 = jax.random.uniform(ks[5], (1, num_class), jnp.float32, -s2, s2)

    n_pad = _round_up(num_class, 128)
    w3p = jnp.zeros((hidden, n_pad), w3.dtype).at[:, :num_class].set(w3)
    b3p = jnp.zeros((1, n_pad), b3.dtype).at[:, :num_class].set(b3)
    return w1, b1, w2, b2, w3p, b3p


def reference(x, w1, b1, w2, b2, w3p, b3p, num_class):
    """Pure-JAX reference mirroring the kernel's compute dtypes."""
    f32 = jnp.float32
    xb = x.astype(jnp.bfloat16)
    h1 = jnp.maximum(jnp.dot(xb, w1, preferred_element_type=f32) + b1, 0.0)
    h2 = jnp.maximum(
        jnp.dot(h1.astype(jnp.bfloat16), w2, preferred_element_type=f32) + b2,
        0.0)
    out = jnp.dot(h2.astype(jnp.bfloat16), w3p, preferred_element_type=f32) + b3p
    return out[:, :num_class]


if __name__ == "__main__":
    key = jax.random.PRNGKey(0)
    kx, kp = jax.random.split(key)

    B, IN_FEATURES, NUM_CLASS = 8, 2048, 2
    x = jax.random.normal(kx, (B, IN_FEATURES), dtype=jnp.float32)
    params = init_params(kp, in_features=IN_FEATURES, num_class=NUM_CLASS)

    out = new_alexnet_classifier(x, *params, num_class=NUM_CLASS)
    out = jax.block_until_ready(out)

    ref = reference(x, *params, NUM_CLASS)
    assert out.shape == (B, NUM_CLASS), out.shape
    assert jnp.allclose(out, ref, atol=2e-2, rtol=2e-2), "mismatch vs reference"

    print("KERNEL_OK")
</pallas_src>

<mosaic_0001>
module attributes {stable_mosaic.version = 11 : i64} {
  func.func @_mlp_kernel(%arg0: i32, %arg1: memref<16x2048xbf16, #tpu.memory_space<vmem>>, %arg2: memref<2048x1024xbf16, #tpu.memory_space<vmem>>, %arg3: memref<1x1024xf32, #tpu.memory_space<vmem>>, %arg4: memref<1024x1024xbf16, #tpu.memory_space<vmem>>, %arg5: memref<1x1024xf32, #tpu.memory_space<vmem>>, %arg6: memref<1024x128xbf16, #tpu.memory_space<vmem>>, %arg7: memref<1x128xf32, #tpu.memory_space<vmem>>, %arg8: memref<16x128xf32, #tpu.memory_space<vmem>>) attributes {dimension_semantics = [#tpu.dimension_semantics<parallel>], iteration_bounds = array<i64: 1>, scalar_prefetch = 0 : i64, scratch_operands = 0 : i64, tpu.core_type = #tpu.core_type<tc>, window_params = [{transform_indices = @transform_0, window_bounds = array<i64: 16, 2048>}, {pipeline_mode = #tpu.pipeline_mode<synchronous>, transform_indices = @transform_1, window_bounds = array<i64: 2048, 1024>}, {pipeline_mode = #tpu.pipeline_mode<synchronous>, transform_indices = @transform_2, window_bounds = array<i64: 1, 1024>}, {pipeline_mode = #tpu.pipeline_mode<synchronous>, transform_indices = @transform_3, window_bounds = array<i64: 1024, 1024>}, {pipeline_mode = #tpu.pipeline_mode<synchronous>, transform_indices = @transform_4, window_bounds = array<i64: 1, 1024>}, {pipeline_mode = #tpu.pipeline_mode<synchronous>, transform_indices = @transform_5, window_bounds = array<i64: 1024, 128>}, {pipeline_mode = #tpu.pipeline_mode<synchronous>, transform_indices = @transform_6, window_bounds = array<i64: 1, 128>}, {transform_indices = @transform_7, window_bounds = array<i64: 16, 128>}]} {
    %c0 = arith.constant 0 : index
    %c0_0 = arith.constant 0 : index
    %0 = vector.load %arg1[%c0, %c0_0] : memref<16x2048xbf16, #tpu.memory_space<vmem>>, vector<16x2048xbf16>
    %c0_1 = arith.constant 0 : index
    %c0_2 = arith.constant 0 : index
    %1 = vector.load %arg2[%c0_1, %c0_2] : memref<2048x1024xbf16, #tpu.memory_space<vmem>>, vector<2048x1024xbf16>
    %cst = arith.constant dense<0.000000e+00> : vector<16x1024xf32>
    %2 = tpu.matmul %0, %1, %cst {dimension_numbers = #tpu.dot_dimension_numbers<[1], [0], [0], [1], [0, 0, 1, 1], [], []>} : vector<16x2048xbf16>, vector<2048x1024xbf16>, vector<16x1024xf32> -> vector<16x1024xf32>
    %c0_3 = arith.constant 0 : index
    %c0_4 = arith.constant 0 : index
    %3 = vector.load %arg3[%c0_3, %c0_4] : memref<1x1024xf32, #tpu.memory_space<vmem>>, vector<1x1024xf32>
    %4 = vector.broadcast %3 : vector<1x1024xf32> to vector<16x1024xf32>
    %5 = arith.addf %2, %4 : vector<16x1024xf32>
    %cst_5 = arith.constant 0.000000e+00 : f32
    %6 = vector.broadcast %cst_5 : f32 to vector<16x1024xf32>
    %7 = arith.maximumf %5, %6 : vector<16x1024xf32>
    %8 = arith.truncf %7 : vector<16x1024xf32> to vector<16x1024xbf16>
    %c0_6 = arith.constant 0 : index
    %c0_7 = arith.constant 0 : index
    %9 = vector.load %arg4[%c0_6, %c0_7] : memref<1024x1024xbf16, #tpu.memory_space<vmem>>, vector<1024x1024xbf16>
    %cst_8 = arith.constant dense<0.000000e+00> : vector<16x1024xf32>
    %10 = tpu.matmul %8, %9, %cst_8 {dimension_numbers = #tpu.dot_dimension_numbers<[1], [0], [0], [1], [0, 0, 1, 1], [], []>} : vector<16x1024xbf16>, vector<1024x1024xbf16>, vector<16x1024xf32> -> vector<16x1024xf32>
    %c0_9 = arith.constant 0 : index
    %c0_10 = arith.constant 0 : index
    %11 = vector.load %arg5[%c0_9, %c0_10] : memref<1x1024xf32, #tpu.memory_space<vmem>>, vector<1x1024xf32>
    %12 = vector.broadcast %11 : vector<1x1024xf32> to vector<16x1024xf32>
    %13 = arith.addf %10, %12 : vector<16x1024xf32>
    %cst_11 = arith.constant 0.000000e+00 : f32
    %14 = vector.broadcast %cst_11 : f32 to vector<16x1024xf32>
    %15 = arith.maximumf %13, %14 : vector<16x1024xf32>
    %16 = arith.truncf %15 : vector<16x1024xf32> to vector<16x1024xbf16>
    %c0_12 = arith.constant 0 : index
    %c0_13 = arith.constant 0 : index
    %17 = vector.load %arg6[%c0_12, %c0_13] : memref<1024x128xbf16, #tpu.memory_space<vmem>>, vector<1024x128xbf16>
    %cst_14 = arith.constant dense<0.000000e+00> : vector<16x128xf32>
    %18 = tpu.matmul %16, %17, %cst_14 {dimension_numbers = #tpu.dot_dimension_numbers<[1], [0], [0], [1], [0, 0, 1, 1], [], []>} : vector<16x1024xbf16>, vector<1024x128xbf16>, vector<16x128xf32> -> vector<16x128xf32>
    %c0_15 = arith.constant 0 : index
    %c0_16 = arith.constant 0 : index
    %19 = vector.load %arg7[%c0_15, %c0_16] : memref<1x128xf32, #tpu.memory_space<vmem>>, vector<1x128xf32>
    %20 = vector.broadcast %19 : vector<1x128xf32> to vector<16x128xf32>
    %21 = arith.addf %18, %20 : vector<16x128xf32>
    %c0_17 = arith.constant 0 : index
    %c0_18 = arith.constant 0 : index
    %22 = vector.load %arg8[%c0_17, %c0_18] : memref<16x128xf32, #tpu.memory_space<vmem>>, vector<16x128xf32>
    tpu.vector_store %arg8[%c0_17, %c0_18], %21 {strides = array<i32>} : memref<16x128xf32, #tpu.memory_space<vmem>>, vector<16x128xf32>,
    return
  }
  func.func @transform_0(%arg0: i32) -> (i32, i32) {
    %c0_i32 = arith.constant 0 : i32
    %c0_i32_0 = arith.constant 0 : i32
    return %arg0, %c0_i32 : i32, i32
  }
  func.func @transform_1(%arg0: i32) -> (i32, i32) {
    %c0_i32 = arith.constant 0 : i32
    %c0_i32_0 = arith.constant 0 : i32
    %c0_i32_1 = arith.constant 0 : i32
    return %c0_i32, %c0_i32_0 : i32, i32
  }
  func.func @transform_2(%arg0: i32) -> (i32, i32) {
    %c0_i32 = arith.constant 0 : i32
    %c0_i32_0 = arith.constant 0 : i32
    %c0_i32_1 = arith.constant 0 : i32
    return %c0_i32, %c0_i32_0 : i32, i32
  }
  func.func @transform_3(%arg0: i32) -> (i32, i32) {
    %c0_i32 = arith.constant 0 : i32
    %c0_i32_0 = arith.constant 0 : i32
    %c0_i32_1 = arith.constant 0 : i32
    return %c0_i32, %c0_i32_0 : i32, i32
  }
  func.func @transform_4(%arg0: i32) -> (i32, i32) {
    %c0_i32 = arith.constant 0 : i32
    %c0_i32_0 = arith.constant 0 : i32
    %c0_i32_1 = arith.constant 0 : i32
    return %c0_i32, %c0_i32_0 : i32, i32
  }
  func.func @transform_5(%arg0: i32) -> (i32, i32) {
    %c0_i32 = arith.constant 0 : i32
    %c0_i32_0 = arith.constant 0 : i32
    %c0_i32_1 = arith.constant 0 : i32
    return %c0_i32, %c0_i32_0 : i32, i32
  }
  func.func @transform_6(%arg0: i32) -> (i32, i32) {
    %c0_i32 = arith.constant 0 : i32
    %c0_i32_0 = arith.constant 0 : i32
    %c0_i32_1 = arith.constant 0 : i32
    return %c0_i32, %c0_i32_0 : i32, i32
  }
  func.func @transform_7(%arg0: i32) -> (i32, i32) {
    %c0_i32 = arith.constant 0 : i32
    %c0_i32_0 = arith.constant 0 : i32
    return %arg0, %c0_i32 : i32, i32
  }
}

</mosaic_0001>

<llo_original>
// kernel: tpu_custom_call.1
$region0: #{tpu_custom_call.1}
  #allocation0 [shape = 'u32[]', space=smem, size = 0x4, offset = 0x4, fixed_abs, tag = 'smem constant byte address 0x4 - core index']
  #allocation1 [shape = 'u32[144,128]{1,0:T(1,128)}', space=vmem, size = 0x12000, scoped, tag = 'internal scratch']
  %s0 = inlined_call_operand.hbm [shape: bf16[16,2048], index: 0, kind: input, shape index: {}]
  %s1 = inlined_call_operand.hbm [shape: bf16[2048,1024], index: 1, kind: input, shape index: {}]
  %s2 = inlined_call_operand.hbm [shape: f32[1,1024], index: 2, kind: input, shape index: {}]
  %s3 = inlined_call_operand.hbm [shape: bf16[1024,1024], index: 3, kind: input, shape index: {}]
  %s4 = inlined_call_operand.hbm [shape: f32[1,1024], index: 4, kind: input, shape index: {}]
  %s5 = inlined_call_operand.hbm [shape: bf16[1024,128], index: 5, kind: input, shape index: {}]
  %s6 = inlined_call_operand.hbm [shape: f32[1,128], index: 6, kind: input, shape index: {}]
  %s7 = inlined_call_operand.hbm [shape: f32[16,128], index: 7, kind: output, shape index: {}]
  %s8 = sld [smem:[#allocation0]]
  $region66: #{tpu_custom_call.1} parent=0
    _
  %s10 = ssub.s32 1, %s8
  %s11 = scalar_select 0, %s10, %s8
  $region1: #{tpu_custom_call.1} parent=0
    #allocation2 [shape = 'u8[65536]{0}', space=vmem, size = 0x10000, scoped, tag = 'input window, operand 0, single buffered']
    #allocation3 [shape = 's32[1]{0}', space=sflag, size = 0x4, scoped, tag = 'scoped memory for tpu_custom_call.1']
    #allocation4 [shape = 's32[1]{0}', space=sflag, size = 0x4, scoped, tag = 'scoped memory for tpu_custom_call.1']
    #allocation5 [shape = 'u8[4194304]{0}', space=vmem, size = 0x400000, scoped, tag = 'input window, operand 1, single buffered']
    #allocation6 [shape = 's32[1]{0}', space=sflag, size = 0x4, scoped, tag = 'scoped memory for tpu_custom_call.1']
    #allocation7 [shape = 'u8[4096]{0}', space=vmem, size = 0x1000, scoped, tag = 'input window, operand 2, single buffered']
    #allocation8 [shape = 'u8[2097152]{0}', space=vmem, size = 0x200000, scoped, tag = 'input window, operand 3, single buffered']
    #allocation9 [shape = 's32[1]{0}', space=sflag, size = 0x4, scoped, tag = 'scoped memory for tpu_custom_call.1']
    #allocation10 [shape = 'u8[4096]{0}', space=vmem, size = 0x1000, scoped, tag = 'input window, operand 4, single buffered']
    #allocation11 [shape = 'u8[262144]{0}', space=vmem, size = 0x40000, scoped, tag = 'input window, operand 5, single buffered']
    #allocation12 [shape = 's32[1]{0}', space=sflag, size = 0x4, scoped, tag = 'scoped memory for tpu_custom_call.1']
    #allocation13 [shape = 'u8[512]{0}', space=vmem, size = 0x400, scoped, tag = 'input window, operand 6, single buffered']
    #allocation14 [shape = 'u8[8192]{0}', space=vmem, size = 0x2000, scoped, tag = 'output window, operand 0, single buffered']
    %12 = vsyncpa [#allocation3], 0
    %13 = vsyncpa [#allocation6], 0
    %14 = vsyncpa [#allocation9], 0
    %15 = vsyncpa [#allocation12], 0
    %16 = vsyncpa [#allocation4], 0
    // Predicated region
    $region2: #{tpu_custom_call.1} parent=1 // pred_check
      _
    $region3: #{tpu_custom_call.1} parent=1 // pred_check_branch
      %18 = sbr.rel (0) target = $region5
    $region4: #{tpu_custom_call.1} parent=1 // pred_region
      %s20 = ssub.s32 2048, 2048
      %21 = vsyncadd [#allocation3], %s20
      %s22 = sshll.u32 [#allocation2], 4
      %s23 = int_to_ptr.vmem [resolvable:$true] %s22
      %28 = dma.hbm_to_vmem [thread:$0]  %s0, 2048, %s23, [#allocation3], 1024, 1024, 64
    $region5: #{tpu_custom_call.1} parent=1 // pred_fallthru
      _
    // Predicated region
    $region6: #{tpu_custom_call.1} parent=1 // pred_check
      _
    $region7: #{tpu_custom_call.1} parent=1 // pred_check_branch
      %30 = sbr.rel (0) target = $region9
    $region8: #{tpu_custom_call.1} parent=1 // pred_region
      %s32 = ssub.s32 131072, 131072
      %33 = vsyncadd [#allocation6], %s32
      %s34 = sshll.u32 [#allocation5], 4
      %s35 = int_to_ptr.vmem [resolvable:$true] %s34
      %40 = dma.hbm_to_vmem [thread:$0]  %s1, 131072, %s35, [#allocation6], 512, 512, 32
    $region9: #{tpu_custom_call.1} parent=1 // pred_fallthru
      _
    // Predicated region
    $region10: #{tpu_custom_call.1} parent=1 // pred_check
      _
    $region11: #{tpu_custom_call.1} parent=1 // pred_check_branch
      %42 = sbr.rel (0) target = $region13
    $region12: #{tpu_custom_call.1} parent=1 // pred_region
      %s44 = ssub.s32 128, 128
      %45 = vsyncadd [#allocation6], %s44
      %s47 = sshll.u32 [#allocation7], 4
      %s48 = int_to_ptr.vmem [resolvable:$true] %s47
      %50 = dma.hbm_to_vmem [thread:$0]  %s2, 128, %s48, [#allocation6]
    $region13: #{tpu_custom_call.1} parent=1 // pred_fallthru
      _
    // Predicated region
    $region14: #{tpu_custom_call.1} parent=1 // pred_check
      _
    $region15: #{tpu_custom_call.1} parent=1 // pred_check_branch
      %52 = sbr.rel (0) target = $region17
    $region16: #{tpu_custom_call.1} parent=1 // pred_region
      %s54 = ssub.s32 65536, 65536
      %55 = vsyncadd [#allocation9], %s54
      %s56 = sshll.u32 [#allocation8], 4
      %s57 = int_to_ptr.vmem [resolvable:$true] %s56
      %62 = dma.hbm_to_vmem [thread:$0]  %s3, 65536, %s57, [#allocation9], 512, 512, 32
    $region17: #{tpu_custom_call.1} parent=1 // pred_fallthru
      _
    // Predicated region
    $region18: #{tpu_custom_call.1} parent=1 // pred_check
      _
    $region19: #{tpu_custom_call.1} parent=1 // pred_check_branch
      %64 = sbr.rel (0) target = $region21
    $region20: #{tpu_custom_call.1} parent=1 // pred_region
      %s66 = ssub.s32 128, 128
      %67 = vsyncadd [#allocation9], %s66
      %s69 = sshll.u32 [#allocation10], 4
      %s70 = int_to_ptr.vmem [resolvable:$true] %s69
      %72 = dma.hbm_to_vmem [thread:$0]  %s4, 128, %s70, [#allocation9]
    $region21: #{tpu_custom_call.1} parent=1 // pred_fallthru
      _
    // Predicated region
    $region22: #{tpu_custom_call.1} parent=1 // pred_check
      _
    $region23: #{tpu_custom_call.1} parent=1 // pred_check_branch
      %74 = sbr.rel (0) target = $region25
    $region24: #{tpu_custom_call.1} parent=1 // pred_region
      %s76 = ssub.s32 8192, 8192
      %77 = vsyncadd [#allocation12], %s76
      %s78 = sshll.u32 [#allocation11], 4
      %s79 = int_to_ptr.vmem [resolvable:$true] %s78
      %84 = dma.hbm_to_vmem [thread:$0]  %s5, 8192, %s79, [#allocation12], 64, 64, 4
    $region25: #{tpu_custom_call.1} parent=1 // pred_fallthru
      _
    // Predicated region
    $region26: #{tpu_custom_call.1} parent=1 // pred_check
      _
    $region27: #{tpu_custom_call.1} parent=1 // pred_check_branch
      %86 = sbr.rel (0) target = $region29
    $region28: #{tpu_custom_call.1} parent=1 // pred_region
      %s88 = ssub.s32 16, 16
      %89 = vsyncadd [#allocation12], %s88
      %s91 = sshll.u32 [#allocation13], 4
      %s92 = int_to_ptr.vmem [resolvable:$true] %s91
      %94 = dma.hbm_to_vmem [thread:$0]  %s6, 16, %s92, [#allocation12]
    $region29: #{tpu_custom_call.1} parent=1 // pred_fallthru
      _
    // Predicated region
    $region30: #{tpu_custom_call.1} parent=1 // pred_check
      _
    $region31: #{tpu_custom_call.1} parent=1 // pred_check_branch
      %96 = sbr.rel (0) target = $region33
    $region32: #{tpu_custom_call.1} parent=1 // pred_region
      %97 = dma.done [#allocation3], 2048
    $region33: #{tpu_custom_call.1} parent=1 // pred_fallthru
      _
    // Predicated region
    $region34: #{tpu_custom_call.1} parent=1 // pred_check
      _
    $region35: #{tpu_custom_call.1} parent=1 // pred_check_branch
      %99 = sbr.rel (0) target = $region37
    $region36: #{tpu_custom_call.1} parent=1 // pred_region
      %100 = dma.done [#allocation6], 131072
    $region37: #{tpu_custom_call.1} parent=1 // pred_fallthru
      _
    // Predicated region
    $region38: #{tpu_custom_call.1} parent=1 // pred_check
      _
    $region39: #{tpu_custom_call.1} parent=1 // pred_check_branch
      %102 = sbr.rel (0) target = $region41
    $region40: #{tpu_custom_call.1} parent=1 // pred_region
      %103 = dma.done [#allocation6], 128
    $region41: #{tpu_custom_call.1} parent=1 // pred_fallthru
      _
    // Predicated region
    $region42: #{tpu_custom_call.1} parent=1 // pred_check
      _
    $region43: #{tpu_custom_call.1} parent=1 // pred_check_branch
      %105 = sbr.rel (0) target = $region45
    $region44: #{tpu_custom_call.1} parent=1 // pred_region
      %106 = dma.done [#allocation9], 65536
    $region45: #{tpu_custom_call.1} parent=1 // pred_fallthru
      _
    // Predicated region
    $region46: #{tpu_custom_call.1} parent=1 // pred_check
      _
    $region47: #{tpu_custom_call.1} parent=1 // pred_check_branch
      %108 = sbr.rel (0) target = $region49
    $region48: #{tpu_custom_call.1} parent=1 // pred_region
      %109 = dma.done [#allocation9], 128
    $region49: #{tpu_custom_call.1} parent=1 // pred_fallthru
      _
    // Predicated region
    $region50: #{tpu_custom_call.1} parent=1 // pred_check
      _
    $region51: #{tpu_custom_call.1} parent=1 // pred_check_branch
      %111 = sbr.rel (0) target = $region53
    $region52: #{tpu_custom_call.1} parent=1 // pred_region
      %112 = dma.done [#allocation12], 8192
    $region53: #{tpu_custom_call.1} parent=1 // pred_fallthru
      _
    // Predicated region
    $region54: #{tpu_custom_call.1} parent=1 // pred_check
      _
    $region55: #{tpu_custom_call.1} parent=1 // pred_check_branch
      %114 = sbr.rel (0) target = $region57
    $region56: #{tpu_custom_call.1} parent=1 // pred_region
      %115 = dma.done [#allocation12], 16
    $region57: #{tpu_custom_call.1} parent=1 // pred_fallthru
      _
    %v117 = vld [vmem:[#allocation2] sm:$0xff]
    %v118 = vld [vmem:[#allocation2 + $0x8] sm:$0xff]
    %v119 = vld [vmem:[#allocation2 + $0x10] sm:$0xff]
    %v120 = vld [vmem:[#allocation2 + $0x18] sm:$0xff]
    %v121 = vld [vmem:[#allocation2 + $0x20] sm:$0xff]
    %v122 = vld [vmem:[#allocation2 + $0x28] sm:$0xff]
    %v123 = vld [vmem:[#allocation2 + $0x30] sm:$0xff]
    %v124 = vld [vmem:[#allocation2 + $0x38] sm:$0xff]
    %v125 = vld [vmem:[#allocation2 + $0x40] sm:$0xff]
    %v126 = vld [vmem:[#allocation2 + $0x48] sm:$0xff]
    %v127 = vld [vmem:[#allocation2 + $0x50] sm:$0xff]
    %v128 = vld [vmem:[#allocation2 + $0x58] sm:$0xff]
    %v129 = vld [vmem:[#allocation2 + $0x60] sm:$0xff]
    %v130 = vld [vmem:[#allocation2 + $0x68] sm:$0xff]
    %v131 = vld [vmem:[#allocation2 + $0x70] sm:$0xff]
    %v132 = vld [vmem:[#allocation2 + $0x78] sm:$0xff]
    %v133 = vld [vmem:[#allocation5] sm:$0xff]
    %v134 = vld [vmem:[#allocation5 + $0x8] sm:$0xff]
    %v135 = vld [vmem:[#allocation5 + $0x10] sm:$0xff]
    %v136 = vld [vmem:[#allocation5 + $0x18] sm:$0xff]
    %v137 = vld [vmem:[#allocation5 + $0x20] sm:$0xff]
    %v138 = vld [vmem:[#allocation5 + $0x28] sm:$0xff]
    %v139 = vld [vmem:[#allocation5 + $0x30] sm:$0xff]
    %v140 = vld [vmem:[#allocation5 + $0x38] sm:$0xff]
    %v141 = vld [vmem:[#allocation5 + $0x40] sm:$0xff]
    %v142 = vld [vmem:[#allocation5 + $0x48] sm:$0xff]
    %v143 = vld [vmem:[#allocation5 + $0x50] sm:$0xff]
    %v144 = vld [vmem:[#allocation5 + $0x58] sm:$0xff]
    %v145 = vld [vmem:[#allocation5 + $0x60] sm:$0xff]
    %v146 = vld [vmem:[#allocation5 + $0x68] sm:$0xff]
    %v147 = vld [vmem:[#allocation5 + $0x70] sm:$0xff]
    %v148 = vld [vmem:[#allocation5 + $0x78] sm:$0xff]
    %v149 = vld [vmem:[#allocation5 + $0x80] sm:$0xff]
    %v150 = vld [vmem:[#allocation5 + $0x88] sm:$0xff]
    %v151 = vld [vmem:[#allocation5 + $0x90] sm:$0xff]
    %v152 = vld [vmem:[#allocation5 + $0x98] sm:$0xff]
    %v153 = vld [vmem:[#allocation5 + $0xa0] sm:$0xff]
    %v154 = vld [vmem:[#allocation5 + $0xa8] sm:$0xff]
    %v155 = vld [vmem:[#allocation5 + $0xb0] sm:$0xff]
    %v156 = vld [vmem:[#allocation5 + $0xb8] sm:$0xff]
    %v157 = vld [vmem:[#allocation5 + $0xc0] sm:$0xff]
    %v158 = vld [vmem:[#allocation5 + $0xc8] sm:$0xff]
    %v159 = vld [vmem:[#allocation5 + $0xd0] sm:$0xff]
    %v160 = vld [vmem:[#allocation5 + $0xd8] sm:$0xff]
    %v161 = vld [vmem:[#allocation5 + $0xe0] sm:$0xff]
    %v162 = vld [vmem:[#allocation5 + $0xe8] sm:$0xff]
    %v163 = vld [vmem:[#allocation5 + $0xf0] sm:$0xff]
    %v164 = vld [vmem:[#allocation5 + $0xf8] sm:$0xff]
    %v165 = vld [vmem:[#allocation5 + $0x100] sm:$0xff]
    %v166 = vld [vmem:[#allocation5 + $0x108] sm:$0xff]
    %v167 = vld [vmem:[#allocation5 + $0x110] sm:$0xff]
    %v168 = vld [vmem:[#allocation5 + $0x118] sm:$0xff]
    %v169 = vld [vmem:[#allocation5 + $0x120] sm:$0xff]
    %v170 = vld [vmem:[#allocation5 + $0x128] sm:$0xff]
    %v171 = vld [vmem:[#allocation5 + $0x130] sm:$0xff]
    %v172 = vld [vmem:[#allocation5 + $0x138] sm:$0xff]
    %v173 = vld [vmem:[#allocation5 + $0x140] sm:$0xff]
    %v174 = vld [vmem:[#allocation5 + $0x148] sm:$0xff]
    %v175 = vld [vmem:[#allocation5 + $0x150] sm:$0xff]
    %v176 = vld [vmem:[#allocation5 + $0x158] sm:$0xff]
    %v177 = vld [vmem:[#allocation5 + $0x160] sm:$0xff]
    %v178 = vld [vmem:[#allocation5 + $0x168] sm:$0xff]
    %v179 = vld [vmem:[#allocation5 + $0x170] sm:$0xff]
    %v180 = vld [vmem:[#allocation5 + $0x178] sm:$0xff]
    %v181 = vld [vmem:[#allocation5 + $0x180] sm:$0xff]
    %v182 = vld [vmem:[#allocation5 + $0x188] sm:$0xff]
    %v183 = vld [vmem:[#allocation5 + $0x190] sm:$0xff]
    %v184 = vld [vmem:[#allocation5 + $0x198] sm:$0xff]
    %v185 = vld [vmem:[#allocation5 + $0x1a0] sm:$0xff]
    %v186 = vld [vmem:[#allocation5 + $0x1a8] sm:$0xff]
    %v187 = vld [vmem:[#allocation5 + $0x1b0] sm:$0xff]
    %v188 = vld [vmem:[#allocation5 + $0x1b8] sm:$0xff]
    %v189 = vld [vmem:[#allocation5 + $0x1c0] sm:$0xff]
    %v190 = vld [vmem:[#allocation5 + $0x1c8] sm:$0xff]
    %v191 = vld [vmem:[#allocation5 + $0x1d0] sm:$0xff]
    %v192 = vld [vmem:[#allocation5 + $0x1d8] sm:$0xff]
    %v193 = vld [vmem:[#allocation5 + $0x1e0] sm:$0xff]
    %v194 = vld [vmem:[#allocation5 + $0x1e8] sm:$0xff]
    %v195 = vld [vmem:[#allocation5 + $0x1f0] sm:$0xff]
    %v196 = vld [vmem:[#allocation5 + $0x1f8] sm:$0xff]
    %v197 = vld [vmem:[#allocation5 + $0x200] sm:$0xff]
    %v198 = vld [vmem:[#allocation5 + $0x208] sm:$0xff]
    %v199 = vld [vmem:[#allocation5 + $0x210] sm:$0xff]
    %v200 = vld [vmem:[#allocation5 + $0x218] sm:$0xff]
    %v201 = vld [vmem:[#allocation5 + $0x220] sm:$0xff]
    %v202 = vld [vmem:[#allocation5 + $0x228] sm:$0xff]
    %v203 = vld [vmem:[#allocation5 + $0x230] sm:$0xff]
    %v204 = vld [vmem:[#allocation5 + $0x238] sm:$0xff]
    %v205 = vld [vmem:[#allocation5 + $0x240] sm:$0xff]
    %v206 = vld [vmem:[#allocation5 + $0x248] sm:$0xff]
    %v207 = vld [vmem:[#allocation5 + $0x250] sm:$0xff]
    %v208 = vld [vmem:[#allocation5 + $0x258] sm:$0xff]
    %v209 = vld [vmem:[#allocation5 + $0x260] sm:$0xff]
    %v210 = vld [vmem:[#allocation5 + $0x268] sm:$0xff]
    %v211 = vld [vmem:[#allocation5 + $0x270] sm:$0xff]
    %v212 = vld [vmem:[#allocation5 + $0x278] sm:$0xff]
    %v213 = vld [vmem:[#allocation5 + $0x280] sm:$0xff]
    %v214 = vld [vmem:[#allocation5 + $0x288] sm:$0xff]
    %v215 = vld [vmem:[#allocation5 + $0x290] sm:$0xff]
    %v216 = vld [vmem:[#allocation5 + $0x298] sm:$0xff]
    %v217 = vld [vmem:[#allocation5 + $0x2a0] sm:$0xff]
    %v218 = vld [vmem:[#allocation5 + $0x2a8] sm:$0xff]
    %v219 = vld [vmem:[#allocation5 + $0x2b0] sm:$0xff]
    %v220 = vld [vmem:[#allocation5 + $0x2b8] sm:$0xff]
    %v221 = vld [vmem:[#allocation5 + $0x2c0] sm:$0xff]
    %v222 = vld [vmem:[#allocation5 + $0x2c8] sm:$0xff]
    %v223 = vld [vmem:[#allocation5 + $0x2d0] sm:$0xff]
    %v224 = vld [vmem:[#allocation5 + $0x2d8] sm:$0xff]
    %v225 = vld [vmem:[#allocation5 + $0x2e0] sm:$0xff]
    %v226 = vld [vmem:[#allocation5 + $0x2e8] sm:$0xff]
    %v227 = vld [vmem:[#allocation5 + $0x2f0] sm:$0xff]
    %v228 = vld [vmem:[#allocation5 + $0x2f8] sm:$0xff]
    %v229 = vld [vmem:[#allocation5 + $0x300] sm:$0xff]
    %v230 = vld [vmem:[#allocation5 + $0x308] sm:$0xff]
    %v231 = vld [vmem:[#allocation5 + $0x310] sm:$0xff]
    %v232 = vld [vmem:[#allocation5 + $0x318] sm:$0xff]
    %v233 = vld [vmem:[#allocation5 + $0x320] sm:$0xff]
    %v234 = vld [vmem:[#allocation5 + $0x328] sm:$0xff]
    %v235 = vld [vmem:[#allocation5 + $0x330] sm:$0xff]
    %v236 = vld [vmem:[#allocation5 + $0x338] sm:$0xff]
    %v237 = vld [vmem:[#allocation5 + $0x340] sm:$0xff]
    %v238 = vld [vmem:[#allocation5 + $0x348] sm:$0xff]
    %v239 = vld [vmem:[#allocation5 + $0x350] sm:$0xff]
    %v240 = vld [vmem:[#allocation5 + $0x358] sm:$0xff]
    %v241 = vld [vmem:[#allocation5 + $0x360] sm:$0xff]
    %v242 = vld [vmem:[#allocation5 + $0x368] sm:$0xff]
    %v243 = vld [vmem:[#allocation5 + $0x370] sm:$0xff]
    %v244 = vld [vmem:[#allocation5 + $0x378] sm:$0xff]
    %v245 = vld [vmem:[#allocation5 + $0x380] sm:$0xff]
    %v246 = vld [vmem:[#allocation5 + $0x388] sm:$0xff]
    %v247 = vld [vmem:[#allocation5 + $0x390] sm:$0xff]
    %v248 = vld [vmem:[#allocation5 + $0x398] sm:$0xff]
    %v249 = vld [vmem:[#allocation5 + $0x3a0] sm:$0xff]
    %v250 = vld [vmem:[#allocation5 + $0x3a8] sm:$0xff]
    %v251 = vld [vmem:[#allocation5 + $0x3b0] sm:$0xff]
    %v252 = vld [vmem:[#allocation5 + $0x3b8] sm:$0xff]
    %v253 = vld [vmem:[#allocation5 + $0x3c0] sm:$0xff]
    %v254 = vld [vmem:[#allocation5 + $0x3c8] sm:$0xff]
    %v255 = vld [vmem:[#allocation5 + $0x3d0] sm:$0xff]
    %v256 = vld [vmem:[#allocation5 + $0x3d8] sm:$0xff]
    %v257 = vld [vmem:[#allocation5 + $0x3e0] sm:$0xff]
    %v258 = vld [vmem:[#allocation5 + $0x3e8] sm:$0xff]
    %v259 = vld [vmem:[#allocation5 + $0x3f0] sm:$0xff]
    %v260 = vld [vmem:[#allocation5 + $0x3f8] sm:$0xff]
    %v261 = vld [vmem:[#allocation5 + $0x400] sm:$0xff]
    %v262 = vld [vmem:[#allocation5 + $0x408] sm:$0xff]
    %v263 = vld [vmem:[#allocation5 + $0x410] sm:$0xff]
    %v264 = vld [vmem:[#allocation5 + $0x418] sm:$0xff]
    %v265 = vld [vmem:[#allocation5 + $0x420] sm:$0xff]
    %v266 = vld [vmem:[#allocation5 + $0x428] sm:$0xff]
    %v267 = vld [vmem:[#allocation5 + $0x430] sm:$0xff]
    %v268 = vld [vmem:[#allocation5 + $0x438] sm:$0xff]
    %v269 = vld [vmem:[#allocation5 + $0x440] sm:$0xff]
    %v270 = vld [vmem:[#allocation5 + $0x448] sm:$0xff]
    %v271 = vld [vmem:[#allocation5 + $0x450] sm:$0xff]
    %v272 = vld [vmem:[#allocation5 + $0x458] sm:$0xff]
    %v273 = vld [vmem:[#allocation5 + $0x460] sm:$0xff]
    %v274 = vld [vmem:[#allocation5 + $0x468] sm:$0xff]
    %v275 = vld [vmem:[#allocation5 + $0x470] sm:$0xff]
    %v276 = vld [vmem:[#allocation5 + $0x478] sm:$0xff]
    %v277 = vld [vmem:[#allocation5 + $0x480] sm:$0xff]
    %v278 = vld [vmem:[#allocation5 + $0x488] sm:$0xff]
    %v279 = vld [vmem:[#allocation5 + $0x490] sm:$0xff]
    %v280 = vld [vmem:[#allocation5 + $0x498] sm:$0xff]
    %v281 = vld [vmem:[#allocation5 + $0x4a0] sm:$0xff]
    %v282 = vld [vmem:[#allocation5 + $0x4a8] sm:$0xff]
    %v283 = vld [vmem:[#allocation5 + $0x4b0] sm:$0xff]
    %v284 = vld [vmem:[#allocation5 + $0x4b8] sm:$0xff]
    %v285 = vld [vmem:[#allocation5 + $0x4c0] sm:$0xff]
    %v286 = vld [vmem:[#allocation5 + $0x4c8] sm:$0xff]
    %v287 = vld [vmem:[#allocation5 + $0x4d0] sm:$0xff]
    %v288 = vld [vmem:[#allocation5 + $0x4d8] sm:$0xff]
    %v289 = vld [vmem:[#allocation5 + $0x4e0] sm:$0xff]
    %v290 = vld [vmem:[#allocation5 + $0x4e8] sm:$0xff]
    %v291 = vld [vmem:[#allocation5 + $0x4f0] sm:$0xff]
    %v292 = vld [vmem:[#allocation5 + $0x4f8] sm:$0xff]
    %v293 = vld [vmem:[#allocation5 + $0x500] sm:$0xff]
    %v294 = vld [vmem:[#allocation5 + $0x508] sm:$0xff]
    %v295 = vld [vmem:[#allocation5 + $0x510] sm:$0xff]
    %v296 = vld [vmem:[#allocation5 + $0x518] sm:$0xff]
    %v297 = vld [vmem:[#allocation5 + $0x520] sm:$0xff]
    %v298 = vld [vmem:[#allocation5 + $0x528] sm:$0xff]
    %v299 = vld [vmem:[#allocation5 + $0x530] sm:$0xff]
    %v300 = vld [vmem:[#allocation5 + $0x538] sm:$0xff]
    %v301 = vld [vmem:[#allocation5 + $0x540] sm:$0xff]
    %v302 = vld [vmem:[#allocation5 + $0x548] sm:$0xff]
    %v303 = vld [vmem:[#allocation5 + $0x550] sm:$0xff]
    %v304 = vld [vmem:[#allocation5 + $0x558] sm:$0xff]
    %v305 = vld [vmem:[#allocation5 + $0x560] sm:$0xff]
    %v306 = vld [vmem:[#allocation5 + $0x568] sm:$0xff]
    %v307 = vld [vmem:[#allocation5 + $0x570] sm:$0xff]
    %v308 = vld [vmem:[#allocation5 + $0x578] sm:$0xff]
    %v309 = vld [vmem:[#allocation5 + $0x580] sm:$0xff]
    %v310 = vld [vmem:[#allocation5 + $0x588] sm:$0xff]
    %v311 = vld [vmem:[#allocation5 + $0x590] sm:$0xff]
    %v312 = vld [vmem:[#allocation5 + $0x598] sm:$0xff]
    %v313 = vld [vmem:[#allocation5 + $0x5a0] sm:$0xff]
    %v314 = vld [vmem:[#allocation5 + $0x5a8] sm:$0xff]
    %v315 = vld [vmem:[#allocation5 + $0x5b0] sm:$0xff]
    %v316 = vld [vmem:[#allocation5 + $0x5b8] sm:$0xff]
    %v317 = vld [vmem:[#allocation5 + $0x5c0] sm:$0xff]
    %v318 = vld [vmem:[#allocation5 + $0x5c8] sm:$0xff]
    %v319 = vld [vmem:[#allocation5 + $0x5d0] sm:$0xff]
    %v320 = vld [vmem:[#allocation5 + $0x5d8] sm:$0xff]
    %v321 = vld [vmem:[#allocation5 + $0x5e0] sm:$0xff]
    %v322 = vld [vmem:[#allocation5 + $0x5e8] sm:$0xff]
    %v323 = vld [vmem:[#allocation5 + $0x5f0] sm:$0xff]
    %v324 = vld [vmem:[#allocation5 + $0x5f8] sm:$0xff]
    %v325 = vld [vmem:[#allocation5 + $0x600] sm:$0xff]
    %v326 = vld [vmem:[#allocation5 + $0x608] sm:$0xff]
    %v327 = vld [vmem:[#allocation5 + $0x610] sm:$0xff]
    %v328 = vld [vmem:[#allocation5 + $0x618] sm:$0xff]
    %v329 = vld [vmem:[#allocation5 + $0x620] sm:$0xff]
    %v330 = vld [vmem:[#allocation5 + $0x628] sm:$0xff]
    %v331 = vld [vmem:[#allocation5 + $0x630] sm:$0xff]
    %v332 = vld [vmem:[#allocation5 + $0x638] sm:$0xff]
    %v333 = vld [vmem:[#allocation5 + $0x640] sm:$0xff]
    %v334 = vld [vmem:[#allocation5 + $0x648] sm:$0xff]
    %v335 = vld [vmem:[#allocation5 + $0x650] sm:$0xff]
    %v336 = vld [vmem:[#allocation5 + $0x658] sm:$0xff]
    %v337 = vld [vmem:[#allocation5 + $0x660] sm:$0xff]
    %v338 = vld [vmem:[#allocation5 + $0x668] sm:$0xff]
    %v339 = vld [vmem:[#allocation5 + $0x670] sm:$0xff]
    %v340 = vld [vmem:[#allocation5 + $0x678] sm:$0xff]
    %v341 = vld [vmem:[#allocation5 + $0x680] sm:$0xff]
    %v342 = vld [vmem:[#allocation5 + $0x688] sm:$0xff]
    %v343 = vld [vmem:[#allocation5 + $0x690] sm:$0xff]
    %v344 = vld [vmem:[#allocation5 + $0x698] sm:$0xff]
    %v345 = vld [vmem:[#allocation5 + $0x6a0] sm:$0xff]
    %v346 = vld [vmem:[#allocation5 + $0x6a8] sm:$0xff]
    %v347 = vld [vmem:[#allocation5 + $0x6b0] sm:$0xff]
    %v348 = vld [vmem:[#allocation5 + $0x6b8] sm:$0xff]
    %v349 = vld [vmem:[#allocation5 + $0x6c0] sm:$0xff]
    %v350 = vld [vmem:[#allocation5 + $0x6c8] sm:$0xff]
    %v351 = vld [vmem:[#allocation5 + $0x6d0] sm:$0xff]
    %v352 = vld [vmem:[#allocation5 + $0x6d8] sm:$0xff]
    %v353 = vld [vmem:[#allocation5 + $0x6e0] sm:$0xff]
    %v354 = vld [vmem:[#allocation5 + $0x6e8] sm:$0xff]
    %v355 = vld [vmem:[#allocation5 + $0x6f0] sm:$0xff]
    %v356 = vld [vmem:[#allocation5 + $0x6f8] sm:$0xff]
    %v357 = vld [vmem:[#allocation5 + $0x700] sm:$0xff]
    %v358 = vld [vmem:[#allocation5 + $0x708] sm:$0xff]
    %v359 = vld [vmem:[#allocation5 + $0x710] sm:$0xff]
    %v360 = vld [vmem:[#allocation5 + $0x718] sm:$0xff]
    %v361 = vld [vmem:[#allocation5 + $0x720] sm:$0xff]
    %v362 = vld [vmem:[#allocation5 + $0x728] sm:$0xff]
    %v363 = vld [vmem:[#allocation5 + $0x730] sm:$0xff]
    %v364 = vld [vmem:[#allocation5 + $0x738] sm:$0xff]
    %v365 = vld [vmem:[#allocation5 + $0x740] sm:$0xff]
    %v366 = vld [vmem:[#allocation5 + $0x748] sm:$0xff]
    %v367 = vld [vmem:[#allocation5 + $0x750] sm:$0xff]
    %v368 = vld [vmem:[#allocation5 + $0x758] sm:$0xff]
    %v369 = vld [vmem:[#allocation5 + $0x760] sm:$0xff]
    %v370 = vld [vmem:[#allocation5 + $0x768] sm:$0xff]
    %v371 = vld [vmem:[#allocation5 + $0x770] sm:$0xff]
    %v372 = vld [vmem:[#allocation5 + $0x778] sm:$0xff]
    %v373 = vld [vmem:[#allocation5 + $0x780] sm:$0xff]
    %v374 = vld [vmem:[#allocation5 + $0x788] sm:$0xff]
    %v375 = vld [vmem:[#allocation5 + $0x790] sm:$0xff]
    %v376 = vld [vmem:[#allocation5 + $0x798] sm:$0xff]
    %v377 = vld [vmem:[#allocation5 + $0x7a0] sm:$0xff]
    %v378 = vld [vmem:[#allocation5 + $0x7a8] sm:$0xff]
    %v379 = vld [vmem:[#allocation5 + $0x7b0] sm:$0xff]
    %v380 = vld [vmem:[#allocation5 + $0x7b8] sm:$0xff]
    %v381 = vld [vmem:[#allocation5 + $0x7c0] sm:$0xff]
    %v382 = vld [vmem:[#allocation5 + $0x7c8] sm:$0xff]
    %v383 = vld [vmem:[#allocation5 + $0x7d0] sm:$0xff]
    %v384 = vld [vmem:[#allocation5 + $0x7d8] sm:$0xff]
    %v385 = vld [vmem:[#allocation5 + $0x7e0] sm:$0xff]
    %v386 = vld [vmem:[#allocation5 + $0x7e8] sm:$0xff]
    %v387 = vld [vmem:[#allocation5 + $0x7f0] sm:$0xff]
    %v388 = vld [vmem:[#allocation5 + $0x7f8] sm:$0xff]
    %v389 = vld [vmem:[#allocation5 + $0x800] sm:$0xff]
    %v390 = vld [vmem:[#allocation5 + $0x808] sm:$0xff]
    %v391 = vld [vmem:[#allocation5 + $0x810] sm:$0xff]
    %v392 = vld [vmem:[#allocation5 + $0x818] sm:$0xff]
    %v393 = vld [vmem:[#allocation5 + $0x820] sm:$0xff]
    %v394 = vld [vmem:[#allocation5 + $0x828] sm:$0xff]
    %v395 = vld [vmem:[#allocation5 + $0x830] sm:$0xff]
    %v396 = vld [vmem:[#allocation5 + $0x838] sm:$0xff]
    %v397 = vld [vmem:[#allocation5 + $0x840] sm:$0xff]
    %v398 = vld [vmem:[#allocation5 + $0x848] sm:$0xff]
    %v399 = vld [vmem:[#allocation5 + $0x850] sm:$0xff]
    %v400 = vld [vmem:[#allocation5 + $0x858] sm:$0xff]
    %v401 = vld [vmem:[#allocation5 + $0x860] sm:$0xff]
    %v402 = vld [vmem:[#allocation5 + $0x868] sm:$0xff]
    %v403 = vld [vmem:[#allocation5 + $0x870] sm:$0xff]
    %v404 = vld [vmem:[#allocation5 + $0x878] sm:$0xff]
    %v405 = vld [vmem:[#allocation5 + $0x880] sm:$0xff]
    %v406 = vld [vmem:[#allocation5 + $0x888] sm:$0xff]
    %v407 = vld [vmem:[#allocation5 + $0x890] sm:$0xff]
    %v408 = vld [vmem:[#allocation5 + $0x898] sm:$0xff]
    %v409 = vld [vmem:[#allocation5 + $0x8a0] sm:$0xff]
    %v410 = vld [vmem:[#allocation5 + $0x8a8] sm:$0xff]
    %v411 = vld [vmem:[#allocation5 + $0x8b0] sm:$0xff]
    %v412 = vld [vmem:[#allocation5 + $0x8b8] sm:$0xff]
    %v413 = vld [vmem:[#allocation5 + $0x8c0] sm:$0xff]
    %v414 = vld [vmem:[#allocation5 + $0x8c8] sm:$0xff]
    %v415 = vld [vmem:[#allocation5 + $0x8d0] sm:$0xff]
    %v416 = vld [vmem:[#allocation5 + $0x8d8] sm:$0xff]
    %v417 = vld [vmem:[#allocation5 + $0x8e0] sm:$0xff]
    %v418 = vld [vmem:[#allocation5 + $0x8e8] sm:$0xff]
    %v419 = vld [vmem:[#allocation5 + $0x8f0] sm:$0xff]
    %v420 = vld [vmem:[#allocation5 + $0x8f8] sm:$0xff]
    %v421 = vld [vmem:[#allocation5 + $0x900] sm:$0xff]
    %v422 = vld [vmem:[#allocation5 + $0x908] sm:$0xff]
    %v423 = vld [vmem:[#allocation5 + $0x910] sm:$0xff]
    %v424 = vld [vmem:[#allocation5 + $0x918] sm:$0xff]
    %v425 = vld [vmem:[#allocation5 + $0x920] sm:$0xff]
    %v426 = vld [vmem:[#allocation5 + $0x928] sm:$0xff]
    %v427 = vld [vmem:[#allocation5 + $0x930] sm:$0xff]
    %v428 = vld [vmem:[#allocation5 + $0x938] sm:$0xff]
    %v429 = vld [vmem:[#allocation5 + $0x940] sm:$0xff]
    %v430 = vld [vmem:[#allocation5 + $0x948] sm:$0xff]
    %v431 = vld [vmem:[#allocation5 + $0x950] sm:$0xff]
    %v432 = vld [vmem:[#allocation5 + $0x958] sm:$0xff]
    %v433 = vld [vmem:[#allocation5 + $0x960] sm:$0xff]
    %v434 = vld [vmem:[#allocation5 + $0x968] sm:$0xff]
    %v435 = vld [vmem:[#allocation5 + $0x970] sm:$0xff]
    %v436 = vld [vmem:[#allocation5 + $0x978] sm:$0xff]
    %v437 = vld [vmem:[#allocation5 + $0x980] sm:$0xff]
    %v438 = vld [vmem:[#allocation5 + $0x988] sm:$0xff]
    %v439 = vld [vmem:[#allocation5 + $0x990] sm:$0xff]
    %v440 = vld [vmem:[#allocation5 + $0x998] sm:$0xff]
    %v441 = vld [vmem:[#allocation5 + $0x9a0] sm:$0xff]
    %v442 = vld [vmem:[#allocation5 + $0x9a8] sm:$0xff]
    %v443 = vld [vmem:[#allocation5 + $0x9b0] sm:$0xff]
    %v444 = vld [vmem:[#allocation5 + $0x9b8] sm:$0xff]
    %v445 = vld [vmem:[#allocation5 + $0x9c0] sm:$0xff]
    %v446 = vld [vmem:[#allocation5 + $0x9c8] sm:$0xff]
    %v447 = vld [vmem:[#allocation5 + $0x9d0] sm:$0xff]
    %v448 = vld [vmem:[#allocation5 + $0x9d8] sm:$0xff]
    %v449 = vld [vmem:[#allocation5 + $0x9e0] sm:$0xff]
    %v450 = vld [vmem:[#allocation5 + $0x9e8] sm:$0xff]
    %v451 = vld [vmem:[#allocation5 + $0x9f0] sm:$0xff]
    %v452 = vld [vmem:[#allocation5 + $0x9f8] sm:$0xff]
    %v453 = vld [vmem:[#allocation5 + $0xa00] sm:$0xff]
    %v454 = vld [vmem:[#allocation5 + $0xa08] sm:$0xff]
    %v455 = vld [vmem:[#allocation5 + $0xa10] sm:$0xff]
    %v456 = vld [vmem:[#allocation5 + $0xa18] sm:$0xff]
    %v457 = vld [vmem:[#allocation5 + $0xa20] sm:$0xff]
    %v458 = vld [vmem:[#allocation5 + $0xa28] sm:$0xff]
    %v459 = vld [vmem:[#allocation5 + $0xa30] sm:$0xff]
    %v460 = vld [vmem:[#allocation5 + $0xa38] sm:$0xff]
    %v461 = vld [vmem:[#allocation5 + $0xa40] sm:$0xff]
    %v462 = vld [vmem:[#allocation5 + $0xa48] sm:$0xff]
    %v463 = vld [vmem:[#allocation5 + $0xa50] sm:$0xff]
    %v464 = vld [vmem:[#allocation5 + $0xa58] sm:$0xff]
    %v465 = vld [vmem:[#allocation5 + $0xa60] sm:$0xff]
    %v466 = vld [vmem:[#allocation5 + $0xa68] sm:$0xff]
    %v467 = vld [vmem:[#allocation5 + $0xa70] sm:$0xff]
    %v468 = vld [vmem:[#allocation5 + $0xa78] sm:$0xff]
    %v469 = vld [vmem:[#allocation5 + $0xa80] sm:$0xff]
    %v470 = vld [vmem:[#allocation5 + $0xa88] sm:$0xff]
    %v471 = vld [vmem:[#allocation5 + $0xa90] sm:$0xff]
    %v472 = vld [vmem:[#allocation5 + $0xa98] sm:$0xff]
    %v473 = vld [vmem:[#allocation5 + $0xaa0] sm:$0xff]
    %v474 = vld [vmem:[#allocation5 + $0xaa8] sm:$0xff]
    %v475 = vld [vmem:[#allocation5 + $0xab0] sm:$0xff]
    %v476 = vld [vmem:[#allocation5 + $0xab8] sm:$0xff]
    %v477 = vld [vmem:[#allocation5 + $0xac0] sm:$0xff]
    %v478 = vld [vmem:[#allocation5 + $0xac8] sm:$0xff]
    %v479 = vld [vmem:[#allocation5 + $0xad0] sm:$0xff]
    %v480 = vld [vmem:[#allocation5 + $0xad8] sm:$0xff]
    %v481 = vld [vmem:[#allocation5 + $0xae0] sm:$0xff]
    %v482 = vld [vmem:[#allocation5 + $0xae8] sm:$0xff]
    %v483 = vld [vmem:[#allocation5 + $0xaf0] sm:$0xff]
    %v484 = vld [vmem:[#allocation5 + $0xaf8] sm:$0xff]
    %v485 = vld [vmem:[#allocation5 + $0xb00] sm:$0xff]
    %v486 = vld [vmem:[#allocation5 + $0xb08] sm:$0xff]
    %v487 = vld [vmem:[#allocation5 + $0xb10] sm:$0xff]
    %v488 = vld [vmem:[#allocation5 + $0xb18] sm:$0xff]
    %v489 = vld [vmem:[#allocation5 + $0xb20] sm:$0xff]
    %v490 = vld [vmem:[#allocation5 + $0xb28] sm:$0xff]
    %v491 = vld [vmem:[#allocation5 + $0xb30] sm:$0xff]
    %v492 = vld [vmem:[#allocation5 + $0xb38] sm:$0xff]
    %v493 = vld [vmem:[#allocation5 + $0xb40] sm:$0xff]
    %v494 = vld [vmem:[#allocation5 + $0xb48] sm:$0xff]
    %v495 = vld [vmem:[#allocation5 + $0xb50] sm:$0xff]
    %v496 = vld [vmem:[#allocation5 + $0xb58] sm:$0xff]
    %v497 = vld [vmem:[#allocation5 + $0xb60] sm:$0xff]
    %v498 = vld [vmem:[#allocation5 + $0xb68] sm:$0xff]
    %v499 = vld [vmem:[#allocation5 + $0xb70] sm:$0xff]
    %v500 = vld [vmem:[#allocation5 + $0xb78] sm:$0xff]
    %v501 = vld [vmem:[#allocation5 + $0xb80] sm:$0xff]
    %v502 = vld [vmem:[#allocation5 + $0xb88] sm:$0xff]
    %v503 = vld [vmem:[#allocation5 + $0xb90] sm:$0xff]
    %v504 = vld [vmem:[#allocation5 + $0xb98] sm:$0xff]
    %v505 = vld [vmem:[#allocation5 + $0xba0] sm:$0xff]
    %v506 = vld [vmem:[#allocation5 + $0xba8] sm:$0xff]
    %v507 = vld [vmem:[#allocation5 + $0xbb0] sm:$0xff]
    %v508 = vld [vmem:[#allocation5 + $0xbb8] sm:$0xff]
    %v509 = vld [vmem:[#allocation5 + $0xbc0] sm:$0xff]
    %v510 = vld [vmem:[#allocation5 + $0xbc8] sm:$0xff]
    %v511 = vld [vmem:[#allocation5 + $0xbd0] sm:$0xff]
    %v512 = vld [vmem:[#allocation5 + $0xbd8] sm:$0xff]
    %v513 = vld [vmem:[#allocation5 + $0xbe0] sm:$0xff]
    %v514 = vld [vmem:[#allocation5 + $0xbe8] sm:$0xff]
    %v515 = vld [vmem:[#allocation5 + $0xbf0] sm:$0xff]
    %v516 = vld [vmem:[#allocation5 + $0xbf8] sm:$0xff]
    %v517 = vld [vmem:[#allocation5 + $0xc00] sm:$0xff]
    %v518 = vld [vmem:[#allocation5 + $0xc08] sm:$0xff]
    %v519 = vld [vmem:[#allocation5 + $0xc10] sm:$0xff]
    %v520 = vld [vmem:[#allocation5 + $0xc18] sm:$0xff]
    %v521 = vld [vmem:[#allocation5 + $0xc20] sm:$0xff]
    %v522 = vld [vmem:[#allocation5 + $0xc28] sm:$0xff]
    %v523 = vld [vmem:[#allocation5 + $0xc30] sm:$0xff]
    %v524 = vld [vmem:[#allocation5 + $0xc38] sm:$0xff]
    %v525 = vld [vmem:[#allocation5 + $0xc40] sm:$0xff]
    %v526 = vld [vmem:[#allocation5 + $0xc48] sm:$0xff]
    %v527 = vld [vmem:[#allocation5 + $0xc50] sm:$0xff]
    %v528 = vld [vmem:[#allocation5 + $0xc58] sm:$0xff]
    %v529 = vld [vmem:[#allocation5 + $0xc60] sm:$0xff]
    %v530 = vld [vmem:[#allocation5 + $0xc68] sm:$0xff]
    %v531 = vld [vmem:[#allocation5 + $0xc70] sm:$0xff]
    %v532 = vld [vmem:[#allocation5 + $0xc78] sm:$0xff]
    %v533 = vld [vmem:[#allocation5 + $0xc80] sm:$0xff]
    %v534 = vld [vmem:[#allocation5 + $0xc88] sm:$0xff]
    %v535 = vld [vmem:[#allocation5 + $0xc90] sm:$0xff]
    %v536 = vld [vmem:[#allocation5 + $0xc98] sm:$0xff]
    %v537 = vld [vmem:[#allocation5 + $0xca0] sm:$0xff]
    %v538 = vld [vmem:[#allocation5 + $0xca8] sm:$0xff]
    %v539 = vld [vmem:[#allocation5 + $0xcb0] sm:$0xff]
    %v540 = vld [vmem:[#allocation5 + $0xcb8] sm:$0xff]
    %v541 = vld [vmem:[#allocation5 + $0xcc0] sm:$0xff]
    %v542 = vld [vmem:[#allocation5 + $0xcc8] sm:$0xff]
    %v543 = vld [vmem:[#allocation5 + $0xcd0] sm:$0xff]
    %v544 = vld [vmem:[#allocation5 + $0xcd8] sm:$0xff]
    %v545 = vld [vmem:[#allocation5 + $0xce0] sm:$0xff]
    %v546 = vld [vmem:[#allocation5 + $0xce8] sm:$0xff]
    %v547 = vld [vmem:[#allocation5 + $0xcf0] sm:$0xff]
    %v548 = vld [vmem:[#allocation5 + $0xcf8] sm:$0xff]
    %v549 = vld [vmem:[#allocation5 + $0xd00] sm:$0xff]
    %v550 = vld [vmem:[#allocation5 + $0xd08] sm:$0xff]
    %v551 = vld [vmem:[#allocation5 + $0xd10] sm:$0xff]
    %v552 = vld [vmem:[#allocation5 + $0xd18] sm:$0xff]
    %v553 = vld [vmem:[#allocation5 + $0xd20] sm:$0xff]
    %v554 = vld [vmem:[#allocation5 + $0xd28] sm:$0xff]
    %v555 = vld [vmem:[#allocation5 + $0xd30] sm:$0xff]
    %v556 = vld [vmem:[#allocation5 + $0xd38] sm:$0xff]
    %v557 = vld [vmem:[#allocation5 + $0xd40] sm:$0xff]
    %v558 = vld [vmem:[#allocation5 + $0xd48] sm:$0xff]
    %v559 = vld [vmem:[#allocation5 + $0xd50] sm:$0xff]
    %v560 = vld [vmem:[#allocation5 + $0xd58] sm:$0xff]
    %v561 = vld [vmem:[#allocation5 + $0xd60] sm:$0xff]
    %v562 = vld [vmem:[#allocation5 + $0xd68] sm:$0xff]
    %v563 = vld [vmem:[#allocation5 + $0xd70] sm:$0xff]
    %v564 = vld [vmem:[#allocation5 + $0xd78] sm:$0xff]
    %v565 = vld [vmem:[#allocation5 + $0xd80] sm:$0xff]
    %v566 = vld [vmem:[#allocation5 + $0xd88] sm:$0xff]
    %v567 = vld [vmem:[#allocation5 + $0xd90] sm:$0xff]
    %v568 = vld [vmem:[#allocation5 + $0xd98] sm:$0xff]
    %v569 = vld [vmem:[#allocation5 + $0xda0] sm:$0xff]
    %v570 = vld [vmem:[#allocation5 + $0xda8] sm:$0xff]
    %v571 = vld [vmem:[#allocation5 + $0xdb0] sm:$0xff]
    %v572 = vld [vmem:[#allocation5 + $0xdb8] sm:$0xff]
    %v573 = vld [vmem:[#allocation5 + $0xdc0] sm:$0xff]
    %v574 = vld [vmem:[#allocation5 + $0xdc8] sm:$0xff]
    %v575 = vld [vmem:[#allocation5 + $0xdd0] sm:$0xff]
    %v576 = vld [vmem:[#allocation5 + $0xdd8] sm:$0xff]
    %v577 = vld [vmem:[#allocation5 + $0xde0] sm:$0xff]
    %v578 = vld [vmem:[#allocation5 + $0xde8] sm:$0xff]
    %v579 = vld [vmem:[#allocation5 + $0xdf0] sm:$0xff]
    %v580 = vld [vmem:[#allocation5 + $0xdf8] sm:$0xff]
    %v581 = vld [vmem:[#allocation5 + $0xe00] sm:$0xff]
    %v582 = vld [vmem:[#allocation5 + $0xe08] sm:$0xff]
    %v583 = vld [vmem:[#allocation5 + $0xe10] sm:$0xff]
    %v584 = vld [vmem:[#allocation5 + $0xe18] sm:$0xff]
    %v585 = vld [vmem:[#allocation5 + $0xe20] sm:$0xff]
    %v586 = vld [vmem:[#allocation5 + $0xe28] sm:$0xff]
    %v587 = vld [vmem:[#allocation5 + $0xe30] sm:$0xff]
    %v588 = vld [vmem:[#allocation5 + $0xe38] sm:$0xff]
    %v589 = vld [vmem:[#allocation5 + $0xe40] sm:$0xff]
    %v590 = vld [vmem:[#allocation5 + $0xe48] sm:$0xff]
    %v591 = vld [vmem:[#allocation5 + $0xe50] sm:$0xff]
    %v592 = vld [vmem:[#allocation5 + $0xe58] sm:$0xff]
    %v593 = vld [vmem:[#allocation5 + $0xe60] sm:$0xff]
    %v594 = vld [vmem:[#allocation5 + $0xe68] sm:$0xff]
    %v595 = vld [vmem:[#allocation5 + $0xe70] sm:$0xff]
    %v596 = vld [vmem:[#allocation5 + $0xe78] sm:$0xff]
    %v597 = vld [vmem:[#allocation5 + $0xe80] sm:$0xff]
    %v598 = vld [vmem:[#allocation5 + $0xe88] sm:$0xff]
    %v599 = vld [vmem:[#allocation5 + $0xe90] sm:$0xff]
    %v600 = vld [vmem:[#allocation5 + $0xe98] sm:$0xff]
    %v601 = vld [vmem:[#allocation5 + $0xea0] sm:$0xff]
    %v602 = vld [vmem:[#allocation5 + $0xea8] sm:$0xff]
    %v603 = vld [vmem:[#allocation5 + $0xeb0] sm:$0xff]
    %v604 = vld [vmem:[#allocation5 + $0xeb8] sm:$0xff]
    %v605 = vld [vmem:[#allocation5 + $0xec0] sm:$0xff]
    %v606 = vld [vmem:[#allocation5 + $0xec8] sm:$0xff]
    %v607 = vld [vmem:[#allocation5 + $0xed0] sm:$0xff]
    %v608 = vld [vmem:[#allocation5 + $0xed8] sm:$0xff]
    %v609 = vld [vmem:[#allocation5 + $0xee0] sm:$0xff]
    %v610 = vld [vmem:[#allocation5 + $0xee8] sm:$0xff]
    %v611 = vld [vmem:[#allocation5 + $0xef0] sm:$0xff]
    %v612 = vld [vmem:[#allocation5 + $0xef8] sm:$0xff]
    %v613 = vld [vmem:[#allocation5 + $0xf00] sm:$0xff]
    %v614 = vld [vmem:[#allocation5 + $0xf08] sm:$0xff]
    %v615 = vld [vmem:[#allocation5 + $0xf10] sm:$0xff]
    %v616 = vld [vmem:[#allocation5 + $0xf18] sm:$0xff]
    %v617 = vld [vmem:[#allocation5 + $0xf20] sm:$0xff]
    %v618 = vld [vmem:[#allocation5 + $0xf28] sm:$0xff]
    %v619 = vld [vmem:[#allocation5 + $0xf30] sm:$0xff]
    %v620 = vld [vmem:[#allocation5 + $0xf38] sm:$0xff]
    %v621 = vld [vmem:[#allocation5 + $0xf40] sm:$0xff]
    %v622 = vld [vmem:[#allocation5 + $0xf48] sm:$0xff]
    %v623 = vld [vmem:[#allocation5 + $0xf50] sm:$0xff]
    %v624 = vld [vmem:[#allocation5 + $0xf58] sm:$0xff]
    %v625 = vld [vmem:[#allocation5 + $0xf60] sm:$0xff]
    %v626 = vld [vmem:[#allocation5 + $0xf68] sm:$0xff]
    %v627 = vld [vmem:[#allocation5 + $0xf70] sm:$0xff]
    %v628 = vld [vmem:[#allocation5 + $0xf78] sm:$0xff]
    %v629 = vld [vmem:[#allocation5 + $0xf80] sm:$0xff]
    %v630 = vld [vmem:[#allocation5 + $0xf88] sm:$0xff]
    %v631 = vld [vmem:[#allocation5 + $0xf90] sm:$0xff]
    %v632 = vld [vmem:[#allocation5 + $0xf98] sm:$0xff]
    %v633 = vld [vmem:[#allocation5 + $0xfa0] sm:$0xff]
    %v634 = vld [vmem:[#allocation5 + $0xfa8] sm:$0xff]
    %v635 = vld [vmem:[#allocation5 + $0xfb0] sm:$0xff]
    %v636 = vld [vmem:[#allocation5 + $0xfb8] sm:$0xff]
    %v637 = vld [vmem:[#allocation5 + $0xfc0] sm:$0xff]
    %v638 = vld [vmem:[#allocation5 + $0xfc8] sm:$0xff]
    %v639 = vld [vmem:[#allocation5 + $0xfd0] sm:$0xff]
    %v640 = vld [vmem:[#allocation5 + $0xfd8] sm:$0xff]
    %v641 = vld [vmem:[#allocation5 + $0xfe0] sm:$0xff]
    %v642 = vld [vmem:[#allocation5 + $0xfe8] sm:$0xff]
    %v643 = vld [vmem:[#allocation5 + $0xff0] sm:$0xff]
    %v644 = vld [vmem:[#allocation5 + $0xff8] sm:$0xff]
    %v645 = vld [vmem:[#allocation5 + $0x1000] sm:$0xff]
    %v646 = vld [vmem:[#allocation5 + $0x1008] sm:$0xff]
    %v647 = vld [vmem:[#allocation5 + $0x1010] sm:$0xff]
    %v648 = vld [vmem:[#allocation5 + $0x1018] sm:$0xff]
    %v649 = vld [vmem:[#allocation5 + $0x1020] sm:$0xff]
    %v650 = vld [vmem:[#allocation5 + $0x1028] sm:$0xff]
    %v651 = vld [vmem:[#allocation5 + $0x1030] sm:$0xff]
    %v652 = vld [vmem:[#allocation5 + $0x1038] sm:$0xff]
    %v653 = vld [vmem:[#allocation5 + $0x1040] sm:$0xff]
    %v654 = vld [vmem:[#allocation5 + $0x1048] sm:$0xff]
    %v655 = vld [vmem:[#allocation5 + $0x1050] sm:$0xff]
    %v656 = vld [vmem:[#allocation5 + $0x1058] sm:$0xff]
    %v657 = vld [vmem:[#allocation5 + $0x1060] sm:$0xff]
    %v658 = vld [vmem:[#allocation5 + $0x1068] sm:$0xff]
    %v659 = vld [vmem:[#allocation5 + $0x1070] sm:$0xff]
    %v660 = vld [vmem:[#allocation5 + $0x1078] sm:$0xff]
    %v661 = vld [vmem:[#allocation5 + $0x1080] sm:$0xff]
    %v662 = vld [vmem:[#allocation5 + $0x1088] sm:$0xff]
    %v663 = vld [vmem:[#allocation5 + $0x1090] sm:$0xff]
    %v664 = vld [vmem:[#allocation5 + $0x1098] sm:$0xff]
    %v665 = vld [vmem:[#allocation5 + $0x10a0] sm:$0xff]
    %v666 = vld [vmem:[#allocation5 + $0x10a8] sm:$0xff]
    %v667 = vld [vmem:[#allocation5 + $0x10b0] sm:$0xff]
    %v668 = vld [vmem:[#allocation5 + $0x10b8] sm:$0xff]
    %v669 = vld [vmem:[#allocation5 + $0x10c0] sm:$0xff]
    %v670 = vld [vmem:[#allocation5 + $0x10c8] sm:$0xff]
    %v671 = vld [vmem:[#allocation5 + $0x10d0] sm:$0xff]
    %v672 = vld [vmem:[#allocation5 + $0x10d8] sm:$0xff]
    %v673 = vld [vmem:[#allocation5 + $0x10e0] sm:$0xff]
    %v674 = vld [vmem:[#allocation5 + $0x10e8] sm:$0xff]
    %v675 = vld [vmem:[#allocation5 + $0x10f0] sm:$0xff]
    %v676 = vld [vmem:[#allocation5 + $0x10f8] sm:$0xff]
    %v677 = vld [vmem:[#allocation5 + $0x1100] sm:$0xff]
    %v678 = vld [vmem:[#allocation5 + $0x1108] sm:$0xff]
    %v679 = vld [vmem:[#allocation5 + $0x1110] sm:$0xff]
    %v680 = vld [vmem:[#allocation5 + $0x1118] sm:$0xff]
    %v681 = vld [vmem:[#allocation5 + $0x1120] sm:$0xff]
    %v682 = vld [vmem:[#allocation5 + $0x1128] sm:$0xff]
    %v683 = vld [vmem:[#allocation5 + $0x1130] sm:$0xff]
    %v684 = vld [vmem:[#allocation5 + $0x1138] sm:$0xff]
    %v685 = vld [vmem:[#allocation5 + $0x1140] sm:$0xff]
    %v686 = vld [vmem:[#allocation5 + $0x1148] sm:$0xff]
    %v687 = vld [vmem:[#allocation5 + $0x1150] sm:$0xff]
    %v688 = vld [vmem:[#allocation5 + $0x1158] sm:$0xff]
    %v689 = vld [vmem:[#allocation5 + $0x1160] sm:$0xff]
    %v690 = vld [vmem:[#allocation5 + $0x1168] sm:$0xff]
    %v691 = vld [vmem:[#allocation5 + $0x1170] sm:$0xff]
    %v692 = vld [vmem:[#allocation5 + $0x1178] sm:$0xff]
    %v693 = vld [vmem:[#allocation5 + $0x1180] sm:$0xff]
    %v694 = vld [vmem:[#allocation5 + $0x1188] sm:$0xff]
    %v695 = vld [vmem:[#allocation5 + $0x1190] sm:$0xff]
    %v696 = vld [vmem:[#allocation5 + $0x1198] sm:$0xff]
    %v697 = vld [vmem:[#allocation5 + $0x11a0] sm:$0xff]
    %v698 = vld [vmem:[#allocation5 + $0x11a8] sm:$0xff]
    %v699 = vld [vmem:[#allocation5 + $0x11b0] sm:$0xff]
    %v700 = vld [vmem:[#allocation5 + $0x11b8] sm:$0xff]
    %v701 = vld [vmem:[#allocation5 + $0x11c0] sm:$0xff]
    %v702 = vld [vmem:[#allocation5 + $0x11c8] sm:$0xff]
    %v703 = vld [vmem:[#allocation5 + $0x11d0] sm:$0xff]
    %v704 = vld [vmem:[#allocation5 + $0x11d8] sm:$0xff]
    %v705 = vld [vmem:[#allocation5 + $0x11e0] sm:$0xff]
    %v706 = vld [vmem:[#allocation5 + $0x11e8] sm:$0xff]
    %v707 = vld [vmem:[#allocation5 + $0x11f0] sm:$0xff]
    %v708 = vld [vmem:[#allocation5 + $0x11f8] sm:$0xff]
    %v709 = vld [vmem:[#allocation5 + $0x1200] sm:$0xff]
    %v710 = vld [vmem:[#allocation5 + $0x1208] sm:$0xff]
    %v711 = vld [vmem:[#allocation5 + $0x1210] sm:$0xff]
    %v712 = vld [vmem:[#allocation5 + $0x1218] sm:$0xff]
    %v713 = vld [vmem:[#allocation5 + $0x1220] sm:$0xff]
    %v714 = vld [vmem:[#allocation5 + $0x1228] sm:$0xff]
    %v715 = vld [vmem:[#allocation5 + $0x1230] sm:$0xff]
    %v716 = vld [vmem:[#allocation5 + $0x1238] sm:$0xff]
    %v717 = vld [vmem:[#allocation5 + $0x1240] sm:$0xff]
    %v718 = vld [vmem:[#allocation5 + $0x1248] sm:$0xff]
    %v719 = vld [vmem:[#allocation5 + $0x1250] sm:$0xff]
    %v720 = vld [vmem:[#allocation5 + $0x1258] sm:$0xff]
    %v721 = vld [vmem:[#allocation5 + $0x1260] sm:$0xff]
    %v722 = vld [vmem:[#allocation5 + $0x1268] sm:$0xff]
    %v723 = vld [vmem:[#allocation5 + $0x1270] sm:$0xff]
    %v724 = vld [vmem:[#allocation5 + $0x1278] sm:$0xff]
    %v725 = vld [vmem:[#allocation5 + $0x1280] sm:$0xff]
    %v726 = vld [vmem:[#allocation5 + $0x1288] sm:$0xff]
    %v727 = vld [vmem:[#allocation5 + $0x1290] sm:$0xff]
    %v728 = vld [vmem:[#allocation5 + $0x1298] sm:$0xff]
    %v729 = vld [vmem:[#allocation5 + $0x12a0] sm:$0xff]
    %v730 = vld [vmem:[#allocation5 + $0x12a8] sm:$0xff]
    %v731 = vld [vmem:[#allocation5 + $0x12b0] sm:$0xff]
    %v732 = vld [vmem:[#allocation5 + $0x12b8] sm:$0xff]
    %v733 = vld [vmem:[#allocation5 + $0x12c0] sm:$0xff]
    %v734 = vld [vmem:[#allocation5 + $0x12c8] sm:$0xff]
    %v735 = vld [vmem:[#allocation5 + $0x12d0] sm:$0xff]
    %v736 = vld [vmem:[#allocation5 + $0x12d8] sm:$0xff]
    %v737 = vld [vmem:[#allocation5 + $0x12e0] sm:$0xff]
    %v738 = vld [vmem:[#allocation5 + $0x12e8] sm:$0xff]
    %v739 = vld [vmem:[#allocation5 + $0x12f0] sm:$0xff]
    %v740 = vld [vmem:[#allocation5 + $0x12f8] sm:$0xff]
    %v741 = vld [vmem:[#allocation5 + $0x1300] sm:$0xff]
    %v742 = vld [vmem:[#allocation5 + $0x1308] sm:$0xff]
    %v743 = vld [vmem:[#allocation5 + $0x1310] sm:$0xff]
    %v744 = vld [vmem:[#allocation5 + $0x1318] sm:$0xff]
    %v745 = vld [vmem:[#allocation5 + $0x1320] sm:$0xff]
    %v746 = vld [vmem:[#allocation5 + $0x1328] sm:$0xff]
    %v747 = vld [vmem:[#allocation5 + $0x1330] sm:$0xff]
    %v748 = vld [vmem:[#allocation5 + $0x1338] sm:$0xff]
    %v749 = vld [vmem:[#allocation5 + $0x1340] sm:$0xff]
    %v750 = vld [vmem:[#allocation5 + $0x1348] sm:$0xff]
    %v751 = vld [vmem:[#allocation5 + $0x1350] sm:$0xff]
    %v752 = vld [vmem:[#allocation5 + $0x1358] sm:$0xff]
    %v753 = vld [vmem:[#allocation5 + $0x1360] sm:$0xff]
    %v754 = vld [vmem:[#allocation5 + $0x1368] sm:$0xff]
    %v755 = vld [vmem:[#allocation5 + $0x1370] sm:$0xff]
    %v756 = vld [vmem:[#allocation5 + $0x1378] sm:$0xff]
    %v757 = vld [vmem:[#allocation5 + $0x1380] sm:$0xff]
    %v758 = vld [vmem:[#allocation5 + $0x1388] sm:$0xff]
    %v759 = vld [vmem:[#allocation5 + $0x1390] sm:$0xff]
    %v760 = vld [vmem:[#allocation5 + $0x1398] sm:$0xff]
    %v761 = vld [vmem:[#allocation5 + $0x13a0] sm:$0xff]
    %v762 = vld [vmem:[#allocation5 + $0x13a8] sm:$0xff]
    %v763 = vld [vmem:[#allocation5 + $0x13b0] sm:$0xff]
    %v764 = vld [vmem:[#allocation5 + $0x13b8] sm:$0xff]
    %v765 = vld [vmem:[#allocation5 + $0x13c0] sm:$0xff]
    %v766 = vld [vmem:[#allocation5 + $0x13c8] sm:$0xff]
    %v767 = vld [vmem:[#allocation5 + $0x13d0] sm:$0xff]
    %v768 = vld [vmem:[#allocation5 + $0x13d8] sm:$0xff]
    %v769 = vld [vmem:[#allocation5 + $0x13e0] sm:$0xff]
    %v770 = vld [vmem:[#allocation5 + $0x13e8] sm:$0xff]
    %v771 = vld [vmem:[#allocation5 + $0x13f0] sm:$0xff]
    %v772 = vld [vmem:[#allocation5 + $0x13f8] sm:$0xff]
    %v773 = vld [vmem:[#allocation5 + $0x1400] sm:$0xff]
    %v774 = vld [vmem:[#allocation5 + $0x1408] sm:$0xff]
    %v775 = vld [vmem:[#allocation5 + $0x1410] sm:$0xff]
    %v776 = vld [vmem:[#allocation5 + $0x1418] sm:$0xff]
    %v777 = vld [vmem:[#allocation5 + $0x1420] sm:$0xff]
    %v778 = vld [vmem:[#allocation5 + $0x1428] sm:$0xff]
    %v779 = vld [vmem:[#allocation5 + $0x1430] sm:$0xff]
    %v780 = vld [vmem:[#allocation5 + $0x1438] sm:$0xff]
    %v781 = vld [vmem:[#allocation5 + $0x1440] sm:$0xff]
    %v782 = vld [vmem:[#allocation5 + $0x1448] sm:$0xff]
    %v783 = vld [vmem:[#allocation5 + $0x1450] sm:$0xff]
    %v784 = vld [vmem:[#allocation5 + $0x1458] sm:$0xff]
    %v785 = vld [vmem:[#allocation5 + $0x1460] sm:$0xff]
    %v786 = vld [vmem:[#allocation5 + $0x1468] sm:$0xff]
    %v787 = vld [vmem:[#allocation5 + $0x1470] sm:$0xff]
    %v788 = vld [vmem:[#allocation5 + $0x1478] sm:$0xff]
    %v789 = vld [vmem:[#allocation5 + $0x1480] sm:$0xff]
    %v790 = vld [vmem:[#allocation5 + $0x1488] sm:$0xff]
    %v791 = vld [vmem:[#allocation5 + $0x1490] sm:$0xff]
    %v792 = vld [vmem:[#allocation5 + $0x1498] sm:$0xff]
    %v793 = vld [vmem:[#allocation5 + $0x14a0] sm:$0xff]
    %v794 = vld [vmem:[#allocation5 + $0x14a8] sm:$0xff]
    %v795 = vld [vmem:[#allocation5 + $0x14b0] sm:$0xff]
    %v796 = vld [vmem:[#allocation5 + $0x14b8] sm:$0xff]
    %v797 = vld [vmem:[#allocation5 + $0x14c0] sm:$0xff]
    %v798 = vld [vmem:[#allocation5 + $0x14c8] sm:$0xff]
    %v799 = vld [vmem:[#allocation5 + $0x14d0] sm:$0xff]
    %v800 = vld [vmem:[#allocation5 + $0x14d8] sm:$0xff]
    %v801 = vld [vmem:[#allocation5 + $0x14e0] sm:$0xff]
    %v802 = vld [vmem:[#allocation5 + $0x14e8] sm:$0xff]
    %v803 = vld [vmem:[#allocation5 + $0x14f0] sm:$0xff]
    %v804 = vld [vmem:[#allocation5 + $0x14f8] sm:$0xff]
    %v805 = vld [vmem:[#allocation5 + $0x1500] sm:$0xff]
    %v806 = vld [vmem:[#allocation5 + $0x1508] sm:$0xff]
    %v807 = vld [vmem:[#allocation5 + $0x1510] sm:$0xff]
    %v808 = vld [vmem:[#allocation5 + $0x1518] sm:$0xff]
    %v809 = vld [vmem:[#allocation5 + $0x1520] sm:$0xff]
    %v810 = vld [vmem:[#allocation5 + $0x1528] sm:$0xff]
    %v811 = vld [vmem:[#allocation5 + $0x1530] sm:$0xff]
    %v812 = vld [vmem:[#allocation5 + $0x1538] sm:$0xff]
    %v813 = vld [vmem:[#allocation5 + $0x1540] sm:$0xff]
    %v814 = vld [vmem:[#allocation5 + $0x1548] sm:$0xff]
    %v815 = vld [vmem:[#allocation5 + $0x1550] sm:$0xff]
    %v816 = vld [vmem:[#allocation5 + $0x1558] sm:$0xff]
    %v817 = vld [vmem:[#allocation5 + $0x1560] sm:$0xff]
    %v818 = vld [vmem:[#allocation5 + $0x1568] sm:$0xff]
    %v819 = vld [vmem:[#allocation5 + $0x1570] sm:$0xff]
    %v820 = vld [vmem:[#allocation5 + $0x1578] sm:$0xff]
    %v821 = vld [vmem:[#allocation5 + $0x1580] sm:$0xff]
    %v822 = vld [vmem:[#allocation5 + $0x1588] sm:$0xff]
    %v823 = vld [vmem:[#allocation5 + $0x1590] sm:$0xff]
    %v824 = vld [vmem:[#allocation5 + $0x1598] sm:$0xff]
    %v825 = vld [vmem:[#allocation5 + $0x15a0] sm:$0xff]
    %v826 = vld [vmem:[#allocation5 + $0x15a8] sm:$0xff]
    %v827 = vld [vmem:[#allocation5 + $0x15b0] sm:$0xff]
    %v828 = vld [vmem:[#allocation5 + $0x15b8] sm:$0xff]
    %v829 = vld [vmem:[#allocation5 + $0x15c0] sm:$0xff]
    %v830 = vld [vmem:[#allocation5 + $0x15c8] sm:$0xff]
    %v831 = vld [vmem:[#allocation5 + $0x15d0] sm:$0xff]
    %v832 = vld [vmem:[#allocation5 + $0x15d8] sm:$0xff]
    %v833 = vld [vmem:[#allocation5 + $0x15e0] sm:$0xff]
    %v834 = vld [vmem:[#allocation5 + $0x15e8] sm:$0xff]
    %v835 = vld [vmem:[#allocation5 + $0x15f0] sm:$0xff]
    %v836 = vld [vmem:[#allocation5 + $0x15f8] sm:$0xff]
    %v837 = vld [vmem:[#allocation5 + $0x1600] sm:$0xff]
    %v838 = vld [vmem:[#allocation5 + $0x1608] sm:$0xff]
    %v839 = vld [vmem:[#allocation5 + $0x1610] sm:$0xff]
    %v840 = vld [vmem:[#allocation5 + $0x1618] sm:$0xff]
    %v841 = vld [vmem:[#allocation5 + $0x1620] sm:$0xff]
    %v842 = vld [vmem:[#allocation5 + $0x1628] sm:$0xff]
    %v843 = vld [vmem:[#allocation5 + $0x1630] sm:$0xff]
    %v844 = vld [vmem:[#allocation5 + $0x1638] sm:$0xff]
    %v845 = vld [vmem:[#allocation5 + $0x1640] sm:$0xff]
    %v846 = vld [vmem:[#allocation5 + $0x1648] sm:$0xff]
    %v847 = vld [vmem:[#allocation5 + $0x1650] sm:$0xff]
    %v848 = vld [vmem:[#allocation5 + $0x1658] sm:$0xff]
    %v849 = vld [vmem:[#allocation5 + $0x1660] sm:$0xff]
    %v850 = vld [vmem:[#allocation5 + $0x1668] sm:$0xff]
    %v851 = vld [vmem:[#allocation5 + $0x1670] sm:$0xff]
    %v852 = vld [vmem:[#allocation5 + $0x1678] sm:$0xff]
    %v853 = vld [vmem:[#allocation5 + $0x1680] sm:$0xff]
    %v854 = vld [vmem:[#allocation5 + $0x1688] sm:$0xff]
    %v855 = vld [vmem:[#allocation5 + $0x1690] sm:$0xff]
    %v856 = vld [vmem:[#allocation5 + $0x1698] sm:$0xff]
    %v857 = vld [vmem:[#allocation5 + $0x16a0] sm:$0xff]
    %v858 = vld [vmem:[#allocation5 + $0x16a8] sm:$0xff]
    %v859 = vld [vmem:[#allocation5 + $0x16b0] sm:$0xff]
    %v860 = vld [vmem:[#allocation5 + $0x16b8] sm:$0xff]
    %v861 = vld [vmem:[#allocation5 + $0x16c0] sm:$0xff]
    %v862 = vld [vmem:[#allocation5 + $0x16c8] sm:$0xff]
    %v863 = vld [vmem:[#allocation5 + $0x16d0] sm:$0xff]
    %v864 = vld [vmem:[#allocation5 + $0x16d8] sm:$0xff]
    %v865 = vld [vmem:[#allocation5 + $0x16e0] sm:$0xff]
    %v866 = vld [vmem:[#allocation5 + $0x16e8] sm:$0xff]
    %v867 = vld [vmem:[#allocation5 + $0x16f0] sm:$0xff]
    %v868 = vld [vmem:[#allocation5 + $0x16f8] sm:$0xff]
    %v869 = vld [vmem:[#allocation5 + $0x1700] sm:$0xff]
    %v870 = vld [vmem:[#allocation5 + $0x1708] sm:$0xff]
    %v871 = vld [vmem:[#allocation5 + $0x1710] sm:$0xff]
    %v872 = vld [vmem:[#allocation5 + $0x1718] sm:$0xff]
    %v873 = vld [vmem:[#allocation5 + $0x1720] sm:$0xff]
    %v874 = vld [vmem:[#allocation5 + $0x1728] sm:$0xff]
    %v875 = vld [vmem:[#allocation5 + $0x1730] sm:$0xff]
    %v876 = vld [vmem:[#allocation5 + $0x1738] sm:$0xff]
    %v877 = vld [vmem:[#allocation5 + $0x1740] sm:$0xff]
    %v878 = vld [vmem:[#allocation5 + $0x1748] sm:$0xff]
    %v879 = vld [vmem:[#allocation5 + $0x1750] sm:$0xff]
    %v880 = vld [vmem:[#allocation5 + $0x1758] sm:$0xff]
    %v881 = vld [vmem:[#allocation5 + $0x1760] sm:$0xff]
    %v882 = vld [vmem:[#allocation5 + $0x1768] sm:$0xff]
    %v883 = vld [vmem:[#allocation5 + $0x1770] sm:$0xff]
    %v884 = vld [vmem:[#allocation5 + $0x1778] sm:$0xff]
    %v885 = vld [vmem:[#allocation5 + $0x1780] sm:$0xff]
    %v886 = vld [vmem:[#allocation5 + $0x1788] sm:$0xff]
    %v887 = vld [vmem:[#allocation5 + $0x1790] sm:$0xff]
    %v888 = vld [vmem:[#allocation5 + $0x1798] sm:$0xff]
    %v889 = vld [vmem:[#allocation5 + $0x17a0] sm:$0xff]
    %v890 = vld [vmem:[#allocation5 + $0x17a8] sm:$0xff]
    %v891 = vld [vmem:[#allocation5 + $0x17b0] sm:$0xff]
    %v892 = vld [vmem:[#allocation5 + $0x17b8] sm:$0xff]
    %v893 = vld [vmem:[#allocation5 + $0x17c0] sm:$0xff]
    %v894 = vld [vmem:[#allocation5 + $0x17c8] sm:$0xff]
    %v895 = vld [vmem:[#allocation5 + $0x17d0] sm:$0xff]
    %v896 = vld [vmem:[#allocation5 + $0x17d8] sm:$0xff]
    %v897 = vld [vmem:[#allocation5 + $0x17e0] sm:$0xff]
    %v898 = vld [vmem:[#allocation5 + $0x17e8] sm:$0xff]
    %v899 = vld [vmem:[#allocation5 + $0x17f0] sm:$0xff]
    %v900 = vld [vmem:[#allocation5 + $0x17f8] sm:$0xff]
    %v901 = vld [vmem:[#allocation5 + $0x1800] sm:$0xff]
    %v902 = vld [vmem:[#allocation5 + $0x1808] sm:$0xff]
    %v903 = vld [vmem:[#allocation5 + $0x1810] sm:$0xff]
    %v904 = vld [vmem:[#allocation5 + $0x1818] sm:$0xff]
    %v905 = vld [vmem:[#allocation5 + $0x1820] sm:$0xff]
    %v906 = vld [vmem:[#allocation5 + $0x1828] sm:$0xff]
    %v907 = vld [vmem:[#allocation5 + $0x1830] sm:$0xff]
    %v908 = vld [vmem:[#allocation5 + $0x1838] sm:$0xff]
    %v909 = vld [vmem:[#allocation5 + $0x1840] sm:$0xff]
    %v910 = vld [vmem:[#allocation5 + $0x1848] sm:$0xff]
    %v911 = vld [vmem:[#allocation5 + $0x1850] sm:$0xff]
    %v912 = vld [vmem:[#allocation5 + $0x1858] sm:$0xff]
    %v913 = vld [vmem:[#allocation5 + $0x1860] sm:$0xff]
    %v914 = vld [vmem:[#allocation5 + $0x1868] sm:$0xff]
    %v915 = vld [vmem:[#allocation5 + $0x1870] sm:$0xff]
    %v916 = vld [vmem:[#allocation5 + $0x1878] sm:$0xff]
    %v917 = vld [vmem:[#allocation5 + $0x1880] sm:$0xff]
    %v918 = vld [vmem:[#allocation5 + $0x1888] sm:$0xff]
    %v919 = vld [vmem:[#allocation5 + $0x1890] sm:$0xff]
    %v920 = vld [vmem:[#allocation5 + $0x1898] sm:$0xff]
    %v921 = vld [vmem:[#allocation5 + $0x18a0] sm:$0xff]
    %v922 = vld [vmem:[#allocation5 + $0x18a8] sm:$0xff]
    %v923 = vld [vmem:[#allocation5 + $0x18b0] sm:$0xff]
    %v924 = vld [vmem:[#allocation5 + $0x18b8] sm:$0xff]
    %v925 = vld [vmem:[#allocation5 + $0x18c0] sm:$0xff]
    %v926 = vld [vmem:[#allocation5 + $0x18c8] sm:$0xff]
    %v927 = vld [vmem:[#allocation5 + $0x18d0] sm:$0xff]
    %v928 = vld [vmem:[#allocation5 + $0x18d8] sm:$0xff]
    %v929 = vld [vmem:[#allocation5 + $0x18e0] sm:$0xff]
    %v930 = vld [vmem:[#allocation5 + $0x18e8] sm:$0xff]
    %v931 = vld [vmem:[#allocation5 + $0x18f0] sm:$0xff]
    %v932 = vld [vmem:[#allocation5 + $0x18f8] sm:$0xff]
    %v933 = vld [vmem:[#allocation5 + $0x1900] sm:$0xff]
    %v934 = vld [vmem:[#allocation5 + $0x1908] sm:$0xff]
    %v935 = vld [vmem:[#allocation5 + $0x1910] sm:$0xff]
    %v936 = vld [vmem:[#allocation5 + $0x1918] sm:$0xff]
    %v937 = vld [vmem:[#allocation5 + $0x1920] sm:$0xff]
    %v938 = vld [vmem:[#allocation5 + $0x1928] sm:$0xff]
    %v939 = vld [vmem:[#allocation5 + $0x1930] sm:$0xff]
    %v940 = vld [vmem:[#allocation5 + $0x1938] sm:$0xff]
    %v941 = vld [vmem:[#allocation5 + $0x1940] sm:$0xff]
    %v942 = vld [vmem:[#allocation5 + $0x1948] sm:$0xff]
    %v943 = vld [vmem:[#allocation5 + $0x1950] sm:$0xff]
    %v944 = vld [vmem:[#allocation5 + $0x1958] sm:$0xff]
    %v945 = vld [vmem:[#allocation5 + $0x1960] sm:$0xff]
    %v946 = vld [vmem:[#allocation5 + $0x1968] sm:$0xff]
    %v947 = vld [vmem:[#allocation5 + $0x1970] sm:$0xff]
    %v948 = vld [vmem:[#allocation5 + $0x1978] sm:$0xff]
    %v949 = vld [vmem:[#allocation5 + $0x1980] sm:$0xff]
    %v950 = vld [vmem:[#allocation5 + $0x1988] sm:$0xff]
    %v951 = vld [vmem:[#allocation5 + $0x1990] sm:$0xff]
    %v952 = vld [vmem:[#allocation5 + $0x1998] sm:$0xff]
    %v953 = vld [vmem:[#allocation5 + $0x19a0] sm:$0xff]
    %v954 = vld [vmem:[#allocation5 + $0x19a8] sm:$0xff]
    %v955 = vld [vmem:[#allocation5 + $0x19b0] sm:$0xff]
    %v956 = vld [vmem:[#allocation5 + $0x19b8] sm:$0xff]
    %v957 = vld [vmem:[#allocation5 + $0x19c0] sm:$0xff]
    %v958 = vld [vmem:[#allocation5 + $0x19c8] sm:$0xff]
    %v959 = vld [vmem:[#allocation5 + $0x19d0] sm:$0xff]
    %v960 = vld [vmem:[#allocation5 + $0x19d8] sm:$0xff]
    %v961 = vld [vmem:[#allocation5 + $0x19e0] sm:$0xff]
    %v962 = vld [vmem:[#allocation5 + $0x19e8] sm:$0xff]
    %v963 = vld [vmem:[#allocation5 + $0x19f0] sm:$0xff]
    %v964 = vld [vmem:[#allocation5 + $0x19f8] sm:$0xff]
    %v965 = vld [vmem:[#allocation5 + $0x1a00] sm:$0xff]
    %v966 = vld [vmem:[#allocation5 + $0x1a08] sm:$0xff]
    %v967 = vld [vmem:[#allocation5 + $0x1a10] sm:$0xff]
    %v968 = vld [vmem:[#allocation5 + $0x1a18] sm:$0xff]
    %v969 = vld [vmem:[#allocation5 + $0x1a20] sm:$0xff]
    %v970 = vld [vmem:[#allocation5 + $0x1a28] sm:$0xff]
    %v971 = vld [vmem:[#allocation5 + $0x1a30] sm:$0xff]
    %v972 = vld [vmem:[#allocation5 + $0x1a38] sm:$0xff]
    %v973 = vld [vmem:[#allocation5 + $0x1a40] sm:$0xff]
    %v974 = vld [vmem:[#allocation5 + $0x1a48] sm:$0xff]
    %v975 = vld [vmem:[#allocation5 + $0x1a50] sm:$0xff]
    %v976 = vld [vmem:[#allocation5 + $0x1a58] sm:$0xff]
    %v977 = vld [vmem:[#allocation5 + $0x1a60] sm:$0xff]
    %v978 = vld [vmem:[#allocation5 + $0x1a68] sm:$0xff]
    %v979 = vld [vmem:[#allocation5 + $0x1a70] sm:$0xff]
    %v980 = vld [vmem:[#allocation5 + $0x1a78] sm:$0xff]
    %v981 = vld [vmem:[#allocation5 + $0x1a80] sm:$0xff]
    %v982 = vld [vmem:[#allocation5 + $0x1a88] sm:$0xff]
    %v983 = vld [vmem:[#allocation5 + $0x1a90] sm:$0xff]
    %v984 = vld [vmem:[#allocation5 + $0x1a98] sm:$0xff]
    %v985 = vld [vmem:[#allocation5 + $0x1aa0] sm:$0xff]
    %v986 = vld [vmem:[#allocation5 + $0x1aa8] sm:$0xff]
    %v987 = vld [vmem:[#allocation5 + $0x1ab0] sm:$0xff]
    %v988 = vld [vmem:[#allocation5 + $0x1ab8] sm:$0xff]
    %v989 = vld [vmem:[#allocation5 + $0x1ac0] sm:$0xff]
    %v990 = vld [vmem:[#allocation5 + $0x1ac8] sm:$0xff]
    %v991 = vld [vmem:[#allocation5 + $0x1ad0] sm:$0xff]
    %v992 = vld [vmem:[#allocation5 + $0x1ad8] sm:$0xff]
    %v993 = vld [vmem:[#allocation5 + $0x1ae0] sm:$0xff]
    %v994 = vld [vmem:[#allocation5 + $0x1ae8] sm:$0xff]
    %v995 = vld [vmem:[#allocation5 + $0x1af0] sm:$0xff]
    %v996 = vld [vmem:[#allocation5 + $0x1af8] sm:$0xff]
    %v997 = vld [vmem:[#allocation5 + $0x1b00] sm:$0xff]
    %v998 = vld [vmem:[#allocation5 + $0x1b08] sm:$0xff]
    %v999 = vld [vmem:[#allocation5 + $0x1b10] sm:$0xff]
    %v1000 = vld [vmem:[#allocation5 + $0x1b18] sm:$0xff]
    %v1001 = vld [vmem:[#allocation5 + $0x1b20] sm:$0xff]
    %v1002 = vld [vmem:[#allocation5 + $0x1b28] sm:$0xff]
    %v1003 = vld [vmem:[#allocation5 + $0x1b30] sm:$0xff]
    %v1004 = vld [vmem:[#allocation5 + $0x1b38] sm:$0xff]
    %v1005 = vld [vmem:[#allocation5 + $0x1b40] sm:$0xff]
    %v1006 = vld [vmem:[#allocation5 + $0x1b48] sm:$0xff]
    %v1007 = vld [vmem:[#allocation5 + $0x1b50] sm:$0xff]
    %v1008 = vld [vmem:[#allocation5 + $0x1b58] sm:$0xff]
    %v1009 = vld [vmem:[#allocation5 + $0x1b60] sm:$0xff]
    %v1010 = vld [vmem:[#allocation5 + $0x1b68] sm:$0xff]
    %v1011 = vld [vmem:[#allocation5 + $0x1b70] sm:$0xff]
    %v1012 = vld [vmem:[#allocation5 + $0x1b78] sm:$0xff]
    %v1013 = vld [vmem:[#allocation5 + $0x1b80] sm:$0xff]
    %v1014 = vld [vmem:[#allocation5 + $0x1b88] sm:$0xff]
    %v1015 = vld [vmem:[#allocation5 + $0x1b90] sm:$0xff]
    %v1016 = vld [vmem:[#allocation5 + $0x1b98] sm:$0xff]
    %v1017 = vld [vmem:[#allocation5 + $0x1ba0] sm:$0xff]
    %v1018 = vld [vmem:[#allocation5 + $0x1ba8] sm:$0xff]
    %v1019 = vld [vmem:[#allocation5 + $0x1bb0] sm:$0xff]
    %v1020 = vld [vmem:[#allocation5 + $0x1bb8] sm:$0xff]
    %v1021 = vld [vmem:[#allocation5 + $0x1bc0] sm:$0xff]
    %v1022 = vld [vmem:[#allocation5 + $0x1bc8] sm:$0xff]
    %v1023 = vld [vmem:[#allocation5 + $0x1bd0] sm:$0xff]
    %v1024 = vld [vmem:[#allocation5 + $0x1bd8] sm:$0xff]
    %v1025 = vld [vmem:[#allocation5 + $0x1be0] sm:$0xff]
    %v1026 = vld [vmem:[#allocation5 + $0x1be8] sm:$0xff]
    %v1027 = vld [vmem:[#allocation5 + $0x1bf0] sm:$0xff]
    %v1028 = vld [vmem:[#allocation5 + $0x1bf8] sm:$0xff]
    %v1029 = vld [vmem:[#allocation5 + $0x1c00] sm:$0xff]
    %v1030 = vld [vmem:[#allocation5 + $0x1c08] sm:$0xff]
    %v1031 = vld [vmem:[#allocation5 + $0x1c10] sm:$0xff]
    %v1032 = vld [vmem:[#allocation5 + $0x1c18] sm:$0xff]
    %v1033 = vld [vmem:[#allocation5 + $0x1c20] sm:$0xff]
    %v1034 = vld [vmem:[#allocation5 + $0x1c28] sm:$0xff]
    %v1035 = vld [vmem:[#allocation5 + $0x1c30] sm:$0xff]
    %v1036 = vld [vmem:[#allocation5 + $0x1c38] sm:$0xff]
    %v1037 = vld [vmem:[#allocation5 + $0x1c40] sm:$0xff]
    %v1038 = vld [vmem:[#allocation5 + $0x1c48] sm:$0xff]
    %v1039 = vld [vmem:[#allocation5 + $0x1c50] sm:$0xff]
    %v1040 = vld [vmem:[#allocation5 + $0x1c58] sm:$0xff]
    %v1041 = vld [vmem:[#allocation5 + $0x1c60] sm:$0xff]
    %v1042 = vld [vmem:[#allocation5 + $0x1c68] sm:$0xff]
    %v1043 = vld [vmem:[#allocation5 + $0x1c70] sm:$0xff]
    %v1044 = vld [vmem:[#allocation5 + $0x1c78] sm:$0xff]
    %v1045 = vld [vmem:[#allocation5 + $0x1c80] sm:$0xff]
    %v1046 = vld [vmem:[#allocation5 + $0x1c88] sm:$0xff]
    %v1047 = vld [vmem:[#allocation5 + $0x1c90] sm:$0xff]
    %v1048 = vld [vmem:[#allocation5 + $0x1c98] sm:$0xff]
    %v1049 = vld [vmem:[#allocation5 + $0x1ca0] sm:$0xff]
    %v1050 = vld [vmem:[#allocation5 + $0x1ca8] sm:$0xff]
    %v1051 = vld [vmem:[#allocation5 + $0x1cb0] sm:$0xff]
    %v1052 = vld [vmem:[#allocation5 + $0x1cb8] sm:$0xff]
    %v1053 = vld [vmem:[#allocation5 + $0x1cc0] sm:$0xff]
    %v1054 = vld [vmem:[#allocation5 + $0x1cc8] sm:$0xff]
    %v1055 = vld [vmem:[#allocation5 + $0x1cd0] sm:$0xff]
    %v1056 = vld [vmem:[#allocation5 + $0x1cd8] sm:$0xff]
    %v1057 = vld [vmem:[#allocation5 + $0x1ce0] sm:$0xff]
    %v1058 = vld [vmem:[#allocation5 + $0x1ce8] sm:$0xff]
    %v1059 = vld [vmem:[#allocation5 + $0x1cf0] sm:$0xff]
    %v1060 = vld [vmem:[#allocation5 + $0x1cf8] sm:$0xff]
    %v1061 = vld [vmem:[#allocation5 + $0x1d00] sm:$0xff]
    %v1062 = vld [vmem:[#allocation5 + $0x1d08] sm:$0xff]
    %v1063 = vld [vmem:[#allocation5 + $0x1d10] sm:$0xff]
    %v1064 = vld [vmem:[#allocation5 + $0x1d18] sm:$0xff]
    %v1065 = vld [vmem:[#allocation5 + $0x1d20] sm:$0xff]
    %v1066 = vld [vmem:[#allocation5 + $0x1d28] sm:$0xff]
    %v1067 = vld [vmem:[#allocation5 + $0x1d30] sm:$0xff]
    %v1068 = vld [vmem:[#allocation5 + $0x1d38] sm:$0xff]
    %v1069 = vld [vmem:[#allocation5 + $0x1d40] sm:$0xff]
    %v1070 = vld [vmem:[#allocation5 + $0x1d48] sm:$0xff]
    %v1071 = vld [vmem:[#allocation5 + $0x1d50] sm:$0xff]
    %v1072 = vld [vmem:[#allocation5 + $0x1d58] sm:$0xff]
    %v1073 = vld [vmem:[#allocation5 + $0x1d60] sm:$0xff]
    %v1074 = vld [vmem:[#allocation5 + $0x1d68] sm:$0xff]
    %v1075 = vld [vmem:[#allocation5 + $0x1d70] sm:$0xff]
    %v1076 = vld [vmem:[#allocation5 + $0x1d78] sm:$0xff]
    %v1077 = vld [vmem:[#allocation5 + $0x1d80] sm:$0xff]
    %v1078 = vld [vmem:[#allocation5 + $0x1d88] sm:$0xff]
    %v1079 = vld [vmem:[#allocation5 + $0x1d90] sm:$0xff]
    %v1080 = vld [vmem:[#allocation5 + $0x1d98] sm:$0xff]
    %v1081 = vld [vmem:[#allocation5 + $0x1da0] sm:$0xff]
    %v1082 = vld [vmem:[#allocation5 + $0x1da8] sm:$0xff]
    %v1083 = vld [vmem:[#allocation5 + $0x1db0] sm:$0xff]
    %v1084 = vld [vmem:[#allocation5 + $0x1db8] sm:$0xff]
    %v1085 = vld [vmem:[#allocation5 + $0x1dc0] sm:$0xff]
    %v1086 = vld [vmem:[#allocation5 + $0x1dc8] sm:$0xff]
    %v1087 = vld [vmem:[#allocation5 + $0x1dd0] sm:$0xff]
    %v1088 = vld [vmem:[#allocation5 + $0x1dd8] sm:$0xff]
    %v1089 = vld [vmem:[#allocation5 + $0x1de0] sm:$0xff]
    %v1090 = vld [vmem:[#allocation5 + $0x1de8] sm:$0xff]
    %v1091 = vld [vmem:[#allocation5 + $0x1df0] sm:$0xff]
    %v1092 = vld [vmem:[#allocation5 + $0x1df8] sm:$0xff]
    %v1093 = vld [vmem:[#allocation5 + $0x1e00] sm:$0xff]
    %v1094 = vld [vmem:[#allocation5 + $0x1e08] sm:$0xff]
    %v1095 = vld [vmem:[#allocation5 + $0x1e10] sm:$0xff]
    %v1096 = vld [vmem:[#allocation5 + $0x1e18] sm:$0xff]
    %v1097 = vld [vmem:[#allocation5 + $0x1e20] sm:$0xff]
    %v1098 = vld [vmem:[#allocation5 + $0x1e28] sm:$0xff]
    %v1099 = vld [vmem:[#allocation5 + $0x1e30] sm:$0xff]
    %v1100 = vld [vmem:[#allocation5 + $0x1e38] sm:$0xff]
    %v1101 = vld [vmem:[#allocation5 + $0x1e40] sm:$0xff]
    %v1102 = vld [vmem:[#allocation5 + $0x1e48] sm:$0xff]
    %v1103 = vld [vmem:[#allocation5 + $0x1e50] sm:$0xff]
    %v1104 = vld [vmem:[#allocation5 + $0x1e58] sm:$0xff]
    %v1105 = vld [vmem:[#allocation5 + $0x1e60] sm:$0xff]
    %v1106 = vld [vmem:[#allocation5 + $0x1e68] sm:$0xff]
    %v1107 = vld [vmem:[#allocation5 + $0x1e70] sm:$0xff]
    %v1108 = vld [vmem:[#allocation5 + $0x1e78] sm:$0xff]
    %v1109 = vld [vmem:[#allocation5 + $0x1e80] sm:$0xff]
    %v1110 = vld [vmem:[#allocation5 + $0x1e88] sm:$0xff]
    %v1111 = vld [vmem:[#allocation5 + $0x1e90] sm:$0xff]
    %v1112 = vld [vmem:[#allocation5 + $0x1e98] sm:$0xff]
    %v1113 = vld [vmem:[#allocation5 + $0x1ea0] sm:$0xff]
    %v1114 = vld [vmem:[#allocation5 + $0x1ea8] sm:$0xff]
    %v1115 = vld [vmem:[#allocation5 + $0x1eb0] sm:$0xff]
    %v1116 = vld [vmem:[#allocation5 + $0x1eb8] sm:$0xff]
    %v1117 = vld [vmem:[#allocation5 + $0x1ec0] sm:$0xff]
    %v1118 = vld [vmem:[#allocation5 + $0x1ec8] sm:$0xff]
    %v1119 = vld [vmem:[#allocation5 + $0x1ed0] sm:$0xff]
    %v1120 = vld [vmem:[#allocation5 + $0x1ed8] sm:$0xff]
    %v1121 = vld [vmem:[#allocation5 + $0x1ee0] sm:$0xff]
    %v1122 = vld [vmem:[#allocation5 + $0x1ee8] sm:$0xff]
    %v1123 = vld [vmem:[#allocation5 + $0x1ef0] sm:$0xff]
    %v1124 = vld [vmem:[#allocation5 + $0x1ef8] sm:$0xff]
    %v1125 = vld [vmem:[#allocation5 + $0x1f00] sm:$0xff]
    %v1126 = vld [vmem:[#allocation5 + $0x1f08] sm:$0xff]
    %v1127 = vld [vmem:[#allocation5 + $0x1f10] sm:$0xff]
    %v1128 = vld [vmem:[#allocation5 + $0x1f18] sm:$0xff]
    %v1129 = vld [vmem:[#allocation5 + $0x1f20] sm:$0xff]
    %v1130 = vld [vmem:[#allocation5 + $0x1f28] sm:$0xff]
    %v1131 = vld [vmem:[#allocation5 + $0x1f30] sm:$0xff]
    %v1132 = vld [vmem:[#allocation5 + $0x1f38] sm:$0xff]
    %v1133 = vld [vmem:[#allocation5 + $0x1f40] sm:$0xff]
    %v1134 = vld [vmem:[#allocation5 + $0x1f48] sm:$0xff]
    %v1135 = vld [vmem:[#allocation5 + $0x1f50] sm:$0xff]
    %v1136 = vld [vmem:[#allocation5 + $0x1f58] sm:$0xff]
    %v1137 = vld [vmem:[#allocation5 + $0x1f60] sm:$0xff]
    %v1138 = vld [vmem:[#allocation5 + $0x1f68] sm:$0xff]
    %v1139 = vld [vmem:[#allocation5 + $0x1f70] sm:$0xff]
    %v1140 = vld [vmem:[#allocation5 + $0x1f78] sm:$0xff]
    %v1141 = vld [vmem:[#allocation5 + $0x1f80] sm:$0xff]
    %v1142 = vld [vmem:[#allocation5 + $0x1f88] sm:$0xff]
    %v1143 = vld [vmem:[#allocation5 + $0x1f90] sm:$0xff]
    %v1144 = vld [vmem:[#allocation5 + $0x1f98] sm:$0xff]
    %v1145 = vld [vmem:[#allocation5 + $0x1fa0] sm:$0xff]
    %v1146 = vld [vmem:[#allocation5 + $0x1fa8] sm:$0xff]
    %v1147 = vld [vmem:[#allocation5 + $0x1fb0] sm:$0xff]
    %v1148 = vld [vmem:[#allocation5 + $0x1fb8] sm:$0xff]
    %v1149 = vld [vmem:[#allocation5 + $0x1fc0] sm:$0xff]
    %v1150 = vld [vmem:[#allocation5 + $0x1fc8] sm:$0xff]
    %v1151 = vld [vmem:[#allocation5 + $0x1fd0] sm:$0xff]
    %v1152 = vld [vmem:[#allocation5 + $0x1fd8] sm:$0xff]
    %v1153 = vld [vmem:[#allocation5 + $0x1fe0] sm:$0xff]
    %v1154 = vld [vmem:[#allocation5 + $0x1fe8] sm:$0xff]
    %v1155 = vld [vmem:[#allocation5 + $0x1ff0] sm:$0xff]
    %v1156 = vld [vmem:[#allocation5 + $0x1ff8] sm:$0xff]
    %v1157 = vld [vmem:[#allocation7] sm:$0xff]
    %v1159 = vlaneseq
    %v1160 = vshrl.u32 %v1159, 7
    %v1161 = vsub.s32 0, %v1160
    %v1162 = vrot.slane %v1157, %v1161
    %v1163 = vlaneseq
    %v1164 = vshrl.u32 %v1163, 7
    %v1165 = vsub.s32 1, %v1164
    %v1166 = vrot.slane %v1157, %v1165
    %v1167 = vlaneseq
    %v1168 = vshrl.u32 %v1167, 7
    %v1169 = vsub.s32 2, %v1168
    %v1170 = vrot.slane %v1157, %v1169
    %v1171 = vlaneseq
    %v1172 = vshrl.u32 %v1171, 7
    %v1173 = vsub.s32 3, %v1172
    %v1174 = vrot.slane %v1157, %v1173
    %v1175 = vlaneseq
    %v1176 = vshrl.u32 %v1175, 7
    %v1177 = vsub.s32 4, %v1176
    %v1178 = vrot.slane %v1157, %v1177
    %v1179 = vlaneseq
    %v1180 = vshrl.u32 %v1179, 7
    %v1181 = vsub.s32 5, %v1180
    %v1182 = vrot.slane %v1157, %v1181
    %v1183 = vlaneseq
    %v1184 = vshrl.u32 %v1183, 7
    %v1185 = vsub.s32 6, %v1184
    %v1186 = vrot.slane %v1157, %v1185
    %v1187 = vlaneseq
    %v1188 = vshrl.u32 %v1187, 7
    %v1189 = vsub.s32 7, %v1188
    %v1190 = vrot.slane %v1157, %v1189
    %v1215 = vunpack.c.l.b16 %v117
    %v1216 = vunpack.c.h.b16 %v117
    %v1217 = vunpack.c.l.b16 %v118
    %v1218 = vunpack.c.h.b16 %v118
    %v1219 = vunpack.c.l.b16 %v119
    %v1220 = vunpack.c.h.b16 %v119
    %v1221 = vunpack.c.l.b16 %v120
    %v1222 = vunpack.c.h.b16 %v120
    %v1223 = vunpack.c.l.b16 %v121
    %v1224 = vunpack.c.h.b16 %v121
    %v1225 = vunpack.c.l.b16 %v122
    %v1226 = vunpack.c.h.b16 %v122
    %v1227 = vunpack.c.l.b16 %v123
    %v1228 = vunpack.c.h.b16 %v123
    %v1229 = vunpack.c.l.b16 %v124
    %v1230 = vunpack.c.h.b16 %v124
    %v1231 = vunpack.c.l.b16 %v125
    %v1232 = vunpack.c.h.b16 %v125
    %v1233 = vunpack.c.l.b16 %v126
    %v1234 = vunpack.c.h.b16 %v126
    %v1235 = vunpack.c.l.b16 %v127
    %v1236 = vunpack.c.h.b16 %v127
    %v1237 = vunpack.c.l.b16 %v128
    %v1238 = vunpack.c.h.b16 %v128
    %v1239 = vunpack.c.l.b16 %v129
    %v1240 = vunpack.c.h.b16 %v129
    %v1241 = vunpack.c.l.b16 %v130
    %v1242 = vunpack.c.h.b16 %v130
    %v1243 = vunpack.c.l.b16 %v131
    %v1244 = vunpack.c.h.b16 %v131
    %v1245 = vunpack.c.l.b16 %v132
    %v1246 = vunpack.c.h.b16 %v132
    %v1247 = vpack.c.b16 %v1231, %v1215
    %v1248 = vpack.c.b16 %v1232, %v1216
    %v1249 = vpack.c.b16 %v1233, %v1217
    %v1250 = vpack.c.b16 %v1234, %v1218
    %v1251 = vpack.c.b16 %v1235, %v1219
    %v1252 = vpack.c.b16 %v1236, %v1220
    %v1253 = vpack.c.b16 %v1237, %v1221
    %v1254 = vpack.c.b16 %v1238, %v1222
    %v1255 = vpack.c.b16 %v1239, %v1223
    %v1256 = vpack.c.b16 %v1240, %v1224
    %v1257 = vpack.c.b16 %v1241, %v1225
    %v1258 = vpack.c.b16 %v1242, %v1226
    %v1259 = vpack.c.b16 %v1243, %v1227
    %v1260 = vpack.c.b16 %v1244, %v1228
    %v1261 = vpack.c.b16 %v1245, %v1229
    %v1262 = vpack.c.b16 %v1246, %v1230
    %v2303 = vunpack.c.l.b16 %v133
    %v2304 = vunpack.c.h.b16 %v133
    %v2305 = vunpack.c.l.b16 %v134
    %v2306 = vunpack.c.h.b16 %v134
    %v2307 = vunpack.c.l.b16 %v135
    %v2308 = vunpack.c.h.b16 %v135
    %v2309 = vunpack.c.l.b16 %v136
    %v2310 = vunpack.c.h.b16 %v136
    %v2311 = vunpack.c.l.b16 %v137
    %v2312 = vunpack.c.h.b16 %v137
    %v2313 = vunpack.c.l.b16 %v138
    %v2314 = vunpack.c.h.b16 %v138
    %v2315 = vunpack.c.l.b16 %v139
    %v2316 = vunpack.c.h.b16 %v139
    %v2317 = vunpack.c.l.b16 %v140
    %v2318 = vunpack.c.h.b16 %v140
    %v2319 = vunpack.c.l.b16 %v141
    %v2320 = vunpack.c.h.b16 %v141
    %v2321 = vunpack.c.l.b16 %v142
    %v2322 = vunpack.c.h.b16 %v142
    %v2323 = vunpack.c.l.b16 %v143
    %v2324 = vunpack.c.h.b16 %v143
    %v2325 = vunpack.c.l.b16 %v144
    %v2326 = vunpack.c.h.b16 %v144
    %v2327 = vunpack.c.l.b16 %v145
    %v2328 = vunpack.c.h.b16 %v145
    %v2329 = vunpack.c.l.b16 %v146
    %v2330 = vunpack.c.h.b16 %v146
    %v2331 = vunpack.c.l.b16 %v147
    %v2332 = vunpack.c.h.b16 %v147
    %v2333 = vunpack.c.l.b16 %v148
    %v2334 = vunpack.c.h.b16 %v148
    %v2335 = vunpack.c.l.b16 %v149
    %v2336 = vunpack.c.h.b16 %v149
    %v2337 = vunpack.c.l.b16 %v150
    %v2338 = vunpack.c.h.b16 %v150
    %v2339 = vunpack.c.l.b16 %v151
    %v2340 = vunpack.c.h.b16 %v151
    %v2341 = vunpack.c.l.b16 %v152
    %v2342 = vunpack.c.h.b16 %v152
    %v2343 = vunpack.c.l.b16 %v153
    %v2344 = vunpack.c.h.b16 %v153
    %v2345 = vunpack.c.l.b16 %v154
    %v2346 = vunpack.c.h.b16 %v154
    %v2347 = vunpack.c.l.b16 %v155
    %v2348 = vunpack.c.h.b16 %v155
    %v2349 = vunpack.c.l.b16 %v156
    %v2350 = vunpack.c.h.b16 %v156
    %v2351 = vunpack.c.l.b16 %v157
    %v2352 = vunpack.c.h.b16 %v157
    %v2353 = vunpack.c.l.b16 %v158
    %v2354 = vunpack.c.h.b16 %v158
    %v2355 = vunpack.c.l.b16 %v159
    %v2356 = vunpack.c.h.b16 %v159
    %v2357 = vunpack.c.l.b16 %v160
    %v2358 = vunpack.c.h.b16 %v160
    %v2359 = vunpack.c.l.b16 %v161
    %v2360 = vunpack.c.h.b16 %v161
    %v2361 = vunpack.c.l.b16 %v162
    %v2362 = vunpack.c.h.b16 %v162
    %v2363 = vunpack.c.l.b16 %v163
    %v2364 = vunpack.c.h.b16 %v163
    %v2365 = vunpack.c.l.b16 %v164
    %v2366 = vunpack.c.h.b16 %v164
    %v2367 = vunpack.c.l.b16 %v165
    %v2368 = vunpack.c.h.b16 %v165
    %v2369 = vunpack.c.l.b16 %v166
    %v2370 = vunpack.c.h.b16 %v166
    %v2371 = vunpack.c.l.b16 %v167
    %v2372 = vunpack.c.h.b16 %v167
    %v2373 = vunpack.c.l.b16 %v168
    %v2374 = vunpack.c.h.b16 %v168
    %v2375 = vunpack.c.l.b16 %v169
    %v2376 = vunpack.c.h.b16 %v169
    %v2377 = vunpack.c.l.b16 %v170
    %v2378 = vunpack.c.h.b16 %v170
    %v2379 = vunpack.c.l.b16 %v171
    %v2380 = vunpack.c.h.b16 %v171
    %v2381 = vunpack.c.l.b16 %v172
    %v2382 = vunpack.c.h.b16 %v172
    %v2383 = vunpack.c.l.b16 %v173
    %v2384 = vunpack.c.h.b16 %v173
    %v2385 = vunpack.c.l.b16 %v174
    %v2386 = vunpack.c.h.b16 %v174
    %v2387 = vunpack.c.l.b16 %v175
    %v2388 = vunpack.c.h.b16 %v175
    %v2389 = vunpack.c.l.b16 %v176
    %v2390 = vunpack.c.h.b16 %v176
    %v2391 = vunpack.c.l.b16 %v177
    %v2392 = vunpack.c.h.b16 %v177
    %v2393 = vunpack.c.l.b16 %v178
    %v2394 = vunpack.c.h.b16 %v178
    %v2395 = vunpack.c.l.b16 %v179
    %v2396 = vunpack.c.h.b16 %v179
    %v2397 = vunpack.c.l.b16 %v180
    %v2398 = vunpack.c.h.b16 %v180
    %v2399 = vunpack.c.l.b16 %v181
    %v2400 = vunpack.c.h.b16 %v181
    %v2401 = vunpack.c.l.b16 %v182
    %v2402 = vunpack.c.h.b16 %v182
    %v2403 = vunpack.c.l.b16 %v183
    %v2404 = vunpack.c.h.b16 %v183
    %v2405 = vunpack.c.l.b16 %v184
    %v2406 = vunpack.c.h.b16 %v184
    %v2407 = vunpack.c.l.b16 %v185
    %v2408 = vunpack.c.h.b16 %v185
    %v2409 = vunpack.c.l.b16 %v186
    %v2410 = vunpack.c.h.b16 %v186
    %v2411 = vunpack.c.l.b16 %v187
    %v2412 = vunpack.c.h.b16 %v187
    %v2413 = vunpack.c.l.b16 %v188
    %v2414 = vunpack.c.h.b16 %v188
    %v2415 = vunpack.c.l.b16 %v189
    %v2416 = vunpack.c.h.b16 %v189
    %v2417 = vunpack.c.l.b16 %v190
    %v2418 = vunpack.c.h.b16 %v190
    %v2419 = vunpack.c.l.b16 %v191
    %v2420 = vunpack.c.h.b16 %v191
    %v2421 = vunpack.c.l.b16 %v192
    %v2422 = vunpack.c.h.b16 %v192
    %v2423 = vunpack.c.l.b16 %v193
    %v2424 = vunpack.c.h.b16 %v193
    %v2425 = vunpack.c.l.b16 %v194
    %v2426 = vunpack.c.h.b16 %v194
    %v2427 = vunpack.c.l.b16 %v195
    %v2428 = vunpack.c.h.b16 %v195
    %v2429 = vunpack.c.l.b16 %v196
    %v2430 = vunpack.c.h.b16 %v196
    %v2431 = vunpack.c.l.b16 %v197
    %v2432 = vunpack.c.h.b16 %v197
    %v2433 = vunpack.c.l.b16 %v198
    %v2434 = vunpack.c.h.b16 %v198
    %v2435 = vunpack.c.l.b16 %v199
    %v2436 = vunpack.c.h.b16 %v199
    %v2437 = vunpack.c.l.b16 %v200
    %v2438 = vunpack.c.h.b16 %v200
    %v2439 = vunpack.c.l.b16 %v201
    %v2440 = vunpack.c.h.b16 %v201
    %v2441 = vunpack.c.l.b16 %v202
    %v2442 = vunpack.c.h.b16 %v202
    %v2443 = vunpack.c.l.b16 %v203
    %v2444 = vunpack.c.h.b16 %v203
    %v2445 = vunpack.c.l.b16 %v204
    %v2446 = vunpack.c.h.b16 %v204
    %v2447 = vunpack.c.l.b16 %v205
    %v2448 = vunpack.c.h.b16 %v205
    %v2449 = vunpack.c.l.b16 %v206
    %v2450 = vunpack.c.h.b16 %v206
    %v2451 = vunpack.c.l.b16 %v207
    %v2452 = vunpack.c.h.b16 %v207
    %v2453 = vunpack.c.l.b16 %v208
    %v2454 = vunpack.c.h.b16 %v208
    %v2455 = vunpack.c.l.b16 %v209
    %v2456 = vunpack.c.h.b16 %v209
    %v2457 = vunpack.c.l.b16 %v210
    %v2458 = vunpack.c.h.b16 %v210
    %v2459 = vunpack.c.l.b16 %v211
    %v2460 = vunpack.c.h.b16 %v211
    %v2461 = vunpack.c.l.b16 %v212
    %v2462 = vunpack.c.h.b16 %v212
    %v2463 = vunpack.c.l.b16 %v213
    %v2464 = vunpack.c.h.b16 %v213
    %v2465 = vunpack.c.l.b16 %v214
    %v2466 = vunpack.c.h.b16 %v214
    %v2467 = vunpack.c.l.b16 %v215
    %v2468 = vunpack.c.h.b16 %v215
    %v2469 = vunpack.c.l.b16 %v216
    %v2470 = vunpack.c.h.b16 %v216
    %v2471 = vunpack.c.l.b16 %v217
    %v2472 = vunpack.c.h.b16 %v217
    %v2473 = vunpack.c.l.b16 %v218
    %v2474 = vunpack.c.h.b16 %v218
    %v2475 = vunpack.c.l.b16 %v219
    %v2476 = vunpack.c.h.b16 %v219
    %v2477 = vunpack.c.l.b16 %v220
    %v2478 = vunpack.c.h.b16 %v220
    %v2479 = vunpack.c.l.b16 %v221
    %v2480 = vunpack.c.h.b16 %v221
    %v2481 = vunpack.c.l.b16 %v222
    %v2482 = vunpack.c.h.b16 %v222
    %v2483 = vunpack.c.l.b16 %v223
    %v2484 = vunpack.c.h.b16 %v223
    %v2485 = vunpack.c.l.b16 %v224
    %v2486 = vunpack.c.h.b16 %v224
    %v2487 = vunpack.c.l.b16 %v225
    %v2488 = vunpack.c.h.b16 %v225
    %v2489 = vunpack.c.l.b16 %v226
    %v2490 = vunpack.c.h.b16 %v226
    %v2491 = vunpack.c.l.b16 %v227
    %v2492 = vunpack.c.h.b16 %v227
    %v2493 = vunpack.c.l.b16 %v228
    %v2494 = vunpack.c.h.b16 %v228
    %v2495 = vunpack.c.l.b16 %v229
    %v2496 = vunpack.c.h.b16 %v229
    %v2497 = vunpack.c.l.b16 %v230
    %v2498 = vunpack.c.h.b16 %v230
    %v2499 = vunpack.c.l.b16 %v231
    %v2500 = vunpack.c.h.b16 %v231
    %v2501 = vunpack.c.l.b16 %v232
    %v2502 = vunpack.c.h.b16 %v232
    %v2503 = vunpack.c.l.b16 %v233
    %v2504 = vunpack.c.h.b16 %v233
    %v2505 = vunpack.c.l.b16 %v234
    %v2506 = vunpack.c.h.b16 %v234
    %v2507 = vunpack.c.l.b16 %v235
    %v2508 = vunpack.c.h.b16 %v235
    %v2509 = vunpack.c.l.b16 %v236
    %v2510 = vunpack.c.h.b16 %v236
    %v2511 = vunpack.c.l.b16 %v237
    %v2512 = vunpack.c.h.b16 %v237
    %v2513 = vunpack.c.l.b16 %v238
    %v2514 = vunpack.c.h.b16 %v238
    %v2515 = vunpack.c.l.b16 %v239
    %v2516 = vunpack.c.h.b16 %v239
    %v2517 = vunpack.c.l.b16 %v240
    %v2518 = vunpack.c.h.b16 %v240
    %v2519 = vunpack.c.l.b16 %v241
    %v2520 = vunpack.c.h.b16 %v241
    %v2521 = vunpack.c.l.b16 %v242
    %v2522 = vunpack.c.h.b16 %v242
    %v2523 = vunpack.c.l.b16 %v243
    %v2524 = vunpack.c.h.b16 %v243
    %v2525 = vunpack.c.l.b16 %v244
    %v2526 = vunpack.c.h.b16 %v244
    %v2527 = vunpack.c.l.b16 %v245
    %v2528 = vunpack.c.h.b16 %v245
    %v2529 = vunpack.c.l.b16 %v246
    %v2530 = vunpack.c.h.b16 %v246
    %v2531 = vunpack.c.l.b16 %v247
    %v2532 = vunpack.c.h.b16 %v247
    %v2533 = vunpack.c.l.b16 %v248
    %v2534 = vunpack.c.h.b16 %v248
    %v2535 = vunpack.c.l.b16 %v249
    %v2536 = vunpack.c.h.b16 %v249
    %v2537 = vunpack.c.l.b16 %v250
    %v2538 = vunpack.c.h.b16 %v250
    %v2539 = vunpack.c.l.b16 %v251
    %v2540 = vunpack.c.h.b16 %v251
    %v2541 = vunpack.c.l.b16 %v252
    %v2542 = vunpack.c.h.b16 %v252
    %v2543 = vunpack.c.l.b16 %v253
    %v2544 = vunpack.c.h.b16 %v253
    %v2545 = vunpack.c.l.b16 %v254
    %v2546 = vunpack.c.h.b16 %v254
    %v2547 = vunpack.c.l.b16 %v255
    %v2548 = vunpack.c.h.b16 %v255
    %v2549 = vunpack.c.l.b16 %v256
    %v2550 = vunpack.c.h.b16 %v256
    %v2551 = vunpack.c.l.b16 %v257
    %v2552 = vunpack.c.h.b16 %v257
    %v2553 = vunpack.c.l.b16 %v258
    %v2554 = vunpack.c.h.b16 %v258
    %v2555 = vunpack.c.l.b16 %v259
    %v2556 = vunpack.c.h.b16 %v259
    %v2557 = vunpack.c.l.b16 %v260
    %v2558 = vunpack.c.h.b16 %v260
    %v2559 = vunpack.c.l.b16 %v261
    %v2560 = vunpack.c.h.b16 %v261
    %v2561 = vunpack.c.l.b16 %v262
    %v2562 = vunpack.c.h.b16 %v262
    %v2563 = vunpack.c.l.b16 %v263
    %v2564 = vunpack.c.h.b16 %v263
    %v2565 = vunpack.c.l.b16 %v264
    %v2566 = vunpack.c.h.b16 %v264
    %v2567 = vunpack.c.l.b16 %v265
    %v2568 = vunpack.c.h.b16 %v265
    %v2569 = vunpack.c.l.b16 %v266
    %v2570 = vunpack.c.h.b16 %v266
    %v2571 = vunpack.c.l.b16 %v267
    %v2572 = vunpack.c.h.b16 %v267
    %v2573 = vunpack.c.l.b16 %v268
    %v2574 = vunpack.c.h.b16 %v268
    %v2575 = vunpack.c.l.b16 %v269
    %v2576 = vunpack.c.h.b16 %v269
    %v2577 = vunpack.c.l.b16 %v270
    %v2578 = vunpack.c.h.b16 %v270
    %v2579 = vunpack.c.l.b16 %v271
    %v2580 = vunpack.c.h.b16 %v271
    %v2581 = vunpack.c.l.b16 %v272
    %v2582 = vunpack.c.h.b16 %v272
    %v2583 = vunpack.c.l.b16 %v273
    %v2584 = vunpack.c.h.b16 %v273
    %v2585 = vunpack.c.l.b16 %v274
    %v2586 = vunpack.c.h.b16 %v274
    %v2587 = vunpack.c.l.b16 %v275
    %v2588 = vunpack.c.h.b16 %v275
    %v2589 = vunpack.c.l.b16 %v276
    %v2590 = vunpack.c.h.b16 %v276
    %v2591 = vunpack.c.l.b16 %v277
    %v2592 = vunpack.c.h.b16 %v277
    %v2593 = vunpack.c.l.b16 %v278
    %v2594 = vunpack.c.h.b16 %v278
    %v2595 = vunpack.c.l.b16 %v279
    %v2596 = vunpack.c.h.b16 %v279
    %v2597 = vunpack.c.l.b16 %v280
    %v2598 = vunpack.c.h.b16 %v280
    %v2599 = vunpack.c.l.b16 %v281
    %v2600 = vunpack.c.h.b16 %v281
    %v2601 = vunpack.c.l.b16 %v282
    %v2602 = vunpack.c.h.b16 %v282
    %v2603 = vunpack.c.l.b16 %v283
    %v2604 = vunpack.c.h.b16 %v283
    %v2605 = vunpack.c.l.b16 %v284
    %v2606 = vunpack.c.h.b16 %v284
    %v2607 = vunpack.c.l.b16 %v285
    %v2608 = vunpack.c.h.b16 %v285
    %v2609 = vunpack.c.l.b16 %v286
    %v2610 = vunpack.c.h.b16 %v286
    %v2611 = vunpack.c.l.b16 %v287
    %v2612 = vunpack.c.h.b16 %v287
    %v2613 = vunpack.c.l.b16 %v288
    %v2614 = vunpack.c.h.b16 %v288
    %v2615 = vunpack.c.l.b16 %v289
    %v2616 = vunpack.c.h.b16 %v289
    %v2617 = vunpack.c.l.b16 %v290
    %v2618 = vunpack.c.h.b16 %v290
    %v2619 = vunpack.c.l.b16 %v291
    %v2620 = vunpack.c.h.b16 %v291
    %v2621 = vunpack.c.l.b16 %v292
    %v2622 = vunpack.c.h.b16 %v292
    %v2623 = vunpack.c.l.b16 %v293
    %v2624 = vunpack.c.h.b16 %v293
    %v2625 = vunpack.c.l.b16 %v294
    %v2626 = vunpack.c.h.b16 %v294
    %v2627 = vunpack.c.l.b16 %v295
    %v2628 = vunpack.c.h.b16 %v295
    %v2629 = vunpack.c.l.b16 %v296
    %v2630 = vunpack.c.h.b16 %v296
    %v2631 = vunpack.c.l.b16 %v297
    %v2632 = vunpack.c.h.b16 %v297
    %v2633 = vunpack.c.l.b16 %v298
    %v2634 = vunpack.c.h.b16 %v298
    %v2635 = vunpack.c.l.b16 %v299
    %v2636 = vunpack.c.h.b16 %v299
    %v2637 = vunpack.c.l.b16 %v300
    %v2638 = vunpack.c.h.b16 %v300
    %v2639 = vunpack.c.l.b16 %v301
    %v2640 = vunpack.c.h.b16 %v301
    %v2641 = vunpack.c.l.b16 %v302
    %v2642 = vunpack.c.h.b16 %v302
    %v2643 = vunpack.c.l.b16 %v303
    %v2644 = vunpack.c.h.b16 %v303
    %v2645 = vunpack.c.l.b16 %v304
    %v2646 = vunpack.c.h.b16 %v304
    %v2647 = vunpack.c.l.b16 %v305
    %v2648 = vunpack.c.h.b16 %v305
    %v2649 = vunpack.c.l.b16 %v306
    %v2650 = vunpack.c.h.b16 %v306
    %v2651 = vunpack.c.l.b16 %v307
    %v2652 = vunpack.c.h.b16 %v307
    %v2653 = vunpack.c.l.b16 %v308
    %v2654 = vunpack.c.h.b16 %v308
    %v2655 = vunpack.c.l.b16 %v309
    %v2656 = vunpack.c.h.b16 %v309
    %v2657 = vunpack.c.l.b16 %v310
    %v2658 = vunpack.c.h.b16 %v310
    %v2659 = vunpack.c.l.b16 %v311
    %v2660 = vunpack.c.h.b16 %v311
    %v2661 = vunpack.c.l.b16 %v312
    %v2662 = vunpack.c.h.b16 %v312
    %v2663 = vunpack.c.l.b16 %v313
    %v2664 = vunpack.c.h.b16 %v313
    %v2665 = vunpack.c.l.b16 %v314
    %v2666 = vunpack.c.h.b16 %v314
    %v2667 = vunpack.c.l.b16 %v315
    %v2668 = vunpack.c.h.b16 %v315
    %v2669 = vunpack.c.l.b16 %v316
    %v2670 = vunpack.c.h.b16 %v316
    %v2671 = vunpack.c.l.b16 %v317
    %v2672 = vunpack.c.h.b16 %v317
    %v2673 = vunpack.c.l.b16 %v318
    %v2674 = vunpack.c.h.b16 %v318
    %v2675 = vunpack.c.l.b16 %v319
    %v2676 = vunpack.c.h.b16 %v319
    %v2677 = vunpack.c.l.b16 %v320
    %v2678 = vunpack.c.h.b16 %v320
    %v2679 = vunpack.c.l.b16 %v321
    %v2680 = vunpack.c.h.b16 %v321
    %v2681 = vunpack.c.l.b16 %v322
    %v2682 = vunpack.c.h.b16 %v322
    %v2683 = vunpack.c.l.b16 %v323
    %v2684 = vunpack.c.h.b16 %v323
    %v2685 = vunpack.c.l.b16 %v324
    %v2686 = vunpack.c.h.b16 %v324
    %v2687 = vunpack.c.l.b16 %v325
    %v2688 = vunpack.c.h.b16 %v325
    %v2689 = vunpack.c.l.b16 %v326
    %v2690 = vunpack.c.h.b16 %v326
    %v2691 = vunpack.c.l.b16 %v327
    %v2692 = vunpack.c.h.b16 %v327
    %v2693 = vunpack.c.l.b16 %v328
    %v2694 = vunpack.c.h.b16 %v328
    %v2695 = vunpack.c.l.b16 %v329
    %v2696 = vunpack.c.h.b16 %v329
    %v2697 = vunpack.c.l.b16 %v330
    %v2698 = vunpack.c.h.b16 %v330
    %v2699 = vunpack.c.l.b16 %v331
    %v2700 = vunpack.c.h.b16 %v331
    %v2701 = vunpack.c.l.b16 %v332
    %v2702 = vunpack.c.h.b16 %v332
    %v2703 = vunpack.c.l.b16 %v333
    %v2704 = vunpack.c.h.b16 %v333
    %v2705 = vunpack.c.l.b16 %v334
    %v2706 = vunpack.c.h.b16 %v334
    %v2707 = vunpack.c.l.b16 %v335
    %v2708 = vunpack.c.h.b16 %v335
    %v2709 = vunpack.c.l.b16 %v336
    %v2710 = vunpack.c.h.b16 %v336
    %v2711 = vunpack.c.l.b16 %v337
    %v2712 = vunpack.c.h.b16 %v337
    %v2713 = vunpack.c.l.b16 %v338
    %v2714 = vunpack.c.h.b16 %v338
    %v2715 = vunpack.c.l.b16 %v339
    %v2716 = vunpack.c.h.b16 %v339
    %v2717 = vunpack.c.l.b16 %v340
    %v2718 = vunpack.c.h.b16 %v340
    %v2719 = vunpack.c.l.b16 %v341
    %v2720 = vunpack.c.h.b16 %v341
    %v2721 = vunpack.c.l.b16 %v342
    %v2722 = vunpack.c.h.b16 %v342
    %v2723 = vunpack.c.l.b16 %v343
    %v2724 = vunpack.c.h.b16 %v343
    %v2725 = vunpack.c.l.b16 %v344
    %v2726 = vunpack.c.h.b16 %v344
    %v2727 = vunpack.c.l.b16 %v345
    %v2728 = vunpack.c.h.b16 %v345
    %v2729 = vunpack.c.l.b16 %v346
    %v2730 = vunpack.c.h.b16 %v346
    %v2731 = vunpack.c.l.b16 %v347
    %v2732 = vunpack.c.h.b16 %v347
    %v2733 = vunpack.c.l.b16 %v348
    %v2734 = vunpack.c.h.b16 %v348
    %v2735 = vunpack.c.l.b16 %v349
    %v2736 = vunpack.c.h.b16 %v349
    %v2737 = vunpack.c.l.b16 %v350
    %v2738 = vunpack.c.h.b16 %v350
    %v2739 = vunpack.c.l.b16 %v351
    %v2740 = vunpack.c.h.b16 %v351
    %v2741 = vunpack.c.l.b16 %v352
    %v2742 = vunpack.c.h.b16 %v352
    %v2743 = vunpack.c.l.b16 %v353
    %v2744 = vunpack.c.h.b16 %v353
    %v2745 = vunpack.c.l.b16 %v354
    %v2746 = vunpack.c.h.b16 %v354
    %v2747 = vunpack.c.l.b16 %v355
    %v2748 = vunpack.c.h.b16 %v355
    %v2749 = vunpack.c.l.b16 %v356
    %v2750 = vunpack.c.h.b16 %v356
    %v2751 = vunpack.c.l.b16 %v357
    %v2752 = vunpack.c.h.b16 %v357
    %v2753 = vunpack.c.l.b16 %v358
    %v2754 = vunpack.c.h.b16 %v358
    %v2755 = vunpack.c.l.b16 %v359
    %v2756 = vunpack.c.h.b16 %v359
    %v2757 = vunpack.c.l.b16 %v360
    %v2758 = vunpack.c.h.b16 %v360
    %v2759 = vunpack.c.l.b16 %v361
    %v2760 = vunpack.c.h.b16 %v361
    %v2761 = vunpack.c.l.b16 %v362
    %v2762 = vunpack.c.h.b16 %v362
    %v2763 = vunpack.c.l.b16 %v363
    %v2764 = vunpack.c.h.b16 %v363
    %v2765 = vunpack.c.l.b16 %v364
    %v2766 = vunpack.c.h.b16 %v364
    %v2767 = vunpack.c.l.b16 %v365
    %v2768 = vunpack.c.h.b16 %v365
    %v2769 = vunpack.c.l.b16 %v366
    %v2770 = vunpack.c.h.b16 %v366
    %v2771 = vunpack.c.l.b16 %v367
    %v2772 = vunpack.c.h.b16 %v367
    %v2773 = vunpack.c.l.b16 %v368
    %v2774 = vunpack.c.h.b16 %v368
    %v2775 = vunpack.c.l.b16 %v369
    %v2776 = vunpack.c.h.b16 %v369
    %v2777 = vunpack.c.l.b16 %v370
    %v2778 = vunpack.c.h.b16 %v370
    %v2779 = vunpack.c.l.b16 %v371
    %v2780 = vunpack.c.h.b16 %v371
    %v2781 = vunpack.c.l.b16 %v372
    %v2782 = vunpack.c.h.b16 %v372
    %v2783 = vunpack.c.l.b16 %v373
    %v2784 = vunpack.c.h.b16 %v373
    %v2785 = vunpack.c.l.b16 %v374
    %v2786 = vunpack.c.h.b16 %v374
    %v2787 = vunpack.c.l.b16 %v375
    %v2788 = vunpack.c.h.b16 %v375
    %v2789 = vunpack.c.l.b16 %v376
    %v2790 = vunpack.c.h.b16 %v376
    %v2791 = vunpack.c.l.b16 %v377
    %v2792 = vunpack.c.h.b16 %v377
    %v2793 = vunpack.c.l.b16 %v378
    %v2794 = vunpack.c.h.b16 %v378
    %v2795 = vunpack.c.l.b16 %v379
    %v2796 = vunpack.c.h.b16 %v379
    %v2797 = vunpack.c.l.b16 %v380
    %v2798 = vunpack.c.h.b16 %v380
    %v2799 = vunpack.c.l.b16 %v381
    %v2800 = vunpack.c.h.b16 %v381
    %v2801 = vunpack.c.l.b16 %v382
    %v2802 = vunpack.c.h.b16 %v382
    %v2803 = vunpack.c.l.b16 %v383
    %v2804 = vunpack.c.h.b16 %v383
    %v2805 = vunpack.c.l.b16 %v384
    %v2806 = vunpack.c.h.b16 %v384
    %v2807 = vunpack.c.l.b16 %v385
    %v2808 = vunpack.c.h.b16 %v385
    %v2809 = vunpack.c.l.b16 %v386
    %v2810 = vunpack.c.h.b16 %v386
    %v2811 = vunpack.c.l.b16 %v387
    %v2812 = vunpack.c.h.b16 %v387
    %v2813 = vunpack.c.l.b16 %v388
    %v2814 = vunpack.c.h.b16 %v388
    %v2815 = vunpack.c.l.b16 %v389
    %v2816 = vunpack.c.h.b16 %v389
    %v2817 = vunpack.c.l.b16 %v390
    %v2818 = vunpack.c.h.b16 %v390
    %v2819 = vunpack.c.l.b16 %v391
    %v2820 = vunpack.c.h.b16 %v391
    %v2821 = vunpack.c.l.b16 %v392
    %v2822 = vunpack.c.h.b16 %v392
    %v2823 = vunpack.c.l.b16 %v393
    %v2824 = vunpack.c.h.b16 %v393
    %v2825 = vunpack.c.l.b16 %v394
    %v2826 = vunpack.c.h.b16 %v394
    %v2827 = vunpack.c.l.b16 %v395
    %v2828 = vunpack.c.h.b16 %v395
    %v2829 = vunpack.c.l.b16 %v396
    %v2830 = vunpack.c.h.b16 %v396
    %v2831 = vunpack.c.l.b16 %v397
    %v2832 = vunpack.c.h.b16 %v397
    %v2833 = vunpack.c.l.b16 %v398
    %v2834 = vunpack.c.h.b16 %v398
    %v2835 = vunpack.c.l.b16 %v399
    %v2836 = vunpack.c.h.b16 %v399
    %v2837 = vunpack.c.l.b16 %v400
    %v2838 = vunpack.c.h.b16 %v400
    %v2839 = vunpack.c.l.b16 %v401
    %v2840 = vunpack.c.h.b16 %v401
    %v2841 = vunpack.c.l.b16 %v402
    %v2842 = vunpack.c.h.b16 %v402
    %v2843 = vunpack.c.l.b16 %v403
    %v2844 = vunpack.c.h.b16 %v403
    %v2845 = vunpack.c.l.b16 %v404
    %v2846 = vunpack.c.h.b16 %v404
    %v2847 = vunpack.c.l.b16 %v405
    %v2848 = vunpack.c.h.b16 %v405
    %v2849 = vunpack.c.l.b16 %v406
    %v2850 = vunpack.c.h.b16 %v406
    %v2851 = vunpack.c.l.b16 %v407
    %v2852 = vunpack.c.h.b16 %v407
    %v2853 = vunpack.c.l.b16 %v408
    %v2854 = vunpack.c.h.b16 %v408
    %v2855 = vunpack.c.l.b16 %v409
    %v2856 = vunpack.c.h.b16 %v409
    %v2857 = vunpack.c.l.b16 %v410
    %v2858 = vunpack.c.h.b16 %v410
    %v2859 = vunpack.c.l.b16 %v411
    %v2860 = vunpack.c.h.b16 %v411
    %v2861 = vunpack.c.l.b16 %v412
    %v2862 = vunpack.c.h.b16 %v412
    %v2863 = vunpack.c.l.b16 %v413
    %v2864 = vunpack.c.h.b16 %v413
    %v2865 = vunpack.c.l.b16 %v414
    %v2866 = vunpack.c.h.b16 %v414
    %v2867 = vunpack.c.l.b16 %v415
    %v2868 = vunpack.c.h.b16 %v415
    %v2869 = vunpack.c.l.b16 %v416
    %v2870 = vunpack.c.h.b16 %v416
    %v2871 = vunpack.c.l.b16 %v417
    %v2872 = vunpack.c.h.b16 %v417
    %v2873 = vunpack.c.l.b16 %v418
    %v2874 = vunpack.c.h.b16 %v418
    %v2875 = vunpack.c.l.b16 %v419
    %v2876 = vunpack.c.h.b16 %v419
    %v2877 = vunpack.c.l.b16 %v420
    %v2878 = vunpack.c.h.b16 %v420
    %v2879 = vunpack.c.l.b16 %v421
    %v2880 = vunpack.c.h.b16 %v421
    %v2881 = vunpack.c.l.b16 %v422
    %v2882 = vunpack.c.h.b16 %v422
    %v2883 = vunpack.c.l.b16 %v423
    %v2884 = vunpack.c.h.b16 %v423
    %v2885 = vunpack.c.l.b16 %v424
    %v2886 = vunpack.c.h.b16 %v424
    %v2887 = vunpack.c.l.b16 %v425
    %v2888 = vunpack.c.h.b16 %v425
    %v2889 = vunpack.c.l.b16 %v426
    %v2890 = vunpack.c.h.b16 %v426
    %v2891 = vunpack.c.l.b16 %v427
    %v2892 = vunpack.c.h.b16 %v427
    %v2893 = vunpack.c.l.b16 %v428
    %v2894 = vunpack.c.h.b16 %v428
    %v2895 = vunpack.c.l.b16 %v429
    %v2896 = vunpack.c.h.b16 %v429
    %v2897 = vunpack.c.l.b16 %v430
    %v2898 = vunpack.c.h.b16 %v430
    %v2899 = vunpack.c.l.b16 %v431
    %v2900 = vunpack.c.h.b16 %v431
    %v2901 = vunpack.c.l.b16 %v432
    %v2902 = vunpack.c.h.b16 %v432
    %v2903 = vunpack.c.l.b16 %v433
    %v2904 = vunpack.c.h.b16 %v433
    %v2905 = vunpack.c.l.b16 %v434
    %v2906 = vunpack.c.h.b16 %v434
    %v2907 = vunpack.c.l.b16 %v435
    %v2908 = vunpack.c.h.b16 %v435
    %v2909 = vunpack.c.l.b16 %v436
    %v2910 = vunpack.c.h.b16 %v436
    %v2911 = vunpack.c.l.b16 %v437
    %v2912 = vunpack.c.h.b16 %v437
    %v2913 = vunpack.c.l.b16 %v438
    %v2914 = vunpack.c.h.b16 %v438
    %v2915 = vunpack.c.l.b16 %v439
    %v2916 = vunpack.c.h.b16 %v439
    %v2917 = vunpack.c.l.b16 %v440
    %v2918 = vunpack.c.h.b16 %v440
    %v2919 = vunpack.c.l.b16 %v441
    %v2920 = vunpack.c.h.b16 %v441
    %v2921 = vunpack.c.l.b16 %v442
    %v2922 = vunpack.c.h.b16 %v442
    %v2923 = vunpack.c.l.b16 %v443
    %v2924 = vunpack.c.h.b16 %v443
    %v2925 = vunpack.c.l.b16 %v444
    %v2926 = vunpack.c.h.b16 %v444
    %v2927 = vunpack.c.l.b16 %v445
    %v2928 = vunpack.c.h.b16 %v445
    %v2929 = vunpack.c.l.b16 %v446
    %v2930 = vunpack.c.h.b16 %v446
    %v2931 = vunpack.c.l.b16 %v447
    %v2932 = vunpack.c.h.b16 %v447
    %v2933 = vunpack.c.l.b16 %v448
    %v2934 = vunpack.c.h.b16 %v448
    %v2935 = vunpack.c.l.b16 %v449
    %v2936 = vunpack.c.h.b16 %v449
    %v2937 = vunpack.c.l.b16 %v450
    %v2938 = vunpack.c.h.b16 %v450
    %v2939 = vunpack.c.l.b16 %v451
    %v2940 = vunpack.c.h.b16 %v451
    %v2941 = vunpack.c.l.b16 %v452
    %v2942 = vunpack.c.h.b16 %v452
    %v2943 = vunpack.c.l.b16 %v453
    %v2944 = vunpack.c.h.b16 %v453
    %v2945 = vunpack.c.l.b16 %v454
    %v2946 = vunpack.c.h.b16 %v454
    %v2947 = vunpack.c.l.b16 %v455
    %v2948 = vunpack.c.h.b16 %v455
    %v2949 = vunpack.c.l.b16 %v456
    %v2950 = vunpack.c.h.b16 %v456
    %v2951 = vunpack.c.l.b16 %v457
    %v2952 = vunpack.c.h.b16 %v457
    %v2953 = vunpack.c.l.b16 %v458
    %v2954 = vunpack.c.h.b16 %v458
    %v2955 = vunpack.c.l.b16 %v459
    %v2956 = vunpack.c.h.b16 %v459
    %v2957 = vunpack.c.l.b16 %v460
    %v2958 = vunpack.c.h.b16 %v460
    %v2959 = vunpack.c.l.b16 %v461
    %v2960 = vunpack.c.h.b16 %v461
    %v2961 = vunpack.c.l.b16 %v462
    %v2962 = vunpack.c.h.b16 %v462
    %v2963 = vunpack.c.l.b16 %v463
    %v2964 = vunpack.c.h.b16 %v463
    %v2965 = vunpack.c.l.b16 %v464
    %v2966 = vunpack.c.h.b16 %v464
    %v2967 = vunpack.c.l.b16 %v465
    %v2968 = vunpack.c.h.b16 %v465
    %v2969 = vunpack.c.l.b16 %v466
    %v2970 = vunpack.c.h.b16 %v466
    %v2971 = vunpack.c.l.b16 %v467
    %v2972 = vunpack.c.h.b16 %v467
    %v2973 = vunpack.c.l.b16 %v468
    %v2974 = vunpack.c.h.b16 %v468
    %v2975 = vunpack.c.l.b16 %v469
    %v2976 = vunpack.c.h.b16 %v469
    %v2977 = vunpack.c.l.b16 %v470
    %v2978 = vunpack.c.h.b16 %v470
    %v2979 = vunpack.c.l.b16 %v471
    %v2980 = vunpack.c.h.b16 %v471
    %v2981 = vunpack.c.l.b16 %v472
    %v2982 = vunpack.c.h.b16 %v472
    %v2983 = vunpack.c.l.b16 %v473
    %v2984 = vunpack.c.h.b16 %v473
    %v2985 = vunpack.c.l.b16 %v474
    %v2986 = vunpack.c.h.b16 %v474
    %v2987 = vunpack.c.l.b16 %v475
    %v2988 = vunpack.c.h.b16 %v475
    %v2989 = vunpack.c.l.b16 %v476
    %v2990 = vunpack.c.h.b16 %v476
    %v2991 = vunpack.c.l.b16 %v477
    %v2992 = vunpack.c.h.b16 %v477
    %v2993 = vunpack.c.l.b16 %v478
    %v2994 = vunpack.c.h.b16 %v478
    %v2995 = vunpack.c.l.b16 %v479
    %v2996 = vunpack.c.h.b16 %v479
    %v2997 = vunpack.c.l.b16 %v480
    %v2998 = vunpack.c.h.b16 %v480
    %v2999 = vunpack.c.l.b16 %v481
    %v3000 = vunpack.c.h.b16 %v481
    %v3001 = vunpack.c.l.b16 %v482
    %v3002 = vunpack.c.h.b16 %v482
    %v3003 = vunpack.c.l.b16 %v483
    %v3004 = vunpack.c.h.b16 %v483
    %v3005 = vunpack.c.l.b16 %v484
    %v3006 = vunpack.c.h.b16 %v484
    %v3007 = vunpack.c.l.b16 %v485
    %v3008 = vunpack.c.h.b16 %v485
    %v3009 = vunpack.c.l.b16 %v486
    %v3010 = vunpack.c.h.b16 %v486
    %v3011 = vunpack.c.l.b16 %v487
    %v3012 = vunpack.c.h.b16 %v487
    %v3013 = vunpack.c.l.b16 %v488
    %v3014 = vunpack.c.h.b16 %v488
    %v3015 = vunpack.c.l.b16 %v489
    %v3016 = vunpack.c.h.b16 %v489
    %v3017 = vunpack.c.l.b16 %v490
    %v3018 = vunpack.c.h.b16 %v490
    %v3019 = vunpack.c.l.b16 %v491
    %v3020 = vunpack.c.h.b16 %v491
    %v3021 = vunpack.c.l.b16 %v492
    %v3022 = vunpack.c.h.b16 %v492
    %v3023 = vunpack.c.l.b16 %v493
    %v3024 = vunpack.c.h.b16 %v493
    %v3025 = vunpack.c.l.b16 %v494
    %v3026 = vunpack.c.h.b16 %v494
    %v3027 = vunpack.c.l.b16 %v495
    %v3028 = vunpack.c.h.b16 %v495
    %v3029 = vunpack.c.l.b16 %v496
    %v3030 = vunpack.c.h.b16 %v496
    %v3031 = vunpack.c.l.b16 %v497
    %v3032 = vunpack.c.h.b16 %v497
    %v3033 = vunpack.c.l.b16 %v498
    %v3034 = vunpack.c.h.b16 %v498
    %v3035 = vunpack.c.l.b16 %v499
    %v3036 = vunpack.c.h.b16 %v499
    %v3037 = vunpack.c.l.b16 %v500
    %v3038 = vunpack.c.h.b16 %v500
    %v3039 = vunpack.c.l.b16 %v501
    %v3040 = vunpack.c.h.b16 %v501
    %v3041 = vunpack.c.l.b16 %v502
    %v3042 = vunpack.c.h.b16 %v502
    %v3043 = vunpack.c.l.b16 %v503
    %v3044 = vunpack.c.h.b16 %v503
    %v3045 = vunpack.c.l.b16 %v504
    %v3046 = vunpack.c.h.b16 %v504
    %v3047 = vunpack.c.l.b16 %v505
    %v3048 = vunpack.c.h.b16 %v505
    %v3049 = vunpack.c.l.b16 %v506
    %v3050 = vunpack.c.h.b16 %v506
    %v3051 = vunpack.c.l.b16 %v507
    %v3052 = vunpack.c.h.b16 %v507
    %v3053 = vunpack.c.l.b16 %v508
    %v3054 = vunpack.c.h.b16 %v508
    %v3055 = vunpack.c.l.b16 %v509
    %v3056 = vunpack.c.h.b16 %v509
    %v3057 = vunpack.c.l.b16 %v510
    %v3058 = vunpack.c.h.b16 %v510
    %v3059 = vunpack.c.l.b16 %v511
    %v3060 = vunpack.c.h.b16 %v511
    %v3061 = vunpack.c.l.b16 %v512
    %v3062 = vunpack.c.h.b16 %v512
    %v3063 = vunpack.c.l.b16 %v513
    %v3064 = vunpack.c.h.b16 %v513
    %v3065 = vunpack.c.l.b16 %v514
    %v3066 = vunpack.c.h.b16 %v514
    %v3067 = vunpack.c.l.b16 %v515
    %v3068 = vunpack.c.h.b16 %v515
    %v3069 = vunpack.c.l.b16 %v516
    %v3070 = vunpack.c.h.b16 %v516
    %v3071 = vunpack.c.l.b16 %v517
    %v3072 = vunpack.c.h.b16 %v517
    %v3073 = vunpack.c.l.b16 %v518
    %v3074 = vunpack.c.h.b16 %v518
    %v3075 = vunpack.c.l.b16 %v519
    %v3076 = vunpack.c.h.b16 %v519
    %v3077 = vunpack.c.l.b16 %v520
    %v3078 = vunpack.c.h.b16 %v520
    %v3079 = vunpack.c.l.b16 %v521
    %v3080 = vunpack.c.h.b16 %v521
    %v3081 = vunpack.c.l.b16 %v522
    %v3082 = vunpack.c.h.b16 %v522
    %v3083 = vunpack.c.l.b16 %v523
    %v3084 = vunpack.c.h.b16 %v523
    %v3085 = vunpack.c.l.b16 %v524
    %v3086 = vunpack.c.h.b16 %v524
    %v3087 = vunpack.c.l.b16 %v525
    %v3088 = vunpack.c.h.b16 %v525
    %v3089 = vunpack.c.l.b16 %v526
    %v3090 = vunpack.c.h.b16 %v526
    %v3091 = vunpack.c.l.b16 %v527
    %v3092 = vunpack.c.h.b16 %v527
    %v3093 = vunpack.c.l.b16 %v528
    %v3094 = vunpack.c.h.b16 %v528
    %v3095 = vunpack.c.l.b16 %v529
    %v3096 = vunpack.c.h.b16 %v529
    %v3097 = vunpack.c.l.b16 %v530
    %v3098 = vunpack.c.h.b16 %v530
    %v3099 = vunpack.c.l.b16 %v531
    %v3100 = vunpack.c.h.b16 %v531
    %v3101 = vunpack.c.l.b16 %v532
    %v3102 = vunpack.c.h.b16 %v532
    %v3103 = vunpack.c.l.b16 %v533
    %v3104 = vunpack.c.h.b16 %v533
    %v3105 = vunpack.c.l.b16 %v534
    %v3106 = vunpack.c.h.b16 %v534
    %v3107 = vunpack.c.l.b16 %v535
    %v3108 = vunpack.c.h.b16 %v535
    %v3109 = vunpack.c.l.b16 %v536
    %v3110 = vunpack.c.h.b16 %v536
    %v3111 = vunpack.c.l.b16 %v537
    %v3112 = vunpack.c.h.b16 %v537
    %v3113 = vunpack.c.l.b16 %v538
    %v3114 = vunpack.c.h.b16 %v538
    %v3115 = vunpack.c.l.b16 %v539
    %v3116 = vunpack.c.h.b16 %v539
    %v3117 = vunpack.c.l.b16 %v540
    %v3118 = vunpack.c.h.b16 %v540
    %v3119 = vunpack.c.l.b16 %v541
    %v3120 = vunpack.c.h.b16 %v541
    %v3121 = vunpack.c.l.b16 %v542
    %v3122 = vunpack.c.h.b16 %v542
    %v3123 = vunpack.c.l.b16 %v543
    %v3124 = vunpack.c.h.b16 %v543
    %v3125 = vunpack.c.l.b16 %v544
    %v3126 = vunpack.c.h.b16 %v544
    %v3127 = vunpack.c.l.b16 %v545
    %v3128 = vunpack.c.h.b16 %v545
    %v3129 = vunpack.c.l.b16 %v546
    %v3130 = vunpack.c.h.b16 %v546
    %v3131 = vunpack.c.l.b16 %v547
    %v3132 = vunpack.c.h.b16 %v547
    %v3133 = vunpack.c.l.b16 %v548
    %v3134 = vunpack.c.h.b16 %v548
    %v3135 = vunpack.c.l.b16 %v549
    %v3136 = vunpack.c.h.b16 %v549
    %v3137 = vunpack.c.l.b16 %v550
    %v3138 = vunpack.c.h.b16 %v550
    %v3139 = vunpack.c.l.b16 %v551
    %v3140 = vunpack.c.h.b16 %v551
    %v3141 = vunpack.c.l.b16 %v552
    %v3142 = vunpack.c.h.b16 %v552
    %v3143 = vunpack.c.l.b16 %v553
    %v3144 = vunpack.c.h.b16 %v553
    %v3145 = vunpack.c.l.b16 %v554
    %v3146 = vunpack.c.h.b16 %v554
    %v3147 = vunpack.c.l.b16 %v555
    %v3148 = vunpack.c.h.b16 %v555
    %v3149 = vunpack.c.l.b16 %v556
    %v3150 = vunpack.c.h.b16 %v556
    %v3151 = vunpack.c.l.b16 %v557
    %v3152 = vunpack.c.h.b16 %v557
    %v3153 = vunpack.c.l.b16 %v558
    %v3154 = vunpack.c.h.b16 %v558
    %v3155 = vunpack.c.l.b16 %v559
    %v3156 = vunpack.c.h.b16 %v559
    %v3157 = vunpack.c.l.b16 %v560
    %v3158 = vunpack.c.h.b16 %v560
    %v3159 = vunpack.c.l.b16 %v561
    %v3160 = vunpack.c.h.b16 %v561
    %v3161 = vunpack.c.l.b16 %v562
    %v3162 = vunpack.c.h.b16 %v562
    %v3163 = vunpack.c.l.b16 %v563
    %v3164 = vunpack.c.h.b16 %v563
    %v3165 = vunpack.c.l.b16 %v564
    %v3166 = vunpack.c.h.b16 %v564
    %v3167 = vunpack.c.l.b16 %v565
    %v3168 = vunpack.c.h.b16 %v565
    %v3169 = vunpack.c.l.b16 %v566
    %v3170 = vunpack.c.h.b16 %v566
    %v3171 = vunpack.c.l.b16 %v567
    %v3172 = vunpack.c.h.b16 %v567
    %v3173 = vunpack.c.l.b16 %v568
    %v3174 = vunpack.c.h.b16 %v568
    %v3175 = vunpack.c.l.b16 %v569
    %v3176 = vunpack.c.h.b16 %v569
    %v3177 = vunpack.c.l.b16 %v570
    %v3178 = vunpack.c.h.b16 %v570
    %v3179 = vunpack.c.l.b16 %v571
    %v3180 = vunpack.c.h.b16 %v571
    %v3181 = vunpack.c.l.b16 %v572
    %v3182 = vunpack.c.h.b16 %v572
    %v3183 = vunpack.c.l.b16 %v573
    %v3184 = vunpack.c.h.b16 %v573
    %v3185 = vunpack.c.l.b16 %v574
    %v3186 = vunpack.c.h.b16 %v574
    %v3187 = vunpack.c.l.b16 %v575
    %v3188 = vunpack.c.h.b16 %v575
    %v3189 = vunpack.c.l.b16 %v576
    %v3190 = vunpack.c.h.b16 %v576
    %v3191 = vunpack.c.l.b16 %v577
    %v3192 = vunpack.c.h.b16 %v577
    %v3193 = vunpack.c.l.b16 %v578
    %v3194 = vunpack.c.h.b16 %v578
    %v3195 = vunpack.c.l.b16 %v579
    %v3196 = vunpack.c.h.b16 %v579
    %v3197 = vunpack.c.l.b16 %v580
    %v3198 = vunpack.c.h.b16 %v580
    %v3199 = vunpack.c.l.b16 %v581
    %v3200 = vunpack.c.h.b16 %v581
    %v3201 = vunpack.c.l.b16 %v582
    %v3202 = vunpack.c.h.b16 %v582
    %v3203 = vunpack.c.l.b16 %v583
    %v3204 = vunpack.c.h.b16 %v583
    %v3205 = vunpack.c.l.b16 %v584
    %v3206 = vunpack.c.h.b16 %v584
    %v3207 = vunpack.c.l.b16 %v585
    %v3208 = vunpack.c.h.b16 %v585
    %v3209 = vunpack.c.l.b16 %v586
    %v3210 = vunpack.c.h.b16 %v586
    %v3211 = vunpack.c.l.b16 %v587
    %v3212 = vunpack.c.h.b16 %v587
    %v3213 = vunpack.c.l.b16 %v588
    %v3214 = vunpack.c.h.b16 %v588
    %v3215 = vunpack.c.l.b16 %v589
    %v3216 = vunpack.c.h.b16 %v589
    %v3217 = vunpack.c.l.b16 %v590
    %v3218 = vunpack.c.h.b16 %v590
    %v3219 = vunpack.c.l.b16 %v591
    %v3220 = vunpack.c.h.b16 %v591
    %v3221 = vunpack.c.l.b16 %v592
    %v3222 = vunpack.c.h.b16 %v592
    %v3223 = vunpack.c.l.b16 %v593
    %v3224 = vunpack.c.h.b16 %v593
    %v3225 = vunpack.c.l.b16 %v594
    %v3226 = vunpack.c.h.b16 %v594
    %v3227 = vunpack.c.l.b16 %v595
    %v3228 = vunpack.c.h.b16 %v595
    %v3229 = vunpack.c.l.b16 %v596
    %v3230 = vunpack.c.h.b16 %v596
    %v3231 = vunpack.c.l.b16 %v597
    %v3232 = vunpack.c.h.b16 %v597
    %v3233 = vunpack.c.l.b16 %v598
    %v3234 = vunpack.c.h.b16 %v598
    %v3235 = vunpack.c.l.b16 %v599
    %v3236 = vunpack.c.h.b16 %v599
    %v3237 = vunpack.c.l.b16 %v600
    %v3238 = vunpack.c.h.b16 %v600
    %v3239 = vunpack.c.l.b16 %v601
    %v3240 = vunpack.c.h.b16 %v601
    %v3241 = vunpack.c.l.b16 %v602
    %v3242 = vunpack.c.h.b16 %v602
    %v3243 = vunpack.c.l.b16 %v603
    %v3244 = vunpack.c.h.b16 %v603
    %v3245 = vunpack.c.l.b16 %v604
    %v3246 = vunpack.c.h.b16 %v604
    %v3247 = vunpack.c.l.b16 %v605
    %v3248 = vunpack.c.h.b16 %v605
    %v3249 = vunpack.c.l.b16 %v606
    %v3250 = vunpack.c.h.b16 %v606
    %v3251 = vunpack.c.l.b16 %v607
    %v3252 = vunpack.c.h.b16 %v607
    %v3253 = vunpack.c.l.b16 %v608
    %v3254 = vunpack.c.h.b16 %v608
    %v3255 = vunpack.c.l.b16 %v609
    %v3256 = vunpack.c.h.b16 %v609
    %v3257 = vunpack.c.l.b16 %v610
    %v3258 = vunpack.c.h.b16 %v610
    %v3259 = vunpack.c.l.b16 %v611
    %v3260 = vunpack.c.h.b16 %v611
    %v3261 = vunpack.c.l.b16 %v612
    %v3262 = vunpack.c.h.b16 %v612
    %v3263 = vunpack.c.l.b16 %v613
    %v3264 = vunpack.c.h.b16 %v613
    %v3265 = vunpack.c.l.b16 %v614
    %v3266 = vunpack.c.h.b16 %v614
    %v3267 = vunpack.c.l.b16 %v615
    %v3268 = vunpack.c.h.b16 %v615
    %v3269 = vunpack.c.l.b16 %v616
    %v3270 = vunpack.c.h.b16 %v616
    %v3271 = vunpack.c.l.b16 %v617
    %v3272 = vunpack.c.h.b16 %v617
    %v3273 = vunpack.c.l.b16 %v618
    %v3274 = vunpack.c.h.b16 %v618
    %v3275 = vunpack.c.l.b16 %v619
    %v3276 = vunpack.c.h.b16 %v619
    %v3277 = vunpack.c.l.b16 %v620
    %v3278 = vunpack.c.h.b16 %v620
    %v3279 = vunpack.c.l.b16 %v621
    %v3280 = vunpack.c.h.b16 %v621
    %v3281 = vunpack.c.l.b16 %v622
    %v3282 = vunpack.c.h.b16 %v622
    %v3283 = vunpack.c.l.b16 %v623
    %v3284 = vunpack.c.h.b16 %v623
    %v3285 = vunpack.c.l.b16 %v624
    %v3286 = vunpack.c.h.b16 %v624
    %v3287 = vunpack.c.l.b16 %v625
    %v3288 = vunpack.c.h.b16 %v625
    %v3289 = vunpack.c.l.b16 %v626
    %v3290 = vunpack.c.h.b16 %v626
    %v3291 = vunpack.c.l.b16 %v627
    %v3292 = vunpack.c.h.b16 %v627
    %v3293 = vunpack.c.l.b16 %v628
    %v3294 = vunpack.c.h.b16 %v628
    %v3295 = vunpack.c.l.b16 %v629
    %v3296 = vunpack.c.h.b16 %v629
    %v3297 = vunpack.c.l.b16 %v630
    %v3298 = vunpack.c.h.b16 %v630
    %v3299 = vunpack.c.l.b16 %v631
    %v3300 = vunpack.c.h.b16 %v631
    %v3301 = vunpack.c.l.b16 %v632
    %v3302 = vunpack.c.h.b16 %v632
    %v3303 = vunpack.c.l.b16 %v633
    %v3304 = vunpack.c.h.b16 %v633
    %v3305 = vunpack.c.l.b16 %v634
    %v3306 = vunpack.c.h.b16 %v634
    %v3307 = vunpack.c.l.b16 %v635
    %v3308 = vunpack.c.h.b16 %v635
    %v3309 = vunpack.c.l.b16 %v636
    %v3310 = vunpack.c.h.b16 %v636
    %v3311 = vunpack.c.l.b16 %v637
    %v3312 = vunpack.c.h.b16 %v637
    %v3313 = vunpack.c.l.b16 %v638
    %v3314 = vunpack.c.h.b16 %v638
    %v3315 = vunpack.c.l.b16 %v639
    %v3316 = vunpack.c.h.b16 %v639
    %v3317 = vunpack.c.l.b16 %v640
    %v3318 = vunpack.c.h.b16 %v640
    %v3319 = vunpack.c.l.b16 %v641
    %v3320 = vunpack.c.h.b16 %v641
    %v3321 = vunpack.c.l.b16 %v642
    %v3322 = vunpack.c.h.b16 %v642
    %v3323 = vunpack.c.l.b16 %v643
    %v3324 = vunpack.c.h.b16 %v643
    %v3325 = vunpack.c.l.b16 %v644
    %v3326 = vunpack.c.h.b16 %v644
    %v3327 = vunpack.c.l.b16 %v645
    %v3328 = vunpack.c.h.b16 %v645
    %v3329 = vunpack.c.l.b16 %v646
    %v3330 = vunpack.c.h.b16 %v646
    %v3331 = vunpack.c.l.b16 %v647
    %v3332 = vunpack.c.h.b16 %v647
    %v3333 = vunpack.c.l.b16 %v648
    %v3334 = vunpack.c.h.b16 %v648
    %v3335 = vunpack.c.l.b16 %v649
    %v3336 = vunpack.c.h.b16 %v649
    %v3337 = vunpack.c.l.b16 %v650
    %v3338 = vunpack.c.h.b16 %v650
    %v3339 = vunpack.c.l.b16 %v651
    %v3340 = vunpack.c.h.b16 %v651
    %v3341 = vunpack.c.l.b16 %v652
    %v3342 = vunpack.c.h.b16 %v652
    %v3343 = vunpack.c.l.b16 %v653
    %v3344 = vunpack.c.h.b16 %v653
    %v3345 = vunpack.c.l.b16 %v654
    %v3346 = vunpack.c.h.b16 %v654
    %v3347 = vunpack.c.l.b16 %v655
    %v3348 = vunpack.c.h.b16 %v655
    %v3349 = vunpack.c.l.b16 %v656
    %v3350 = vunpack.c.h.b16 %v656
    %v3351 = vunpack.c.l.b16 %v657
    %v3352 = vunpack.c.h.b16 %v657
    %v3353 = vunpack.c.l.b16 %v658
    %v3354 = vunpack.c.h.b16 %v658
    %v3355 = vunpack.c.l.b16 %v659
    %v3356 = vunpack.c.h.b16 %v659
    %v3357 = vunpack.c.l.b16 %v660
    %v3358 = vunpack.c.h.b16 %v660
    %v3359 = vunpack.c.l.b16 %v661
    %v3360 = vunpack.c.h.b16 %v661
    %v3361 = vunpack.c.l.b16 %v662
    %v3362 = vunpack.c.h.b16 %v662
    %v3363 = vunpack.c.l.b16 %v663
    %v3364 = vunpack.c.h.b16 %v663
    %v3365 = vunpack.c.l.b16 %v664
    %v3366 = vunpack.c.h.b16 %v664
    %v3367 = vunpack.c.l.b16 %v665
    %v3368 = vunpack.c.h.b16 %v665
    %v3369 = vunpack.c.l.b16 %v666
    %v3370 = vunpack.c.h.b16 %v666
    %v3371 = vunpack.c.l.b16 %v667
    %v3372 = vunpack.c.h.b16 %v667
    %v3373 = vunpack.c.l.b16 %v668
    %v3374 = vunpack.c.h.b16 %v668
    %v3375 = vunpack.c.l.b16 %v669
    %v3376 = vunpack.c.h.b16 %v669
    %v3377 = vunpack.c.l.b16 %v670
    %v3378 = vunpack.c.h.b16 %v670
    %v3379 = vunpack.c.l.b16 %v671
    %v3380 = vunpack.c.h.b16 %v671
    %v3381 = vunpack.c.l.b16 %v672
    %v3382 = vunpack.c.h.b16 %v672
    %v3383 = vunpack.c.l.b16 %v673
    %v3384 = vunpack.c.h.b16 %v673
    %v3385 = vunpack.c.l.b16 %v674
    %v3386 = vunpack.c.h.b16 %v674
    %v3387 = vunpack.c.l.b16 %v675
    %v3388 = vunpack.c.h.b16 %v675
    %v3389 = vunpack.c.l.b16 %v676
    %v3390 = vunpack.c.h.b16 %v676
    %v3391 = vunpack.c.l.b16 %v677
    %v3392 = vunpack.c.h.b16 %v677
    %v3393 = vunpack.c.l.b16 %v678
    %v3394 = vunpack.c.h.b16 %v678
    %v3395 = vunpack.c.l.b16 %v679
    %v3396 = vunpack.c.h.b16 %v679
    %v3397 = vunpack.c.l.b16 %v680
    %v3398 = vunpack.c.h.b16 %v680
    %v3399 = vunpack.c.l.b16 %v681
    %v3400 = vunpack.c.h.b16 %v681
    %v3401 = vunpack.c.l.b16 %v682
    %v3402 = vunpack.c.h.b16 %v682
    %v3403 = vunpack.c.l.b16 %v683
    %v3404 = vunpack.c.h.b16 %v683
    %v3405 = vunpack.c.l.b16 %v684
    %v3406 = vunpack.c.h.b16 %v684
    %v3407 = vunpack.c.l.b16 %v685
    %v3408 = vunpack.c.h.b16 %v685
    %v3409 = vunpack.c.l.b16 %v686
    %v3410 = vunpack.c.h.b16 %v686
    %v3411 = vunpack.c.l.b16 %v687
    %v3412 = vunpack.c.h.b16 %v687
    %v3413 = vunpack.c.l.b16 %v688
    %v3414 = vunpack.c.h.b16 %v688
    %v3415 = vunpack.c.l.b16 %v689
    %v3416 = vunpack.c.h.b16 %v689
    %v3417 = vunpack.c.l.b16 %v690
    %v3418 = vunpack.c.h.b16 %v690
    %v3419 = vunpack.c.l.b16 %v691
    %v3420 = vunpack.c.h.b16 %v691
    %v3421 = vunpack.c.l.b16 %v692
    %v3422 = vunpack.c.h.b16 %v692
    %v3423 = vunpack.c.l.b16 %v693
    %v3424 = vunpack.c.h.b16 %v693
    %v3425 = vunpack.c.l.b16 %v694
    %v3426 = vunpack.c.h.b16 %v694
    %v3427 = vunpack.c.l.b16 %v695
    %v3428 = vunpack.c.h.b16 %v695
    %v3429 = vunpack.c.l.b16 %v696
    %v3430 = vunpack.c.h.b16 %v696
    %v3431 = vunpack.c.l.b16 %v697
    %v3432 = vunpack.c.h.b16 %v697
    %v3433 = vunpack.c.l.b16 %v698
    %v3434 = vunpack.c.h.b16 %v698
    %v3435 = vunpack.c.l.b16 %v699
    %v3436 = vunpack.c.h.b16 %v699
    %v3437 = vunpack.c.l.b16 %v700
    %v3438 = vunpack.c.h.b16 %v700
    %v3439 = vunpack.c.l.b16 %v701
    %v3440 = vunpack.c.h.b16 %v701
    %v3441 = vunpack.c.l.b16 %v702
    %v3442 = vunpack.c.h.b16 %v702
    %v3443 = vunpack.c.l.b16 %v703
    %v3444 = vunpack.c.h.b16 %v703
    %v3445 = vunpack.c.l.b16 %v704
    %v3446 = vunpack.c.h.b16 %v704
    %v3447 = vunpack.c.l.b16 %v705
    %v3448 = vunpack.c.h.b16 %v705
    %v3449 = vunpack.c.l.b16 %v706
    %v3450 = vunpack.c.h.b16 %v706
    %v3451 = vunpack.c.l.b16 %v707
    %v3452 = vunpack.c.h.b16 %v707
    %v3453 = vunpack.c.l.b16 %v708
    %v3454 = vunpack.c.h.b16 %v708
    %v3455 = vunpack.c.l.b16 %v709
    %v3456 = vunpack.c.h.b16 %v709
    %v3457 = vunpack.c.l.b16 %v710
    %v3458 = vunpack.c.h.b16 %v710
    %v3459 = vunpack.c.l.b16 %v711
    %v3460 = vunpack.c.h.b16 %v711
    %v3461 = vunpack.c.l.b16 %v712
    %v3462 = vunpack.c.h.b16 %v712
    %v3463 = vunpack.c.l.b16 %v713
    %v3464 = vunpack.c.h.b16 %v713
    %v3465 = vunpack.c.l.b16 %v714
    %v3466 = vunpack.c.h.b16 %v714
    %v3467 = vunpack.c.l.b16 %v715
    %v3468 = vunpack.c.h.b16 %v715
    %v3469 = vunpack.c.l.b16 %v716
    %v3470 = vunpack.c.h.b16 %v716
    %v3471 = vunpack.c.l.b16 %v717
    %v3472 = vunpack.c.h.b16 %v717
    %v3473 = vunpack.c.l.b16 %v718
    %v3474 = vunpack.c.h.b16 %v718
    %v3475 = vunpack.c.l.b16 %v719
    %v3476 = vunpack.c.h.b16 %v719
    %v3477 = vunpack.c.l.b16 %v720
    %v3478 = vunpack.c.h.b16 %v720
    %v3479 = vunpack.c.l.b16 %v721
    %v3480 = vunpack.c.h.b16 %v721
    %v3481 = vunpack.c.l.b16 %v722
    %v3482 = vunpack.c.h.b16 %v722
    %v3483 = vunpack.c.l.b16 %v723
    %v3484 = vunpack.c.h.b16 %v723
    %v3485 = vunpack.c.l.b16 %v724
    %v3486 = vunpack.c.h.b16 %v724
    %v3487 = vunpack.c.l.b16 %v725
    %v3488 = vunpack.c.h.b16 %v725
    %v3489 = vunpack.c.l.b16 %v726
    %v3490 = vunpack.c.h.b16 %v726
    %v3491 = vunpack.c.l.b16 %v727
    %v3492 = vunpack.c.h.b16 %v727
    %v3493 = vunpack.c.l.b16 %v728
    %v3494 = vunpack.c.h.b16 %v728
    %v3495 = vunpack.c.l.b16 %v729
    %v3496 = vunpack.c.h.b16 %v729
    %v3497 = vunpack.c.l.b16 %v730
    %v3498 = vunpack.c.h.b16 %v730
    %v3499 = vunpack.c.l.b16 %v731
    %v3500 = vunpack.c.h.b16 %v731
    %v3501 = vunpack.c.l.b16 %v732
    %v3502 = vunpack.c.h.b16 %v732
    %v3503 = vunpack.c.l.b16 %v733
    %v3504 = vunpack.c.h.b16 %v733
    %v3505 = vunpack.c.l.b16 %v734
    %v3506 = vunpack.c.h.b16 %v734
    %v3507 = vunpack.c.l.b16 %v735
    %v3508 = vunpack.c.h.b16 %v735
    %v3509 = vunpack.c.l.b16 %v736
    %v3510 = vunpack.c.h.b16 %v736
    %v3511 = vunpack.c.l.b16 %v737
    %v3512 = vunpack.c.h.b16 %v737
    %v3513 = vunpack.c.l.b16 %v738
    %v3514 = vunpack.c.h.b16 %v738
    %v3515 = vunpack.c.l.b16 %v739
    %v3516 = vunpack.c.h.b16 %v739
    %v3517 = vunpack.c.l.b16 %v740
    %v3518 = vunpack.c.h.b16 %v740
    %v3519 = vunpack.c.l.b16 %v741
    %v3520 = vunpack.c.h.b16 %v741
    %v3521 = vunpack.c.l.b16 %v742
    %v3522 = vunpack.c.h.b16 %v742
    %v3523 = vunpack.c.l.b16 %v743
    %v3524 = vunpack.c.h.b16 %v743
    %v3525 = vunpack.c.l.b16 %v744
    %v3526 = vunpack.c.h.b16 %v744
    %v3527 = vunpack.c.l.b16 %v745
    %v3528 = vunpack.c.h.b16 %v745
    %v3529 = vunpack.c.l.b16 %v746
    %v3530 = vunpack.c.h.b16 %v746
    %v3531 = vunpack.c.l.b16 %v747
    %v3532 = vunpack.c.h.b16 %v747
    %v3533 = vunpack.c.l.b16 %v748
    %v3534 = vunpack.c.h.b16 %v748
    %v3535 = vunpack.c.l.b16 %v749
    %v3536 = vunpack.c.h.b16 %v749
    %v3537 = vunpack.c.l.b16 %v750
    %v3538 = vunpack.c.h.b16 %v750
    %v3539 = vunpack.c.l.b16 %v751
    %v3540 = vunpack.c.h.b16 %v751
    %v3541 = vunpack.c.l.b16 %v752
    %v3542 = vunpack.c.h.b16 %v752
    %v3543 = vunpack.c.l.b16 %v753
    %v3544 = vunpack.c.h.b16 %v753
    %v3545 = vunpack.c.l.b16 %v754
    %v3546 = vunpack.c.h.b16 %v754
    %v3547 = vunpack.c.l.b16 %v755
    %v3548 = vunpack.c.h.b16 %v755
    %v3549 = vunpack.c.l.b16 %v756
    %v3550 = vunpack.c.h.b16 %v756
    %v3551 = vunpack.c.l.b16 %v757
    %v3552 = vunpack.c.h.b16 %v757
    %v3553 = vunpack.c.l.b16 %v758
    %v3554 = vunpack.c.h.b16 %v758
    %v3555 = vunpack.c.l.b16 %v759
    %v3556 = vunpack.c.h.b16 %v759
    %v3557 = vunpack.c.l.b16 %v760
    %v3558 = vunpack.c.h.b16 %v760
    %v3559 = vunpack.c.l.b16 %v761
    %v3560 = vunpack.c.h.b16 %v761
    %v3561 = vunpack.c.l.b16 %v762
    %v3562 = vunpack.c.h.b16 %v762
    %v3563 = vunpack.c.l.b16 %v763
    %v3564 = vunpack.c.h.b16 %v763
    %v3565 = vunpack.c.l.b16 %v764
    %v3566 = vunpack.c.h.b16 %v764
    %v3567 = vunpack.c.l.b16 %v765
    %v3568 = vunpack.c.h.b16 %v765
    %v3569 = vunpack.c.l.b16 %v766
    %v3570 = vunpack.c.h.b16 %v766
    %v3571 = vunpack.c.l.b16 %v767
    %v3572 = vunpack.c.h.b16 %v767
    %v3573 = vunpack.c.l.b16 %v768
    %v3574 = vunpack.c.h.b16 %v768
    %v3575 = vunpack.c.l.b16 %v769
    %v3576 = vunpack.c.h.b16 %v769
    %v3577 = vunpack.c.l.b16 %v770
    %v3578 = vunpack.c.h.b16 %v770
    %v3579 = vunpack.c.l.b16 %v771
    %v3580 = vunpack.c.h.b16 %v771
    %v3581 = vunpack.c.l.b16 %v772
    %v3582 = vunpack.c.h.b16 %v772
    %v3583 = vunpack.c.l.b16 %v773
    %v3584 = vunpack.c.h.b16 %v773
    %v3585 = vunpack.c.l.b16 %v774
    %v3586 = vunpack.c.h.b16 %v774
    %v3587 = vunpack.c.l.b16 %v775
    %v3588 = vunpack.c.h.b16 %v775
    %v3589 = vunpack.c.l.b16 %v776
    %v3590 = vunpack.c.h.b16 %v776
    %v3591 = vunpack.c.l.b16 %v777
    %v3592 = vunpack.c.h.b16 %v777
    %v3593 = vunpack.c.l.b16 %v778
    %v3594 = vunpack.c.h.b16 %v778
    %v3595 = vunpack.c.l.b16 %v779
    %v3596 = vunpack.c.h.b16 %v779
    %v3597 = vunpack.c.l.b16 %v780
    %v3598 = vunpack.c.h.b16 %v780
    %v3599 = vunpack.c.l.b16 %v781
    %v3600 = vunpack.c.h.b16 %v781
    %v3601 = vunpack.c.l.b16 %v782
    %v3602 = vunpack.c.h.b16 %v782
    %v3603 = vunpack.c.l.b16 %v783
    %v3604 = vunpack.c.h.b16 %v783
    %v3605 = vunpack.c.l.b16 %v784
    %v3606 = vunpack.c.h.b16 %v784
    %v3607 = vunpack.c.l.b16 %v785
    %v3608 = vunpack.c.h.b16 %v785
    %v3609 = vunpack.c.l.b16 %v786
    %v3610 = vunpack.c.h.b16 %v786
    %v3611 = vunpack.c.l.b16 %v787
    %v3612 = vunpack.c.h.b16 %v787
    %v3613 = vunpack.c.l.b16 %v788
    %v3614 = vunpack.c.h.b16 %v788
    %v3615 = vunpack.c.l.b16 %v789
    %v3616 = vunpack.c.h.b16 %v789
    %v3617 = vunpack.c.l.b16 %v790
    %v3618 = vunpack.c.h.b16 %v790
    %v3619 = vunpack.c.l.b16 %v791
    %v3620 = vunpack.c.h.b16 %v791
    %v3621 = vunpack.c.l.b16 %v792
    %v3622 = vunpack.c.h.b16 %v792
    %v3623 = vunpack.c.l.b16 %v793
    %v3624 = vunpack.c.h.b16 %v793
    %v3625 = vunpack.c.l.b16 %v794
    %v3626 = vunpack.c.h.b16 %v794
    %v3627 = vunpack.c.l.b16 %v795
    %v3628 = vunpack.c.h.b16 %v795
    %v3629 = vunpack.c.l.b16 %v796
    %v3630 = vunpack.c.h.b16 %v796
    %v3631 = vunpack.c.l.b16 %v797
    %v3632 = vunpack.c.h.b16 %v797
    %v3633 = vunpack.c.l.b16 %v798
    %v3634 = vunpack.c.h.b16 %v798
    %v3635 = vunpack.c.l.b16 %v799
    %v3636 = vunpack.c.h.b16 %v799
    %v3637 = vunpack.c.l.b16 %v800
    %v3638 = vunpack.c.h.b16 %v800
    %v3639 = vunpack.c.l.b16 %v801
    %v3640 = vunpack.c.h.b16 %v801
    %v3641 = vunpack.c.l.b16 %v802
    %v3642 = vunpack.c.h.b16 %v802
    %v3643 = vunpack.c.l.b16 %v803
    %v3644 = vunpack.c.h.b16 %v803
    %v3645 = vunpack.c.l.b16 %v804
    %v3646 = vunpack.c.h.b16 %v804
    %v3647 = vunpack.c.l.b16 %v805
    %v3648 = vunpack.c.h.b16 %v805
    %v3649 = vunpack.c.l.b16 %v806
    %v3650 = vunpack.c.h.b16 %v806
    %v3651 = vunpack.c.l.b16 %v807
    %v3652 = vunpack.c.h.b16 %v807
    %v3653 = vunpack.c.l.b16 %v808
    %v3654 = vunpack.c.h.b16 %v808
    %v3655 = vunpack.c.l.b16 %v809
    %v3656 = vunpack.c.h.b16 %v809
    %v3657 = vunpack.c.l.b16 %v810
    %v3658 = vunpack.c.h.b16 %v810
    %v3659 = vunpack.c.l.b16 %v811
    %v3660 = vunpack.c.h.b16 %v811
    %v3661 = vunpack.c.l.b16 %v812
    %v3662 = vunpack.c.h.b16 %v812
    %v3663 = vunpack.c.l.b16 %v813
    %v3664 = vunpack.c.h.b16 %v813
    %v3665 = vunpack.c.l.b16 %v814
    %v3666 = vunpack.c.h.b16 %v814
    %v3667 = vunpack.c.l.b16 %v815
    %v3668 = vunpack.c.h.b16 %v815
    %v3669 = vunpack.c.l.b16 %v816
    %v3670 = vunpack.c.h.b16 %v816
    %v3671 = vunpack.c.l.b16 %v817
    %v3672 = vunpack.c.h.b16 %v817
    %v3673 = vunpack.c.l.b16 %v818
    %v3674 = vunpack.c.h.b16 %v818
    %v3675 = vunpack.c.l.b16 %v819
    %v3676 = vunpack.c.h.b16 %v819
    %v3677 = vunpack.c.l.b16 %v820
    %v3678 = vunpack.c.h.b16 %v820
    %v3679 = vunpack.c.l.b16 %v821
    %v3680 = vunpack.c.h.b16 %v821
    %v3681 = vunpack.c.l.b16 %v822
    %v3682 = vunpack.c.h.b16 %v822
    %v3683 = vunpack.c.l.b16 %v823
    %v3684 = vunpack.c.h.b16 %v823
    %v3685 = vunpack.c.l.b16 %v824
    %v3686 = vunpack.c.h.b16 %v824
    %v3687 = vunpack.c.l.b16 %v825
    %v3688 = vunpack.c.h.b16 %v825
    %v3689 = vunpack.c.l.b16 %v826
    %v3690 = vunpack.c.h.b16 %v826
    %v3691 = vunpack.c.l.b16 %v827
    %v3692 = vunpack.c.h.b16 %v827
    %v3693 = vunpack.c.l.b16 %v828
    %v3694 = vunpack.c.h.b16 %v828
    %v3695 = vunpack.c.l.b16 %v829
    %v3696 = vunpack.c.h.b16 %v829
    %v3697 = vunpack.c.l.b16 %v830
    %v3698 = vunpack.c.h.b16 %v830
    %v3699 = vunpack.c.l.b16 %v831
    %v3700 = vunpack.c.h.b16 %v831
    %v3701 = vunpack.c.l.b16 %v832
    %v3702 = vunpack.c.h.b16 %v832
    %v3703 = vunpack.c.l.b16 %v833
    %v3704 = vunpack.c.h.b16 %v833
    %v3705 = vunpack.c.l.b16 %v834
    %v3706 = vunpack.c.h.b16 %v834
    %v3707 = vunpack.c.l.b16 %v835
    %v3708 = vunpack.c.h.b16 %v835
    %v3709 = vunpack.c.l.b16 %v836
    %v3710 = vunpack.c.h.b16 %v836
    %v3711 = vunpack.c.l.b16 %v837
    %v3712 = vunpack.c.h.b16 %v837
    %v3713 = vunpack.c.l.b16 %v838
    %v3714 = vunpack.c.h.b16 %v838
    %v3715 = vunpack.c.l.b16 %v839
    %v3716 = vunpack.c.h.b16 %v839
    %v3717 = vunpack.c.l.b16 %v840
    %v3718 = vunpack.c.h.b16 %v840
    %v3719 = vunpack.c.l.b16 %v841
    %v3720 = vunpack.c.h.b16 %v841
    %v3721 = vunpack.c.l.b16 %v842
    %v3722 = vunpack.c.h.b16 %v842
    %v3723 = vunpack.c.l.b16 %v843
    %v3724 = vunpack.c.h.b16 %v843
    %v3725 = vunpack.c.l.b16 %v844
    %v3726 = vunpack.c.h.b16 %v844
    %v3727 = vunpack.c.l.b16 %v845
    %v3728 = vunpack.c.h.b16 %v845
    %v3729 = vunpack.c.l.b16 %v846
    %v3730 = vunpack.c.h.b16 %v846
    %v3731 = vunpack.c.l.b16 %v847
    %v3732 = vunpack.c.h.b16 %v847
    %v3733 = vunpack.c.l.b16 %v848
    %v3734 = vunpack.c.h.b16 %v848
    %v3735 = vunpack.c.l.b16 %v849
    %v3736 = vunpack.c.h.b16 %v849
    %v3737 = vunpack.c.l.b16 %v850
    %v3738 = vunpack.c.h.b16 %v850
    %v3739 = vunpack.c.l.b16 %v851
    %v3740 = vunpack.c.h.b16 %v851
    %v3741 = vunpack.c.l.b16 %v852
    %v3742 = vunpack.c.h.b16 %v852
    %v3743 = vunpack.c.l.b16 %v853
    %v3744 = vunpack.c.h.b16 %v853
    %v3745 = vunpack.c.l.b16 %v854
    %v3746 = vunpack.c.h.b16 %v854
    %v3747 = vunpack.c.l.b16 %v855
    %v3748 = vunpack.c.h.b16 %v855
    %v3749 = vunpack.c.l.b16 %v856
    %v3750 = vunpack.c.h.b16 %v856
    %v3751 = vunpack.c.l.b16 %v857
    %v3752 = vunpack.c.h.b16 %v857
    %v3753 = vunpack.c.l.b16 %v858
    %v3754 = vunpack.c.h.b16 %v858
    %v3755 = vunpack.c.l.b16 %v859
    %v3756 = vunpack.c.h.b16 %v859
    %v3757 = vunpack.c.l.b16 %v860
    %v3758 = vunpack.c.h.b16 %v860
    %v3759 = vunpack.c.l.b16 %v861
    %v3760 = vunpack.c.h.b16 %v861
    %v3761 = vunpack.c.l.b16 %v862
    %v3762 = vunpack.c.h.b16 %v862
    %v3763 = vunpack.c.l.b16 %v863
    %v3764 = vunpack.c.h.b16 %v863
    %v3765 = vunpack.c.l.b16 %v864
    %v3766 = vunpack.c.h.b16 %v864
    %v3767 = vunpack.c.l.b16 %v865
    %v3768 = vunpack.c.h.b16 %v865
    %v3769 = vunpack.c.l.b16 %v866
    %v3770 = vunpack.c.h.b16 %v866
    %v3771 = vunpack.c.l.b16 %v867
    %v3772 = vunpack.c.h.b16 %v867
    %v3773 = vunpack.c.l.b16 %v868
    %v3774 = vunpack.c.h.b16 %v868
    %v3775 = vunpack.c.l.b16 %v869
    %v3776 = vunpack.c.h.b16 %v869
    %v3777 = vunpack.c.l.b16 %v870
    %v3778 = vunpack.c.h.b16 %v870
    %v3779 = vunpack.c.l.b16 %v871
    %v3780 = vunpack.c.h.b16 %v871
    %v3781 = vunpack.c.l.b16 %v872
    %v3782 = vunpack.c.h.b16 %v872
    %v3783 = vunpack.c.l.b16 %v873
    %v3784 = vunpack.c.h.b16 %v873
    %v3785 = vunpack.c.l.b16 %v874
    %v3786 = vunpack.c.h.b16 %v874
    %v3787 = vunpack.c.l.b16 %v875
    %v3788 = vunpack.c.h.b16 %v875
    %v3789 = vunpack.c.l.b16 %v876
    %v3790 = vunpack.c.h.b16 %v876
    %v3791 = vunpack.c.l.b16 %v877
    %v3792 = vunpack.c.h.b16 %v877
    %v3793 = vunpack.c.l.b16 %v878
    %v3794 = vunpack.c.h.b16 %v878
    %v3795 = vunpack.c.l.b16 %v879
    %v3796 = vunpack.c.h.b16 %v879
    %v3797 = vunpack.c.l.b16 %v880
    %v3798 = vunpack.c.h.b16 %v880
    %v3799 = vunpack.c.l.b16 %v881
    %v3800 = vunpack.c.h.b16 %v881
    %v3801 = vunpack.c.l.b16 %v882
    %v3802 = vunpack.c.h.b16 %v882
    %v3803 = vunpack.c.l.b16 %v883
    %v3804 = vunpack.c.h.b16 %v883
    %v3805 = vunpack.c.l.b16 %v884
    %v3806 = vunpack.c.h.b16 %v884
    %v3807 = vunpack.c.l.b16 %v885
    %v3808 = vunpack.c.h.b16 %v885
    %v3809 = vunpack.c.l.b16 %v886
    %v3810 = vunpack.c.h.b16 %v886
    %v3811 = vunpack.c.l.b16 %v887
    %v3812 = vunpack.c.h.b16 %v887
    %v3813 = vunpack.c.l.b16 %v888
    %v3814 = vunpack.c.h.b16 %v888
    %v3815 = vunpack.c.l.b16 %v889
    %v3816 = vunpack.c.h.b16 %v889
    %v3817 = vunpack.c.l.b16 %v890
    %v3818 = vunpack.c.h.b16 %v890
    %v3819 = vunpack.c.l.b16 %v891
    %v3820 = vunpack.c.h.b16 %v891
    %v3821 = vunpack.c.l.b16 %v892
    %v3822 = vunpack.c.h.b16 %v892
    %v3823 = vunpack.c.l.b16 %v893
    %v3824 = vunpack.c.h.b16 %v893
    %v3825 = vunpack.c.l.b16 %v894
    %v3826 = vunpack.c.h.b16 %v894
    %v3827 = vunpack.c.l.b16 %v895
    %v3828 = vunpack.c.h.b16 %v895
    %v3829 = vunpack.c.l.b16 %v896
    %v3830 = vunpack.c.h.b16 %v896
    %v3831 = vunpack.c.l.b16 %v897
    %v3832 = vunpack.c.h.b16 %v897
    %v3833 = vunpack.c.l.b16 %v898
    %v3834 = vunpack.c.h.b16 %v898
    %v3835 = vunpack.c.l.b16 %v899
    %v3836 = vunpack.c.h.b16 %v899
    %v3837 = vunpack.c.l.b16 %v900
    %v3838 = vunpack.c.h.b16 %v900
    %v3839 = vunpack.c.l.b16 %v901
    %v3840 = vunpack.c.h.b16 %v901
    %v3841 = vunpack.c.l.b16 %v902
    %v3842 = vunpack.c.h.b16 %v902
    %v3843 = vunpack.c.l.b16 %v903
    %v3844 = vunpack.c.h.b16 %v903
    %v3845 = vunpack.c.l.b16 %v904
    %v3846 = vunpack.c.h.b16 %v904
    %v3847 = vunpack.c.l.b16 %v905
    %v3848 = vunpack.c.h.b16 %v905
    %v3849 = vunpack.c.l.b16 %v906
    %v3850 = vunpack.c.h.b16 %v906
    %v3851 = vunpack.c.l.b16 %v907
    %v3852 = vunpack.c.h.b16 %v907
    %v3853 = vunpack.c.l.b16 %v908
    %v3854 = vunpack.c.h.b16 %v908
    %v3855 = vunpack.c.l.b16 %v909
    %v3856 = vunpack.c.h.b16 %v909
    %v3857 = vunpack.c.l.b16 %v910
    %v3858 = vunpack.c.h.b16 %v910
    %v3859 = vunpack.c.l.b16 %v911
    %v3860 = vunpack.c.h.b16 %v911
    %v3861 = vunpack.c.l.b16 %v912
    %v3862 = vunpack.c.h.b16 %v912
    %v3863 = vunpack.c.l.b16 %v913
    %v3864 = vunpack.c.h.b16 %v913
    %v3865 = vunpack.c.l.b16 %v914
    %v3866 = vunpack.c.h.b16 %v914
    %v3867 = vunpack.c.l.b16 %v915
    %v3868 = vunpack.c.h.b16 %v915
    %v3869 = vunpack.c.l.b16 %v916
    %v3870 = vunpack.c.h.b16 %v916
    %v3871 = vunpack.c.l.b16 %v917
    %v3872 = vunpack.c.h.b16 %v917
    %v3873 = vunpack.c.l.b16 %v918
    %v3874 = vunpack.c.h.b16 %v918
    %v3875 = vunpack.c.l.b16 %v919
    %v3876 = vunpack.c.h.b16 %v919
    %v3877 = vunpack.c.l.b16 %v920
    %v3878 = vunpack.c.h.b16 %v920
    %v3879 = vunpack.c.l.b16 %v921
    %v3880 = vunpack.c.h.b16 %v921
    %v3881 = vunpack.c.l.b16 %v922
    %v3882 = vunpack.c.h.b16 %v922
    %v3883 = vunpack.c.l.b16 %v923
    %v3884 = vunpack.c.h.b16 %v923
    %v3885 = vunpack.c.l.b16 %v924
    %v3886 = vunpack.c.h.b16 %v924
    %v3887 = vunpack.c.l.b16 %v925
    %v3888 = vunpack.c.h.b16 %v925
    %v3889 = vunpack.c.l.b16 %v926
    %v3890 = vunpack.c.h.b16 %v926
    %v3891 = vunpack.c.l.b16 %v927
    %v3892 = vunpack.c.h.b16 %v927
    %v3893 = vunpack.c.l.b16 %v928
    %v3894 = vunpack.c.h.b16 %v928
    %v3895 = vunpack.c.l.b16 %v929
    %v3896 = vunpack.c.h.b16 %v929
    %v3897 = vunpack.c.l.b16 %v930
    %v3898 = vunpack.c.h.b16 %v930
    %v3899 = vunpack.c.l.b16 %v931
    %v3900 = vunpack.c.h.b16 %v931
    %v3901 = vunpack.c.l.b16 %v932
    %v3902 = vunpack.c.h.b16 %v932
    %v3903 = vunpack.c.l.b16 %v933
    %v3904 = vunpack.c.h.b16 %v933
    %v3905 = vunpack.c.l.b16 %v934
    %v3906 = vunpack.c.h.b16 %v934
    %v3907 = vunpack.c.l.b16 %v935
    %v3908 = vunpack.c.h.b16 %v935
    %v3909 = vunpack.c.l.b16 %v936
    %v3910 = vunpack.c.h.b16 %v936
    %v3911 = vunpack.c.l.b16 %v937
    %v3912 = vunpack.c.h.b16 %v937
    %v3913 = vunpack.c.l.b16 %v938
    %v3914 = vunpack.c.h.b16 %v938
    %v3915 = vunpack.c.l.b16 %v939
    %v3916 = vunpack.c.h.b16 %v939
    %v3917 = vunpack.c.l.b16 %v940
    %v3918 = vunpack.c.h.b16 %v940
    %v3919 = vunpack.c.l.b16 %v941
    %v3920 = vunpack.c.h.b16 %v941
    %v3921 = vunpack.c.l.b16 %v942
    %v3922 = vunpack.c.h.b16 %v942
    %v3923 = vunpack.c.l.b16 %v943
    %v3924 = vunpack.c.h.b16 %v943
    %v3925 = vunpack.c.l.b16 %v944
    %v3926 = vunpack.c.h.b16 %v944
    %v3927 = vunpack.c.l.b16 %v945
    %v3928 = vunpack.c.h.b16 %v945
    %v3929 = vunpack.c.l.b16 %v946
    %v3930 = vunpack.c.h.b16 %v946
    %v3931 = vunpack.c.l.b16 %v947
    %v3932 = vunpack.c.h.b16 %v947
    %v3933 = vunpack.c.l.b16 %v948
    %v3934 = vunpack.c.h.b16 %v948
    %v3935 = vunpack.c.l.b16 %v949
    %v3936 = vunpack.c.h.b16 %v949
    %v3937 = vunpack.c.l.b16 %v950
    %v3938 = vunpack.c.h.b16 %v950
    %v3939 = vunpack.c.l.b16 %v951
    %v3940 = vunpack.c.h.b16 %v951
    %v3941 = vunpack.c.l.b16 %v952
    %v3942 = vunpack.c.h.b16 %v952
    %v3943 = vunpack.c.l.b16 %v953
    %v3944 = vunpack.c.h.b16 %v953
    %v3945 = vunpack.c.l.b16 %v954
    %v3946 = vunpack.c.h.b16 %v954
    %v3947 = vunpack.c.l.b16 %v955
    %v3948 = vunpack.c.h.b16 %v955
    %v3949 = vunpack.c.l.b16 %v956
    %v3950 = vunpack.c.h.b16 %v956
    %v3951 = vunpack.c.l.b16 %v957
    %v3952 = vunpack.c.h.b16 %v957
    %v3953 = vunpack.c.l.b16 %v958
    %v3954 = vunpack.c.h.b16 %v958
    %v3955 = vunpack.c.l.b16 %v959
    %v3956 = vunpack.c.h.b16 %v959
    %v3957 = vunpack.c.l.b16 %v960
    %v3958 = vunpack.c.h.b16 %v960
    %v3959 = vunpack.c.l.b16 %v961
    %v3960 = vunpack.c.h.b16 %v961
    %v3961 = vunpack.c.l.b16 %v962
    %v3962 = vunpack.c.h.b16 %v962
    %v3963 = vunpack.c.l.b16 %v963
    %v3964 = vunpack.c.h.b16 %v963
    %v3965 = vunpack.c.l.b16 %v964
    %v3966 = vunpack.c.h.b16 %v964
    %v3967 = vunpack.c.l.b16 %v965
    %v3968 = vunpack.c.h.b16 %v965
    %v3969 = vunpack.c.l.b16 %v966
    %v3970 = vunpack.c.h.b16 %v966
    %v3971 = vunpack.c.l.b16 %v967
    %v3972 = vunpack.c.h.b16 %v967
    %v3973 = vunpack.c.l.b16 %v968
    %v3974 = vunpack.c.h.b16 %v968
    %v3975 = vunpack.c.l.b16 %v969
    %v3976 = vunpack.c.h.b16 %v969
    %v3977 = vunpack.c.l.b16 %v970
    %v3978 = vunpack.c.h.b16 %v970
    %v3979 = vunpack.c.l.b16 %v971
    %v3980 = vunpack.c.h.b16 %v971
    %v3981 = vunpack.c.l.b16 %v972
    %v3982 = vunpack.c.h.b16 %v972
    %v3983 = vunpack.c.l.b16 %v973
    %v3984 = vunpack.c.h.b16 %v973
    %v3985 = vunpack.c.l.b16 %v974
    %v3986 = vunpack.c.h.b16 %v974
    %v3987 = vunpack.c.l.b16 %v975
    %v3988 = vunpack.c.h.b16 %v975
    %v3989 = vunpack.c.l.b16 %v976
    %v3990 = vunpack.c.h.b16 %v976
    %v3991 = vunpack.c.l.b16 %v977
    %v3992 = vunpack.c.h.b16 %v977
    %v3993 = vunpack.c.l.b16 %v978
    %v3994 = vunpack.c.h.b16 %v978
    %v3995 = vunpack.c.l.b16 %v979
    %v3996 = vunpack.c.h.b16 %v979
    %v3997 = vunpack.c.l.b16 %v980
    %v3998 = vunpack.c.h.b16 %v980
    %v3999 = vunpack.c.l.b16 %v981
    %v4000 = vunpack.c.h.b16 %v981
    %v4001 = vunpack.c.l.b16 %v982
    %v4002 = vunpack.c.h.b16 %v982
    %v4003 = vunpack.c.l.b16 %v983
    %v4004 = vunpack.c.h.b16 %v983
    %v4005 = vunpack.c.l.b16 %v984
    %v4006 = vunpack.c.h.b16 %v984
    %v4007 = vunpack.c.l.b16 %v985
    %v4008 = vunpack.c.h.b16 %v985
    %v4009 = vunpack.c.l.b16 %v986
    %v4010 = vunpack.c.h.b16 %v986
    %v4011 = vunpack.c.l.b16 %v987
    %v4012 = vunpack.c.h.b16 %v987
    %v4013 = vunpack.c.l.b16 %v988
    %v4014 = vunpack.c.h.b16 %v988
    %v4015 = vunpack.c.l.b16 %v989
    %v4016 = vunpack.c.h.b16 %v989
    %v4017 = vunpack.c.l.b16 %v990
    %v4018 = vunpack.c.h.b16 %v990
    %v4019 = vunpack.c.l.b16 %v991
    %v4020 = vunpack.c.h.b16 %v991
    %v4021 = vunpack.c.l.b16 %v992
    %v4022 = vunpack.c.h.b16 %v992
    %v4023 = vunpack.c.l.b16 %v993
    %v4024 = vunpack.c.h.b16 %v993
    %v4025 = vunpack.c.l.b16 %v994
    %v4026 = vunpack.c.h.b16 %v994
    %v4027 = vunpack.c.l.b16 %v995
    %v4028 = vunpack.c.h.b16 %v995
    %v4029 = vunpack.c.l.b16 %v996
    %v4030 = vunpack.c.h.b16 %v996
    %v4031 = vunpack.c.l.b16 %v997
    %v4032 = vunpack.c.h.b16 %v997
    %v4033 = vunpack.c.l.b16 %v998
    %v4034 = vunpack.c.h.b16 %v998
    %v4035 = vunpack.c.l.b16 %v999
    %v4036 = vunpack.c.h.b16 %v999
    %v4037 = vunpack.c.l.b16 %v1000
    %v4038 = vunpack.c.h.b16 %v1000
    %v4039 = vunpack.c.l.b16 %v1001
    %v4040 = vunpack.c.h.b16 %v1001
    %v4041 = vunpack.c.l.b16 %v1002
    %v4042 = vunpack.c.h.b16 %v1002
    %v4043 = vunpack.c.l.b16 %v1003
    %v4044 = vunpack.c.h.b16 %v1003
    %v4045 = vunpack.c.l.b16 %v1004
    %v4046 = vunpack.c.h.b16 %v1004
    %v4047 = vunpack.c.l.b16 %v1005
    %v4048 = vunpack.c.h.b16 %v1005
    %v4049 = vunpack.c.l.b16 %v1006
    %v4050 = vunpack.c.h.b16 %v1006
    %v4051 = vunpack.c.l.b16 %v1007
    %v4052 = vunpack.c.h.b16 %v1007
    %v4053 = vunpack.c.l.b16 %v1008
    %v4054 = vunpack.c.h.b16 %v1008
    %v4055 = vunpack.c.l.b16 %v1009
    %v4056 = vunpack.c.h.b16 %v1009
    %v4057 = vunpack.c.l.b16 %v1010
    %v4058 = vunpack.c.h.b16 %v1010
    %v4059 = vunpack.c.l.b16 %v1011
    %v4060 = vunpack.c.h.b16 %v1011
    %v4061 = vunpack.c.l.b16 %v1012
    %v4062 = vunpack.c.h.b16 %v1012
    %v4063 = vunpack.c.l.b16 %v1013
    %v4064 = vunpack.c.h.b16 %v1013
    %v4065 = vunpack.c.l.b16 %v1014
    %v4066 = vunpack.c.h.b16 %v1014
    %v4067 = vunpack.c.l.b16 %v1015
    %v4068 = vunpack.c.h.b16 %v1015
    %v4069 = vunpack.c.l.b16 %v1016
    %v4070 = vunpack.c.h.b16 %v1016
    %v4071 = vunpack.c.l.b16 %v1017
    %v4072 = vunpack.c.h.b16 %v1017
    %v4073 = vunpack.c.l.b16 %v1018
    %v4074 = vunpack.c.h.b16 %v1018
    %v4075 = vunpack.c.l.b16 %v1019
    %v4076 = vunpack.c.h.b16 %v1019
    %v4077 = vunpack.c.l.b16 %v1020
    %v4078 = vunpack.c.h.b16 %v1020
    %v4079 = vunpack.c.l.b16 %v1021
    %v4080 = vunpack.c.h.b16 %v1021
    %v4081 = vunpack.c.l.b16 %v1022
    %v4082 = vunpack.c.h.b16 %v1022
    %v4083 = vunpack.c.l.b16 %v1023
    %v4084 = vunpack.c.h.b16 %v1023
    %v4085 = vunpack.c.l.b16 %v1024
    %v4086 = vunpack.c.h.b16 %v1024
    %v4087 = vunpack.c.l.b16 %v1025
    %v4088 = vunpack.c.h.b16 %v1025
    %v4089 = vunpack.c.l.b16 %v1026
    %v4090 = vunpack.c.h.b16 %v1026
    %v4091 = vunpack.c.l.b16 %v1027
    %v4092 = vunpack.c.h.b16 %v1027
    %v4093 = vunpack.c.l.b16 %v1028
    %v4094 = vunpack.c.h.b16 %v1028
    %v4095 = vunpack.c.l.b16 %v1029
    %v4096 = vunpack.c.h.b16 %v1029
    %v4097 = vunpack.c.l.b16 %v1030
    %v4098 = vunpack.c.h.b16 %v1030
    %v4099 = vunpack.c.l.b16 %v1031
    %v4100 = vunpack.c.h.b16 %v1031
    %v4101 = vunpack.c.l.b16 %v1032
    %v4102 = vunpack.c.h.b16 %v1032
    %v4103 = vunpack.c.l.b16 %v1033
    %v4104 = vunpack.c.h.b16 %v1033
    %v4105 = vunpack.c.l.b16 %v1034
    %v4106 = vunpack.c.h.b16 %v1034
    %v4107 = vunpack.c.l.b16 %v1035
    %v4108 = vunpack.c.h.b16 %v1035
    %v4109 = vunpack.c.l.b16 %v1036
    %v4110 = vunpack.c.h.b16 %v1036
    %v4111 = vunpack.c.l.b16 %v1037
    %v4112 = vunpack.c.h.b16 %v1037
    %v4113 = vunpack.c.l.b16 %v1038
    %v4114 = vunpack.c.h.b16 %v1038
    %v4115 = vunpack.c.l.b16 %v1039
    %v4116 = vunpack.c.h.b16 %v1039
    %v4117 = vunpack.c.l.b16 %v1040
    %v4118 = vunpack.c.h.b16 %v1040
    %v4119 = vunpack.c.l.b16 %v1041
    %v4120 = vunpack.c.h.b16 %v1041
    %v4121 = vunpack.c.l.b16 %v1042
    %v4122 = vunpack.c.h.b16 %v1042
    %v4123 = vunpack.c.l.b16 %v1043
    %v4124 = vunpack.c.h.b16 %v1043
    %v4125 = vunpack.c.l.b16 %v1044
    %v4126 = vunpack.c.h.b16 %v1044
    %v4127 = vunpack.c.l.b16 %v1045
    %v4128 = vunpack.c.h.b16 %v1045
    %v4129 = vunpack.c.l.b16 %v1046
    %v4130 = vunpack.c.h.b16 %v1046
    %v4131 = vunpack.c.l.b16 %v1047
    %v4132 = vunpack.c.h.b16 %v1047
    %v4133 = vunpack.c.l.b16 %v1048
    %v4134 = vunpack.c.h.b16 %v1048
    %v4135 = vunpack.c.l.b16 %v1049
    %v4136 = vunpack.c.h.b16 %v1049
    %v4137 = vunpack.c.l.b16 %v1050
    %v4138 = vunpack.c.h.b16 %v1050
    %v4139 = vunpack.c.l.b16 %v1051
    %v4140 = vunpack.c.h.b16 %v1051
    %v4141 = vunpack.c.l.b16 %v1052
    %v4142 = vunpack.c.h.b16 %v1052
    %v4143 = vunpack.c.l.b16 %v1053
    %v4144 = vunpack.c.h.b16 %v1053
    %v4145 = vunpack.c.l.b16 %v1054
    %v4146 = vunpack.c.h.b16 %v1054
    %v4147 = vunpack.c.l.b16 %v1055
    %v4148 = vunpack.c.h.b16 %v1055
    %v4149 = vunpack.c.l.b16 %v1056
    %v4150 = vunpack.c.h.b16 %v1056
    %v4151 = vunpack.c.l.b16 %v1057
    %v4152 = vunpack.c.h.b16 %v1057
    %v4153 = vunpack.c.l.b16 %v1058
    %v4154 = vunpack.c.h.b16 %v1058
    %v4155 = vunpack.c.l.b16 %v1059
    %v4156 = vunpack.c.h.b16 %v1059
    %v4157 = vunpack.c.l.b16 %v1060
    %v4158 = vunpack.c.h.b16 %v1060
    %v4159 = vunpack.c.l.b16 %v1061
    %v4160 = vunpack.c.h.b16 %v1061
    %v4161 = vunpack.c.l.b16 %v1062
    %v4162 = vunpack.c.h.b16 %v1062
    %v4163 = vunpack.c.l.b16 %v1063
    %v4164 = vunpack.c.h.b16 %v1063
    %v4165 = vunpack.c.l.b16 %v1064
    %v4166 = vunpack.c.h.b16 %v1064
    %v4167 = vunpack.c.l.b16 %v1065
    %v4168 = vunpack.c.h.b16 %v1065
    %v4169 = vunpack.c.l.b16 %v1066
    %v4170 = vunpack.c.h.b16 %v1066
    %v4171 = vunpack.c.l.b16 %v1067
    %v4172 = vunpack.c.h.b16 %v1067
    %v4173 = vunpack.c.l.b16 %v1068
    %v4174 = vunpack.c.h.b16 %v1068
    %v4175 = vunpack.c.l.b16 %v1069
    %v4176 = vunpack.c.h.b16 %v1069
    %v4177 = vunpack.c.l.b16 %v1070
    %v4178 = vunpack.c.h.b16 %v1070
    %v4179 = vunpack.c.l.b16 %v1071
    %v4180 = vunpack.c.h.b16 %v1071
    %v4181 = vunpack.c.l.b16 %v1072
    %v4182 = vunpack.c.h.b16 %v1072
    %v4183 = vunpack.c.l.b16 %v1073
    %v4184 = vunpack.c.h.b16 %v1073
    %v4185 = vunpack.c.l.b16 %v1074
    %v4186 = vunpack.c.h.b16 %v1074
    %v4187 = vunpack.c.l.b16 %v1075
    %v4188 = vunpack.c.h.b16 %v1075
    %v4189 = vunpack.c.l.b16 %v1076
    %v4190 = vunpack.c.h.b16 %v1076
    %v4191 = vunpack.c.l.b16 %v1077
    %v4192 = vunpack.c.h.b16 %v1077
    %v4193 = vunpack.c.l.b16 %v1078
    %v4194 = vunpack.c.h.b16 %v1078
    %v4195 = vunpack.c.l.b16 %v1079
    %v4196 = vunpack.c.h.b16 %v1079
    %v4197 = vunpack.c.l.b16 %v1080
    %v4198 = vunpack.c.h.b16 %v1080
    %v4199 = vunpack.c.l.b16 %v1081
    %v4200 = vunpack.c.h.b16 %v1081
    %v4201 = vunpack.c.l.b16 %v1082
    %v4202 = vunpack.c.h.b16 %v1082
    %v4203 = vunpack.c.l.b16 %v1083
    %v4204 = vunpack.c.h.b16 %v1083
    %v4205 = vunpack.c.l.b16 %v1084
    %v4206 = vunpack.c.h.b16 %v1084
    %v4207 = vunpack.c.l.b16 %v1085
    %v4208 = vunpack.c.h.b16 %v1085
    %v4209 = vunpack.c.l.b16 %v1086
    %v4210 = vunpack.c.h.b16 %v1086
    %v4211 = vunpack.c.l.b16 %v1087
    %v4212 = vunpack.c.h.b16 %v1087
    %v4213 = vunpack.c.l.b16 %v1088
    %v4214 = vunpack.c.h.b16 %v1088
    %v4215 = vunpack.c.l.b16 %v1089
    %v4216 = vunpack.c.h.b16 %v1089
    %v4217 = vunpack.c.l.b16 %v1090
    %v4218 = vunpack.c.h.b16 %v1090
    %v4219 = vunpack.c.l.b16 %v1091
    %v4220 = vunpack.c.h.b16 %v1091
    %v4221 = vunpack.c.l.b16 %v1092
    %v4222 = vunpack.c.h.b16 %v1092
    %v4223 = vunpack.c.l.b16 %v1093
    %v4224 = vunpack.c.h.b16 %v1093
    %v4225 = vunpack.c.l.b16 %v1094
    %v4226 = vunpack.c.h.b16 %v1094
    %v4227 = vunpack.c.l.b16 %v1095
    %v4228 = vunpack.c.h.b16 %v1095
    %v4229 = vunpack.c.l.b16 %v1096
    %v4230 = vunpack.c.h.b16 %v1096
    %v4231 = vunpack.c.l.b16 %v1097
    %v4232 = vunpack.c.h.b16 %v1097
    %v4233 = vunpack.c.l.b16 %v1098
    %v4234 = vunpack.c.h.b16 %v1098
    %v4235 = vunpack.c.l.b16 %v1099
    %v4236 = vunpack.c.h.b16 %v1099
    %v4237 = vunpack.c.l.b16 %v1100
    %v4238 = vunpack.c.h.b16 %v1100
    %v4239 = vunpack.c.l.b16 %v1101
    %v4240 = vunpack.c.h.b16 %v1101
    %v4241 = vunpack.c.l.b16 %v1102
    %v4242 = vunpack.c.h.b16 %v1102
    %v4243 = vunpack.c.l.b16 %v1103
    %v4244 = vunpack.c.h.b16 %v1103
    %v4245 = vunpack.c.l.b16 %v1104
    %v4246 = vunpack.c.h.b16 %v1104
    %v4247 = vunpack.c.l.b16 %v1105
    %v4248 = vunpack.c.h.b16 %v1105
    %v4249 = vunpack.c.l.b16 %v1106
    %v4250 = vunpack.c.h.b16 %v1106
    %v4251 = vunpack.c.l.b16 %v1107
    %v4252 = vunpack.c.h.b16 %v1107
    %v4253 = vunpack.c.l.b16 %v1108
    %v4254 = vunpack.c.h.b16 %v1108
    %v4255 = vunpack.c.l.b16 %v1109
    %v4256 = vunpack.c.h.b16 %v1109
    %v4257 = vunpack.c.l.b16 %v1110
    %v4258 = vunpack.c.h.b16 %v1110
    %v4259 = vunpack.c.l.b16 %v1111
    %v4260 = vunpack.c.h.b16 %v1111
    %v4261 = vunpack.c.l.b16 %v1112
    %v4262 = vunpack.c.h.b16 %v1112
    %v4263 = vunpack.c.l.b16 %v1113
    %v4264 = vunpack.c.h.b16 %v1113
    %v4265 = vunpack.c.l.b16 %v1114
    %v4266 = vunpack.c.h.b16 %v1114
    %v4267 = vunpack.c.l.b16 %v1115
    %v4268 = vunpack.c.h.b16 %v1115
    %v4269 = vunpack.c.l.b16 %v1116
    %v4270 = vunpack.c.h.b16 %v1116
    %v4271 = vunpack.c.l.b16 %v1117
    %v4272 = vunpack.c.h.b16 %v1117
    %v4273 = vunpack.c.l.b16 %v1118
    %v4274 = vunpack.c.h.b16 %v1118
    %v4275 = vunpack.c.l.b16 %v1119
    %v4276 = vunpack.c.h.b16 %v1119
    %v4277 = vunpack.c.l.b16 %v1120
    %v4278 = vunpack.c.h.b16 %v1120
    %v4279 = vunpack.c.l.b16 %v1121
    %v4280 = vunpack.c.h.b16 %v1121
    %v4281 = vunpack.c.l.b16 %v1122
    %v4282 = vunpack.c.h.b16 %v1122
    %v4283 = vunpack.c.l.b16 %v1123
    %v4284 = vunpack.c.h.b16 %v1123
    %v4285 = vunpack.c.l.b16 %v1124
    %v4286 = vunpack.c.h.b16 %v1124
    %v4287 = vunpack.c.l.b16 %v1125
    %v4288 = vunpack.c.h.b16 %v1125
    %v4289 = vunpack.c.l.b16 %v1126
    %v4290 = vunpack.c.h.b16 %v1126
    %v4291 = vunpack.c.l.b16 %v1127
    %v4292 = vunpack.c.h.b16 %v1127
    %v4293 = vunpack.c.l.b16 %v1128
    %v4294 = vunpack.c.h.b16 %v1128
    %v4295 = vunpack.c.l.b16 %v1129
    %v4296 = vunpack.c.h.b16 %v1129
    %v4297 = vunpack.c.l.b16 %v1130
    %v4298 = vunpack.c.h.b16 %v1130
    %v4299 = vunpack.c.l.b16 %v1131
    %v4300 = vunpack.c.h.b16 %v1131
    %v4301 = vunpack.c.l.b16 %v1132
    %v4302 = vunpack.c.h.b16 %v1132
    %v4303 = vunpack.c.l.b16 %v1133
    %v4304 = vunpack.c.h.b16 %v1133
    %v4305 = vunpack.c.l.b16 %v1134
    %v4306 = vunpack.c.h.b16 %v1134
    %v4307 = vunpack.c.l.b16 %v1135
    %v4308 = vunpack.c.h.b16 %v1135
    %v4309 = vunpack.c.l.b16 %v1136
    %v4310 = vunpack.c.h.b16 %v1136
    %v4311 = vunpack.c.l.b16 %v1137
    %v4312 = vunpack.c.h.b16 %v1137
    %v4313 = vunpack.c.l.b16 %v1138
    %v4314 = vunpack.c.h.b16 %v1138
    %v4315 = vunpack.c.l.b16 %v1139
    %v4316 = vunpack.c.h.b16 %v1139
    %v4317 = vunpack.c.l.b16 %v1140
    %v4318 = vunpack.c.h.b16 %v1140
    %v4319 = vunpack.c.l.b16 %v1141
    %v4320 = vunpack.c.h.b16 %v1141
    %v4321 = vunpack.c.l.b16 %v1142
    %v4322 = vunpack.c.h.b16 %v1142
    %v4323 = vunpack.c.l.b16 %v1143
    %v4324 = vunpack.c.h.b16 %v1143
    %v4325 = vunpack.c.l.b16 %v1144
    %v4326 = vunpack.c.h.b16 %v1144
    %v4327 = vunpack.c.l.b16 %v1145
    %v4328 = vunpack.c.h.b16 %v1145
    %v4329 = vunpack.c.l.b16 %v1146
    %v4330 = vunpack.c.h.b16 %v1146
    %v4331 = vunpack.c.l.b16 %v1147
    %v4332 = vunpack.c.h.b16 %v1147
    %v4333 = vunpack.c.l.b16 %v1148
    %v4334 = vunpack.c.h.b16 %v1148
    %v4335 = vunpack.c.l.b16 %v1149
    %v4336 = vunpack.c.h.b16 %v1149
    %v4337 = vunpack.c.l.b16 %v1150
    %v4338 = vunpack.c.h.b16 %v1150
    %v4339 = vunpack.c.l.b16 %v1151
    %v4340 = vunpack.c.h.b16 %v1151
    %v4341 = vunpack.c.l.b16 %v1152
    %v4342 = vunpack.c.h.b16 %v1152
    %v4343 = vunpack.c.l.b16 %v1153
    %v4344 = vunpack.c.h.b16 %v1153
    %v4345 = vunpack.c.l.b16 %v1154
    %v4346 = vunpack.c.h.b16 %v1154
    %v4347 = vunpack.c.l.b16 %v1155
    %v4348 = vunpack.c.h.b16 %v1155
    %v4349 = vunpack.c.l.b16 %v1156
    %v4350 = vunpack.c.h.b16 %v1156
    %v4351 = vpack.c.b16 %v2311, %v2303
    %v4352 = vpack.c.b16 %v2312, %v2304
    %v4353 = vpack.c.b16 %v2313, %v2305
    %v4354 = vpack.c.b16 %v2314, %v2306
    %v4355 = vpack.c.b16 %v2315, %v2307
    %v4356 = vpack.c.b16 %v2316, %v2308
    %v4357 = vpack.c.b16 %v2317, %v2309
    %v4358 = vpack.c.b16 %v2318, %v2310
    %v4359 = vpack.c.b16 %v2327, %v2319
    %v4360 = vpack.c.b16 %v2328, %v2320
    %v4361 = vpack.c.b16 %v2329, %v2321
    %v4362 = vpack.c.b16 %v2330, %v2322
    %v4363 = vpack.c.b16 %v2331, %v2323
    %v4364 = vpack.c.b16 %v2332, %v2324
    %v4365 = vpack.c.b16 %v2333, %v2325
    %v4366 = vpack.c.b16 %v2334, %v2326
    %v4367 = vpack.c.b16 %v2343, %v2335
    %v4368 = vpack.c.b16 %v2344, %v2336
    %v4369 = vpack.c.b16 %v2345, %v2337
    %v4370 = vpack.c.b16 %v2346, %v2338
    %v4371 = vpack.c.b16 %v2347, %v2339
    %v4372 = vpack.c.b16 %v2348, %v2340
    %v4373 = vpack.c.b16 %v2349, %v2341
    %v4374 = vpack.c.b16 %v2350, %v2342
    %v4375 = vpack.c.b16 %v2359, %v2351
    %v4376 = vpack.c.b16 %v2360, %v2352
    %v4377 = vpack.c.b16 %v2361, %v2353
    %v4378 = vpack.c.b16 %v2362, %v2354
    %v4379 = vpack.c.b16 %v2363, %v2355
    %v4380 = vpack.c.b16 %v2364, %v2356
    %v4381 = vpack.c.b16 %v2365, %v2357
    %v4382 = vpack.c.b16 %v2366, %v2358
    %v4383 = vpack.c.b16 %v2375, %v2367
    %v4384 = vpack.c.b16 %v2376, %v2368
    %v4385 = vpack.c.b16 %v2377, %v2369
    %v4386 = vpack.c.b16 %v2378, %v2370
    %v4387 = vpack.c.b16 %v2379, %v2371
    %v4388 = vpack.c.b16 %v2380, %v2372
    %v4389 = vpack.c.b16 %v2381, %v2373
    %v4390 = vpack.c.b16 %v2382, %v2374
    %v4391 = vpack.c.b16 %v2391, %v2383
    %v4392 = vpack.c.b16 %v2392, %v2384
    %v4393 = vpack.c.b16 %v2393, %v2385
    %v4394 = vpack.c.b16 %v2394, %v2386
    %v4395 = vpack.c.b16 %v2395, %v2387
    %v4396 = vpack.c.b16 %v2396, %v2388
    %v4397 = vpack.c.b16 %v2397, %v2389
    %v4398 = vpack.c.b16 %v2398, %v2390
    %v4399 = vpack.c.b16 %v2407, %v2399
    %v4400 = vpack.c.b16 %v2408, %v2400
    %v4401 = vpack.c.b16 %v2409, %v2401
    %v4402 = vpack.c.b16 %v2410, %v2402
    %v4403 = vpack.c.b16 %v2411, %v2403
    %v4404 = vpack.c.b16 %v2412, %v2404
    %v4405 = vpack.c.b16 %v2413, %v2405
    %v4406 = vpack.c.b16 %v2414, %v2406
    %v4407 = vpack.c.b16 %v2423, %v2415
    %v4408 = vpack.c.b16 %v2424, %v2416
    %v4409 = vpack.c.b16 %v2425, %v2417
    %v4410 = vpack.c.b16 %v2426, %v2418
    %v4411 = vpack.c.b16 %v2427, %v2419
    %v4412 = vpack.c.b16 %v2428, %v2420
    %v4413 = vpack.c.b16 %v2429, %v2421
    %v4414 = vpack.c.b16 %v2430, %v2422
    %v4415 = vpack.c.b16 %v2439, %v2431
    %v4416 = vpack.c.b16 %v2440, %v2432
    %v4417 = vpack.c.b16 %v2441, %v2433
    %v4418 = vpack.c.b16 %v2442, %v2434
    %v4419 = vpack.c.b16 %v2443, %v2435
    %v4420 = vpack.c.b16 %v2444, %v2436
    %v4421 = vpack.c.b16 %v2445, %v2437
    %v4422 = vpack.c.b16 %v2446, %v2438
    %v4423 = vpack.c.b16 %v2455, %v2447
    %v4424 = vpack.c.b16 %v2456, %v2448
    %v4425 = vpack.c.b16 %v2457, %v2449
    %v4426 = vpack.c.b16 %v2458, %v2450
    %v4427 = vpack.c.b16 %v2459, %v2451
    %v4428 = vpack.c.b16 %v2460, %v2452
    %v4429 = vpack.c.b16 %v2461, %v2453
    %v4430 = vpack.c.b16 %v2462, %v2454
    %v4431 = vpack.c.b16 %v2471, %v2463
    %v4432 = vpack.c.b16 %v2472, %v2464
    %v4433 = vpack.c.b16 %v2473, %v2465
    %v4434 = vpack.c.b16 %v2474, %v2466
    %v4435 = vpack.c.b16 %v2475, %v2467
    %v4436 = vpack.c.b16 %v2476, %v2468
    %v4437 = vpack.c.b16 %v2477, %v2469
    %v4438 = vpack.c.b16 %v2478, %v2470
    %v4439 = vpack.c.b16 %v2487, %v2479
    %v4440 = vpack.c.b16 %v2488, %v2480
    %v4441 = vpack.c.b16 %v2489, %v2481
    %v4442 = vpack.c.b16 %v2490, %v2482
    %v4443 = vpack.c.b16 %v2491, %v2483
    %v4444 = vpack.c.b16 %v2492, %v2484
    %v4445 = vpack.c.b16 %v2493, %v2485
    %v4446 = vpack.c.b16 %v2494, %v2486
    %v4447 = vpack.c.b16 %v2503, %v2495
    %v4448 = vpack.c.b16 %v2504, %v2496
    %v4449 = vpack.c.b16 %v2505, %v2497
    %v4450 = vpack.c.b16 %v2506, %v2498
    %v4451 = vpack.c.b16 %v2507, %v2499
    %v4452 = vpack.c.b16 %v2508, %v2500
    %v4453 = vpack.c.b16 %v2509, %v2501
    %v4454 = vpack.c.b16 %v2510, %v2502
    %v4455 = vpack.c.b16 %v2519, %v2511
    %v4456 = vpack.c.b16 %v2520, %v2512
    %v4457 = vpack.c.b16 %v2521, %v2513
    %v4458 = vpack.c.b16 %v2522, %v2514
    %v4459 = vpack.c.b16 %v2523, %v2515
    %v4460 = vpack.c.b16 %v2524, %v2516
    %v4461 = vpack.c.b16 %v2525, %v2517
    %v4462 = vpack.c.b16 %v2526, %v2518
    %v4463 = vpack.c.b16 %v2535, %v2527
    %v4464 = vpack.c.b16 %v2536, %v2528
    %v4465 = vpack.c.b16 %v2537, %v2529
    %v4466 = vpack.c.b16 %v2538, %v2530
    %v4467 = vpack.c.b16 %v2539, %v2531
    %v4468 = vpack.c.b16 %v2540, %v2532
    %v4469 = vpack.c.b16 %v2541, %v2533
    %v4470 = vpack.c.b16 %v2542, %v2534
    %v4471 = vpack.c.b16 %v2551, %v2543
    %v4472 = vpack.c.b16 %v2552, %v2544
    %v4473 = vpack.c.b16 %v2553, %v2545
    %v4474 = vpack.c.b16 %v2554, %v2546
    %v4475 = vpack.c.b16 %v2555, %v2547
    %v4476 = vpack.c.b16 %v2556, %v2548
    %v4477 = vpack.c.b16 %v2557, %v2549
    %v4478 = vpack.c.b16 %v2558, %v2550
    %v4479 = vpack.c.b16 %v2567, %v2559
    %v4480 = vpack.c.b16 %v2568, %v2560
    %v4481 = vpack.c.b16 %v2569, %v2561
    %v4482 = vpack.c.b16 %v2570, %v2562
    %v4483 = vpack.c.b16 %v2571, %v2563
    %v4484 = vpack.c.b16 %v2572, %v2564
    %v4485 = vpack.c.b16 %v2573, %v2565
    %v4486 = vpack.c.b16 %v2574, %v2566
    %v4487 = vpack.c.b16 %v2583, %v2575
    %v4488 = vpack.c.b16 %v2584, %v2576
    %v4489 = vpack.c.b16 %v2585, %v2577
    %v4490 = vpack.c.b16 %v2586, %v2578
    %v4491 = vpack.c.b16 %v2587, %v2579
    %v4492 = vpack.c.b16 %v2588, %v2580
    %v4493 = vpack.c.b16 %v2589, %v2581
    %v4494 = vpack.c.b16 %v2590, %v2582
    %v4495 = vpack.c.b16 %v2599, %v2591
    %v4496 = vpack.c.b16 %v2600, %v2592
    %v4497 = vpack.c.b16 %v2601, %v2593
    %v4498 = vpack.c.b16 %v2602, %v2594
    %v4499 = vpack.c.b16 %v2603, %v2595
    %v4500 = vpack.c.b16 %v2604, %v2596
    %v4501 = vpack.c.b16 %v2605, %v2597
    %v4502 = vpack.c.b16 %v2606, %v2598
    %v4503 = vpack.c.b16 %v2615, %v2607
    %v4504 = vpack.c.b16 %v2616, %v2608
    %v4505 = vpack.c.b16 %v2617, %v2609
    %v4506 = vpack.c.b16 %v2618, %v2610
    %v4507 = vpack.c.b16 %v2619, %v2611
    %v4508 = vpack.c.b16 %v2620, %v2612
    %v4509 = vpack.c.b16 %v2621, %v2613
    %v4510 = vpack.c.b16 %v2622, %v2614
    %v4511 = vpack.c.b16 %v2631, %v2623
    %v4512 = vpack.c.b16 %v2632, %v2624
    %v4513 = vpack.c.b16 %v2633, %v2625
    %v4514 = vpack.c.b16 %v2634, %v2626
    %v4515 = vpack.c.b16 %v2635, %v2627
    %v4516 = vpack.c.b16 %v2636, %v2628
    %v4517 = vpack.c.b16 %v2637, %v2629
    %v4518 = vpack.c.b16 %v2638, %v2630
    %v4519 = vpack.c.b16 %v2647, %v2639
    %v4520 = vpack.c.b16 %v2648, %v2640
    %v4521 = vpack.c.b16 %v2649, %v2641
    %v4522 = vpack.c.b16 %v2650, %v2642
    %v4523 = vpack.c.b16 %v2651, %v2643
    %v4524 = vpack.c.b16 %v2652, %v2644
    %v4525 = vpack.c.b16 %v2653, %v2645
    %v4526 = vpack.c.b16 %v2654, %v2646
    %v4527 = vpack.c.b16 %v2663, %v2655
    %v4528 = vpack.c.b16 %v2664, %v2656
    %v4529 = vpack.c.b16 %v2665, %v2657
    %v4530 = vpack.c.b16 %v2666, %v2658
    %v4531 = vpack.c.b16 %v2667, %v2659
    %v4532 = vpack.c.b16 %v2668, %v2660
    %v4533 = vpack.c.b16 %v2669, %v2661
    %v4534 = vpack.c.b16 %v2670, %v2662
    %v4535 = vpack.c.b16 %v2679, %v2671
    %v4536 = vpack.c.b16 %v2680, %v2672
    %v4537 = vpack.c.b16 %v2681, %v2673
    %v4538 = vpack.c.b16 %v2682, %v2674
    %v4539 = vpack.c.b16 %v2683, %v2675
    %v4540 = vpack.c.b16 %v2684, %v2676
    %v4541 = vpack.c.b16 %v2685, %v2677
    %v4542 = vpack.c.b16 %v2686, %v2678
    %v4543 = vpack.c.b16 %v2695, %v2687
    %v4544 = vpack.c.b16 %v2696, %v2688
    %v4545 = vpack.c.b16 %v2697, %v2689
    %v4546 = vpack.c.b16 %v2698, %v2690
    %v4547 = vpack.c.b16 %v2699, %v2691
    %v4548 = vpack.c.b16 %v2700, %v2692
    %v4549 = vpack.c.b16 %v2701, %v2693
    %v4550 = vpack.c.b16 %v2702, %v2694
    %v4551 = vpack.c.b16 %v2711, %v2703
    %v4552 = vpack.c.b16 %v2712, %v2704
    %v4553 = vpack.c.b16 %v2713, %v2705
    %v4554 = vpack.c.b16 %v2714, %v2706
    %v4555 = vpack.c.b16 %v2715, %v2707
    %v4556 = vpack.c.b16 %v2716, %v2708
    %v4557 = vpack.c.b16 %v2717, %v2709
    %v4558 = vpack.c.b16 %v2718, %v2710
    %v4559 = vpack.c.b16 %v2727, %v2719
    %v4560 = vpack.c.b16 %v2728, %v2720
    %v4561 = vpack.c.b16 %v2729, %v2721
    %v4562 = vpack.c.b16 %v2730, %v2722
    %v4563 = vpack.c.b16 %v2731, %v2723
    %v4564 = vpack.c.b16 %v2732, %v2724
    %v4565 = vpack.c.b16 %v2733, %v2725
    %v4566 = vpack.c.b16 %v2734, %v2726
    %v4567 = vpack.c.b16 %v2743, %v2735
    %v4568 = vpack.c.b16 %v2744, %v2736
    %v4569 = vpack.c.b16 %v2745, %v2737
    %v4570 = vpack.c.b16 %v2746, %v2738
    %v4571 = vpack.c.b16 %v2747, %v2739
    %v4572 = vpack.c.b16 %v2748, %v2740
    %v4573 = vpack.c.b16 %v2749, %v2741
    %v4574 = vpack.c.b16 %v2750, %v2742
    %v4575 = vpack.c.b16 %v2759, %v2751
    %v4576 = vpack.c.b16 %v2760, %v2752
    %v4577 = vpack.c.b16 %v2761, %v2753
    %v4578 = vpack.c.b16 %v2762, %v2754
    %v4579 = vpack.c.b16 %v2763, %v2755
    %v4580 = vpack.c.b16 %v2764, %v2756
    %v4581 = vpack.c.b16 %v2765, %v2757
    %v4582 = vpack.c.b16 %v2766, %v2758
    %v4583 = vpack.c.b16 %v2775, %v2767
    %v4584 = vpack.c.b16 %v2776, %v2768
    %v4585 = vpack.c.b16 %v2777, %v2769
    %v4586 = vpack.c.b16 %v2778, %v2770
    %v4587 = vpack.c.b16 %v2779, %v2771
    %v4588 = vpack.c.b16 %v2780, %v2772
    %v4589 = vpack.c.b16 %v2781, %v2773
    %v4590 = vpack.c.b16 %v2782, %v2774
    %v4591 = vpack.c.b16 %v2791, %v2783
    %v4592 = vpack.c.b16 %v2792, %v2784
    %v4593 = vpack.c.b16 %v2793, %v2785
    %v4594 = vpack.c.b16 %v2794, %v2786
    %v4595 = vpack.c.b16 %v2795, %v2787
    %v4596 = vpack.c.b16 %v2796, %v2788
    %v4597 = vpack.c.b16 %v2797, %v2789
    %v4598 = vpack.c.b16 %v2798, %v2790
    %v4599 = vpack.c.b16 %v2807, %v2799
    %v4600 = vpack.c.b16 %v2808, %v2800
    %v4601 = vpack.c.b16 %v2809, %v2801
    %v4602 = vpack.c.b16 %v2810, %v2802
    %v4603 = vpack.c.b16 %v2811, %v2803
    %v4604 = vpack.c.b16 %v2812, %v2804
    %v4605 = vpack.c.b16 %v2813, %v2805
    %v4606 = vpack.c.b16 %v2814, %v2806
    %v4607 = vpack.c.b16 %v2823, %v2815
    %v4608 = vpack.c.b16 %v2824, %v2816
    %v4609 = vpack.c.b16 %v2825, %v2817
    %v4610 = vpack.c.b16 %v2826, %v2818
    %v4611 = vpack.c.b16 %v2827, %v2819
    %v4612 = vpack.c.b16 %v2828, %v2820
    %v4613 = vpack.c.b16 %v2829, %v2821
    %v4614 = vpack.c.b16 %v2830, %v2822
    %v4615 = vpack.c.b16 %v2839, %v2831
    %v4616 = vpack.c.b16 %v2840, %v2832
    %v4617 = vpack.c.b16 %v2841, %v2833
    %v4618 = vpack.c.b16 %v2842, %v2834
    %v4619 = vpack.c.b16 %v2843, %v2835
    %v4620 = vpack.c.b16 %v2844, %v2836
    %v4621 = vpack.c.b16 %v2845, %v2837
    %v4622 = vpack.c.b16 %v2846, %v2838
    %v4623 = vpack.c.b16 %v2855, %v2847
    %v4624 = vpack.c.b16 %v2856, %v2848
    %v4625 = vpack.c.b16 %v2857, %v2849
    %v4626 = vpack.c.b16 %v2858, %v2850
    %v4627 = vpack.c.b16 %v2859, %v2851
    %v4628 = vpack.c.b16 %v2860, %v2852
    %v4629 = vpack.c.b16 %v2861, %v2853
    %v4630 = vpack.c.b16 %v2862, %v2854
    %v4631 = vpack.c.b16 %v2871, %v2863
    %v4632 = vpack.c.b16 %v2872, %v2864
    %v4633 = vpack.c.b16 %v2873, %v2865
    %v4634 = vpack.c.b16 %v2874, %v2866
    %v4635 = vpack.c.b16 %v2875, %v2867
    %v4636 = vpack.c.b16 %v2876, %v2868
    %v4637 = vpack.c.b16 %v2877, %v2869
    %v4638 = vpack.c.b16 %v2878, %v2870
    %v4639 = vpack.c.b16 %v2887, %v2879
    %v4640 = vpack.c.b16 %v2888, %v2880
    %v4641 = vpack.c.b16 %v2889, %v2881
    %v4642 = vpack.c.b16 %v2890, %v2882
    %v4643 = vpack.c.b16 %v2891, %v2883
    %v4644 = vpack.c.b16 %v2892, %v2884
    %v4645 = vpack.c.b16 %v2893, %v2885
    %v4646 = vpack.c.b16 %v2894, %v2886
    %v4647 = vpack.c.b16 %v2903, %v2895
    %v4648 = vpack.c.b16 %v2904, %v2896
    %v4649 = vpack.c.b16 %v2905, %v2897
    %v4650 = vpack.c.b16 %v2906, %v2898
    %v4651 = vpack.c.b16 %v2907, %v2899
    %v4652 = vpack.c.b16 %v2908, %v2900
    %v4653 = vpack.c.b16 %v2909, %v2901
    %v4654 = vpack.c.b16 %v2910, %v2902
    %v4655 = vpack.c.b16 %v2919, %v2911
    %v4656 = vpack.c.b16 %v2920, %v2912
    %v4657 = vpack.c.b16 %v2921, %v2913
    %v4658 = vpack.c.b16 %v2922, %v2914
    %v4659 = vpack.c.b16 %v2923, %v2915
    %v4660 = vpack.c.b16 %v2924, %v2916
    %v4661 = vpack.c.b16 %v2925, %v2917
    %v4662 = vpack.c.b16 %v2926, %v2918
    %v4663 = vpack.c.b16 %v2935, %v2927
    %v4664 = vpack.c.b16 %v2936, %v2928
    %v4665 = vpack.c.b16 %v2937, %v2929
    %v4666 = vpack.c.b16 %v2938, %v2930
    %v4667 = vpack.c.b16 %v2939, %v2931
    %v4668 = vpack.c.b16 %v2940, %v2932
    %v4669 = vpack.c.b16 %v2941, %v2933
    %v4670 = vpack.c.b16 %v2942, %v2934
    %v4671 = vpack.c.b16 %v2951, %v2943
    %v4672 = vpack.c.b16 %v2952, %v2944
    %v4673 = vpack.c.b16 %v2953, %v2945
    %v4674 = vpack.c.b16 %v2954, %v2946
    %v4675 = vpack.c.b16 %v2955, %v2947
    %v4676 = vpack.c.b16 %v2956, %v2948
    %v4677 = vpack.c.b16 %v2957, %v2949
    %v4678 = vpack.c.b16 %v2958, %v2950
    %v4679 = vpack.c.b16 %v2967, %v2959
    %v4680 = vpack.c.b16 %v2968, %v2960
    %v4681 = vpack.c.b16 %v2969, %v2961
    %v4682 = vpack.c.b16 %v2970, %v2962
    %v4683 = vpack.c.b16 %v2971, %v2963
    %v4684 = vpack.c.b16 %v2972, %v2964
    %v4685 = vpack.c.b16 %v2973, %v2965
    %v4686 = vpack.c.b16 %v2974, %v2966
    %v4687 = vpack.c.b16 %v2983, %v2975
    %v4688 = vpack.c.b16 %v2984, %v2976
    %v4689 = vpack.c.b16 %v2985, %v2977
    %v4690 = vpack.c.b16 %v2986, %v2978
    %v4691 = vpack.c.b16 %v2987, %v2979
    %v4692 = vpack.c.b16 %v2988, %v2980
    %v4693 = vpack.c.b16 %v2989, %v2981
    %v4694 = vpack.c.b16 %v2990, %v2982
    %v4695 = vpack.c.b16 %v2999, %v2991
    %v4696 = vpack.c.b16 %v3000, %v2992
    %v4697 = vpack.c.b16 %v3001, %v2993
    %v4698 = vpack.c.b16 %v3002, %v2994
    %v4699 = vpack.c.b16 %v3003, %v2995
    %v4700 = vpack.c.b16 %v3004, %v2996
    %v4701 = vpack.c.b16 %v3005, %v2997
    %v4702 = vpack.c.b16 %v3006, %v2998
    %v4703 = vpack.c.b16 %v3015, %v3007
    %v4704 = vpack.c.b16 %v3016, %v3008
    %v4705 = vpack.c.b16 %v3017, %v3009
    %v4706 = vpack.c.b16 %v3018, %v3010
    %v4707 = vpack.c.b16 %v3019, %v3011
    %v4708 = vpack.c.b16 %v3020, %v3012
    %v4709 = vpack.c.b16 %v3021, %v3013
    %v4710 = vpack.c.b16 %v3022, %v3014
    %v4711 = vpack.c.b16 %v3031, %v3023
    %v4712 = vpack.c.b16 %v3032, %v3024
    %v4713 = vpack.c.b16 %v3033, %v3025
    %v4714 = vpack.c.b16 %v3034, %v3026
    %v4715 = vpack.c.b16 %v3035, %v3027
    %v4716 = vpack.c.b16 %v3036, %v3028
    %v4717 = vpack.c.b16 %v3037, %v3029
    %v4718 = vpack.c.b16 %v3038, %v3030
    %v4719 = vpack.c.b16 %v3047, %v3039
    %v4720 = vpack.c.b16 %v3048, %v3040
    %v4721 = vpack.c.b16 %v3049, %v3041
    %v4722 = vpack.c.b16 %v3050, %v3042
    %v4723 = vpack.c.b16 %v3051, %v3043
    %v4724 = vpack.c.b16 %v3052, %v3044
    %v4725 = vpack.c.b16 %v3053, %v3045
    %v4726 = vpack.c.b16 %v3054, %v3046
    %v4727 = vpack.c.b16 %v3063, %v3055
    %v4728 = vpack.c.b16 %v3064, %v3056
    %v4729 = vpack.c.b16 %v3065, %v3057
    %v4730 = vpack.c.b16 %v3066, %v3058
    %v4731 = vpack.c.b16 %v3067, %v3059
    %v4732 = vpack.c.b16 %v3068, %v3060
    %v4733 = vpack.c.b16 %v3069, %v3061
    %v4734 = vpack.c.b16 %v3070, %v3062
    %v4735 = vpack.c.b16 %v3079, %v3071
    %v4736 = vpack.c.b16 %v3080, %v3072
    %v4737 = vpack.c.b16 %v3081, %v3073
    %v4738 = vpack.c.b16 %v3082, %v3074
    %v4739 = vpack.c.b16 %v3083, %v3075
    %v4740 = vpack.c.b16 %v3084, %v3076
    %v4741 = vpack.c.b16 %v3085, %v3077
    %v4742 = vpack.c.b16 %v3086, %v3078
    %v4743 = vpack.c.b16 %v3095, %v3087
    %v4744 = vpack.c.b16 %v3096, %v3088
    %v4745 = vpack.c.b16 %v3097, %v3089
    %v4746 = vpack.c.b16 %v3098, %v3090
    %v4747 = vpack.c.b16 %v3099, %v3091
    %v4748 = vpack.c.b16 %v3100, %v3092
    %v4749 = vpack.c.b16 %v3101, %v3093
    %v4750 = vpack.c.b16 %v3102, %v3094
    %v4751 = vpack.c.b16 %v3111, %v3103
    %v4752 = vpack.c.b16 %v3112, %v3104
    %v4753 = vpack.c.b16 %v3113, %v3105
    %v4754 = vpack.c.b16 %v3114, %v3106
    %v4755 = vpack.c.b16 %v3115, %v3107
    %v4756 = vpack.c.b16 %v3116, %v3108
    %v4757 = vpack.c.b16 %v3117, %v3109
    %v4758 = vpack.c.b16 %v3118, %v3110
    %v4759 = vpack.c.b16 %v3127, %v3119
    %v4760 = vpack.c.b16 %v3128, %v3120
    %v4761 = vpack.c.b16 %v3129, %v3121
    %v4762 = vpack.c.b16 %v3130, %v3122
    %v4763 = vpack.c.b16 %v3131, %v3123
    %v4764 = vpack.c.b16 %v3132, %v3124
    %v4765 = vpack.c.b16 %v3133, %v3125
    %v4766 = vpack.c.b16 %v3134, %v3126
    %v4767 = vpack.c.b16 %v3143, %v3135
    %v4768 = vpack.c.b16 %v3144, %v3136
    %v4769 = vpack.c.b16 %v3145, %v3137
    %v4770 = vpack.c.b16 %v3146, %v3138
    %v4771 = vpack.c.b16 %v3147, %v3139
    %v4772 = vpack.c.b16 %v3148, %v3140
    %v4773 = vpack.c.b16 %v3149, %v3141
    %v4774 = vpack.c.b16 %v3150, %v3142
    %v4775 = vpack.c.b16 %v3159, %v3151
    %v4776 = vpack.c.b16 %v3160, %v3152
    %v4777 = vpack.c.b16 %v3161, %v3153
    %v4778 = vpack.c.b16 %v3162, %v3154
    %v4779 = vpack.c.b16 %v3163, %v3155
    %v4780 = vpack.c.b16 %v3164, %v3156
    %v4781 = vpack.c.b16 %v3165, %v3157
    %v4782 = vpack.c.b16 %v3166, %v3158
    %v4783 = vpack.c.b16 %v3175, %v3167
    %v4784 = vpack.c.b16 %v3176, %v3168
    %v4785 = vpack.c.b16 %v3177, %v3169
    %v4786 = vpack.c.b16 %v3178, %v3170
    %v4787 = vpack.c.b16 %v3179, %v3171
    %v4788 = vpack.c.b16 %v3180, %v3172
    %v4789 = vpack.c.b16 %v3181, %v3173
    %v4790 = vpack.c.b16 %v3182, %v3174
    %v4791 = vpack.c.b16 %v3191, %v3183
    %v4792 = vpack.c.b16 %v3192, %v3184
    %v4793 = vpack.c.b16 %v3193, %v3185
    %v4794 = vpack.c.b16 %v3194, %v3186
    %v4795 = vpack.c.b16 %v3195, %v3187
    %v4796 = vpack.c.b16 %v3196, %v3188
    %v4797 = vpack.c.b16 %v3197, %v3189
    %v4798 = vpack.c.b16 %v3198, %v3190
    %v4799 = vpack.c.b16 %v3207, %v3199
    %v4800 = vpack.c.b16 %v3208, %v3200
    %v4801 = vpack.c.b16 %v3209, %v3201
    %v4802 = vpack.c.b16 %v3210, %v3202
    %v4803 = vpack.c.b16 %v3211, %v3203
    %v4804 = vpack.c.b16 %v3212, %v3204
    %v4805 = vpack.c.b16 %v3213, %v3205
    %v4806 = vpack.c.b16 %v3214, %v3206
    %v4807 = vpack.c.b16 %v3223, %v3215
    %v4808 = vpack.c.b16 %v3224, %v3216
    %v4809 = vpack.c.b16 %v3225, %v3217
    %v4810 = vpack.c.b16 %v3226, %v3218
    %v4811 = vpack.c.b16 %v3227, %v3219
    %v4812 = vpack.c.b16 %v3228, %v3220
    %v4813 = vpack.c.b16 %v3229, %v3221
    %v4814 = vpack.c.b16 %v3230, %v3222
    %v4815 = vpack.c.b16 %v3239, %v3231
    %v4816 = vpack.c.b16 %v3240, %v3232
    %v4817 = vpack.c.b16 %v3241, %v3233
    %v4818 = vpack.c.b16 %v3242, %v3234
    %v4819 = vpack.c.b16 %v3243, %v3235
    %v4820 = vpack.c.b16 %v3244, %v3236
    %v4821 = vpack.c.b16 %v3245, %v3237
    %v4822 = vpack.c.b16 %v3246, %v3238
    %v4823 = vpack.c.b16 %v3255, %v3247
    %v4824 = vpack.c.b16 %v3256, %v3248
    %v4825 = vpack.c.b16 %v3257, %v3249
    %v4826 = vpack.c.b16 %v3258, %v3250
    %v4827 = vpack.c.b16 %v3259, %v3251
    %v4828 = vpack.c.b16 %v3260, %v3252
    %v4829 = vpack.c.b16 %v3261, %v3253
    %v4830 = vpack.c.b16 %v3262, %v3254
    %v4831 = vpack.c.b16 %v3271, %v3263
    %v4832 = vpack.c.b16 %v3272, %v3264
    %v4833 = vpack.c.b16 %v3273, %v3265
    %v4834 = vpack.c.b16 %v3274, %v3266
    %v4835 = vpack.c.b16 %v3275, %v3267
    %v4836 = vpack.c.b16 %v3276, %v3268
    %v4837 = vpack.c.b16 %v3277, %v3269
    %v4838 = vpack.c.b16 %v3278, %v3270
    %v4839 = vpack.c.b16 %v3287, %v3279
    %v4840 = vpack.c.b16 %v3288, %v3280
    %v4841 = vpack.c.b16 %v3289, %v3281
    %v4842 = vpack.c.b16 %v3290, %v3282
    %v4843 = vpack.c.b16 %v3291, %v3283
    %v4844 = vpack.c.b16 %v3292, %v3284
    %v4845 = vpack.c.b16 %v3293, %v3285
    %v4846 = vpack.c.b16 %v3294, %v3286
    %v4847 = vpack.c.b16 %v3303, %v3295
    %v4848 = vpack.c.b16 %v3304, %v3296
    %v4849 = vpack.c.b16 %v3305, %v3297
    %v4850 = vpack.c.b16 %v3306, %v3298
    %v4851 = vpack.c.b16 %v3307, %v3299
    %v4852 = vpack.c.b16 %v3308, %v3300
    %v4853 = vpack.c.b16 %v3309, %v3301
    %v4854 = vpack.c.b16 %v3310, %v3302
    %v4855 = vpack.c.b16 %v3319, %v3311
    %v4856 = vpack.c.b16 %v3320, %v3312
    %v4857 = vpack.c.b16 %v3321, %v3313
    %v4858 = vpack.c.b16 %v3322, %v3314
    %v4859 = vpack.c.b16 %v3323, %v3315
    %v4860 = vpack.c.b16 %v3324, %v3316
    %v4861 = vpack.c.b16 %v3325, %v3317
    %v4862 = vpack.c.b16 %v3326, %v3318
    %v4863 = vpack.c.b16 %v3335, %v3327
    %v4864 = vpack.c.b16 %v3336, %v3328
    %v4865 = vpack.c.b16 %v3337, %v3329
    %v4866 = vpack.c.b16 %v3338, %v3330
    %v4867 = vpack.c.b16 %v3339, %v3331
    %v4868 = vpack.c.b16 %v3340, %v3332
    %v4869 = vpack.c.b16 %v3341, %v3333
    %v4870 = vpack.c.b16 %v3342, %v3334
    %v4871 = vpack.c.b16 %v3351, %v3343
    %v4872 = vpack.c.b16 %v3352, %v3344
    %v4873 = vpack.c.b16 %v3353, %v3345
    %v4874 = vpack.c.b16 %v3354, %v3346
    %v4875 = vpack.c.b16 %v3355, %v3347
    %v4876 = vpack.c.b16 %v3356, %v3348
    %v4877 = vpack.c.b16 %v3357, %v3349
    %v4878 = vpack.c.b16 %v3358, %v3350
    %v4879 = vpack.c.b16 %v3367, %v3359
    %v4880 = vpack.c.b16 %v3368, %v3360
    %v4881 = vpack.c.b16 %v3369, %v3361
    %v4882 = vpack.c.b16 %v3370, %v3362
    %v4883 = vpack.c.b16 %v3371, %v3363
    %v4884 = vpack.c.b16 %v3372, %v3364
    %v4885 = vpack.c.b16 %v3373, %v3365
    %v4886 = vpack.c.b16 %v3374, %v3366
    %v4887 = vpack.c.b16 %v3383, %v3375
    %v4888 = vpack.c.b16 %v3384, %v3376
    %v4889 = vpack.c.b16 %v3385, %v3377
    %v4890 = vpack.c.b16 %v3386, %v3378
    %v4891 = vpack.c.b16 %v3387, %v3379
    %v4892 = vpack.c.b16 %v3388, %v3380
    %v4893 = vpack.c.b16 %v3389, %v3381
    %v4894 = vpack.c.b16 %v3390, %v3382
    %v4895 = vpack.c.b16 %v3399, %v3391
    %v4896 = vpack.c.b16 %v3400, %v3392
    %v4897 = vpack.c.b16 %v3401, %v3393
    %v4898 = vpack.c.b16 %v3402, %v3394
    %v4899 = vpack.c.b16 %v3403, %v3395
    %v4900 = vpack.c.b16 %v3404, %v3396
    %v4901 = vpack.c.b16 %v3405, %v3397
    %v4902 = vpack.c.b16 %v3406, %v3398
    %v4903 = vpack.c.b16 %v3415, %v3407
    %v4904 = vpack.c.b16 %v3416, %v3408
    %v4905 = vpack.c.b16 %v3417, %v3409
    %v4906 = vpack.c.b16 %v3418, %v3410
    %v4907 = vpack.c.b16 %v3419, %v3411
    %v4908 = vpack.c.b16 %v3420, %v3412
    %v4909 = vpack.c.b16 %v3421, %v3413
    %v4910 = vpack.c.b16 %v3422, %v3414
    %v4911 = vpack.c.b16 %v3431, %v3423
    %v4912 = vpack.c.b16 %v3432, %v3424
    %v4913 = vpack.c.b16 %v3433, %v3425
    %v4914 = vpack.c.b16 %v3434, %v3426
    %v4915 = vpack.c.b16 %v3435, %v3427
    %v4916 = vpack.c.b16 %v3436, %v3428
    %v4917 = vpack.c.b16 %v3437, %v3429
    %v4918 = vpack.c.b16 %v3438, %v3430
    %v4919 = vpack.c.b16 %v3447, %v3439
    %v4920 = vpack.c.b16 %v3448, %v3440
    %v4921 = vpack.c.b16 %v3449, %v3441
    %v4922 = vpack.c.b16 %v3450, %v3442
    %v4923 = vpack.c.b16 %v3451, %v3443
    %v4924 = vpack.c.b16 %v3452, %v3444
    %v4925 = vpack.c.b16 %v3453, %v3445
    %v4926 = vpack.c.b16 %v3454, %v3446
    %v4927 = vpack.c.b16 %v3463, %v3455
    %v4928 = vpack.c.b16 %v3464, %v3456
    %v4929 = vpack.c.b16 %v3465, %v3457
    %v4930 = vpack.c.b16 %v3466, %v3458
    %v4931 = vpack.c.b16 %v3467, %v3459
    %v4932 = vpack.c.b16 %v3468, %v3460
    %v4933 = vpack.c.b16 %v3469, %v3461
    %v4934 = vpack.c.b16 %v3470, %v3462
    %v4935 = vpack.c.b16 %v3479, %v3471
    %v4936 = vpack.c.b16 %v3480, %v3472
    %v4937 = vpack.c.b16 %v3481, %v3473
    %v4938 = vpack.c.b16 %v3482, %v3474
    %v4939 = vpack.c.b16 %v3483, %v3475
    %v4940 = vpack.c.b16 %v3484, %v3476
    %v4941 = vpack.c.b16 %v3485, %v3477
    %v4942 = vpack.c.b16 %v3486, %v3478
    %v4943 = vpack.c.b16 %v3495, %v3487
    %v4944 = vpack.c.b16 %v3496, %v3488
    %v4945 = vpack.c.b16 %v3497, %v3489
    %v4946 = vpack.c.b16 %v3498, %v3490
    %v4947 = vpack.c.b16 %v3499, %v3491
    %v4948 = vpack.c.b16 %v3500, %v3492
    %v4949 = vpack.c.b16 %v3501, %v3493
    %v4950 = vpack.c.b16 %v3502, %v3494
    %v4951 = vpack.c.b16 %v3511, %v3503
    %v4952 = vpack.c.b16 %v3512, %v3504
    %v4953 = vpack.c.b16 %v3513, %v3505
    %v4954 = vpack.c.b16 %v3514, %v3506
    %v4955 = vpack.c.b16 %v3515, %v3507
    %v4956 = vpack.c.b16 %v3516, %v3508
    %v4957 = vpack.c.b16 %v3517, %v3509
    %v4958 = vpack.c.b16 %v3518, %v3510
    %v4959 = vpack.c.b16 %v3527, %v3519
    %v4960 = vpack.c.b16 %v3528, %v3520
    %v4961 = vpack.c.b16 %v3529, %v3521
    %v4962 = vpack.c.b16 %v3530, %v3522
    %v4963 = vpack.c.b16 %v3531, %v3523
    %v4964 = vpack.c.b16 %v3532, %v3524
    %v4965 = vpack.c.b16 %v3533, %v3525
    %v4966 = vpack.c.b16 %v3534, %v3526
    %v4967 = vpack.c.b16 %v3543, %v3535
    %v4968 = vpack.c.b16 %v3544, %v3536
    %v4969 = vpack.c.b16 %v3545, %v3537
    %v4970 = vpack.c.b16 %v3546, %v3538
    %v4971 = vpack.c.b16 %v3547, %v3539
    %v4972 = vpack.c.b16 %v3548, %v3540
    %v4973 = vpack.c.b16 %v3549, %v3541
    %v4974 = vpack.c.b16 %v3550, %v3542
    %v4975 = vpack.c.b16 %v3559, %v3551
    %v4976 = vpack.c.b16 %v3560, %v3552
    %v4977 = vpack.c.b16 %v3561, %v3553
    %v4978 = vpack.c.b16 %v3562, %v3554
    %v4979 = vpack.c.b16 %v3563, %v3555
    %v4980 = vpack.c.b16 %v3564, %v3556
    %v4981 = vpack.c.b16 %v3565, %v3557
    %v4982 = vpack.c.b16 %v3566, %v3558
    %v4983 = vpack.c.b16 %v3575, %v3567
    %v4984 = vpack.c.b16 %v3576, %v3568
    %v4985 = vpack.c.b16 %v3577, %v3569
    %v4986 = vpack.c.b16 %v3578, %v3570
    %v4987 = vpack.c.b16 %v3579, %v3571
    %v4988 = vpack.c.b16 %v3580, %v3572
    %v4989 = vpack.c.b16 %v3581, %v3573
    %v4990 = vpack.c.b16 %v3582, %v3574
    %v4991 = vpack.c.b16 %v3591, %v3583
    %v4992 = vpack.c.b16 %v3592, %v3584
    %v4993 = vpack.c.b16 %v3593, %v3585
    %v4994 = vpack.c.b16 %v3594, %v3586
    %v4995 = vpack.c.b16 %v3595, %v3587
    %v4996 = vpack.c.b16 %v3596, %v3588
    %v4997 = vpack.c.b16 %v3597, %v3589
    %v4998 = vpack.c.b16 %v3598, %v3590
    %v4999 = vpack.c.b16 %v3607, %v3599
    %v5000 = vpack.c.b16 %v3608, %v3600
    %v5001 = vpack.c.b16 %v3609, %v3601
    %v5002 = vpack.c.b16 %v3610, %v3602
    %v5003 = vpack.c.b16 %v3611, %v3603
    %v5004 = vpack.c.b16 %v3612, %v3604
    %v5005 = vpack.c.b16 %v3613, %v3605
    %v5006 = vpack.c.b16 %v3614, %v3606
    %v5007 = vpack.c.b16 %v3623, %v3615
    %v5008 = vpack.c.b16 %v3624, %v3616
    %v5009 = vpack.c.b16 %v3625, %v3617
    %v5010 = vpack.c.b16 %v3626, %v3618
    %v5011 = vpack.c.b16 %v3627, %v3619
    %v5012 = vpack.c.b16 %v3628, %v3620
    %v5013 = vpack.c.b16 %v3629, %v3621
    %v5014 = vpack.c.b16 %v3630, %v3622
    %v5015 = vpack.c.b16 %v3639, %v3631
    %v5016 = vpack.c.b16 %v3640, %v3632
    %v5017 = vpack.c.b16 %v3641, %v3633
    %v5018 = vpack.c.b16 %v3642, %v3634
    %v5019 = vpack.c.b16 %v3643, %v3635
    %v5020 = vpack.c.b16 %v3644, %v3636
    %v5021 = vpack.c.b16 %v3645, %v3637
    %v5022 = vpack.c.b16 %v3646, %v3638
    %v5023 = vpack.c.b16 %v3655, %v3647
    %v5024 = vpack.c.b16 %v3656, %v3648
    %v5025 = vpack.c.b16 %v3657, %v3649
    %v5026 = vpack.c.b16 %v3658, %v3650
    %v5027 = vpack.c.b16 %v3659, %v3651
    %v5028 = vpack.c.b16 %v3660, %v3652
    %v5029 = vpack.c.b16 %v3661, %v3653
    %v5030 = vpack.c.b16 %v3662, %v3654
    %v5031 = vpack.c.b16 %v3671, %v3663
    %v5032 = vpack.c.b16 %v3672, %v3664
    %v5033 = vpack.c.b16 %v3673, %v3665
    %v5034 = vpack.c.b16 %v3674, %v3666
    %v5035 = vpack.c.b16 %v3675, %v3667
    %v5036 = vpack.c.b16 %v3676, %v3668
    %v5037 = vpack.c.b16 %v3677, %v3669
    %v5038 = vpack.c.b16 %v3678, %v3670
    %v5039 = vpack.c.b16 %v3687, %v3679
    %v5040 = vpack.c.b16 %v3688, %v3680
    %v5041 = vpack.c.b16 %v3689, %v3681
    %v5042 = vpack.c.b16 %v3690, %v3682
    %v5043 = vpack.c.b16 %v3691, %v3683
    %v5044 = vpack.c.b16 %v3692, %v3684
    %v5045 = vpack.c.b16 %v3693, %v3685
    %v5046 = vpack.c.b16 %v3694, %v3686
    %v5047 = vpack.c.b16 %v3703, %v3695
    %v5048 = vpack.c.b16 %v3704, %v3696
    %v5049 = vpack.c.b16 %v3705, %v3697
    %v5050 = vpack.c.b16 %v3706, %v3698
    %v5051 = vpack.c.b16 %v3707, %v3699
    %v5052 = vpack.c.b16 %v3708, %v3700
    %v5053 = vpack.c.b16 %v3709, %v3701
    %v5054 = vpack.c.b16 %v3710, %v3702
    %v5055 = vpack.c.b16 %v3719, %v3711
    %v5056 = vpack.c.b16 %v3720, %v3712
    %v5057 = vpack.c.b16 %v3721, %v3713
    %v5058 = vpack.c.b16 %v3722, %v3714
    %v5059 = vpack.c.b16 %v3723, %v3715
    %v5060 = vpack.c.b16 %v3724, %v3716
    %v5061 = vpack.c.b16 %v3725, %v3717
    %v5062 = vpack.c.b16 %v3726, %v3718
    %v5063 = vpack.c.b16 %v3735, %v3727
    %v5064 = vpack.c.b16 %v3736, %v3728
    %v5065 = vpack.c.b16 %v3737, %v3729
    %v5066 = vpack.c.b16 %v3738, %v3730
    %v5067 = vpack.c.b16 %v3739, %v3731
    %v5068 = vpack.c.b16 %v3740, %v3732
    %v5069 = vpack.c.b16 %v3741, %v3733
    %v5070 = vpack.c.b16 %v3742, %v3734
    %v5071 = vpack.c.b16 %v3751, %v3743
    %v5072 = vpack.c.b16 %v3752, %v3744
    %v5073 = vpack.c.b16 %v3753, %v3745
    %v5074 = vpack.c.b16 %v3754, %v3746
    %v5075 = vpack.c.b16 %v3755, %v3747
    %v5076 = vpack.c.b16 %v3756, %v3748
    %v5077 = vpack.c.b16 %v3757, %v3749
    %v5078 = vpack.c.b16 %v3758, %v3750
    %v5079 = vpack.c.b16 %v3767, %v3759
    %v5080 = vpack.c.b16 %v3768, %v3760
    %v5081 = vpack.c.b16 %v3769, %v3761
    %v5082 = vpack.c.b16 %v3770, %v3762
    %v5083 = vpack.c.b16 %v3771, %v3763
    %v5084 = vpack.c.b16 %v3772, %v3764
    %v5085 = vpack.c.b16 %v3773, %v3765
    %v5086 = vpack.c.b16 %v3774, %v3766
    %v5087 = vpack.c.b16 %v3783, %v3775
    %v5088 = vpack.c.b16 %v3784, %v3776
    %v5089 = vpack.c.b16 %v3785, %v3777
    %v5090 = vpack.c.b16 %v3786, %v3778
    %v5091 = vpack.c.b16 %v3787, %v3779
    %v5092 = vpack.c.b16 %v3788, %v3780
    %v5093 = vpack.c.b16 %v3789, %v3781
    %v5094 = vpack.c.b16 %v3790, %v3782
    %v5095 = vpack.c.b16 %v3799, %v3791
    %v5096 = vpack.c.b16 %v3800, %v3792
    %v5097 = vpack.c.b16 %v3801, %v3793
    %v5098 = vpack.c.b16 %v3802, %v3794
    %v5099 = vpack.c.b16 %v3803, %v3795
    %v5100 = vpack.c.b16 %v3804, %v3796
    %v5101 = vpack.c.b16 %v3805, %v3797
    %v5102 = vpack.c.b16 %v3806, %v3798
    %v5103 = vpack.c.b16 %v3815, %v3807
    %v5104 = vpack.c.b16 %v3816, %v3808
    %v5105 = vpack.c.b16 %v3817, %v3809
    %v5106 = vpack.c.b16 %v3818, %v3810
    %v5107 = vpack.c.b16 %v3819, %v3811
    %v5108 = vpack.c.b16 %v3820, %v3812
    %v5109 = vpack.c.b16 %v3821, %v3813
    %v5110 = vpack.c.b16 %v3822, %v3814
    %v5111 = vpack.c.b16 %v3831, %v3823
    %v5112 = vpack.c.b16 %v3832, %v3824
    %v5113 = vpack.c.b16 %v3833, %v3825
    %v5114 = vpack.c.b16 %v3834, %v3826
    %v5115 = vpack.c.b16 %v3835, %v3827
    %v5116 = vpack.c.b16 %v3836, %v3828
    %v5117 = vpack.c.b16 %v3837, %v3829
    %v5118 = vpack.c.b16 %v3838, %v3830
    %v5119 = vpack.c.b16 %v3847, %v3839
    %v5120 = vpack.c.b16 %v3848, %v3840
    %v5121 = vpack.c.b16 %v3849, %v3841
    %v5122 = vpack.c.b16 %v3850, %v3842
    %v5123 = vpack.c.b16 %v3851, %v3843
    %v5124 = vpack.c.b16 %v3852, %v3844
    %v5125 = vpack.c.b16 %v3853, %v3845
    %v5126 = vpack.c.b16 %v3854, %v3846
    %v5127 = vpack.c.b16 %v3863, %v3855
    %v5128 = vpack.c.b16 %v3864, %v3856
    %v5129 = vpack.c.b16 %v3865, %v3857
    %v5130 = vpack.c.b16 %v3866, %v3858
    %v5131 = vpack.c.b16 %v3867, %v3859
    %v5132 = vpack.c.b16 %v3868, %v3860
    %v5133 = vpack.c.b16 %v3869, %v3861
    %v5134 = vpack.c.b16 %v3870, %v3862
    %v5135 = vpack.c.b16 %v3879, %v3871
    %v5136 = vpack.c.b16 %v3880, %v3872
    %v5137 = vpack.c.b16 %v3881, %v3873
    %v5138 = vpack.c.b16 %v3882, %v3874
    %v5139 = vpack.c.b16 %v3883, %v3875
    %v5140 = vpack.c.b16 %v3884, %v3876
    %v5141 = vpack.c.b16 %v3885, %v3877
    %v5142 = vpack.c.b16 %v3886, %v3878
    %v5143 = vpack.c.b16 %v3895, %v3887
    %v5144 = vpack.c.b16 %v3896, %v3888
    %v5145 = vpack.c.b16 %v3897, %v3889
    %v5146 = vpack.c.b16 %v3898, %v3890
    %v5147 = vpack.c.b16 %v3899, %v3891
    %v5148 = vpack.c.b16 %v3900, %v3892
    %v5149 = vpack.c.b16 %v3901, %v3893
    %v5150 = vpack.c.b16 %v3902, %v3894
    %v5151 = vpack.c.b16 %v3911, %v3903
    %v5152 = vpack.c.b16 %v3912, %v3904
    %v5153 = vpack.c.b16 %v3913, %v3905
    %v5154 = vpack.c.b16 %v3914, %v3906
    %v5155 = vpack.c.b16 %v3915, %v3907
    %v5156 = vpack.c.b16 %v3916, %v3908
    %v5157 = vpack.c.b16 %v3917, %v3909
    %v5158 = vpack.c.b16 %v3918, %v3910
    %v5159 = vpack.c.b16 %v3927, %v3919
    %v5160 = vpack.c.b16 %v3928, %v3920
    %v5161 = vpack.c.b16 %v3929, %v3921
    %v5162 = vpack.c.b16 %v3930, %v3922
    %v5163 = vpack.c.b16 %v3931, %v3923
    %v5164 = vpack.c.b16 %v3932, %v3924
    %v5165 = vpack.c.b16 %v3933, %v3925
    %v5166 = vpack.c.b16 %v3934, %v3926
    %v5167 = vpack.c.b16 %v3943, %v3935
    %v5168 = vpack.c.b16 %v3944, %v3936
    %v5169 = vpack.c.b16 %v3945, %v3937
    %v5170 = vpack.c.b16 %v3946, %v3938
    %v5171 = vpack.c.b16 %v3947, %v3939
    %v5172 = vpack.c.b16 %v3948, %v3940
    %v5173 = vpack.c.b16 %v3949, %v3941
    %v5174 = vpack.c.b16 %v3950, %v3942
    %v5175 = vpack.c.b16 %v3959, %v3951
    %v5176 = vpack.c.b16 %v3960, %v3952
    %v5177 = vpack.c.b16 %v3961, %v3953
    %v5178 = vpack.c.b16 %v3962, %v3954
    %v5179 = vpack.c.b16 %v3963, %v3955
    %v5180 = vpack.c.b16 %v3964, %v3956
    %v5181 = vpack.c.b16 %v3965, %v3957
    %v5182 = vpack.c.b16 %v3966, %v3958
    %v5183 = vpack.c.b16 %v3975, %v3967
    %v5184 = vpack.c.b16 %v3976, %v3968
    %v5185 = vpack.c.b16 %v3977, %v3969
    %v5186 = vpack.c.b16 %v3978, %v3970
    %v5187 = vpack.c.b16 %v3979, %v3971
    %v5188 = vpack.c.b16 %v3980, %v3972
    %v5189 = vpack.c.b16 %v3981, %v3973
    %v5190 = vpack.c.b16 %v3982, %v3974
    %v5191 = vpack.c.b16 %v3991, %v3983
    %v5192 = vpack.c.b16 %v3992, %v3984
    %v5193 = vpack.c.b16 %v3993, %v3985
    %v5194 = vpack.c.b16 %v3994, %v3986
    %v5195 = vpack.c.b16 %v3995, %v3987
    %v5196 = vpack.c.b16 %v3996, %v3988
    %v5197 = vpack.c.b16 %v3997, %v3989
    %v5198 = vpack.c.b16 %v3998, %v3990
    %v5199 = vpack.c.b16 %v4007, %v3999
    %v5200 = vpack.c.b16 %v4008, %v4000
    %v5201 = vpack.c.b16 %v4009, %v4001
    %v5202 = vpack.c.b16 %v4010, %v4002
    %v5203 = vpack.c.b16 %v4011, %v4003
    %v5204 = vpack.c.b16 %v4012, %v4004
    %v5205 = vpack.c.b16 %v4013, %v4005
    %v5206 = vpack.c.b16 %v4014, %v4006
    %v5207 = vpack.c.b16 %v4023, %v4015
    %v5208 = vpack.c.b16 %v4024, %v4016
    %v5209 = vpack.c.b16 %v4025, %v4017
    %v5210 = vpack.c.b16 %v4026, %v4018
    %v5211 = vpack.c.b16 %v4027, %v4019
    %v5212 = vpack.c.b16 %v4028, %v4020
    %v5213 = vpack.c.b16 %v4029, %v4021
    %v5214 = vpack.c.b16 %v4030, %v4022
    %v5215 = vpack.c.b16 %v4039, %v4031
    %v5216 = vpack.c.b16 %v4040, %v4032
    %v5217 = vpack.c.b16 %v4041, %v4033
    %v5218 = vpack.c.b16 %v4042, %v4034
    %v5219 = vpack.c.b16 %v4043, %v4035
    %v5220 = vpack.c.b16 %v4044, %v4036
    %v5221 = vpack.c.b16 %v4045, %v4037
    %v5222 = vpack.c.b16 %v4046, %v4038
    %v5223 = vpack.c.b16 %v4055, %v4047
    %v5224 = vpack.c.b16 %v4056, %v4048
    %v5225 = vpack.c.b16 %v4057, %v4049
    %v5226 = vpack.c.b16 %v4058, %v4050
    %v5227 = vpack.c.b16 %v4059, %v4051
    %v5228 = vpack.c.b16 %v4060, %v4052
    %v5229 = vpack.c.b16 %v4061, %v4053
    %v5230 = vpack.c.b16 %v4062, %v4054
    %v5231 = vpack.c.b16 %v4071, %v4063
    %v5232 = vpack.c.b16 %v4072, %v4064
    %v5233 = vpack.c.b16 %v4073, %v4065
    %v5234 = vpack.c.b16 %v4074, %v4066
    %v5235 = vpack.c.b16 %v4075, %v4067
    %v5236 = vpack.c.b16 %v4076, %v4068
    %v5237 = vpack.c.b16 %v4077, %v4069
    %v5238 = vpack.c.b16 %v4078, %v4070
    %v5239 = vpack.c.b16 %v4087, %v4079
    %v5240 = vpack.c.b16 %v4088, %v4080
    %v5241 = vpack.c.b16 %v4089, %v4081
    %v5242 = vpack.c.b16 %v4090, %v4082
    %v5243 = vpack.c.b16 %v4091, %v4083
    %v5244 = vpack.c.b16 %v4092, %v4084
    %v5245 = vpack.c.b16 %v4093, %v4085
    %v5246 = vpack.c.b16 %v4094, %v4086
    %v5247 = vpack.c.b16 %v4103, %v4095
    %v5248 = vpack.c.b16 %v4104, %v4096
    %v5249 = vpack.c.b16 %v4105, %v4097
    %v5250 = vpack.c.b16 %v4106, %v4098
    %v5251 = vpack.c.b16 %v4107, %v4099
    %v5252 = vpack.c.b16 %v4108, %v4100
    %v5253 = vpack.c.b16 %v4109, %v4101
    %v5254 = vpack.c.b16 %v4110, %v4102
    %v5255 = vpack.c.b16 %v4119, %v4111
    %v5256 = vpack.c.b16 %v4120, %v4112
    %v5257 = vpack.c.b16 %v4121, %v4113
    %v5258 = vpack.c.b16 %v4122, %v4114
    %v5259 = vpack.c.b16 %v4123, %v4115
    %v5260 = vpack.c.b16 %v4124, %v4116
    %v5261 = vpack.c.b16 %v4125, %v4117
    %v5262 = vpack.c.b16 %v4126, %v4118
    %v5263 = vpack.c.b16 %v4135, %v4127
    %v5264 = vpack.c.b16 %v4136, %v4128
    %v5265 = vpack.c.b16 %v4137, %v4129
    %v5266 = vpack.c.b16 %v4138, %v4130
    %v5267 = vpack.c.b16 %v4139, %v4131
    %v5268 = vpack.c.b16 %v4140, %v4132
    %v5269 = vpack.c.b16 %v4141, %v4133
    %v5270 = vpack.c.b16 %v4142, %v4134
    %v5271 = vpack.c.b16 %v4151, %v4143
    %v5272 = vpack.c.b16 %v4152, %v4144
    %v5273 = vpack.c.b16 %v4153, %v4145
    %v5274 = vpack.c.b16 %v4154, %v4146
    %v5275 = vpack.c.b16 %v4155, %v4147
    %v5276 = vpack.c.b16 %v4156, %v4148
    %v5277 = vpack.c.b16 %v4157, %v4149
    %v5278 = vpack.c.b16 %v4158, %v4150
    %v5279 = vpack.c.b16 %v4167, %v4159
    %v5280 = vpack.c.b16 %v4168, %v4160
    %v5281 = vpack.c.b16 %v4169, %v4161
    %v5282 = vpack.c.b16 %v4170, %v4162
    %v5283 = vpack.c.b16 %v4171, %v4163
    %v5284 = vpack.c.b16 %v4172, %v4164
    %v5285 = vpack.c.b16 %v4173, %v4165
    %v5286 = vpack.c.b16 %v4174, %v4166
    %v5287 = vpack.c.b16 %v4183, %v4175
    %v5288 = vpack.c.b16 %v4184, %v4176
    %v5289 = vpack.c.b16 %v4185, %v4177
    %v5290 = vpack.c.b16 %v4186, %v4178
    %v5291 = vpack.c.b16 %v4187, %v4179
    %v5292 = vpack.c.b16 %v4188, %v4180
    %v5293 = vpack.c.b16 %v4189, %v4181
    %v5294 = vpack.c.b16 %v4190, %v4182
    %v5295 = vpack.c.b16 %v4199, %v4191
    %v5296 = vpack.c.b16 %v4200, %v4192
    %v5297 = vpack.c.b16 %v4201, %v4193
    %v5298 = vpack.c.b16 %v4202, %v4194
    %v5299 = vpack.c.b16 %v4203, %v4195
    %v5300 = vpack.c.b16 %v4204, %v4196
    %v5301 = vpack.c.b16 %v4205, %v4197
    %v5302 = vpack.c.b16 %v4206, %v4198
    %v5303 = vpack.c.b16 %v4215, %v4207
    %v5304 = vpack.c.b16 %v4216, %v4208
    %v5305 = vpack.c.b16 %v4217, %v4209
    %v5306 = vpack.c.b16 %v4218, %v4210
    %v5307 = vpack.c.b16 %v4219, %v4211
    %v5308 = vpack.c.b16 %v4220, %v4212
    %v5309 = vpack.c.b16 %v4221, %v4213
    %v5310 = vpack.c.b16 %v4222, %v4214
    %v5311 = vpack.c.b16 %v4231, %v4223
    %v5312 = vpack.c.b16 %v4232, %v4224
    %v5313 = vpack.c.b16 %v4233, %v4225
    %v5314 = vpack.c.b16 %v4234, %v4226
    %v5315 = vpack.c.b16 %v4235, %v4227
    %v5316 = vpack.c.b16 %v4236, %v4228
    %v5317 = vpack.c.b16 %v4237, %v4229
    %v5318 = vpack.c.b16 %v4238, %v4230
    %v5319 = vpack.c.b16 %v4247, %v4239
    %v5320 = vpack.c.b16 %v4248, %v4240
    %v5321 = vpack.c.b16 %v4249, %v4241
    %v5322 = vpack.c.b16 %v4250, %v4242
    %v5323 = vpack.c.b16 %v4251, %v4243
    %v5324 = vpack.c.b16 %v4252, %v4244
    %v5325 = vpack.c.b16 %v4253, %v4245
    %v5326 = vpack.c.b16 %v4254, %v4246
    %v5327 = vpack.c.b16 %v4263, %v4255
    %v5328 = vpack.c.b16 %v4264, %v4256
    %v5329 = vpack.c.b16 %v4265, %v4257
    %v5330 = vpack.c.b16 %v4266, %v4258
    %v5331 = vpack.c.b16 %v4267, %v4259
    %v5332 = vpack.c.b16 %v4268, %v4260
    %v5333 = vpack.c.b16 %v4269, %v4261
    %v5334 = vpack.c.b16 %v4270, %v4262
    %v5335 = vpack.c.b16 %v4279, %v4271
    %v5336 = vpack.c.b16 %v4280, %v4272
    %v5337 = vpack.c.b16 %v4281, %v4273
    %v5338 = vpack.c.b16 %v4282, %v4274
    %v5339 = vpack.c.b16 %v4283, %v4275
    %v5340 = vpack.c.b16 %v4284, %v4276
    %v5341 = vpack.c.b16 %v4285, %v4277
    %v5342 = vpack.c.b16 %v4286, %v4278
    %v5343 = vpack.c.b16 %v4295, %v4287
    %v5344 = vpack.c.b16 %v4296, %v4288
    %v5345 = vpack.c.b16 %v4297, %v4289
    %v5346 = vpack.c.b16 %v4298, %v4290
    %v5347 = vpack.c.b16 %v4299, %v4291
    %v5348 = vpack.c.b16 %v4300, %v4292
    %v5349 = vpack.c.b16 %v4301, %v4293
    %v5350 = vpack.c.b16 %v4302, %v4294
    %v5351 = vpack.c.b16 %v4311, %v4303
    %v5352 = vpack.c.b16 %v4312, %v4304
    %v5353 = vpack.c.b16 %v4313, %v4305
    %v5354 = vpack.c.b16 %v4314, %v4306
    %v5355 = vpack.c.b16 %v4315, %v4307
    %v5356 = vpack.c.b16 %v4316, %v4308
    %v5357 = vpack.c.b16 %v4317, %v4309
    %v5358 = vpack.c.b16 %v4318, %v4310
    %v5359 = vpack.c.b16 %v4327, %v4319
    %v5360 = vpack.c.b16 %v4328, %v4320
    %v5361 = vpack.c.b16 %v4329, %v4321
    %v5362 = vpack.c.b16 %v4330, %v4322
    %v5363 = vpack.c.b16 %v4331, %v4323
    %v5364 = vpack.c.b16 %v4332, %v4324
    %v5365 = vpack.c.b16 %v4333, %v4325
    %v5366 = vpack.c.b16 %v4334, %v4326
    %v5367 = vpack.c.b16 %v4343, %v4335
    %v5368 = vpack.c.b16 %v4344, %v4336
    %v5369 = vpack.c.b16 %v4345, %v4337
    %v5370 = vpack.c.b16 %v4346, %v4338
    %v5371 = vpack.c.b16 %v4347, %v4339
    %v5372 = vpack.c.b16 %v4348, %v4340
    %v5373 = vpack.c.b16 %v4349, %v4341
    %v5374 = vpack.c.b16 %v4350, %v4342
    %6399 = vmatprep.subr.bf16.mxu0 %v4352
    %6400 = vmatpush1.bf16.msra.mxu0 %v4351
    %6401 = vmatprep.subr.bf16.mxu0 %v4360
    %6402 = vmatpush1.bf16.msra.mxu0 %v4359
    %6403 = vmatprep.subr.bf16.mxu0 %v4368
    %6404 = vmatpush1.bf16.msra.mxu0 %v4367
    %6405 = vmatprep.subr.bf16.mxu0 %v4376
    %6406 = vmatpush1.bf16.msra.mxu0 %v4375
    %6407 = vmatprep.subr.bf16.mxu0 %v4384
    %6408 = vmatpush1.bf16.msra.mxu0 %v4383
    %6409 = vmatprep.subr.bf16.mxu0 %v4392
    %6410 = vmatpush1.bf16.msra.mxu0 %v4391
    %6411 = vmatprep.subr.bf16.mxu0 %v4400
    %6412 = vmatpush1.bf16.msra.mxu0 %v4399
    %6413 = vmatprep.subr.bf16.mxu0 %v4408
    %6414 = vmatpush1.bf16.msra.mxu0 %v4407
    %6415 = vmatprep.subr.bf16.mxu0 %v4416
    %6416 = vmatpush1.bf16.msra.mxu0 %v4415
    %6417 = vmatprep.subr.bf16.mxu0 %v4424
    %6418 = vmatpush1.bf16.msra.mxu0 %v4423
    %6419 = vmatprep.subr.bf16.mxu0 %v4432
    %6420 = vmatpush1.bf16.msra.mxu0 %v4431
    %6421 = vmatprep.subr.bf16.mxu0 %v4440
    %6422 = vmatpush1.bf16.msra.mxu0 %v4439
    %6423 = vmatprep.subr.bf16.mxu0 %v4448
    %6424 = vmatpush1.bf16.msra.mxu0 %v4447
    %6425 = vmatprep.subr.bf16.mxu0 %v4456
    %6426 = vmatpush1.bf16.msra.mxu0 %v4455
    %6427 = vmatprep.subr.bf16.mxu0 %v4464
    %6428 = vmatpush1.bf16.msra.mxu0 %v4463
    %6429 = vmatprep.subr.bf16.mxu0 %v4472
    %6430 = vmatpush1.bf16.msra.mxu0 %v4471
    %6431 = vmatprep.mubr.bf16.mxu0 %v1248
    %6432 = vmatmul.mubr.bf16.gmra.mrb[0].mxu0 %v1247
    %v6433 = vpop.f32.mrb[0].mxu0
    %v6434 = vadd.f32 %v1162, %v6433
    %v6435 = vpop.f32.mrb[0].mxu0
    %v6436 = vadd.f32 %v1166, %v6435
    %v6437 = vpop.f32.mrb[0].mxu0
    %v6438 = vadd.f32 %v1162, %v6437
    %v6439 = vpop.f32.mrb[0].mxu0
    %v6440 = vadd.f32 %v1166, %v6439
    %6441 = vdwg.mxu0
    %6442 = vmatprep.subr.bf16.mxu0 %v4480
    %6443 = vmatpush1.bf16.msra.mxu0 %v4479
    %6444 = vmatprep.subr.bf16.mxu0 %v4488
    %6445 = vmatpush1.bf16.msra.mxu0 %v4487
    %6446 = vmatprep.subr.bf16.mxu0 %v4496
    %6447 = vmatpush1.bf16.msra.mxu0 %v4495
    %6448 = vmatprep.subr.bf16.mxu0 %v4504
    %6449 = vmatpush1.bf16.msra.mxu0 %v4503
    %6450 = vmatprep.subr.bf16.mxu0 %v4512
    %6451 = vmatpush1.bf16.msra.mxu0 %v4511
    %6452 = vmatprep.subr.bf16.mxu0 %v4520
    %6453 = vmatpush1.bf16.msra.mxu0 %v4519
    %6454 = vmatprep.subr.bf16.mxu0 %v4528
    %6455 = vmatpush1.bf16.msra.mxu0 %v4527
    %6456 = vmatprep.subr.bf16.mxu0 %v4536
    %6457 = vmatpush1.bf16.msra.mxu0 %v4535
    %6458 = vmatprep.subr.bf16.mxu0 %v4544
    %6459 = vmatpush1.bf16.msra.mxu0 %v4543
    %6460 = vmatprep.subr.bf16.mxu0 %v4552
    %6461 = vmatpush1.bf16.msra.mxu0 %v4551
    %6462 = vmatprep.subr.bf16.mxu0 %v4560
    %6463 = vmatpush1.bf16.msra.mxu0 %v4559
    %6464 = vmatprep.subr.bf16.mxu0 %v4568
    %6465 = vmatpush1.bf16.msra.mxu0 %v4567
    %6466 = vmatprep.subr.bf16.mxu0 %v4576
    %6467 = vmatpush1.bf16.msra.mxu0 %v4575
    %6468 = vmatprep.subr.bf16.mxu0 %v4584
    %6469 = vmatpush1.bf16.msra.mxu0 %v4583
    %6470 = vmatprep.subr.bf16.mxu0 %v4592
    %6471 = vmatpush1.bf16.msra.mxu0 %v4591
    %6472 = vmatprep.subr.bf16.mxu0 %v4600
    %6473 = vmatpush1.bf16.msra.mxu0 %v4599
    %6474 = vmatprep.mubr.bf16.mxu0 %v1250
    %6475 = vmatmul.mubr.bf16.gmra.mrb[0].mxu0 %v1249
    %v6476 = vpop.f32.mrb[0].mxu0
    %v6477 = vadd.f32 %v6434, %v6476
    %v6478 = vpop.f32.mrb[0].mxu0
    %v6479 = vadd.f32 %v6436, %v6478
    %v6480 = vpop.f32.mrb[0].mxu0
    %v6481 = vadd.f32 %v6438, %v6480
    %v6482 = vpop.f32.mrb[0].mxu0
    %v6483 = vadd.f32 %v6440, %v6482
    %6484 = vdwg.mxu0
    %6485 = vmatprep.subr.bf16.mxu0 %v4608
    %6486 = vmatpush1.bf16.msra.mxu0 %v4607
    %6487 = vmatprep.subr.bf16.mxu0 %v4616
    %6488 = vmatpush1.bf16.msra.mxu0 %v4615
    %6489 = vmatprep.subr.bf16.mxu0 %v4624
    %6490 = vmatpush1.bf16.msra.mxu0 %v4623
    %6491 = vmatprep.subr.bf16.mxu0 %v4632
    %6492 = vmatpush1.bf16.msra.mxu0 %v4631
    %6493 = vmatprep.subr.bf16.mxu0 %v4640
    %6494 = vmatpush1.bf16.msra.mxu0 %v4639
    %6495 = vmatprep.subr.bf16.mxu0 %v4648
    %6496 = vmatpush1.bf16.msra.mxu0 %v4647
    %6497 = vmatprep.subr.bf16.mxu0 %v4656
    %6498 = vmatpush1.bf16.msra.mxu0 %v4655
    %6499 = vmatprep.subr.bf16.mxu0 %v4664
    %6500 = vmatpush1.bf16.msra.mxu0 %v4663
    %6501 = vmatprep.subr.bf16.mxu0 %v4672
    %6502 = vmatpush1.bf16.msra.mxu0 %v4671
    %6503 = vmatprep.subr.bf16.mxu0 %v4680
    %6504 = vmatpush1.bf16.msra.mxu0 %v4679
    %6505 = vmatprep.subr.bf16.mxu0 %v4688
    %6506 = vmatpush1.bf16.msra.mxu0 %v4687
    %6507 = vmatprep.subr.bf16.mxu0 %v4696
    %6508 = vmatpush1.bf16.msra.mxu0 %v4695
    %6509 = vmatprep.subr.bf16.mxu0 %v4704
    %6510 = vmatpush1.bf16.msra.mxu0 %v4703
    %6511 = vmatprep.subr.bf16.mxu0 %v4712
    %6512 = vmatpush1.bf16.msra.mxu0 %v4711
    %6513 = vmatprep.subr.bf16.mxu0 %v4720
    %6514 = vmatpush1.bf16.msra.mxu0 %v4719
    %6515 = vmatprep.subr.bf16.mxu0 %v4728
    %6516 = vmatpush1.bf16.msra.mxu0 %v4727
    %6517 = vmatprep.mubr.bf16.mxu0 %v1252
    %6518 = vmatmul.mubr.bf16.gmra.mrb[0].mxu0 %v1251
    %v6519 = vpop.f32.mrb[0].mxu0
    %v6520 = vadd.f32 %v6477, %v6519
    %v6521 = vpop.f32.mrb[0].mxu0
    %v6522 = vadd.f32 %v6479, %v6521
    %v6523 = vpop.f32.mrb[0].mxu0
    %v6524 = vadd.f32 %v6481, %v6523
    %v6525 = vpop.f32.mrb[0].mxu0
    %v6526 = vadd.f32 %v6483, %v6525
    %6527 = vdwg.mxu0
    %6528 = vmatprep.subr.bf16.mxu0 %v4736
    %6529 = vmatpush1.bf16.msra.mxu0 %v4735
    %6530 = vmatprep.subr.bf16.mxu0 %v4744
    %6531 = vmatpush1.bf16.msra.mxu0 %v4743
    %6532 = vmatprep.subr.bf16.mxu0 %v4752
    %6533 = vmatpush1.bf16.msra.mxu0 %v4751
    %6534 = vmatprep.subr.bf16.mxu0 %v4760
    %6535 = vmatpush1.bf16.msra.mxu0 %v4759
    %6536 = vmatprep.subr.bf16.mxu0 %v4768
    %6537 = vmatpush1.bf16.msra.mxu0 %v4767
    %6538 = vmatprep.subr.bf16.mxu0 %v4776
    %6539 = vmatpush1.bf16.msra.mxu0 %v4775
    %6540 = vmatprep.subr.bf16.mxu0 %v4784
    %6541 = vmatpush1.bf16.msra.mxu0 %v4783
    %6542 = vmatprep.subr.bf16.mxu0 %v4792
    %6543 = vmatpush1.bf16.msra.mxu0 %v4791
    %6544 = vmatprep.subr.bf16.mxu0 %v4800
    %6545 = vmatpush1.bf16.msra.mxu0 %v4799
    %6546 = vmatprep.subr.bf16.mxu0 %v4808
    %6547 = vmatpush1.bf16.msra.mxu0 %v4807
    %6548 = vmatprep.subr.bf16.mxu0 %v4816
    %6549 = vmatpush1.bf16.msra.mxu0 %v4815
    %6550 = vmatprep.subr.bf16.mxu0 %v4824
    %6551 = vmatpush1.bf16.msra.mxu0 %v4823
    %6552 = vmatprep.subr.bf16.mxu0 %v4832
    %6553 = vmatpush1.bf16.msra.mxu0 %v4831
    %6554 = vmatprep.subr.bf16.mxu0 %v4840
    %6555 = vmatpush1.bf16.msra.mxu0 %v4839
    %6556 = vmatprep.subr.bf16.mxu0 %v4848
    %6557 = vmatpush1.bf16.msra.mxu0 %v4847
    %6558 = vmatprep.subr.bf16.mxu0 %v4856
    %6559 = vmatpush1.bf16.msra.mxu0 %v4855
    %6560 = vmatprep.mubr.bf16.mxu0 %v1254
    %6561 = vmatmul.mubr.bf16.gmra.mrb[0].mxu0 %v1253
    %v6562 = vpop.f32.mrb[0].mxu0
    %v6563 = vadd.f32 %v6520, %v6562
    %v6564 = vpop.f32.mrb[0].mxu0
    %v6565 = vadd.f32 %v6522, %v6564
    %v6566 = vpop.f32.mrb[0].mxu0
    %v6567 = vadd.f32 %v6524, %v6566
    %v6568 = vpop.f32.mrb[0].mxu0
    %v6569 = vadd.f32 %v6526, %v6568
    %6570 = vdwg.mxu0
    %6571 = vmatprep.subr.bf16.mxu0 %v4864
    %6572 = vmatpush1.bf16.msra.mxu0 %v4863
    %6573 = vmatprep.subr.bf16.mxu0 %v4872
    %6574 = vmatpush1.bf16.msra.mxu0 %v4871
    %6575 = vmatprep.subr.bf16.mxu0 %v4880
    %6576 = vmatpush1.bf16.msra.mxu0 %v4879
    %6577 = vmatprep.subr.bf16.mxu0 %v4888
    %6578 = vmatpush1.bf16.msra.mxu0 %v4887
    %6579 = vmatprep.subr.bf16.mxu0 %v4896
    %6580 = vmatpush1.bf16.msra.mxu0 %v4895
    %6581 = vmatprep.subr.bf16.mxu0 %v4904
    %6582 = vmatpush1.bf16.msra.mxu0 %v4903
    %6583 = vmatprep.subr.bf16.mxu0 %v4912
    %6584 = vmatpush1.bf16.msra.mxu0 %v4911
    %6585 = vmatprep.subr.bf16.mxu0 %v4920
    %6586 = vmatpush1.bf16.msra.mxu0 %v4919
    %6587 = vmatprep.subr.bf16.mxu0 %v4928
    %6588 = vmatpush1.bf16.msra.mxu0 %v4927
    %6589 = vmatprep.subr.bf16.mxu0 %v4936
    %6590 = vmatpush1.bf16.msra.mxu0 %v4935
    %6591 = vmatprep.subr.bf16.mxu0 %v4944
    %6592 = vmatpush1.bf16.msra.mxu0 %v4943
    %6593 = vmatprep.subr.bf16.mxu0 %v4952
    %6594 = vmatpush1.bf16.msra.mxu0 %v4951
    %6595 = vmatprep.subr.bf16.mxu0 %v4960
    %6596 = vmatpush1.bf16.msra.mxu0 %v4959
    %6597 = vmatprep.subr.bf16.mxu0 %v4968
    %6598 = vmatpush1.bf16.msra.mxu0 %v4967
    %6599 = vmatprep.subr.bf16.mxu0 %v4976
    %6600 = vmatpush1.bf16.msra.mxu0 %v4975
    %6601 = vmatprep.subr.bf16.mxu0 %v4984
    %6602 = vmatpush1.bf16.msra.mxu0 %v4983
    %6603 = vmatprep.mubr.bf16.mxu0 %v1256
    %6604 = vmatmul.mubr.bf16.gmra.mrb[0].mxu0 %v1255
    %v6605 = vpop.f32.mrb[0].mxu0
    %v6606 = vadd.f32 %v6563, %v6605
    %v6607 = vpop.f32.mrb[0].mxu0
    %v6608 = vadd.f32 %v6565, %v6607
    %v6609 = vpop.f32.mrb[0].mxu0
    %v6610 = vadd.f32 %v6567, %v6609
    %v6611 = vpop.f32.mrb[0].mxu0
    %v6612 = vadd.f32 %v6569, %v6611
    %6613 = vdwg.mxu0
    %6614 = vmatprep.subr.bf16.mxu0 %v4992
    %6615 = vmatpush1.bf16.msra.mxu0 %v4991
    %6616 = vmatprep.subr.bf16.mxu0 %v5000
    %6617 = vmatpush1.bf16.msra.mxu0 %v4999
    %6618 = vmatprep.subr.bf16.mxu0 %v5008
    %6619 = vmatpush1.bf16.msra.mxu0 %v5007
    %6620 = vmatprep.subr.bf16.mxu0 %v5016
    %6621 = vmatpush1.bf16.msra.mxu0 %v5015
    %6622 = vmatprep.subr.bf16.mxu0 %v5024
    %6623 = vmatpush1.bf16.msra.mxu0 %v5023
    %6624 = vmatprep.subr.bf16.mxu0 %v5032
    %6625 = vmatpush1.bf16.msra.mxu0 %v5031
    %6626 = vmatprep.subr.bf16.mxu0 %v5040
    %6627 = vmatpush1.bf16.msra.mxu0 %v5039
    %6628 = vmatprep.subr.bf16.mxu0 %v5048
    %6629 = vmatpush1.bf16.msra.mxu0 %v5047
    %6630 = vmatprep.subr.bf16.mxu0 %v5056
    %6631 = vmatpush1.bf16.msra.mxu0 %v5055
    %6632 = vmatprep.subr.bf16.mxu0 %v5064
    %6633 = vmatpush1.bf16.msra.mxu0 %v5063
    %6634 = vmatprep.subr.bf16.mxu0 %v5072
    %6635 = vmatpush1.bf16.msra.mxu0 %v5071
    %6636 = vmatprep.subr.bf16.mxu0 %v5080
    %6637 = vmatpush1.bf16.msra.mxu0 %v5079
    %6638 = vmatprep.subr.bf16.mxu0 %v5088
    %6639 = vmatpush1.bf16.msra.mxu0 %v5087
    %6640 = vmatprep.subr.bf16.mxu0 %v5096
    %6641 = vmatpush1.bf16.msra.mxu0 %v5095
    %6642 = vmatprep.subr.bf16.mxu0 %v5104
    %6643 = vmatpush1.bf16.msra.mxu0 %v5103
    %6644 = vmatprep.subr.bf16.mxu0 %v5112
    %6645 = vmatpush1.bf16.msra.mxu0 %v5111
    %6646 = vmatprep.mubr.bf16.mxu0 %v1258
    %6647 = vmatmul.mubr.bf16.gmra.mrb[0].mxu0 %v1257
    %v6648 = vpop.f32.mrb[0].mxu0
    %v6649 = vadd.f32 %v6606, %v6648
    %v6650 = vpop.f32.mrb[0].mxu0
    %v6651 = vadd.f32 %v6608, %v6650
    %v6652 = vpop.f32.mrb[0].mxu0
    %v6653 = vadd.f32 %v6610, %v6652
    %v6654 = vpop.f32.mrb[0].mxu0
    %v6655 = vadd.f32 %v6612, %v6654
    %6656 = vdwg.mxu0
    %6657 = vmatprep.subr.bf16.mxu0 %v5120
    %6658 = vmatpush1.bf16.msra.mxu0 %v5119
    %6659 = vmatprep.subr.bf16.mxu0 %v5128
    %6660 = vmatpush1.bf16.msra.mxu0 %v5127
    %6661 = vmatprep.subr.bf16.mxu0 %v5136
    %6662 = vmatpush1.bf16.msra.mxu0 %v5135
    %6663 = vmatprep.subr.bf16.mxu0 %v5144
    %6664 = vmatpush1.bf16.msra.mxu0 %v5143
    %6665 = vmatprep.subr.bf16.mxu0 %v5152
    %6666 = vmatpush1.bf16.msra.mxu0 %v5151
    %6667 = vmatprep.subr.bf16.mxu0 %v5160
    %6668 = vmatpush1.bf16.msra.mxu0 %v5159
    %6669 = vmatprep.subr.bf16.mxu0 %v5168
    %6670 = vmatpush1.bf16.msra.mxu0 %v5167
    %6671 = vmatprep.subr.bf16.mxu0 %v5176
    %6672 = vmatpush1.bf16.msra.mxu0 %v5175
    %6673 = vmatprep.subr.bf16.mxu0 %v5184
    %6674 = vmatpush1.bf16.msra.mxu0 %v5183
    %6675 = vmatprep.subr.bf16.mxu0 %v5192
    %6676 = vmatpush1.bf16.msra.mxu0 %v5191
    %6677 = vmatprep.subr.bf16.mxu0 %v5200
    %6678 = vmatpush1.bf16.msra.mxu0 %v5199
    %6679 = vmatprep.subr.bf16.mxu0 %v5208
    %6680 = vmatpush1.bf16.msra.mxu0 %v5207
    %6681 = vmatprep.subr.bf16.mxu0 %v5216
    %6682 = vmatpush1.bf16.msra.mxu0 %v5215
    %6683 = vmatprep.subr.bf16.mxu0 %v5224
    %6684 = vmatpush1.bf16.msra.mxu0 %v5223
    %6685 = vmatprep.subr.bf16.mxu0 %v5232
    %6686 = vmatpush1.bf16.msra.mxu0 %v5231
    %6687 = vmatprep.subr.bf16.mxu0 %v5240
    %6688 = vmatpush1.bf16.msra.mxu0 %v5239
    %6689 = vmatprep.mubr.bf16.mxu0 %v1260
    %6690 = vmatmul.mubr.bf16.gmra.mrb[0].mxu0 %v1259
    %v6691 = vpop.f32.mrb[0].mxu0
    %v6692 = vadd.f32 %v6649, %v6691
    %v6693 = vpop.f32.mrb[0].mxu0
    %v6694 = vadd.f32 %v6651, %v6693
    %v6695 = vpop.f32.mrb[0].mxu0
    %v6696 = vadd.f32 %v6653, %v6695
    %v6697 = vpop.f32.mrb[0].mxu0
    %v6698 = vadd.f32 %v6655, %v6697
    %6699 = vdwg.mxu0
    %6700 = vmatprep.subr.bf16.mxu0 %v5248
    %6701 = vmatpush1.bf16.msra.mxu0 %v5247
    %6702 = vmatprep.subr.bf16.mxu0 %v5256
    %6703 = vmatpush1.bf16.msra.mxu0 %v5255
    %6704 = vmatprep.subr.bf16.mxu0 %v5264
    %6705 = vmatpush1.bf16.msra.mxu0 %v5263
    %6706 = vmatprep.subr.bf16.mxu0 %v5272
    %6707 = vmatpush1.bf16.msra.mxu0 %v5271
    %6708 = vmatprep.subr.bf16.mxu0 %v5280
    %6709 = vmatpush1.bf16.msra.mxu0 %v5279
    %6710 = vmatprep.subr.bf16.mxu0 %v5288
    %6711 = vmatpush1.bf16.msra.mxu0 %v5287
    %6712 = vmatprep.subr.bf16.mxu0 %v5296
    %6713 = vmatpush1.bf16.msra.mxu0 %v5295
    %6714 = vmatprep.subr.bf16.mxu0 %v5304
    %6715 = vmatpush1.bf16.msra.mxu0 %v5303
    %6716 = vmatprep.subr.bf16.mxu0 %v5312
    %6717 = vmatpush1.bf16.msra.mxu0 %v5311
    %6718 = vmatprep.subr.bf16.mxu0 %v5320
    %6719 = vmatpush1.bf16.msra.mxu0 %v5319
    %6720 = vmatprep.subr.bf16.mxu0 %v5328
    %6721 = vmatpush1.bf16.msra.mxu0 %v5327
    %6722 = vmatprep.subr.bf16.mxu0 %v5336
    %6723 = vmatpush1.bf16.msra.mxu0 %v5335
    %6724 = vmatprep.subr.bf16.mxu0 %v5344
    %6725 = vmatpush1.bf16.msra.mxu0 %v5343
    %6726 = vmatprep.subr.bf16.mxu0 %v5352
    %6727 = vmatpush1.bf16.msra.mxu0 %v5351
    %6728 = vmatprep.subr.bf16.mxu0 %v5360
    %6729 = vmatpush1.bf16.msra.mxu0 %v5359
    %6730 = vmatprep.subr.bf16.mxu0 %v5368
    %6731 = vmatpush1.bf16.msra.mxu0 %v5367
    %6732 = vmatprep.mubr.bf16.mxu0 %v1262
    %6733 = vmatmul.mubr.bf16.gmra.mrb[0].mxu0 %v1261
    %v6734 = vpop.f32.mrb[0].mxu0
    %v6735 = vadd.f32 %v6692, %v6734
    %v6736 = vpop.f32.mrb[0].mxu0
    %v6737 = vadd.f32 %v6694, %v6736
    %v6738 = vpop.f32.mrb[0].mxu0
    %v6739 = vadd.f32 %v6696, %v6738
    %v6740 = vpop.f32.mrb[0].mxu0
    %v6741 = vadd.f32 %v6698, %v6740
    %6742 = vdwg.mxu0
    %6743 = vmatprep.subr.bf16.mxu0 %v4354
    %6744 = vmatpush1.bf16.msra.mxu0 %v4353
    %6745 = vmatprep.subr.bf16.mxu0 %v4362
    %6746 = vmatpush1.bf16.msra.mxu0 %v4361
    %6747 = vmatprep.subr.bf16.mxu0 %v4370
    %6748 = vmatpush1.bf16.msra.mxu0 %v4369
    %6749 = vmatprep.subr.bf16.mxu0 %v4378
    %6750 = vmatpush1.bf16.msra.mxu0 %v4377
    %6751 = vmatprep.subr.bf16.mxu0 %v4386
    %6752 = vmatpush1.bf16.msra.mxu0 %v4385
    %6753 = vmatprep.subr.bf16.mxu0 %v4394
    %6754 = vmatpush1.bf16.msra.mxu0 %v4393
    %6755 = vmatprep.subr.bf16.mxu0 %v4402
    %6756 = vmatpush1.bf16.msra.mxu0 %v4401
    %6757 = vmatprep.subr.bf16.mxu0 %v4410
    %6758 = vmatpush1.bf16.msra.mxu0 %v4409
    %6759 = vmatprep.subr.bf16.mxu0 %v4418
    %6760 = vmatpush1.bf16.msra.mxu0 %v4417
    %6761 = vmatprep.subr.bf16.mxu0 %v4426
    %6762 = vmatpush1.bf16.msra.mxu0 %v4425
    %6763 = vmatprep.subr.bf16.mxu0 %v4434
    %6764 = vmatpush1.bf16.msra.mxu0 %v4433
    %6765 = vmatprep.subr.bf16.mxu0 %v4442
    %6766 = vmatpush1.bf16.msra.mxu0 %v4441
    %6767 = vmatprep.subr.bf16.mxu0 %v4450
    %6768 = vmatpush1.bf16.msra.mxu0 %v4449
    %6769 = vmatprep.subr.bf16.mxu0 %v4458
    %6770 = vmatpush1.bf16.msra.mxu0 %v4457
    %6771 = vmatprep.subr.bf16.mxu0 %v4466
    %6772 = vmatpush1.bf16.msra.mxu0 %v4465
    %6773 = vmatprep.subr.bf16.mxu0 %v4474
    %6774 = vmatpush1.bf16.msra.mxu0 %v4473
    %6775 = vmatprep.mubr.bf16.mxu0 %v1248
    %6776 = vmatmul.mubr.bf16.gmra.mrb[0].mxu0 %v1247
    %v6777 = vpop.f32.mrb[0].mxu0
    %v6778 = vadd.f32 %v1170, %v6777
    %v6779 = vpop.f32.mrb[0].mxu0
    %v6780 = vadd.f32 %v1174, %v6779
    %v6781 = vpop.f32.mrb[0].mxu0
    %v6782 = vadd.f32 %v1170, %v6781
    %v6783 = vpop.f32.mrb[0].mxu0
    %v6784 = vadd.f32 %v1174, %v6783
    %6785 = vdwg.mxu0
    %6786 = vmatprep.subr.bf16.mxu0 %v4482
    %6787 = vmatpush1.bf16.msra.mxu0 %v4481
    %6788 = vmatprep.subr.bf16.mxu0 %v4490
    %6789 = vmatpush1.bf16.msra.mxu0 %v4489
    %6790 = vmatprep.subr.bf16.mxu0 %v4498
    %6791 = vmatpush1.bf16.msra.mxu0 %v4497
    %6792 = vmatprep.subr.bf16.mxu0 %v4506
    %6793 = vmatpush1.bf16.msra.mxu0 %v4505
    %6794 = vmatprep.subr.bf16.mxu0 %v4514
    %6795 = vmatpush1.bf16.msra.mxu0 %v4513
    %6796 = vmatprep.subr.bf16.mxu0 %v4522
    %6797 = vmatpush1.bf16.msra.mxu0 %v4521
    %6798 = vmatprep.subr.bf16.mxu0 %v4530
    %6799 = vmatpush1.bf16.msra.mxu0 %v4529
    %6800 = vmatprep.subr.bf16.mxu0 %v4538
    %6801 = vmatpush1.bf16.msra.mxu0 %v4537
    %6802 = vmatprep.subr.bf16.mxu0 %v4546
    %6803 = vmatpush1.bf16.msra.mxu0 %v4545
    %6804 = vmatprep.subr.bf16.mxu0 %v4554
    %6805 = vmatpush1.bf16.msra.mxu0 %v4553
    %6806 = vmatprep.subr.bf16.mxu0 %v4562
    %6807 = vmatpush1.bf16.msra.mxu0 %v4561
    %6808 = vmatprep.subr.bf16.mxu0 %v4570
    %6809 = vmatpush1.bf16.msra.mxu0 %v4569
    %6810 = vmatprep.subr.bf16.mxu0 %v4578
    %6811 = vmatpush1.bf16.msra.mxu0 %v4577
    %6812 = vmatprep.subr.bf16.mxu0 %v4586
    %6813 = vmatpush1.bf16.msra.mxu0 %v4585
    %6814 = vmatprep.subr.bf16.mxu0 %v4594
    %6815 = vmatpush1.bf16.msra.mxu0 %v4593
    %6816 = vmatprep.subr.bf16.mxu0 %v4602
    %6817 = vmatpush1.bf16.msra.mxu0 %v4601
    %6818 = vmatprep.mubr.bf16.mxu0 %v1250
    %6819 = vmatmul.mubr.bf16.gmra.mrb[0].mxu0 %v1249
    %v6820 = vpop.f32.mrb[0].mxu0
    %v6821 = vadd.f32 %v6778, %v6820
    %v6822 = vpop.f32.mrb[0].mxu0
    %v6823 = vadd.f32 %v6780, %v6822
    %v6824 = vpop.f32.mrb[0].mxu0
    %v6825 = vadd.f32 %v6782, %v6824
    %v6826 = vpop.f32.mrb[0].mxu0
    %v6827 = vadd.f32 %v6784, %v6826
    %6828 = vdwg.mxu0
    %6829 = vmatprep.subr.bf16.mxu0 %v4610
    %6830 = vmatpush1.bf16.msra.mxu0 %v4609
    %6831 = vmatprep.subr.bf16.mxu0 %v4618
    %6832 = vmatpush1.bf16.msra.mxu0 %v4617
    %6833 = vmatprep.subr.bf16.mxu0 %v4626
    %6834 = vmatpush1.bf16.msra.mxu0 %v4625
    %6835 = vmatprep.subr.bf16.mxu0 %v4634
    %6836 = vmatpush1.bf16.msra.mxu0 %v4633
    %6837 = vmatprep.subr.bf16.mxu0 %v4642
    %6838 = vmatpush1.bf16.msra.mxu0 %v4641
    %6839 = vmatprep.subr.bf16.mxu0 %v4650
    %6840 = vmatpush1.bf16.msra.mxu0 %v4649
    %6841 = vmatprep.subr.bf16.mxu0 %v4658
    %6842 = vmatpush1.bf16.msra.mxu0 %v4657
    %6843 = vmatprep.subr.bf16.mxu0 %v4666
    %6844 = vmatpush1.bf16.msra.mxu0 %v4665
    %6845 = vmatprep.subr.bf16.mxu0 %v4674
    %6846 = vmatpush1.bf16.msra.mxu0 %v4673
    %6847 = vmatprep.subr.bf16.mxu0 %v4682
    %6848 = vmatpush1.bf16.msra.mxu0 %v4681
    %6849 = vmatprep.subr.bf16.mxu0 %v4690
    %6850 = vmatpush1.bf16.msra.mxu0 %v4689
    %6851 = vmatprep.subr.bf16.mxu0 %v4698
    %6852 = vmatpush1.bf16.msra.mxu0 %v4697
    %6853 = vmatprep.subr.bf16.mxu0 %v4706
    %6854 = vmatpush1.bf16.msra.mxu0 %v4705
    %6855 = vmatprep.subr.bf16.mxu0 %v4714
    %6856 = vmatpush1.bf16.msra.mxu0 %v4713
    %6857 = vmatprep.subr.bf16.mxu0 %v4722
    %6858 = vmatpush1.bf16.msra.mxu0 %v4721
    %6859 = vmatprep.subr.bf16.mxu0 %v4730
    %6860 = vmatpush1.bf16.msra.mxu0 %v4729
    %6861 = vmatprep.mubr.bf16.mxu0 %v1252
    %6862 = vmatmul.mubr.bf16.gmra.mrb[0].mxu0 %v1251
    %v6863 = vpop.f32.mrb[0].mxu0
    %v6864 = vadd.f32 %v6821, %v6863
    %v6865 = vpop.f32.mrb[0].mxu0
    %v6866 = vadd.f32 %v6823, %v6865
    %v6867 = vpop.f32.mrb[0].mxu0
    %v6868 = vadd.f32 %v6825, %v6867
    %v6869 = vpop.f32.mrb[0].mxu0
    %v6870 = vadd.f32 %v6827, %v6869
    %6871 = vdwg.mxu0
    %6872 = vmatprep.subr.bf16.mxu0 %v4738
    %6873 = vmatpush1.bf16.msra.mxu0 %v4737
    %6874 = vmatprep.subr.bf16.mxu0 %v4746
    %6875 = vmatpush1.bf16.msra.mxu0 %v4745
    %6876 = vmatprep.subr.bf16.mxu0 %v4754
    %6877 = vmatpush1.bf16.msra.mxu0 %v4753
    %6878 = vmatprep.subr.bf16.mxu0 %v4762
    %6879 = vmatpush1.bf16.msra.mxu0 %v4761
    %6880 = vmatprep.subr.bf16.mxu0 %v4770
    %6881 = vmatpush1.bf16.msra.mxu0 %v4769
    %6882 = vmatprep.subr.bf16.mxu0 %v4778
    %6883 = vmatpush1.bf16.msra.mxu0 %v4777
    %6884 = vmatprep.subr.bf16.mxu0 %v4786
    %6885 = vmatpush1.bf16.msra.mxu0 %v4785
    %6886 = vmatprep.subr.bf16.mxu0 %v4794
    %6887 = vmatpush1.bf16.msra.mxu0 %v4793
    %6888 = vmatprep.subr.bf16.mxu0 %v4802
    %6889 = vmatpush1.bf16.msra.mxu0 %v4801
    %6890 = vmatprep.subr.bf16.mxu0 %v4810
    %6891 = vmatpush1.bf16.msra.mxu0 %v4809
    %6892 = vmatprep.subr.bf16.mxu0 %v4818
    %6893 = vmatpush1.bf16.msra.mxu0 %v4817
    %6894 = vmatprep.subr.bf16.mxu0 %v4826
    %6895 = vmatpush1.bf16.msra.mxu0 %v4825
    %6896 = vmatprep.subr.bf16.mxu0 %v4834
    %6897 = vmatpush1.bf16.msra.mxu0 %v4833
    %6898 = vmatprep.subr.bf16.mxu0 %v4842
    %6899 = vmatpush1.bf16.msra.mxu0 %v4841
    %6900 = vmatprep.subr.bf16.mxu0 %v4850
    %6901 = vmatpush1.bf16.msra.mxu0 %v4849
    %6902 = vmatprep.subr.bf16.mxu0 %v4858
    %6903 = vmatpush1.bf16.msra.mxu0 %v4857
    %6904 = vmatprep.mubr.bf16.mxu0 %v1254
    %6905 = vmatmul.mubr.bf16.gmra.mrb[0].mxu0 %v1253
    %v6906 = vpop.f32.mrb[0].mxu0
    %v6907 = vadd.f32 %v6864, %v6906
    %v6908 = vpop.f32.mrb[0].mxu0
    %v6909 = vadd.f32 %v6866, %v6908
    %v6910 = vpop.f32.mrb[0].mxu0
    %v6911 = vadd.f32 %v6868, %v6910
    %v6912 = vpop.f32.mrb[0].mxu0
    %v6913 = vadd.f32 %v6870, %v6912
    %6914 = vdwg.mxu0
    %6915 = vmatprep.subr.bf16.mxu0 %v4866
    %6916 = vmatpush1.bf16.msra.mxu0 %v4865
    %6917 = vmatprep.subr.bf16.mxu0 %v4874
    %6918 = vmatpush1.bf16.msra.mxu0 %v4873
    %6919 = vmatprep.subr.bf16.mxu0 %v4882
    %6920 = vmatpush1.bf16.msra.mxu0 %v4881
    %6921 = vmatprep.subr.bf16.mxu0 %v4890
    %6922 = vmatpush1.bf16.msra.mxu0 %v4889
    %6923 = vmatprep.subr.bf16.mxu0 %v4898
    %6924 = vmatpush1.bf16.msra.mxu0 %v4897
    %6925 = vmatprep.subr.bf16.mxu0 %v4906
    %6926 = vmatpush1.bf16.msra.mxu0 %v4905
    %6927 = vmatprep.subr.bf16.mxu0 %v4914
    %6928 = vmatpush1.bf16.msra.mxu0 %v4913
    %6929 = vmatprep.subr.bf16.mxu0 %v4922
    %6930 = vmatpush1.bf16.msra.mxu0 %v4921
    %6931 = vmatprep.subr.bf16.mxu0 %v4930
    %6932 = vmatpush1.bf16.msra.mxu0 %v4929
    %6933 = vmatprep.subr.bf16.mxu0 %v4938
    %6934 = vmatpush1.bf16.msra.mxu0 %v4937
    %6935 = vmatprep.subr.bf16.mxu0 %v4946
    %6936 = vmatpush1.bf16.msra.mxu0 %v4945
    %6937 = vmatprep.subr.bf16.mxu0 %v4954
    %6938 = vmatpush1.bf16.msra.mxu0 %v4953
    %6939 = vmatprep.subr.bf16.mxu0 %v4962
    %6940 = vmatpush1.bf16.msra.mxu0 %v4961
    %6941 = vmatprep.subr.bf16.mxu0 %v4970
    %6942 = vmatpush1.bf16.msra.mxu0 %v4969
    %6943 = vmatprep.subr.bf16.mxu0 %v4978
    %6944 = vmatpush1.bf16.msra.mxu0 %v4977
    %6945 = vmatprep.subr.bf16.mxu0 %v4986
    %6946 = vmatpush1.bf16.msra.mxu0 %v4985
    %6947 = vmatprep.mubr.bf16.mxu0 %v1256
    %6948 = vmatmul.mubr.bf16.gmra.mrb[0].mxu0 %v1255
    %v6949 = vpop.f32.mrb[0].mxu0
    %v6950 = vadd.f32 %v6907, %v6949
    %v6951 = vpop.f32.mrb[0].mxu0
    %v6952 = vadd.f32 %v6909, %v6951
    %v6953 = vpop.f32.mrb[0].mxu0
    %v6954 = vadd.f32 %v6911, %v6953
    %v6955 = vpop.f32.mrb[0].mxu0
    %v6956 = vadd.f32 %v6913, %v6955
    %6957 = vdwg.mxu0
    %6958 = vmatprep.subr.bf16.mxu0 %v4994
    %6959 = vmatpush1.bf16.msra.mxu0 %v4993
    %6960 = vmatprep.subr.bf16.mxu0 %v5002
    %6961 = vmatpush1.bf16.msra.mxu0 %v5001
    %6962 = vmatprep.subr.bf16.mxu0 %v5010
    %6963 = vmatpush1.bf16.msra.mxu0 %v5009
    %6964 = vmatprep.subr.bf16.mxu0 %v5018
    %6965 = vmatpush1.bf16.msra.mxu0 %v5017
    %6966 = vmatprep.subr.bf16.mxu0 %v5026
    %6967 = vmatpush1.bf16.msra.mxu0 %v5025
    %6968 = vmatprep.subr.bf16.mxu0 %v5034
    %6969 = vmatpush1.bf16.msra.mxu0 %v5033
    %6970 = vmatprep.subr.bf16.mxu0 %v5042
    %6971 = vmatpush1.bf16.msra.mxu0 %v5041
    %6972 = vmatprep.subr.bf16.mxu0 %v5050
    %6973 = vmatpush1.bf16.msra.mxu0 %v5049
    %6974 = vmatprep.subr.bf16.mxu0 %v5058
    %6975 = vmatpush1.bf16.msra.mxu0 %v5057
    %6976 = vmatprep.subr.bf16.mxu0 %v5066
    %6977 = vmatpush1.bf16.msra.mxu0 %v5065
    %6978 = vmatprep.subr.bf16.mxu0 %v5074
    %6979 = vmatpush1.bf16.msra.mxu0 %v5073
    %6980 = vmatprep.subr.bf16.mxu0 %v5082
    %6981 = vmatpush1.bf16.msra.mxu0 %v5081
    %6982 = vmatprep.subr.bf16.mxu0 %v5090
    %6983 = vmatpush1.bf16.msra.mxu0 %v5089
    %6984 = vmatprep.subr.bf16.mxu0 %v5098
    %6985 = vmatpush1.bf16.msra.mxu0 %v5097
    %6986 = vmatprep.subr.bf16.mxu0 %v5106
    %6987 = vmatpush1.bf16.msra.mxu0 %v5105
    %6988 = vmatprep.subr.bf16.mxu0 %v5114
    %6989 = vmatpush1.bf16.msra.mxu0 %v5113
    %6990 = vmatprep.mubr.bf16.mxu0 %v1258
    %6991 = vmatmul.mubr.bf16.gmra.mrb[0].mxu0 %v1257
    %v6992 = vpop.f32.mrb[0].mxu0
    %v6993 = vadd.f32 %v6950, %v6992
    %v6994 = vpop.f32.mrb[0].mxu0
    %v6995 = vadd.f32 %v6952, %v6994
    %v6996 = vpop.f32.mrb[0].mxu0
    %v6997 = vadd.f32 %v6954, %v6996
    %v6998 = vpop.f32.mrb[0].mxu0
    %v6999 = vadd.f32 %v6956, %v6998
    %7000 = vdwg.mxu0
    %7001 = vmatprep.subr.bf16.mxu0 %v5122
    %7002 = vmatpush1.bf16.msra.mxu0 %v5121
    %7003 = vmatprep.subr.bf16.mxu0 %v5130
    %7004 = vmatpush1.bf16.msra.mxu0 %v5129
    %7005 = vmatprep.subr.bf16.mxu0 %v5138
    %7006 = vmatpush1.bf16.msra.mxu0 %v5137
    %7007 = vmatprep.subr.bf16.mxu0 %v5146
    %7008 = vmatpush1.bf16.msra.mxu0 %v5145
    %7009 = vmatprep.subr.bf16.mxu0 %v5154
    %7010 = vmatpush1.bf16.msra.mxu0 %v5153
    %7011 = vmatprep.subr.bf16.mxu0 %v5162
    %7012 = vmatpush1.bf16.msra.mxu0 %v5161
    %7013 = vmatprep.subr.bf16.mxu0 %v5170
    %7014 = vmatpush1.bf16.msra.mxu0 %v5169
    %7015 = vmatprep.subr.bf16.mxu0 %v5178
    %7016 = vmatpush1.bf16.msra.mxu0 %v5177
    %7017 = vmatprep.subr.bf16.mxu0 %v5186
    %7018 = vmatpush1.bf16.msra.mxu0 %v5185
    %7019 = vmatprep.subr.bf16.mxu0 %v5194
    %7020 = vmatpush1.bf16.msra.mxu0 %v5193
    %7021 = vmatprep.subr.bf16.mxu0 %v5202
    %7022 = vmatpush1.bf16.msra.mxu0 %v5201
    %7023 = vmatprep.subr.bf16.mxu0 %v5210
    %7024 = vmatpush1.bf16.msra.mxu0 %v5209
    %7025 = vmatprep.subr.bf16.mxu0 %v5218
    %7026 = vmatpush1.bf16.msra.mxu0 %v5217
    %7027 = vmatprep.subr.bf16.mxu0 %v5226
    %7028 = vmatpush1.bf16.msra.mxu0 %v5225
    %7029 = vmatprep.subr.bf16.mxu0 %v5234
    %7030 = vmatpush1.bf16.msra.mxu0 %v5233
    %7031 = vmatprep.subr.bf16.mxu0 %v5242
    %7032 = vmatpush1.bf16.msra.mxu0 %v5241
    %7033 = vmatprep.mubr.bf16.mxu0 %v1260
    %7034 = vmatmul.mubr.bf16.gmra.mrb[0].mxu0 %v1259
    %v7035 = vpop.f32.mrb[0].mxu0
    %v7036 = vadd.f32 %v6993, %v7035
    %v7037 = vpop.f32.mrb[0].mxu0
    %v7038 = vadd.f32 %v6995, %v7037
    %v7039 = vpop.f32.mrb[0].mxu0
    %v7040 = vadd.f32 %v6997, %v7039
    %v7041 = vpop.f32.mrb[0].mxu0
    %v7042 = vadd.f32 %v6999, %v7041
    %7043 = vdwg.mxu0
    %7044 = vmatprep.subr.bf16.mxu0 %v5250
    %7045 = vmatpush1.bf16.msra.mxu0 %v5249
    %7046 = vmatprep.subr.bf16.mxu0 %v5258
    %7047 = vmatpush1.bf16.msra.mxu0 %v5257
    %7048 = vmatprep.subr.bf16.mxu0 %v5266
    %7049 = vmatpush1.bf16.msra.mxu0 %v5265
    %7050 = vmatprep.subr.bf16.mxu0 %v5274
    %7051 = vmatpush1.bf16.msra.mxu0 %v5273
    %7052 = vmatprep.subr.bf16.mxu0 %v5282
    %7053 = vmatpush1.bf16.msra.mxu0 %v5281
    %7054 = vmatprep.subr.bf16.mxu0 %v5290
    %7055 = vmatpush1.bf16.msra.mxu0 %v5289
    %7056 = vmatprep.subr.bf16.mxu0 %v5298
    %7057 = vmatpush1.bf16.msra.mxu0 %v5297
    %7058 = vmatprep.subr.bf16.mxu0 %v5306
    %7059 = vmatpush1.bf16.msra.mxu0 %v5305
    %7060 = vmatprep.subr.bf16.mxu0 %v5314
    %7061 = vmatpush1.bf16.msra.mxu0 %v5313
    %7062 = vmatprep.subr.bf16.mxu0 %v5322
    %7063 = vmatpush1.bf16.msra.mxu0 %v5321
    %7064 = vmatprep.subr.bf16.mxu0 %v5330
    %7065 = vmatpush1.bf16.msra.mxu0 %v5329
    %7066 = vmatprep.subr.bf16.mxu0 %v5338
    %7067 = vmatpush1.bf16.msra.mxu0 %v5337
    %7068 = vmatprep.subr.bf16.mxu0 %v5346
    %7069 = vmatpush1.bf16.msra.mxu0 %v5345
    %7070 = vmatprep.subr.bf16.mxu0 %v5354
    %7071 = vmatpush1.bf16.msra.mxu0 %v5353
    %7072 = vmatprep.subr.bf16.mxu0 %v5362
    %7073 = vmatpush1.bf16.msra.mxu0 %v5361
    %7074 = vmatprep.subr.bf16.mxu0 %v5370
    %7075 = vmatpush1.bf16.msra.mxu0 %v5369
    %7076 = vmatprep.mubr.bf16.mxu0 %v1262
    %7077 = vmatmul.mubr.bf16.gmra.mrb[0].mxu0 %v1261
    %v7078 = vpop.f32.mrb[0].mxu0
    %v7079 = vadd.f32 %v7036, %v7078
    %v7080 = vpop.f32.mrb[0].mxu0
    %v7081 = vadd.f32 %v7038, %v7080
    %v7082 = vpop.f32.mrb[0].mxu0
    %v7083 = vadd.f32 %v7040, %v7082
    %v7084 = vpop.f32.mrb[0].mxu0
    %v7085 = vadd.f32 %v7042, %v7084
    %7086 = vdwg.mxu0
    %7087 = vmatprep.subr.bf16.mxu0 %v4356
    %7088 = vmatpush1.bf16.msra.mxu0 %v4355
    %7089 = vmatprep.subr.bf16.mxu0 %v4364
    %7090 = vmatpush1.bf16.msra.mxu0 %v4363
    %7091 = vmatprep.subr.bf16.mxu0 %v4372
    %7092 = vmatpush1.bf16.msra.mxu0 %v4371
    %7093 = vmatprep.subr.bf16.mxu0 %v4380
    %7094 = vmatpush1.bf16.msra.mxu0 %v4379
    %7095 = vmatprep.subr.bf16.mxu0 %v4388
    %7096 = vmatpush1.bf16.msra.mxu0 %v4387
    %7097 = vmatprep.subr.bf16.mxu0 %v4396
    %7098 = vmatpush1.bf16.msra.mxu0 %v4395
    %7099 = vmatprep.subr.bf16.mxu0 %v4404
    %7100 = vmatpush1.bf16.msra.mxu0 %v4403
    %7101 = vmatprep.subr.bf16.mxu0 %v4412
    %7102 = vmatpush1.bf16.msra.mxu0 %v4411
    %7103 = vmatprep.subr.bf16.mxu0 %v4420
    %7104 = vmatpush1.bf16.msra.mxu0 %v4419
    %7105 = vmatprep.subr.bf16.mxu0 %v4428
    %7106 = vmatpush1.bf16.msra.mxu0 %v4427
    %7107 = vmatprep.subr.bf16.mxu0 %v4436
    %7108 = vmatpush1.bf16.msra.mxu0 %v4435
    %7109 = vmatprep.subr.bf16.mxu0 %v4444
    %7110 = vmatpush1.bf16.msra.mxu0 %v4443
    %7111 = vmatprep.subr.bf16.mxu0 %v4452
    %7112 = vmatpush1.bf16.msra.mxu0 %v4451
    %7113 = vmatprep.subr.bf16.mxu0 %v4460
    %7114 = vmatpush1.bf16.msra.mxu0 %v4459
    %7115 = vmatprep.subr.bf16.mxu0 %v4468
    %7116 = vmatpush1.bf16.msra.mxu0 %v4467
    %7117 = vmatprep.subr.bf16.mxu0 %v4476
    %7118 = vmatpush1.bf16.msra.mxu0 %v4475
    %7119 = vmatprep.mubr.bf16.mxu0 %v1248
    %7120 = vmatmul.mubr.bf16.gmra.mrb[0].mxu0 %v1247
    %v7121 = vpop.f32.mrb[0].mxu0
    %v7122 = vadd.f32 %v1178, %v7121
    %v7123 = vpop.f32.mrb[0].mxu0
    %v7124 = vadd.f32 %v1182, %v7123
    %v7125 = vpop.f32.mrb[0].mxu0
    %v7126 = vadd.f32 %v1178, %v7125
    %v7127 = vpop.f32.mrb[0].mxu0
    %v7128 = vadd.f32 %v1182, %v7127
    %7129 = vdwg.mxu0
    %7130 = vmatprep.subr.bf16.mxu0 %v4484
    %7131 = vmatpush1.bf16.msra.mxu0 %v4483
    %7132 = vmatprep.subr.bf16.mxu0 %v4492
    %7133 = vmatpush1.bf16.msra.mxu0 %v4491
    %7134 = vmatprep.subr.bf16.mxu0 %v4500
    %7135 = vmatpush1.bf16.msra.mxu0 %v4499
    %7136 = vmatprep.subr.bf16.mxu0 %v4508
    %7137 = vmatpush1.bf16.msra.mxu0 %v4507
    %7138 = vmatprep.subr.bf16.mxu0 %v4516
    %7139 = vmatpush1.bf16.msra.mxu0 %v4515
    %7140 = vmatprep.subr.bf16.mxu0 %v4524
    %7141 = vmatpush1.bf16.msra.mxu0 %v4523
    %7142 = vmatprep.subr.bf16.mxu0 %v4532
    %7143 = vmatpush1.bf16.msra.mxu0 %v4531
    %7144 = vmatprep.subr.bf16.mxu0 %v4540
    %7145 = vmatpush1.bf16.msra.mxu0 %v4539
    %7146 = vmatprep.subr.bf16.mxu0 %v4548
    %7147 = vmatpush1.bf16.msra.mxu0 %v4547
    %7148 = vmatprep.subr.bf16.mxu0 %v4556
    %7149 = vmatpush1.bf16.msra.mxu0 %v4555
    %7150 = vmatprep.subr.bf16.mxu0 %v4564
    %7151 = vmatpush1.bf16.msra.mxu0 %v4563
    %7152 = vmatprep.subr.bf16.mxu0 %v4572
    %7153 = vmatpush1.bf16.msra.mxu0 %v4571
    %7154 = vmatprep.subr.bf16.mxu0 %v4580
    %7155 = vmatpush1.bf16.msra.mxu0 %v4579
    %7156 = vmatprep.subr.bf16.mxu0 %v4588
    %7157 = vmatpush1.bf16.msra.mxu0 %v4587
    %7158 = vmatprep.subr.bf16.mxu0 %v4596
    %7159 = vmatpush1.bf16.msra.mxu0 %v4595
    %7160 = vmatprep.subr.bf16.mxu0 %v4604
    %7161 = vmatpush1.bf16.msra.mxu0 %v4603
    %7162 = vmatprep.mubr.bf16.mxu0 %v1250
    %7163 = vmatmul.mubr.bf16.gmra.mrb[0].mxu0 %v1249
    %v7164 = vpop.f32.mrb[0].mxu0
    %v7165 = vadd.f32 %v7122, %v7164
    %v7166 = vpop.f32.mrb[0].mxu0
    %v7167 = vadd.f32 %v7124, %v7166
    %v7168 = vpop.f32.mrb[0].mxu0
    %v7169 = vadd.f32 %v7126, %v7168
    %v7170 = vpop.f32.mrb[0].mxu0
    %v7171 = vadd.f32 %v7128, %v7170
    %7172 = vdwg.mxu0
    %7173 = vmatprep.subr.bf16.mxu0 %v4612
    %7174 = vmatpush1.bf16.msra.mxu0 %v4611
    %7175 = vmatprep.subr.bf16.mxu0 %v4620
    %7176 = vmatpush1.bf16.msra.mxu0 %v4619
    %7177 = vmatprep.subr.bf16.mxu0 %v4628
    %7178 = vmatpush1.bf16.msra.mxu0 %v4627
    %7179 = vmatprep.subr.bf16.mxu0 %v4636
    %7180 = vmatpush1.bf16.msra.mxu0 %v4635
    %7181 = vmatprep.subr.bf16.mxu0 %v4644
    %7182 = vmatpush1.bf16.msra.mxu0 %v4643
    %7183 = vmatprep.subr.bf16.mxu0 %v4652
    %7184 = vmatpush1.bf16.msra.mxu0 %v4651
    %7185 = vmatprep.subr.bf16.mxu0 %v4660
    %7186 = vmatpush1.bf16.msra.mxu0 %v4659
    %7187 = vmatprep.subr.bf16.mxu0 %v4668
    %7188 = vmatpush1.bf16.msra.mxu0 %v4667
    %7189 = vmatprep.subr.bf16.mxu0 %v4676
    %7190 = vmatpush1.bf16.msra.mxu0 %v4675
    %7191 = vmatprep.subr.bf16.mxu0 %v4684
    %7192 = vmatpush1.bf16.msra.mxu0 %v4683
    %7193 = vmatprep.subr.bf16.mxu0 %v4692
    %7194 = vmatpush1.bf16.msra.mxu0 %v4691
    %7195 = vmatprep.subr.bf16.mxu0 %v4700
    %7196 = vmatpush1.bf16.msra.mxu0 %v4699
    %7197 = vmatprep.subr.bf16.mxu0 %v4708
    %7198 = vmatpush1.bf16.msra.mxu0 %v4707
    %7199 = vmatprep.subr.bf16.mxu0 %v4716
    %7200 = vmatpush1.bf16.msra.mxu0 %v4715
    %7201 = vmatprep.subr.bf16.mxu0 %v4724
    %7202 = vmatpush1.bf16.msra.mxu0 %v4723
    %7203 = vmatprep.subr.bf16.mxu0 %v4732
    %7204 = vmatpush1.bf16.msra.mxu0 %v4731
    %7205 = vmatprep.mubr.bf16.mxu0 %v1252
    %7206 = vmatmul.mubr.bf16.gmra.mrb[0].mxu0 %v1251
    %v7207 = vpop.f32.mrb[0].mxu0
    %v7208 = vadd.f32 %v7165, %v7207
    %v7209 = vpop.f32.mrb[0].mxu0
    %v7210 = vadd.f32 %v7167, %v7209
    %v7211 = vpop.f32.mrb[0].mxu0
    %v7212 = vadd.f32 %v7169, %v7211
    %v7213 = vpop.f32.mrb[0].mxu0
    %v7214 = vadd.f32 %v7171, %v7213
    %7215 = vdwg.mxu0
    %7216 = vmatprep.subr.bf16.mxu0 %v4740
    %7217 = vmatpush1.bf16.msra.mxu0 %v4739
    %7218 = vmatprep.subr.bf16.mxu0 %v4748
    %7219 = vmatpush1.bf16.msra.mxu0 %v4747
    %7220 = vmatprep.subr.bf16.mxu0 %v4756
    %7221 = vmatpush1.bf16.msra.mxu0 %v4755
    %7222 = vmatprep.subr.bf16.mxu0 %v4764
    %7223 = vmatpush1.bf16.msra.mxu0 %v4763
    %7224 = vmatprep.subr.bf16.mxu0 %v4772
    %7225 = vmatpush1.bf16.msra.mxu0 %v4771
    %7226 = vmatprep.subr.bf16.mxu0 %v4780
    %7227 = vmatpush1.bf16.msra.mxu0 %v4779
    %7228 = vmatprep.subr.bf16.mxu0 %v4788
    %7229 = vmatpush1.bf16.msra.mxu0 %v4787
    %7230 = vmatprep.subr.bf16.mxu0 %v4796
    %7231 = vmatpush1.bf16.msra.mxu0 %v4795
    %7232 = vmatprep.subr.bf16.mxu0 %v4804
    %7233 = vmatpush1.bf16.msra.mxu0 %v4803
    %7234 = vmatprep.subr.bf16.mxu0 %v4812
    %7235 = vmatpush1.bf16.msra.mxu0 %v4811
    %7236 = vmatprep.subr.bf16.mxu0 %v4820
    %7237 = vmatpush1.bf16.msra.mxu0 %v4819
    %7238 = vmatprep.subr.bf16.mxu0 %v4828
    %7239 = vmatpush1.bf16.msra.mxu0 %v4827
    %7240 = vmatprep.subr.bf16.mxu0 %v4836
    %7241 = vmatpush1.bf16.msra.mxu0 %v4835
    %7242 = vmatprep.subr.bf16.mxu0 %v4844
    %7243 = vmatpush1.bf16.msra.mxu0 %v4843
    %7244 = vmatprep.subr.bf16.mxu0 %v4852
    %7245 = vmatpush1.bf16.msra.mxu0 %v4851
    %7246 = vmatprep.subr.bf16.mxu0 %v4860
    %7247 = vmatpush1.bf16.msra.mxu0 %v4859
    %7248 = vmatprep.mubr.bf16.mxu0 %v1254
    %7249 = vmatmul.mubr.bf16.gmra.mrb[0].mxu0 %v1253
    %v7250 = vpop.f32.mrb[0].mxu0
    %v7251 = vadd.f32 %v7208, %v7250
    %v7252 = vpop.f32.mrb[0].mxu0
    %v7253 = vadd.f32 %v7210, %v7252
    %v7254 = vpop.f32.mrb[0].mxu0
    %v7255 = vadd.f32 %v7212, %v7254
    %v7256 = vpop.f32.mrb[0].mxu0
    %v7257 = vadd.f32 %v7214, %v7256
    %7258 = vdwg.mxu0
    %7259 = vmatprep.subr.bf16.mxu0 %v4868
    %7260 = vmatpush1.bf16.msra.mxu0 %v4867
    %7261 = vmatprep.subr.bf16.mxu0 %v4876
    %7262 = vmatpush1.bf16.msra.mxu0 %v4875
    %7263 = vmatprep.subr.bf16.mxu0 %v4884
    %7264 = vmatpush1.bf16.msra.mxu0 %v4883
    %7265 = vmatprep.subr.bf16.mxu0 %v4892
    %7266 = vmatpush1.bf16.msra.mxu0 %v4891
    %7267 = vmatprep.subr.bf16.mxu0 %v4900
    %7268 = vmatpush1.bf16.msra.mxu0 %v4899
    %7269 = vmatprep.subr.bf16.mxu0 %v4908
    %7270 = vmatpush1.bf16.msra.mxu0 %v4907
    %7271 = vmatprep.subr.bf16.mxu0 %v4916
    %7272 = vmatpush1.bf16.msra.mxu0 %v4915
    %7273 = vmatprep.subr.bf16.mxu0 %v4924
    %7274 = vmatpush1.bf16.msra.mxu0 %v4923
    %7275 = vmatprep.subr.bf16.mxu0 %v4932
    %7276 = vmatpush1.bf16.msra.mxu0 %v4931
    %7277 = vmatprep.subr.bf16.mxu0 %v4940
    %7278 = vmatpush1.bf16.msra.mxu0 %v4939
    %7279 = vmatprep.subr.bf16.mxu0 %v4948
    %7280 = vmatpush1.bf16.msra.mxu0 %v4947
    %7281 = vmatprep.subr.bf16.mxu0 %v4956
    %7282 = vmatpush1.bf16.msra.mxu0 %v4955
    %7283 = vmatprep.subr.bf16.mxu0 %v4964
    %7284 = vmatpush1.bf16.msra.mxu0 %v4963
    %7285 = vmatprep.subr.bf16.mxu0 %v4972
    %7286 = vmatpush1.bf16.msra.mxu0 %v4971
    %7287 = vmatprep.subr.bf16.mxu0 %v4980
    %7288 = vmatpush1.bf16.msra.mxu0 %v4979
    %7289 = vmatprep.subr.bf16.mxu0 %v4988
    %7290 = vmatpush1.bf16.msra.mxu0 %v4987
    %7291 = vmatprep.mubr.bf16.mxu0 %v1256
    %7292 = vmatmul.mubr.bf16.gmra.mrb[0].mxu0 %v1255
    %v7293 = vpop.f32.mrb[0].mxu0
    %v7294 = vadd.f32 %v7251, %v7293
    %v7295 = vpop.f32.mrb[0].mxu0
    %v7296 = vadd.f32 %v7253, %v7295
    %v7297 = vpop.f32.mrb[0].mxu0
    %v7298 = vadd.f32 %v7255, %v7297
    %v7299 = vpop.f32.mrb[0].mxu0
    %v7300 = vadd.f32 %v7257, %v7299
    %7301 = vdwg.mxu0
    %7302 = vmatprep.subr.bf16.mxu0 %v4996
    %7303 = vmatpush1.bf16.msra.mxu0 %v4995
    %7304 = vmatprep.subr.bf16.mxu0 %v5004
    %7305 = vmatpush1.bf16.msra.mxu0 %v5003
    %7306 = vmatprep.subr.bf16.mxu0 %v5012
    %7307 = vmatpush1.bf16.msra.mxu0 %v5011
    %7308 = vmatprep.subr.bf16.mxu0 %v5020
    %7309 = vmatpush1.bf16.msra.mxu0 %v5019
    %7310 = vmatprep.subr.bf16.mxu0 %v5028
    %7311 = vmatpush1.bf16.msra.mxu0 %v5027
    %7312 = vmatprep.subr.bf16.mxu0 %v5036
    %7313 = vmatpush1.bf16.msra.mxu0 %v5035
    %7314 = vmatprep.subr.bf16.mxu0 %v5044
    %7315 = vmatpush1.bf16.msra.mxu0 %v5043
    %7316 = vmatprep.subr.bf16.mxu0 %v5052
    %7317 = vmatpush1.bf16.msra.mxu0 %v5051
    %7318 = vmatprep.subr.bf16.mxu0 %v5060
    %7319 = vmatpush1.bf16.msra.mxu0 %v5059
    %7320 = vmatprep.subr.bf16.mxu0 %v5068
    %7321 = vmatpush1.bf16.msra.mxu0 %v5067
    %7322 = vmatprep.subr.bf16.mxu0 %v5076
    %7323 = vmatpush1.bf16.msra.mxu0 %v5075
    %7324 = vmatprep.subr.bf16.mxu0 %v5084
    %7325 = vmatpush1.bf16.msra.mxu0 %v5083
    %7326 = vmatprep.subr.bf16.mxu0 %v5092
    %7327 = vmatpush1.bf16.msra.mxu0 %v5091
    %7328 = vmatprep.subr.bf16.mxu0 %v5100
    %7329 = vmatpush1.bf16.msra.mxu0 %v5099
    %7330 = vmatprep.subr.bf16.mxu0 %v5108
    %7331 = vmatpush1.bf16.msra.mxu0 %v5107
    %7332 = vmatprep.subr.bf16.mxu0 %v5116
    %7333 = vmatpush1.bf16.msra.mxu0 %v5115
    %7334 = vmatprep.mubr.bf16.mxu0 %v1258
    %7335 = vmatmul.mubr.bf16.gmra.mrb[0].mxu0 %v1257
    %v7336 = vpop.f32.mrb[0].mxu0
    %v7337 = vadd.f32 %v7294, %v7336
    %v7338 = vpop.f32.mrb[0].mxu0
    %v7339 = vadd.f32 %v7296, %v7338
    %v7340 = vpop.f32.mrb[0].mxu0
    %v7341 = vadd.f32 %v7298, %v7340
    %v7342 = vpop.f32.mrb[0].mxu0
    %v7343 = vadd.f32 %v7300, %v7342
    %7344 = vdwg.mxu0
    %7345 = vmatprep.subr.bf16.mxu0 %v5124
    %7346 = vmatpush1.bf16.msra.mxu0 %v5123
    %7347 = vmatprep.subr.bf16.mxu0 %v5132
    %7348 = vmatpush1.bf16.msra.mxu0 %v5131
    %7349 = vmatprep.subr.bf16.mxu0 %v5140
    %7350 = vmatpush1.bf16.msra.mxu0 %v5139
    %7351 = vmatprep.subr.bf16.mxu0 %v5148
    %7352 = vmatpush1.bf16.msra.mxu0 %v5147
    %7353 = vmatprep.subr.bf16.mxu0 %v5156
    %7354 = vmatpush1.bf16.msra.mxu0 %v5155
    %7355 = vmatprep.subr.bf16.mxu0 %v5164
    %7356 = vmatpush1.bf16.msra.mxu0 %v5163
    %7357 = vmatprep.subr.bf16.mxu0 %v5172
    %7358 = vmatpush1.bf16.msra.mxu0 %v5171
    %7359 = vmatprep.subr.bf16.mxu0 %v5180
    %7360 = vmatpush1.bf16.msra.mxu0 %v5179
    %7361 = vmatprep.subr.bf16.mxu0 %v5188
    %7362 = vmatpush1.bf16.msra.mxu0 %v5187
    %7363 = vmatprep.subr.bf16.mxu0 %v5196
    %7364 = vmatpush1.bf16.msra.mxu0 %v5195
    %7365 = vmatprep.subr.bf16.mxu0 %v5204
    %7366 = vmatpush1.bf16.msra.mxu0 %v5203
    %7367 = vmatprep.subr.bf16.mxu0 %v5212
    %7368 = vmatpush1.bf16.msra.mxu0 %v5211
    %7369 = vmatprep.subr.bf16.mxu0 %v5220
    %7370 = vmatpush1.bf16.msra.mxu0 %v5219
    %7371 = vmatprep.subr.bf16.mxu0 %v5228
    %7372 = vmatpush1.bf16.msra.mxu0 %v5227
    %7373 = vmatprep.subr.bf16.mxu0 %v5236
    %7374 = vmatpush1.bf16.msra.mxu0 %v5235
    %7375 = vmatprep.subr.bf16.mxu0 %v5244
    %7376 = vmatpush1.bf16.msra.mxu0 %v5243
    %7377 = vmatprep.mubr.bf16.mxu0 %v1260
    %7378 = vmatmul.mubr.bf16.gmra.mrb[0].mxu0 %v1259
    %v7379 = vpop.f32.mrb[0].mxu0
    %v7380 = vadd.f32 %v7337, %v7379
    %v7381 = vpop.f32.mrb[0].mxu0
    %v7382 = vadd.f32 %v7339, %v7381
    %v7383 = vpop.f32.mrb[0].mxu0
    %v7384 = vadd.f32 %v7341, %v7383
    %v7385 = vpop.f32.mrb[0].mxu0
    %v7386 = vadd.f32 %v7343, %v7385
    %7387 = vdwg.mxu0
    %7388 = vmatprep.subr.bf16.mxu0 %v5252
    %7389 = vmatpush1.bf16.msra.mxu0 %v5251
    %7390 = vmatprep.subr.bf16.mxu0 %v5260
    %7391 = vmatpush1.bf16.msra.mxu0 %v5259
    %7392 = vmatprep.subr.bf16.mxu0 %v5268
    %7393 = vmatpush1.bf16.msra.mxu0 %v5267
    %7394 = vmatprep.subr.bf16.mxu0 %v5276
    %7395 = vmatpush1.bf16.msra.mxu0 %v5275
    %7396 = vmatprep.subr.bf16.mxu0 %v5284
    %7397 = vmatpush1.bf16.msra.mxu0 %v5283
    %7398 = vmatprep.subr.bf16.mxu0 %v5292
    %7399 = vmatpush1.bf16.msra.mxu0 %v5291
    %7400 = vmatprep.subr.bf16.mxu0 %v5300
    %7401 = vmatpush1.bf16.msra.mxu0 %v5299
    %7402 = vmatprep.subr.bf16.mxu0 %v5308
    %7403 = vmatpush1.bf16.msra.mxu0 %v5307
    %7404 = vmatprep.subr.bf16.mxu0 %v5316
    %7405 = vmatpush1.bf16.msra.mxu0 %v5315
    %7406 = vmatprep.subr.bf16.mxu0 %v5324
    %7407 = vmatpush1.bf16.msra.mxu0 %v5323
    %7408 = vmatprep.subr.bf16.mxu0 %v5332
    %7409 = vmatpush1.bf16.msra.mxu0 %v5331
    %7410 = vmatprep.subr.bf16.mxu0 %v5340
    %7411 = vmatpush1.bf16.msra.mxu0 %v5339
    %7412 = vmatprep.subr.bf16.mxu0 %v5348
    %7413 = vmatpush1.bf16.msra.mxu0 %v5347
    %7414 = vmatprep.subr.bf16.mxu0 %v5356
    %7415 = vmatpush1.bf16.msra.mxu0 %v5355
    %7416 = vmatprep.subr.bf16.mxu0 %v5364
    %7417 = vmatpush1.bf16.msra.mxu0 %v5363
    %7418 = vmatprep.subr.bf16.mxu0 %v5372
    %7419 = vmatpush1.bf16.msra.mxu0 %v5371
    %7420 = vmatprep.mubr.bf16.mxu0 %v1262
    %7421 = vmatmul.mubr.bf16.gmra.mrb[0].mxu0 %v1261
    %v7422 = vpop.f32.mrb[0].mxu0
    %v7423 = vadd.f32 %v7380, %v7422
    %v7424 = vpop.f32.mrb[0].mxu0
    %v7425 = vadd.f32 %v7382, %v7424
    %v7426 = vpop.f32.mrb[0].mxu0
    %v7427 = vadd.f32 %v7384, %v7426
    %v7428 = vpop.f32.mrb[0].mxu0
    %v7429 = vadd.f32 %v7386, %v7428
    %7430 = vdwg.mxu0
    %7431 = vmatprep.subr.bf16.mxu0 %v4358
    %7432 = vmatpush1.bf16.msra.mxu0 %v4357
    %7433 = vmatprep.subr.bf16.mxu0 %v4366
    %7434 = vmatpush1.bf16.msra.mxu0 %v4365
    %7435 = vmatprep.subr.bf16.mxu0 %v4374
    %7436 = vmatpush1.bf16.msra.mxu0 %v4373
    %7437 = vmatprep.subr.bf16.mxu0 %v4382
    %7438 = vmatpush1.bf16.msra.mxu0 %v4381
    %7439 = vmatprep.subr.bf16.mxu0 %v4390
    %7440 = vmatpush1.bf16.msra.mxu0 %v4389
    %7441 = vmatprep.subr.bf16.mxu0 %v4398
    %7442 = vmatpush1.bf16.msra.mxu0 %v4397
    %7443 = vmatprep.subr.bf16.mxu0 %v4406
    %7444 = vmatpush1.bf16.msra.mxu0 %v4405
    %7445 = vmatprep.subr.bf16.mxu0 %v4414
    %7446 = vmatpush1.bf16.msra.mxu0 %v4413
    %7447 = vmatprep.subr.bf16.mxu0 %v4422
    %7448 = vmatpush1.bf16.msra.mxu0 %v4421
    %7449 = vmatprep.subr.bf16.mxu0 %v4430
    %7450 = vmatpush1.bf16.msra.mxu0 %v4429
    %7451 = vmatprep.subr.bf16.mxu0 %v4438
    %7452 = vmatpush1.bf16.msra.mxu0 %v4437
    %7453 = vmatprep.subr.bf16.mxu0 %v4446
    %7454 = vmatpush1.bf16.msra.mxu0 %v4445
    %7455 = vmatprep.subr.bf16.mxu0 %v4454
    %7456 = vmatpush1.bf16.msra.mxu0 %v4453
    %7457 = vmatprep.subr.bf16.mxu0 %v4462
    %7458 = vmatpush1.bf16.msra.mxu0 %v4461
    %7459 = vmatprep.subr.bf16.mxu0 %v4470
    %7460 = vmatpush1.bf16.msra.mxu0 %v4469
    %7461 = vmatprep.subr.bf16.mxu0 %v4478
    %7462 = vmatpush1.bf16.msra.mxu0 %v4477
    %7463 = vmatprep.mubr.bf16.mxu0 %v1248
    %7464 = vmatmul.mubr.bf16.gmra.mrb[0].mxu0 %v1247
    %v7465 = vpop.f32.mrb[0].mxu0
    %v7466 = vadd.f32 %v1186, %v7465
    %v7467 = vpop.f32.mrb[0].mxu0
    %v7468 = vadd.f32 %v1190, %v7467
    %v7469 = vpop.f32.mrb[0].mxu0
    %v7470 = vadd.f32 %v1186, %v7469
    %v7471 = vpop.f32.mrb[0].mxu0
    %v7472 = vadd.f32 %v1190, %v7471
    %7473 = vdwg.mxu0
    %7474 = vmatprep.subr.bf16.mxu0 %v4486
    %7475 = vmatpush1.bf16.msra.mxu0 %v4485
    %7476 = vmatprep.subr.bf16.mxu0 %v4494
    %7477 = vmatpush1.bf16.msra.mxu0 %v4493
    %7478 = vmatprep.subr.bf16.mxu0 %v4502
    %7479 = vmatpush1.bf16.msra.mxu0 %v4501
    %7480 = vmatprep.subr.bf16.mxu0 %v4510
    %7481 = vmatpush1.bf16.msra.mxu0 %v4509
    %7482 = vmatprep.subr.bf16.mxu0 %v4518
    %7483 = vmatpush1.bf16.msra.mxu0 %v4517
    %7484 = vmatprep.subr.bf16.mxu0 %v4526
    %7485 = vmatpush1.bf16.msra.mxu0 %v4525
    %7486 = vmatprep.subr.bf16.mxu0 %v4534
    %7487 = vmatpush1.bf16.msra.mxu0 %v4533
    %7488 = vmatprep.subr.bf16.mxu0 %v4542
    %7489 = vmatpush1.bf16.msra.mxu0 %v4541
    %7490 = vmatprep.subr.bf16.mxu0 %v4550
    %7491 = vmatpush1.bf16.msra.mxu0 %v4549
    %7492 = vmatprep.subr.bf16.mxu0 %v4558
    %7493 = vmatpush1.bf16.msra.mxu0 %v4557
    %7494 = vmatprep.subr.bf16.mxu0 %v4566
    %7495 = vmatpush1.bf16.msra.mxu0 %v4565
    %7496 = vmatprep.subr.bf16.mxu0 %v4574
    %7497 = vmatpush1.bf16.msra.mxu0 %v4573
    %7498 = vmatprep.subr.bf16.mxu0 %v4582
    %7499 = vmatpush1.bf16.msra.mxu0 %v4581
    %7500 = vmatprep.subr.bf16.mxu0 %v4590
    %7501 = vmatpush1.bf16.msra.mxu0 %v4589
    %7502 = vmatprep.subr.bf16.mxu0 %v4598
    %7503 = vmatpush1.bf16.msra.mxu0 %v4597
    %7504 = vmatprep.subr.bf16.mxu0 %v4606
    %7505 = vmatpush1.bf16.msra.mxu0 %v4605
    %7506 = vmatprep.mubr.bf16.mxu0 %v1250
    %7507 = vmatmul.mubr.bf16.gmra.mrb[0].mxu0 %v1249
    %v7508 = vpop.f32.mrb[0].mxu0
    %v7509 = vadd.f32 %v7466, %v7508
    %v7510 = vpop.f32.mrb[0].mxu0
    %v7511 = vadd.f32 %v7468, %v7510
    %v7512 = vpop.f32.mrb[0].mxu0
    %v7513 = vadd.f32 %v7470, %v7512
    %v7514 = vpop.f32.mrb[0].mxu0
    %v7515 = vadd.f32 %v7472, %v7514
    %7516 = vdwg.mxu0
    %7517 = vmatprep.subr.bf16.mxu0 %v4614
    %7518 = vmatpush1.bf16.msra.mxu0 %v4613
    %7519 = vmatprep.subr.bf16.mxu0 %v4622
    %7520 = vmatpush1.bf16.msra.mxu0 %v4621
    %7521 = vmatprep.subr.bf16.mxu0 %v4630
    %7522 = vmatpush1.bf16.msra.mxu0 %v4629
    %7523 = vmatprep.subr.bf16.mxu0 %v4638
    %7524 = vmatpush1.bf16.msra.mxu0 %v4637
    %7525 = vmatprep.subr.bf16.mxu0 %v4646
    %7526 = vmatpush1.bf16.msra.mxu0 %v4645
    %7527 = vmatprep.subr.bf16.mxu0 %v4654
    %7528 = vmatpush1.bf16.msra.mxu0 %v4653
    %7529 = vmatprep.subr.bf16.mxu0 %v4662
    %7530 = vmatpush1.bf16.msra.mxu0 %v4661
    %7531 = vmatprep.subr.bf16.mxu0 %v4670
    %7532 = vmatpush1.bf16.msra.mxu0 %v4669
    %7533 = vmatprep.subr.bf16.mxu0 %v4678
    %7534 = vmatpush1.bf16.msra.mxu0 %v4677
    %7535 = vmatprep.subr.bf16.mxu0 %v4686
    %7536 = vmatpush1.bf16.msra.mxu0 %v4685
    %7537 = vmatprep.subr.bf16.mxu0 %v4694
    %7538 = vmatpush1.bf16.msra.mxu0 %v4693
    %7539 = vmatprep.subr.bf16.mxu0 %v4702
    %7540 = vmatpush1.bf16.msra.mxu0 %v4701
    %7541 = vmatprep.subr.bf16.mxu0 %v4710
    %7542 = vmatpush1.bf16.msra.mxu0 %v4709
    %7543 = vmatprep.subr.bf16.mxu0 %v4718
    %7544 = vmatpush1.bf16.msra.mxu0 %v4717
    %7545 = vmatprep.subr.bf16.mxu0 %v4726
    %7546 = vmatpush1.bf16.msra.mxu0 %v4725
    %7547 = vmatprep.subr.bf16.mxu0 %v4734
    %7548 = vmatpush1.bf16.msra.mxu0 %v4733
    %7549 = vmatprep.mubr.bf16.mxu0 %v1252
    %7550 = vmatmul.mubr.bf16.gmra.mrb[0].mxu0 %v1251
    %v7551 = vpop.f32.mrb[0].mxu0
    %v7552 = vadd.f32 %v7509, %v7551
    %v7553 = vpop.f32.mrb[0].mxu0
    %v7554 = vadd.f32 %v7511, %v7553
    %v7555 = vpop.f32.mrb[0].mxu0
    %v7556 = vadd.f32 %v7513, %v7555
    %v7557 = vpop.f32.mrb[0].mxu0
    %v7558 = vadd.f32 %v7515, %v7557
    %7559 = vdwg.mxu0
    %7560 = vmatprep.subr.bf16.mxu0 %v4742
    %7561 = vmatpush1.bf16.msra.mxu0 %v4741
    %7562 = vmatprep.subr.bf16.mxu0 %v4750
    %7563 = vmatpush1.bf16.msra.mxu0 %v4749
    %7564 = vmatprep.subr.bf16.mxu0 %v4758
    %7565 = vmatpush1.bf16.msra.mxu0 %v4757
    %7566 = vmatprep.subr.bf16.mxu0 %v4766
    %7567 = vmatpush1.bf16.msra.mxu0 %v4765
    %7568 = vmatprep.subr.bf16.mxu0 %v4774
    %7569 = vmatpush1.bf16.msra.mxu0 %v4773
    %7570 = vmatprep.subr.bf16.mxu0 %v4782
    %7571 = vmatpush1.bf16.msra.mxu0 %v4781
    %7572 = vmatprep.subr.bf16.mxu0 %v4790
    %7573 = vmatpush1.bf16.msra.mxu0 %v4789
    %7574 = vmatprep.subr.bf16.mxu0 %v4798
    %7575 = vmatpush1.bf16.msra.mxu0 %v4797
    %7576 = vmatprep.subr.bf16.mxu0 %v4806
    %7577 = vmatpush1.bf16.msra.mxu0 %v4805
    %7578 = vmatprep.subr.bf16.mxu0 %v4814
    %7579 = vmatpush1.bf16.msra.mxu0 %v4813
    %7580 = vmatprep.subr.bf16.mxu0 %v4822
    %7581 = vmatpush1.bf16.msra.mxu0 %v4821
    %7582 = vmatprep.subr.bf16.mxu0 %v4830
    %7583 = vmatpush1.bf16.msra.mxu0 %v4829
    %7584 = vmatprep.subr.bf16.mxu0 %v4838
    %7585 = vmatpush1.bf16.msra.mxu0 %v4837
    %7586 = vmatprep.subr.bf16.mxu0 %v4846
    %7587 = vmatpush1.bf16.msra.mxu0 %v4845
    %7588 = vmatprep.subr.bf16.mxu0 %v4854
    %7589 = vmatpush1.bf16.msra.mxu0 %v4853
    %7590 = vmatprep.subr.bf16.mxu0 %v4862
    %7591 = vmatpush1.bf16.msra.mxu0 %v4861
    %7592 = vmatprep.mubr.bf16.mxu0 %v1254
    %7593 = vmatmul.mubr.bf16.gmra.mrb[0].mxu0 %v1253
    %v7594 = vpop.f32.mrb[0].mxu0
    %v7595 = vadd.f32 %v7552, %v7594
    %v7596 = vpop.f32.mrb[0].mxu0
    %v7597 = vadd.f32 %v7554, %v7596
    %v7598 = vpop.f32.mrb[0].mxu0
    %v7599 = vadd.f32 %v7556, %v7598
    %v7600 = vpop.f32.mrb[0].mxu0
    %v7601 = vadd.f32 %v7558, %v7600
    %7602 = vdwg.mxu0
    %7603 = vmatprep.subr.bf16.mxu0 %v4870
    %7604 = vmatpush1.bf16.msra.mxu0 %v4869
    %7605 = vmatprep.subr.bf16.mxu0 %v4878
    %7606 = vmatpush1.bf16.msra.mxu0 %v4877
    %7607 = vmatprep.subr.bf16.mxu0 %v4886
    %7608 = vmatpush1.bf16.msra.mxu0 %v4885
    %7609 = vmatprep.subr.bf16.mxu0 %v4894
    %7610 = vmatpush1.bf16.msra.mxu0 %v4893
    %7611 = vmatprep.subr.bf16.mxu0 %v4902
    %7612 = vmatpush1.bf16.msra.mxu0 %v4901
    %7613 = vmatprep.subr.bf16.mxu0 %v4910
    %7614 = vmatpush1.bf16.msra.mxu0 %v4909
    %7615 = vmatprep.subr.bf16.mxu0 %v4918
    %7616 = vmatpush1.bf16.msra.mxu0 %v4917
    %7617 = vmatprep.subr.bf16.mxu0 %v4926
    %7618 = vmatpush1.bf16.msra.mxu0 %v4925
    %7619 = vmatprep.subr.bf16.mxu0 %v4934
    %7620 = vmatpush1.bf16.msra.mxu0 %v4933
    %7621 = vmatprep.subr.bf16.mxu0 %v4942
    %7622 = vmatpush1.bf16.msra.mxu0 %v4941
    %7623 = vmatprep.subr.bf16.mxu0 %v4950
    %7624 = vmatpush1.bf16.msra.mxu0 %v4949
    %7625 = vmatprep.subr.bf16.mxu0 %v4958
    %7626 = vmatpush1.bf16.msra.mxu0 %v4957
    %7627 = vmatprep.subr.bf16.mxu0 %v4966
    %7628 = vmatpush1.bf16.msra.mxu0 %v4965
    %7629 = vmatprep.subr.bf16.mxu0 %v4974
    %7630 = vmatpush1.bf16.msra.mxu0 %v4973
    %7631 = vmatprep.subr.bf16.mxu0 %v4982
    %7632 = vmatpush1.bf16.msra.mxu0 %v4981
    %7633 = vmatprep.subr.bf16.mxu0 %v4990
    %7634 = vmatpush1.bf16.msra.mxu0 %v4989
    %7635 = vmatprep.mubr.bf16.mxu0 %v1256
    %7636 = vmatmul.mubr.bf16.gmra.mrb[0].mxu0 %v1255
    %v7637 = vpop.f32.mrb[0].mxu0
    %v7638 = vadd.f32 %v7595, %v7637
    %v7639 = vpop.f32.mrb[0].mxu0
    %v7640 = vadd.f32 %v7597, %v7639
    %v7641 = vpop.f32.mrb[0].mxu0
    %v7642 = vadd.f32 %v7599, %v7641
    %v7643 = vpop.f32.mrb[0].mxu0
    %v7644 = vadd.f32 %v7601, %v7643
    %7645 = vdwg.mxu0
    %7646 = vmatprep.subr.bf16.mxu0 %v4998
    %7647 = vmatpush1.bf16.msra.mxu0 %v4997
    %7648 = vmatprep.subr.bf16.mxu0 %v5006
    %7649 = vmatpush1.bf16.msra.mxu0 %v5005
    %7650 = vmatprep.subr.bf16.mxu0 %v5014
    %7651 = vmatpush1.bf16.msra.mxu0 %v5013
    %7652 = vmatprep.subr.bf16.mxu0 %v5022
    %7653 = vmatpush1.bf16.msra.mxu0 %v5021
    %7654 = vmatprep.subr.bf16.mxu0 %v5030
    %7655 = vmatpush1.bf16.msra.mxu0 %v5029
    %7656 = vmatprep.subr.bf16.mxu0 %v5038
    %7657 = vmatpush1.bf16.msra.mxu0 %v5037
    %7658 = vmatprep.subr.bf16.mxu0 %v5046
    %7659 = vmatpush1.bf16.msra.mxu0 %v5045
    %7660 = vmatprep.subr.bf16.mxu0 %v5054
    %7661 = vmatpush1.bf16.msra.mxu0 %v5053
    %7662 = vmatprep.subr.bf16.mxu0 %v5062
    %7663 = vmatpush1.bf16.msra.mxu0 %v5061
    %7664 = vmatprep.subr.bf16.mxu0 %v5070
    %7665 = vmatpush1.bf16.msra.mxu0 %v5069
    %7666 = vmatprep.subr.bf16.mxu0 %v5078
    %7667 = vmatpush1.bf16.msra.mxu0 %v5077
    %7668 = vmatprep.subr.bf16.mxu0 %v5086
    %7669 = vmatpush1.bf16.msra.mxu0 %v5085
    %7670 = vmatprep.subr.bf16.mxu0 %v5094
    %7671 = vmatpush1.bf16.msra.mxu0 %v5093
    %7672 = vmatprep.subr.bf16.mxu0 %v5102
    %7673 = vmatpush1.bf16.msra.mxu0 %v5101
    %7674 = vmatprep.subr.bf16.mxu0 %v5110
    %7675 = vmatpush1.bf16.msra.mxu0 %v5109
    %7676 = vmatprep.subr.bf16.mxu0 %v5118
    %7677 = vmatpush1.bf16.msra.mxu0 %v5117
    %7678 = vmatprep.mubr.bf16.mxu0 %v1258
    %7679 = vmatmul.mubr.bf16.gmra.mrb[0].mxu0 %v1257
    %v7680 = vpop.f32.mrb[0].mxu0
    %v7681 = vadd.f32 %v7638, %v7680
    %v7682 = vpop.f32.mrb[0].mxu0
    %v7683 = vadd.f32 %v7640, %v7682
    %v7684 = vpop.f32.mrb[0].mxu0
    %v7685 = vadd.f32 %v7642, %v7684
    %v7686 = vpop.f32.mrb[0].mxu0
    %v7687 = vadd.f32 %v7644, %v7686
    %7688 = vdwg.mxu0
    %7689 = vmatprep.subr.bf16.mxu0 %v5126
    %7690 = vmatpush1.bf16.msra.mxu0 %v5125
    %7691 = vmatprep.subr.bf16.mxu0 %v5134
    %7692 = vmatpush1.bf16.msra.mxu0 %v5133
    %7693 = vmatprep.subr.bf16.mxu0 %v5142
    %7694 = vmatpush1.bf16.msra.mxu0 %v5141
    %7695 = vmatprep.subr.bf16.mxu0 %v5150
    %7696 = vmatpush1.bf16.msra.mxu0 %v5149
    %7697 = vmatprep.subr.bf16.mxu0 %v5158
    %7698 = vmatpush1.bf16.msra.mxu0 %v5157
    %7699 = vmatprep.subr.bf16.mxu0 %v5166
    %7700 = vmatpush1.bf16.msra.mxu0 %v5165
    %7701 = vmatprep.subr.bf16.mxu0 %v5174
    %7702 = vmatpush1.bf16.msra.mxu0 %v5173
    %7703 = vmatprep.subr.bf16.mxu0 %v5182
    %7704 = vmatpush1.bf16.msra.mxu0 %v5181
    %7705 = vmatprep.subr.bf16.mxu0 %v5190
    %7706 = vmatpush1.bf16.msra.mxu0 %v5189
    %7707 = vmatprep.subr.bf16.mxu0 %v5198
    %7708 = vmatpush1.bf16.msra.mxu0 %v5197
    %7709 = vmatprep.subr.bf16.mxu0 %v5206
    %7710 = vmatpush1.bf16.msra.mxu0 %v5205
    %7711 = vmatprep.subr.bf16.mxu0 %v5214
    %7712 = vmatpush1.bf16.msra.mxu0 %v5213
    %7713 = vmatprep.subr.bf16.mxu0 %v5222
    %7714 = vmatpush1.bf16.msra.mxu0 %v5221
    %7715 = vmatprep.subr.bf16.mxu0 %v5230
    %7716 = vmatpush1.bf16.msra.mxu0 %v5229
    %7717 = vmatprep.subr.bf16.mxu0 %v5238
    %7718 = vmatpush1.bf16.msra.mxu0 %v5237
    %7719 = vmatprep.subr.bf16.mxu0 %v5246
    %7720 = vmatpush1.bf16.msra.mxu0 %v5245
    %7721 = vmatprep.mubr.bf16.mxu0 %v1260
    %7722 = vmatmul.mubr.bf16.gmra.mrb[0].mxu0 %v1259
    %v7723 = vpop.f32.mrb[0].mxu0
    %v7724 = vadd.f32 %v7681, %v7723
    %v7725 = vpop.f32.mrb[0].mxu0
    %v7726 = vadd.f32 %v7683, %v7725
    %v7727 = vpop.f32.mrb[0].mxu0
    %v7728 = vadd.f32 %v7685, %v7727
    %v7729 = vpop.f32.mrb[0].mxu0
    %v7730 = vadd.f32 %v7687, %v7729
    %7731 = vdwg.mxu0
    %7732 = vmatprep.subr.bf16.mxu0 %v5254
    %7733 = vmatpush1.bf16.msra.mxu0 %v5253
    %7734 = vmatprep.subr.bf16.mxu0 %v5262
    %7735 = vmatpush1.bf16.msra.mxu0 %v5261
    %7736 = vmatprep.subr.bf16.mxu0 %v5270
    %7737 = vmatpush1.bf16.msra.mxu0 %v5269
    %7738 = vmatprep.subr.bf16.mxu0 %v5278
    %7739 = vmatpush1.bf16.msra.mxu0 %v5277
    %7740 = vmatprep.subr.bf16.mxu0 %v5286
    %7741 = vmatpush1.bf16.msra.mxu0 %v5285
    %7742 = vmatprep.subr.bf16.mxu0 %v5294
    %7743 = vmatpush1.bf16.msra.mxu0 %v5293
    %7744 = vmatprep.subr.bf16.mxu0 %v5302
    %7745 = vmatpush1.bf16.msra.mxu0 %v5301
    %7746 = vmatprep.subr.bf16.mxu0 %v5310
    %7747 = vmatpush1.bf16.msra.mxu0 %v5309
    %7748 = vmatprep.subr.bf16.mxu0 %v5318
    %7749 = vmatpush1.bf16.msra.mxu0 %v5317
    %7750 = vmatprep.subr.bf16.mxu0 %v5326
    %7751 = vmatpush1.bf16.msra.mxu0 %v5325
    %7752 = vmatprep.subr.bf16.mxu0 %v5334
    %7753 = vmatpush1.bf16.msra.mxu0 %v5333
    %7754 = vmatprep.subr.bf16.mxu0 %v5342
    %7755 = vmatpush1.bf16.msra.mxu0 %v5341
    %7756 = vmatprep.subr.bf16.mxu0 %v5350
    %7757 = vmatpush1.bf16.msra.mxu0 %v5349
    %7758 = vmatprep.subr.bf16.mxu0 %v5358
    %7759 = vmatpush1.bf16.msra.mxu0 %v5357
    %7760 = vmatprep.subr.bf16.mxu0 %v5366
    %7761 = vmatpush1.bf16.msra.mxu0 %v5365
    %7762 = vmatprep.subr.bf16.mxu0 %v5374
    %7763 = vmatpush1.bf16.msra.mxu0 %v5373
    %7764 = vmatprep.mubr.bf16.mxu0 %v1262
    %7765 = vmatmul.mubr.bf16.gmra.mrb[0].mxu0 %v1261
    %v7766 = vpop.f32.mrb[0].mxu0
    %v7767 = vadd.f32 %v7724, %v7766
    %v7768 = vpop.f32.mrb[0].mxu0
    %v7769 = vadd.f32 %v7726, %v7768
    %v7770 = vpop.f32.mrb[0].mxu0
    %v7771 = vadd.f32 %v7728, %v7770
    %v7772 = vpop.f32.mrb[0].mxu0
    %v7773 = vadd.f32 %v7730, %v7772
    %7774 = vdwg.mxu0
    %v7775 = vmax.f32 %v6735, 0.0
    %v7776 = vmax.f32 %v6737, 0.0
    %v7777 = vmax.f32 %v7079, 0.0
    %v7778 = vmax.f32 %v7081, 0.0
    %v7779 = vmax.f32 %v7423, 0.0
    %v7780 = vmax.f32 %v7425, 0.0
    %v7781 = vmax.f32 %v7767, 0.0
    %v7782 = vmax.f32 %v7769, 0.0
    %v7783 = vmax.f32 %v6739, 0.0
    %v7784 = vmax.f32 %v6741, 0.0
    %v7785 = vmax.f32 %v7083, 0.0
    %v7786 = vmax.f32 %v7085, 0.0
    %v7787 = vmax.f32 %v7427, 0.0
    %v7788 = vmax.f32 %v7429, 0.0
    %v7789 = vmax.f32 %v7771, 0.0
    %v7790 = vmax.f32 %v7773, 0.0
    %v7791 = vpack.c.bf16 %v7783, %v7775
    %v7792 = vpack.c.bf16 %v7784, %v7776
    %v7793 = vpack.c.bf16 %v7785, %v7777
    %v7794 = vpack.c.bf16 %v7786, %v7778
    %v7795 = vpack.c.bf16 %v7787, %v7779
    %v7796 = vpack.c.bf16 %v7788, %v7780
    %v7797 = vpack.c.bf16 %v7789, %v7781
    %v7798 = vpack.c.bf16 %v7790, %v7782
    %v7799 = vld [vmem:[#allocation8] sm:$0xff]
    %v7800 = vld [vmem:[#allocation8 + $0x8] sm:$0xff]
    %v7801 = vld [vmem:[#allocation8 + $0x10] sm:$0xff]
    %v7802 = vld [vmem:[#allocation8 + $0x18] sm:$0xff]
    %v7803 = vld [vmem:[#allocation8 + $0x20] sm:$0xff]
    %v7804 = vld [vmem:[#allocation8 + $0x28] sm:$0xff]
    %v7805 = vld [vmem:[#allocation8 + $0x30] sm:$0xff]
    %v7806 = vld [vmem:[#allocation8 + $0x38] sm:$0xff]
    %v7807 = vld [vmem:[#allocation8 + $0x40] sm:$0xff]
    %v7808 = vld [vmem:[#allocation8 + $0x48] sm:$0xff]
    %v7809 = vld [vmem:[#allocation8 + $0x50] sm:$0xff]
    %v7810 = vld [vmem:[#allocation8 + $0x58] sm:$0xff]
    %v7811 = vld [vmem:[#allocation8 + $0x60] sm:$0xff]
    %v7812 = vld [vmem:[#allocation8 + $0x68] sm:$0xff]
    %v7813 = vld [vmem:[#allocation8 + $0x70] sm:$0xff]
    %v7814 = vld [vmem:[#allocation8 + $0x78] sm:$0xff]
    %v7815 = vld [vmem:[#allocation8 + $0x80] sm:$0xff]
    %v7816 = vld [vmem:[#allocation8 + $0x88] sm:$0xff]
    %v7817 = vld [vmem:[#allocation8 + $0x90] sm:$0xff]
    %v7818 = vld [vmem:[#allocation8 + $0x98] sm:$0xff]
    %v7819 = vld [vmem:[#allocation8 + $0xa0] sm:$0xff]
    %v7820 = vld [vmem:[#allocation8 + $0xa8] sm:$0xff]
    %v7821 = vld [vmem:[#allocation8 + $0xb0] sm:$0xff]
    %v7822 = vld [vmem:[#allocation8 + $0xb8] sm:$0xff]
    %v7823 = vld [vmem:[#allocation8 + $0xc0] sm:$0xff]
    %v7824 = vld [vmem:[#allocation8 + $0xc8] sm:$0xff]
    %v7825 = vld [vmem:[#allocation8 + $0xd0] sm:$0xff]
    %v7826 = vld [vmem:[#allocation8 + $0xd8] sm:$0xff]
    %v7827 = vld [vmem:[#allocation8 + $0xe0] sm:$0xff]
    %v7828 = vld [vmem:[#allocation8 + $0xe8] sm:$0xff]
    %v7829 = vld [vmem:[#allocation8 + $0xf0] sm:$0xff]
    %v7830 = vld [vmem:[#allocation8 + $0xf8] sm:$0xff]
    %v7831 = vld [vmem:[#allocation8 + $0x100] sm:$0xff]
    %v7832 = vld [vmem:[#allocation8 + $0x108] sm:$0xff]
    %v7833 = vld [vmem:[#allocation8 + $0x110] sm:$0xff]
    %v7834 = vld [vmem:[#allocation8 + $0x118] sm:$0xff]
    %v7835 = vld [vmem:[#allocation8 + $0x120] sm:$0xff]
    %v7836 = vld [vmem:[#allocation8 + $0x128] sm:$0xff]
    %v7837 = vld [vmem:[#allocation8 + $0x130] sm:$0xff]
    %v7838 = vld [vmem:[#allocation8 + $0x138] sm:$0xff]
    %v7839 = vld [vmem:[#allocation8 + $0x140] sm:$0xff]
    %v7840 = vld [vmem:[#allocation8 + $0x148] sm:$0xff]
    %v7841 = vld [vmem:[#allocation8 + $0x150] sm:$0xff]
    %v7842 = vld [vmem:[#allocation8 + $0x158] sm:$0xff]
    %v7843 = vld [vmem:[#allocation8 + $0x160] sm:$0xff]
    %v7844 = vld [vmem:[#allocation8 + $0x168] sm:$0xff]
    %v7845 = vld [vmem:[#allocation8 + $0x170] sm:$0xff]
    %v7846 = vld [vmem:[#allocation8 + $0x178] sm:$0xff]
    %v7847 = vld [vmem:[#allocation8 + $0x180] sm:$0xff]
    %v7848 = vld [vmem:[#allocation8 + $0x188] sm:$0xff]
    %v7849 = vld [vmem:[#allocation8 + $0x190] sm:$0xff]
    %v7850 = vld [vmem:[#allocation8 + $0x198] sm:$0xff]
    %v7851 = vld [vmem:[#allocation8 + $0x1a0] sm:$0xff]
    %v7852 = vld [vmem:[#allocation8 + $0x1a8] sm:$0xff]
    %v7853 = vld [vmem:[#allocation8 + $0x1b0] sm:$0xff]
    %v7854 = vld [vmem:[#allocation8 + $0x1b8] sm:$0xff]
    %v7855 = vld [vmem:[#allocation8 + $0x1c0] sm:$0xff]
    %v7856 = vld [vmem:[#allocation8 + $0x1c8] sm:$0xff]
    %v7857 = vld [vmem:[#allocation8 + $0x1d0] sm:$0xff]
    %v7858 = vld [vmem:[#allocation8 + $0x1d8] sm:$0xff]
    %v7859 = vld [vmem:[#allocation8 + $0x1e0] sm:$0xff]
    %v7860 = vld [vmem:[#allocation8 + $0x1e8] sm:$0xff]
    %v7861 = vld [vmem:[#allocation8 + $0x1f0] sm:$0xff]
    %v7862 = vld [vmem:[#allocation8 + $0x1f8] sm:$0xff]
    %v7863 = vld [vmem:[#allocation8 + $0x200] sm:$0xff]
    %v7864 = vld [vmem:[#allocation8 + $0x208] sm:$0xff]
    %v7865 = vld [vmem:[#allocation8 + $0x210] sm:$0xff]
    %v7866 = vld [vmem:[#allocation8 + $0x218] sm:$0xff]
    %v7867 = vld [vmem:[#allocation8 + $0x220] sm:$0xff]
    %v7868 = vld [vmem:[#allocation8 + $0x228] sm:$0xff]
    %v7869 = vld [vmem:[#allocation8 + $0x230] sm:$0xff]
    %v7870 = vld [vmem:[#allocation8 + $0x238] sm:$0xff]
    %v7871 = vld [vmem:[#allocation8 + $0x240] sm:$0xff]
    %v7872 = vld [vmem:[#allocation8 + $0x248] sm:$0xff]
    %v7873 = vld [vmem:[#allocation8 + $0x250] sm:$0xff]
    %v7874 = vld [vmem:[#allocation8 + $0x258] sm:$0xff]
    %v7875 = vld [vmem:[#allocation8 + $0x260] sm:$0xff]
    %v7876 = vld [vmem:[#allocation8 + $0x268] sm:$0xff]
    %v7877 = vld [vmem:[#allocation8 + $0x270] sm:$0xff]
    %v7878 = vld [vmem:[#allocation8 + $0x278] sm:$0xff]
    %v7879 = vld [vmem:[#allocation8 + $0x280] sm:$0xff]
    %v7880 = vld [vmem:[#allocation8 + $0x288] sm:$0xff]
    %v7881 = vld [vmem:[#allocation8 + $0x290] sm:$0xff]
    %v7882 = vld [vmem:[#allocation8 + $0x298] sm:$0xff]
    %v7883 = vld [vmem:[#allocation8 + $0x2a0] sm:$0xff]
    %v7884 = vld [vmem:[#allocation8 + $0x2a8] sm:$0xff]
    %v7885 = vld [vmem:[#allocation8 + $0x2b0] sm:$0xff]
    %v7886 = vld [vmem:[#allocation8 + $0x2b8] sm:$0xff]
    %v7887 = vld [vmem:[#allocation8 + $0x2c0] sm:$0xff]
    %v7888 = vld [vmem:[#allocation8 + $0x2c8] sm:$0xff]
    %v7889 = vld [vmem:[#allocation8 + $0x2d0] sm:$0xff]
    %v7890 = vld [vmem:[#allocation8 + $0x2d8] sm:$0xff]
    %v7891 = vld [vmem:[#allocation8 + $0x2e0] sm:$0xff]
    %v7892 = vld [vmem:[#allocation8 + $0x2e8] sm:$0xff]
    %v7893 = vld [vmem:[#allocation8 + $0x2f0] sm:$0xff]
    %v7894 = vld [vmem:[#allocation8 + $0x2f8] sm:$0xff]
    %v7895 = vld [vmem:[#allocation8 + $0x300] sm:$0xff]
    %v7896 = vld [vmem:[#allocation8 + $0x308] sm:$0xff]
    %v7897 = vld [vmem:[#allocation8 + $0x310] sm:$0xff]
    %v7898 = vld [vmem:[#allocation8 + $0x318] sm:$0xff]
    %v7899 = vld [vmem:[#allocation8 + $0x320] sm:$0xff]
    %v7900 = vld [vmem:[#allocation8 + $0x328] sm:$0xff]
    %v7901 = vld [vmem:[#allocation8 + $0x330] sm:$0xff]
    %v7902 = vld [vmem:[#allocation8 + $0x338] sm:$0xff]
    %v7903 = vld [vmem:[#allocation8 + $0x340] sm:$0xff]
    %v7904 = vld [vmem:[#allocation8 + $0x348] sm:$0xff]
    %v7905 = vld [vmem:[#allocation8 + $0x350] sm:$0xff]
    %v7906 = vld [vmem:[#allocation8 + $0x358] sm:$0xff]
    %v7907 = vld [vmem:[#allocation8 + $0x360] sm:$0xff]
    %v7908 = vld [vmem:[#allocation8 + $0x368] sm:$0xff]
    %v7909 = vld [vmem:[#allocation8 + $0x370] sm:$0xff]
    %v7910 = vld [vmem:[#allocation8 + $0x378] sm:$0xff]
    %v7911 = vld [vmem:[#allocation8 + $0x380] sm:$0xff]
    %v7912 = vld [vmem:[#allocation8 + $0x388] sm:$0xff]
    %v7913 = vld [vmem:[#allocation8 + $0x390] sm:$0xff]
    %v7914 = vld [vmem:[#allocation8 + $0x398] sm:$0xff]
    %v7915 = vld [vmem:[#allocation8 + $0x3a0] sm:$0xff]
    %v7916 = vld [vmem:[#allocation8 + $0x3a8] sm:$0xff]
    %v7917 = vld [vmem:[#allocation8 + $0x3b0] sm:$0xff]
    %v7918 = vld [vmem:[#allocation8 + $0x3b8] sm:$0xff]
    %v7919 = vld [vmem:[#allocation8 + $0x3c0] sm:$0xff]
    %v7920 = vld [vmem:[#allocation8 + $0x3c8] sm:$0xff]
    %v7921 = vld [vmem:[#allocation8 + $0x3d0] sm:$0xff]
    %v7922 = vld [vmem:[#allocation8 + $0x3d8] sm:$0xff]
    %v7923 = vld [vmem:[#allocation8 + $0x3e0] sm:$0xff]
    %v7924 = vld [vmem:[#allocation8 + $0x3e8] sm:$0xff]
    %v7925 = vld [vmem:[#allocation8 + $0x3f0] sm:$0xff]
    %v7926 = vld [vmem:[#allocation8 + $0x3f8] sm:$0xff]
    %v7927 = vld [vmem:[#allocation8 + $0x400] sm:$0xff]
    %v7928 = vld [vmem:[#allocation8 + $0x408] sm:$0xff]
    %v7929 = vld [vmem:[#allocation8 + $0x410] sm:$0xff]
    %v7930 = vld [vmem:[#allocation8 + $0x418] sm:$0xff]
    %v7931 = vld [vmem:[#allocation8 + $0x420] sm:$0xff]
    %v7932 = vld [vmem:[#allocation8 + $0x428] sm:$0xff]
    %v7933 = vld [vmem:[#allocation8 + $0x430] sm:$0xff]
    %v7934 = vld [vmem:[#allocation8 + $0x438] sm:$0xff]
    %v7935 = vld [vmem:[#allocation8 + $0x440] sm:$0xff]
    %v7936 = vld [vmem:[#allocation8 + $0x448] sm:$0xff]
    %v7937 = vld [vmem:[#allocation8 + $0x450] sm:$0xff]
    %v7938 = vld [vmem:[#allocation8 + $0x458] sm:$0xff]
    %v7939 = vld [vmem:[#allocation8 + $0x460] sm:$0xff]
    %v7940 = vld [vmem:[#allocation8 + $0x468] sm:$0xff]
    %v7941 = vld [vmem:[#allocation8 + $0x470] sm:$0xff]
    %v7942 = vld [vmem:[#allocation8 + $0x478] sm:$0xff]
    %v7943 = vld [vmem:[#allocation8 + $0x480] sm:$0xff]
    %v7944 = vld [vmem:[#allocation8 + $0x488] sm:$0xff]
    %v7945 = vld [vmem:[#allocation8 + $0x490] sm:$0xff]
    %v7946 = vld [vmem:[#allocation8 + $0x498] sm:$0xff]
    %v7947 = vld [vmem:[#allocation8 + $0x4a0] sm:$0xff]
    %v7948 = vld [vmem:[#allocation8 + $0x4a8] sm:$0xff]
    %v7949 = vld [vmem:[#allocation8 + $0x4b0] sm:$0xff]
    %v7950 = vld [vmem:[#allocation8 + $0x4b8] sm:$0xff]
    %v7951 = vld [vmem:[#allocation8 + $0x4c0] sm:$0xff]
    %v7952 = vld [vmem:[#allocation8 + $0x4c8] sm:$0xff]
    %v7953 = vld [vmem:[#allocation8 + $0x4d0] sm:$0xff]
    %v7954 = vld [vmem:[#allocation8 + $0x4d8] sm:$0xff]
    %v7955 = vld [vmem:[#allocation8 + $0x4e0] sm:$0xff]
    %v7956 = vld [vmem:[#allocation8 + $0x4e8] sm:$0xff]
    %v7957 = vld [vmem:[#allocation8 + $0x4f0] sm:$0xff]
    %v7958 = vld [vmem:[#allocation8 + $0x4f8] sm:$0xff]
    %v7959 = vld [vmem:[#allocation8 + $0x500] sm:$0xff]
    %v7960 = vld [vmem:[#allocation8 + $0x508] sm:$0xff]
    %v7961 = vld [vmem:[#allocation8 + $0x510] sm:$0xff]
    %v7962 = vld [vmem:[#allocation8 + $0x518] sm:$0xff]
    %v7963 = vld [vmem:[#allocation8 + $0x520] sm:$0xff]
    %v7964 = vld [vmem:[#allocation8 + $0x528] sm:$0xff]
    %v7965 = vld [vmem:[#allocation8 + $0x530] sm:$0xff]
    %v7966 = vld [vmem:[#allocation8 + $0x538] sm:$0xff]
    %v7967 = vld [vmem:[#allocation8 + $0x540] sm:$0xff]
    %v7968 = vld [vmem:[#allocation8 + $0x548] sm:$0xff]
    %v7969 = vld [vmem:[#allocation8 + $0x550] sm:$0xff]
    %v7970 = vld [vmem:[#allocation8 + $0x558] sm:$0xff]
    %v7971 = vld [vmem:[#allocation8 + $0x560] sm:$0xff]
    %v7972 = vld [vmem:[#allocation8 + $0x568] sm:$0xff]
    %v7973 = vld [vmem:[#allocation8 + $0x570] sm:$0xff]
    %v7974 = vld [vmem:[#allocation8 + $0x578] sm:$0xff]
    %v7975 = vld [vmem:[#allocation8 + $0x580] sm:$0xff]
    %v7976 = vld [vmem:[#allocation8 + $0x588] sm:$0xff]
    %v7977 = vld [vmem:[#allocation8 + $0x590] sm:$0xff]
    %v7978 = vld [vmem:[#allocation8 + $0x598] sm:$0xff]
    %v7979 = vld [vmem:[#allocation8 + $0x5a0] sm:$0xff]
    %v7980 = vld [vmem:[#allocation8 + $0x5a8] sm:$0xff]
    %v7981 = vld [vmem:[#allocation8 + $0x5b0] sm:$0xff]
    %v7982 = vld [vmem:[#allocation8 + $0x5b8] sm:$0xff]
    %v7983 = vld [vmem:[#allocation8 + $0x5c0] sm:$0xff]
    %v7984 = vld [vmem:[#allocation8 + $0x5c8] sm:$0xff]
    %v7985 = vld [vmem:[#allocation8 + $0x5d0] sm:$0xff]
    %v7986 = vld [vmem:[#allocation8 + $0x5d8] sm:$0xff]
    %v7987 = vld [vmem:[#allocation8 + $0x5e0] sm:$0xff]
    %v7988 = vld [vmem:[#allocation8 + $0x5e8] sm:$0xff]
    %v7989 = vld [vmem:[#allocation8 + $0x5f0] sm:$0xff]
    %v7990 = vld [vmem:[#allocation8 + $0x5f8] sm:$0xff]
    %v7991 = vld [vmem:[#allocation8 + $0x600] sm:$0xff]
    %v7992 = vld [vmem:[#allocation8 + $0x608] sm:$0xff]
    %v7993 = vld [vmem:[#allocation8 + $0x610] sm:$0xff]
    %v7994 = vld [vmem:[#allocation8 + $0x618] sm:$0xff]
    %v7995 = vld [vmem:[#allocation8 + $0x620] sm:$0xff]
    %v7996 = vld [vmem:[#allocation8 + $0x628] sm:$0xff]
    %v7997 = vld [vmem:[#allocation8 + $0x630] sm:$0xff]
    %v7998 = vld [vmem:[#allocation8 + $0x638] sm:$0xff]
    %v7999 = vld [vmem:[#allocation8 + $0x640] sm:$0xff]
    %v8000 = vld [vmem:[#allocation8 + $0x648] sm:$0xff]
    %v8001 = vld [vmem:[#allocation8 + $0x650] sm:$0xff]
    %v8002 = vld [vmem:[#allocation8 + $0x658] sm:$0xff]
    %v8003 = vld [vmem:[#allocation8 + $0x660] sm:$0xff]
    %v8004 = vld [vmem:[#allocation8 + $0x668] sm:$0xff]
    %v8005 = vld [vmem:[#allocation8 + $0x670] sm:$0xff]
    %v8006 = vld [vmem:[#allocation8 + $0x678] sm:$0xff]
    %v8007 = vld [vmem:[#allocation8 + $0x680] sm:$0xff]
    %v8008 = vld [vmem:[#allocation8 + $0x688] sm:$0xff]
    %v8009 = vld [vmem:[#allocation8 + $0x690] sm:$0xff]
    %v8010 = vld [vmem:[#allocation8 + $0x698] sm:$0xff]
    %v8011 = vld [vmem:[#allocation8 + $0x6a0] sm:$0xff]
    %v8012 = vld [vmem:[#allocation8 + $0x6a8] sm:$0xff]
    %v8013 = vld [vmem:[#allocation8 + $0x6b0] sm:$0xff]
    %v8014 = vld [vmem:[#allocation8 + $0x6b8] sm:$0xff]
    %v8015 = vld [vmem:[#allocation8 + $0x6c0] sm:$0xff]
    %v8016 = vld [vmem:[#allocation8 + $0x6c8] sm:$0xff]
    %v8017 = vld [vmem:[#allocation8 + $0x6d0] sm:$0xff]
    %v8018 = vld [vmem:[#allocation8 + $0x6d8] sm:$0xff]
    %v8019 = vld [vmem:[#allocation8 + $0x6e0] sm:$0xff]
    %v8020 = vld [vmem:[#allocation8 + $0x6e8] sm:$0xff]
    %v8021 = vld [vmem:[#allocation8 + $0x6f0] sm:$0xff]
    %v8022 = vld [vmem:[#allocation8 + $0x6f8] sm:$0xff]
    %v8023 = vld [vmem:[#allocation8 + $0x700] sm:$0xff]
    %v8024 = vld [vmem:[#allocation8 + $0x708] sm:$0xff]
    %v8025 = vld [vmem:[#allocation8 + $0x710] sm:$0xff]
    %v8026 = vld [vmem:[#allocation8 + $0x718] sm:$0xff]
    %v8027 = vld [vmem:[#allocation8 + $0x720] sm:$0xff]
    %v8028 = vld [vmem:[#allocation8 + $0x728] sm:$0xff]
    %v8029 = vld [vmem:[#allocation8 + $0x730] sm:$0xff]
    %v8030 = vld [vmem:[#allocation8 + $0x738] sm:$0xff]
    %v8031 = vld [vmem:[#allocation8 + $0x740] sm:$0xff]
    %v8032 = vld [vmem:[#allocation8 + $0x748] sm:$0xff]
    %v8033 = vld [vmem:[#allocation8 + $0x750] sm:$0xff]
    %v8034 = vld [vmem:[#allocation8 + $0x758] sm:$0xff]
    %v8035 = vld [vmem:[#allocation8 + $0x760] sm:$0xff]
    %v8036 = vld [vmem:[#allocation8 + $0x768] sm:$0xff]
    %v8037 = vld [vmem:[#allocation8 + $0x770] sm:$0xff]
    %v8038 = vld [vmem:[#allocation8 + $0x778] sm:$0xff]
    %v8039 = vld [vmem:[#allocation8 + $0x780] sm:$0xff]
    %v8040 = vld [vmem:[#allocation8 + $0x788] sm:$0xff]
    %v8041 = vld [vmem:[#allocation8 + $0x790] sm:$0xff]
    %v8042 = vld [vmem:[#allocation8 + $0x798] sm:$0xff]
    %v8043 = vld [vmem:[#allocation8 + $0x7a0] sm:$0xff]
    %v8044 = vld [vmem:[#allocation8 + $0x7a8] sm:$0xff]
    %v8045 = vld [vmem:[#allocation8 + $0x7b0] sm:$0xff]
    %v8046 = vld [vmem:[#allocation8 + $0x7b8] sm:$0xff]
    %v8047 = vld [vmem:[#allocation8 + $0x7c0] sm:$0xff]
    %v8048 = vld [vmem:[#allocation8 + $0x7c8] sm:$0xff]
    %v8049 = vld [vmem:[#allocation8 + $0x7d0] sm:$0xff]
    %v8050 = vld [vmem:[#allocation8 + $0x7d8] sm:$0xff]
    %v8051 = vld [vmem:[#allocation8 + $0x7e0] sm:$0xff]
    %v8052 = vld [vmem:[#allocation8 + $0x7e8] sm:$0xff]
    %v8053 = vld [vmem:[#allocation8 + $0x7f0] sm:$0xff]
    %v8054 = vld [vmem:[#allocation8 + $0x7f8] sm:$0xff]
    %v8055 = vld [vmem:[#allocation8 + $0x800] sm:$0xff]
    %v8056 = vld [vmem:[#allocation8 + $0x808] sm:$0xff]
    %v8057 = vld [vmem:[#allocation8 + $0x810] sm:$0xff]
    %v8058 = vld [vmem:[#allocation8 + $0x818] sm:$0xff]
    %v8059 = vld [vmem:[#allocation8 + $0x820] sm:$0xff]
    %v8060 = vld [vmem:[#allocation8 + $0x828] sm:$0xff]
    %v8061 = vld [vmem:[#allocation8 + $0x830] sm:$0xff]
    %v8062 = vld [vmem:[#allocation8 + $0x838] sm:$0xff]
    %v8063 = vld [vmem:[#allocation8 + $0x840] sm:$0xff]
    %v8064 = vld [vmem:[#allocation8 + $0x848] sm:$0xff]
    %v8065 = vld [vmem:[#allocation8 + $0x850] sm:$0xff]
    %v8066 = vld [vmem:[#allocation8 + $0x858] sm:$0xff]
    %v8067 = vld [vmem:[#allocation8 + $0x860] sm:$0xff]
    %v8068 = vld [vmem:[#allocation8 + $0x868] sm:$0xff]
    %v8069 = vld [vmem:[#allocation8 + $0x870] sm:$0xff]
    %v8070 = vld [vmem:[#allocation8 + $0x878] sm:$0xff]
    %v8071 = vld [vmem:[#allocation8 + $0x880] sm:$0xff]
    %v8072 = vld [vmem:[#allocation8 + $0x888] sm:$0xff]
    %v8073 = vld [vmem:[#allocation8 + $0x890] sm:$0xff]
    %v8074 = vld [vmem:[#allocation8 + $0x898] sm:$0xff]
    %v8075 = vld [vmem:[#allocation8 + $0x8a0] sm:$0xff]
    %v8076 = vld [vmem:[#allocation8 + $0x8a8] sm:$0xff]
    %v8077 = vld [vmem:[#allocation8 + $0x8b0] sm:$0xff]
    %v8078 = vld [vmem:[#allocation8 + $0x8b8] sm:$0xff]
    %v8079 = vld [vmem:[#allocation8 + $0x8c0] sm:$0xff]
    %v8080 = vld [vmem:[#allocation8 + $0x8c8] sm:$0xff]
    %v8081 = vld [vmem:[#allocation8 + $0x8d0] sm:$0xff]
    %v8082 = vld [vmem:[#allocation8 + $0x8d8] sm:$0xff]
    %v8083 = vld [vmem:[#allocation8 + $0x8e0] sm:$0xff]
    %v8084 = vld [vmem:[#allocation8 + $0x8e8] sm:$0xff]
    %v8085 = vld [vmem:[#allocation8 + $0x8f0] sm:$0xff]
    %v8086 = vld [vmem:[#allocation8 + $0x8f8] sm:$0xff]
    %v8087 = vld [vmem:[#allocation8 + $0x900] sm:$0xff]
    %v8088 = vld [vmem:[#allocation8 + $0x908] sm:$0xff]
    %v8089 = vld [vmem:[#allocation8 + $0x910] sm:$0xff]
    %v8090 = vld [vmem:[#allocation8 + $0x918] sm:$0xff]
    %v8091 = vld [vmem:[#allocation8 + $0x920] sm:$0xff]
    %v8092 = vld [vmem:[#allocation8 + $0x928] sm:$0xff]
    %v8093 = vld [vmem:[#allocation8 + $0x930] sm:$0xff]
    %v8094 = vld [vmem:[#allocation8 + $0x938] sm:$0xff]
    %v8095 = vld [vmem:[#allocation8 + $0x940] sm:$0xff]
    %v8096 = vld [vmem:[#allocation8 + $0x948] sm:$0xff]
    %v8097 = vld [vmem:[#allocation8 + $0x950] sm:$0xff]
    %v8098 = vld [vmem:[#allocation8 + $0x958] sm:$0xff]
    %v8099 = vld [vmem:[#allocation8 + $0x960] sm:$0xff]
    %v8100 = vld [vmem:[#allocation8 + $0x968] sm:$0xff]
    %v8101 = vld [vmem:[#allocation8 + $0x970] sm:$0xff]
    %v8102 = vld [vmem:[#allocation8 + $0x978] sm:$0xff]
    %v8103 = vld [vmem:[#allocation8 + $0x980] sm:$0xff]
    %v8104 = vld [vmem:[#allocation8 + $0x988] sm:$0xff]
    %v8105 = vld [vmem:[#allocation8 + $0x990] sm:$0xff]
    %v8106 = vld [vmem:[#allocation8 + $0x998] sm:$0xff]
    %v8107 = vld [vmem:[#allocation8 + $0x9a0] sm:$0xff]
    %v8108 = vld [vmem:[#allocation8 + $0x9a8] sm:$0xff]
    %v8109 = vld [vmem:[#allocation8 + $0x9b0] sm:$0xff]
    %v8110 = vld [vmem:[#allocation8 + $0x9b8] sm:$0xff]
    %v8111 = vld [vmem:[#allocation8 + $0x9c0] sm:$0xff]
    %v8112 = vld [vmem:[#allocation8 + $0x9c8] sm:$0xff]
    %v8113 = vld [vmem:[#allocation8 + $0x9d0] sm:$0xff]
    %v8114 = vld [vmem:[#allocation8 + $0x9d8] sm:$0xff]
    %v8115 = vld [vmem:[#allocation8 + $0x9e0] sm:$0xff]
    %v8116 = vld [vmem:[#allocation8 + $0x9e8] sm:$0xff]
    %v8117 = vld [vmem:[#allocation8 + $0x9f0] sm:$0xff]
    %v8118 = vld [vmem:[#allocation8 + $0x9f8] sm:$0xff]
    %v8119 = vld [vmem:[#allocation8 + $0xa00] sm:$0xff]
    %v8120 = vld [vmem:[#allocation8 + $0xa08] sm:$0xff]
    %v8121 = vld [vmem:[#allocation8 + $0xa10] sm:$0xff]
    %v8122 = vld [vmem:[#allocation8 + $0xa18] sm:$0xff]
    %v8123 = vld [vmem:[#allocation8 + $0xa20] sm:$0xff]
    %v8124 = vld [vmem:[#allocation8 + $0xa28] sm:$0xff]
    %v8125 = vld [vmem:[#allocation8 + $0xa30] sm:$0xff]
    %v8126 = vld [vmem:[#allocation8 + $0xa38] sm:$0xff]
    %v8127 = vld [vmem:[#allocation8 + $0xa40] sm:$0xff]
    %v8128 = vld [vmem:[#allocation8 + $0xa48] sm:$0xff]
    %v8129 = vld [vmem:[#allocation8 + $0xa50] sm:$0xff]
    %v8130 = vld [vmem:[#allocation8 + $0xa58] sm:$0xff]
    %v8131 = vld [vmem:[#allocation8 + $0xa60] sm:$0xff]
    %v8132 = vld [vmem:[#allocation8 + $0xa68] sm:$0xff]
    %v8133 = vld [vmem:[#allocation8 + $0xa70] sm:$0xff]
    %v8134 = vld [vmem:[#allocation8 + $0xa78] sm:$0xff]
    %v8135 = vld [vmem:[#allocation8 + $0xa80] sm:$0xff]
    %v8136 = vld [vmem:[#allocation8 + $0xa88] sm:$0xff]
    %v8137 = vld [vmem:[#allocation8 + $0xa90] sm:$0xff]
    %v8138 = vld [vmem:[#allocation8 + $0xa98] sm:$0xff]
    %v8139 = vld [vmem:[#allocation8 + $0xaa0] sm:$0xff]
    %v8140 = vld [vmem:[#allocation8 + $0xaa8] sm:$0xff]
    %v8141 = vld [vmem:[#allocation8 + $0xab0] sm:$0xff]
    %v8142 = vld [vmem:[#allocation8 + $0xab8] sm:$0xff]
    %v8143 = vld [vmem:[#allocation8 + $0xac0] sm:$0xff]
    %v8144 = vld [vmem:[#allocation8 + $0xac8] sm:$0xff]
    %v8145 = vld [vmem:[#allocation8 + $0xad0] sm:$0xff]
    %v8146 = vld [vmem:[#allocation8 + $0xad8] sm:$0xff]
    %v8147 = vld [vmem:[#allocation8 + $0xae0] sm:$0xff]
    %v8148 = vld [vmem:[#allocation8 + $0xae8] sm:$0xff]
    %v8149 = vld [vmem:[#allocation8 + $0xaf0] sm:$0xff]
    %v8150 = vld [vmem:[#allocation8 + $0xaf8] sm:$0xff]
    %v8151 = vld [vmem:[#allocation8 + $0xb00] sm:$0xff]
    %v8152 = vld [vmem:[#allocation8 + $0xb08] sm:$0xff]
    %v8153 = vld [vmem:[#allocation8 + $0xb10] sm:$0xff]
    %v8154 = vld [vmem:[#allocation8 + $0xb18] sm:$0xff]
    %v8155 = vld [vmem:[#allocation8 + $0xb20] sm:$0xff]
    %v8156 = vld [vmem:[#allocation8 + $0xb28] sm:$0xff]
    %v8157 = vld [vmem:[#allocation8 + $0xb30] sm:$0xff]
    %v8158 = vld [vmem:[#allocation8 + $0xb38] sm:$0xff]
    %v8159 = vld [vmem:[#allocation8 + $0xb40] sm:$0xff]
    %v8160 = vld [vmem:[#allocation8 + $0xb48] sm:$0xff]
    %v8161 = vld [vmem:[#allocation8 + $0xb50] sm:$0xff]
    %v8162 = vld [vmem:[#allocation8 + $0xb58] sm:$0xff]
    %v8163 = vld [vmem:[#allocation8 + $0xb60] sm:$0xff]
    %v8164 = vld [vmem:[#allocation8 + $0xb68] sm:$0xff]
    %v8165 = vld [vmem:[#allocation8 + $0xb70] sm:$0xff]
    %v8166 = vld [vmem:[#allocation8 + $0xb78] sm:$0xff]
    %v8167 = vld [vmem:[#allocation8 + $0xb80] sm:$0xff]
    %v8168 = vld [vmem:[#allocation8 + $0xb88] sm:$0xff]
    %v8169 = vld [vmem:[#allocation8 + $0xb90] sm:$0xff]
    %v8170 = vld [vmem:[#allocation8 + $0xb98] sm:$0xff]
    %v8171 = vld [vmem:[#allocation8 + $0xba0] sm:$0xff]
    %v8172 = vld [vmem:[#allocation8 + $0xba8] sm:$0xff]
    %v8173 = vld [vmem:[#allocation8 + $0xbb0] sm:$0xff]
    %v8174 = vld [vmem:[#allocation8 + $0xbb8] sm:$0xff]
    %v8175 = vld [vmem:[#allocation8 + $0xbc0] sm:$0xff]
    %v8176 = vld [vmem:[#allocation8 + $0xbc8] sm:$0xff]
    %v8177 = vld [vmem:[#allocation8 + $0xbd0] sm:$0xff]
    %v8178 = vld [vmem:[#allocation8 + $0xbd8] sm:$0xff]
    %v8179 = vld [vmem:[#allocation8 + $0xbe0] sm:$0xff]
    %v8180 = vld [vmem:[#allocation8 + $0xbe8] sm:$0xff]
    %v8181 = vld [vmem:[#allocation8 + $0xbf0] sm:$0xff]
    %v8182 = vld [vmem:[#allocation8 + $0xbf8] sm:$0xff]
    %v8183 = vld [vmem:[#allocation8 + $0xc00] sm:$0xff]
    %v8184 = vld [vmem:[#allocation8 + $0xc08] sm:$0xff]
    %v8185 = vld [vmem:[#allocation8 + $0xc10] sm:$0xff]
    %v8186 = vld [vmem:[#allocation8 + $0xc18] sm:$0xff]
    %v8187 = vld [vmem:[#allocation8 + $0xc20] sm:$0xff]
    %v8188 = vld [vmem:[#allocation8 + $0xc28] sm:$0xff]
    %v8189 = vld [vmem:[#allocation8 + $0xc30] sm:$0xff]
    %v8190 = vld [vmem:[#allocation8 + $0xc38] sm:$0xff]
    %v8191 = vld [vmem:[#allocation8 + $0xc40] sm:$0xff]
    %v8192 = vld [vmem:[#allocation8 + $0xc48] sm:$0xff]
    %v8193 = vld [vmem:[#allocation8 + $0xc50] sm:$0xff]
    %v8194 = vld [vmem:[#allocation8 + $0xc58] sm:$0xff]
    %v8195 = vld [vmem:[#allocation8 + $0xc60] sm:$0xff]
    %v8196 = vld [vmem:[#allocation8 + $0xc68] sm:$0xff]
    %v8197 = vld [vmem:[#allocation8 + $0xc70] sm:$0xff]
    %v8198 = vld [vmem:[#allocation8 + $0xc78] sm:$0xff]
    %v8199 = vld [vmem:[#allocation8 + $0xc80] sm:$0xff]
    %v8200 = vld [vmem:[#allocation8 + $0xc88] sm:$0xff]
    %v8201 = vld [vmem:[#allocation8 + $0xc90] sm:$0xff]
    %v8202 = vld [vmem:[#allocation8 + $0xc98] sm:$0xff]
    %v8203 = vld [vmem:[#allocation8 + $0xca0] sm:$0xff]
    %v8204 = vld [vmem:[#allocation8 + $0xca8] sm:$0xff]
    %v8205 = vld [vmem:[#allocation8 + $0xcb0] sm:$0xff]
    %v8206 = vld [vmem:[#allocation8 + $0xcb8] sm:$0xff]
    %v8207 = vld [vmem:[#allocation8 + $0xcc0] sm:$0xff]
    %v8208 = vld [vmem:[#allocation8 + $0xcc8] sm:$0xff]
    %v8209 = vld [vmem:[#allocation8 + $0xcd0] sm:$0xff]
    %v8210 = vld [vmem:[#allocation8 + $0xcd8] sm:$0xff]
    %v8211 = vld [vmem:[#allocation8 + $0xce0] sm:$0xff]
    %v8212 = vld [vmem:[#allocation8 + $0xce8] sm:$0xff]
    %v8213 = vld [vmem:[#allocation8 + $0xcf0] sm:$0xff]
    %v8214 = vld [vmem:[#allocation8 + $0xcf8] sm:$0xff]
    %v8215 = vld [vmem:[#allocation8 + $0xd00] sm:$0xff]
    %v8216 = vld [vmem:[#allocation8 + $0xd08] sm:$0xff]
    %v8217 = vld [vmem:[#allocation8 + $0xd10] sm:$0xff]
    %v8218 = vld [vmem:[#allocation8 + $0xd18] sm:$0xff]
    %v8219 = vld [vmem:[#allocation8 + $0xd20] sm:$0xff]
    %v8220 = vld [vmem:[#allocation8 + $0xd28] sm:$0xff]
    %v8221 = vld [vmem:[#allocation8 + $0xd30] sm:$0xff]
    %v8222 = vld [vmem:[#allocation8 + $0xd38] sm:$0xff]
    %v8223 = vld [vmem:[#allocation8 + $0xd40] sm:$0xff]
    %v8224 = vld [vmem:[#allocation8 + $0xd48] sm:$0xff]
    %v8225 = vld [vmem:[#allocation8 + $0xd50] sm:$0xff]
    %v8226 = vld [vmem:[#allocation8 + $0xd58] sm:$0xff]
    %v8227 = vld [vmem:[#allocation8 + $0xd60] sm:$0xff]
    %v8228 = vld [vmem:[#allocation8 + $0xd68] sm:$0xff]
    %v8229 = vld [vmem:[#allocation8 + $0xd70] sm:$0xff]
    %v8230 = vld [vmem:[#allocation8 + $0xd78] sm:$0xff]
    %v8231 = vld [vmem:[#allocation8 + $0xd80] sm:$0xff]
    %v8232 = vld [vmem:[#allocation8 + $0xd88] sm:$0xff]
    %v8233 = vld [vmem:[#allocation8 + $0xd90] sm:$0xff]
    %v8234 = vld [vmem:[#allocation8 + $0xd98] sm:$0xff]
    %v8235 = vld [vmem:[#allocation8 + $0xda0] sm:$0xff]
    %v8236 = vld [vmem:[#allocation8 + $0xda8] sm:$0xff]
    %v8237 = vld [vmem:[#allocation8 + $0xdb0] sm:$0xff]
    %v8238 = vld [vmem:[#allocation8 + $0xdb8] sm:$0xff]
    %v8239 = vld [vmem:[#allocation8 + $0xdc0] sm:$0xff]
    %v8240 = vld [vmem:[#allocation8 + $0xdc8] sm:$0xff]
    %v8241 = vld [vmem:[#allocation8 + $0xdd0] sm:$0xff]
    %v8242 = vld [vmem:[#allocation8 + $0xdd8] sm:$0xff]
    %v8243 = vld [vmem:[#allocation8 + $0xde0] sm:$0xff]
    %v8244 = vld [vmem:[#allocation8 + $0xde8] sm:$0xff]
    %v8245 = vld [vmem:[#allocation8 + $0xdf0] sm:$0xff]
    %v8246 = vld [vmem:[#allocation8 + $0xdf8] sm:$0xff]
    %v8247 = vld [vmem:[#allocation8 + $0xe00] sm:$0xff]
    %v8248 = vld [vmem:[#allocation8 + $0xe08] sm:$0xff]
    %v8249 = vld [vmem:[#allocation8 + $0xe10] sm:$0xff]
    %v8250 = vld [vmem:[#allocation8 + $0xe18] sm:$0xff]
    %v8251 = vld [vmem:[#allocation8 + $0xe20] sm:$0xff]
    %v8252 = vld [vmem:[#allocation8 + $0xe28] sm:$0xff]
    %v8253 = vld [vmem:[#allocation8 + $0xe30] sm:$0xff]
    %v8254 = vld [vmem:[#allocation8 + $0xe38] sm:$0xff]
    %v8255 = vld [vmem:[#allocation8 + $0xe40] sm:$0xff]
    %v8256 = vld [vmem:[#allocation8 + $0xe48] sm:$0xff]
    %v8257 = vld [vmem:[#allocation8 + $0xe50] sm:$0xff]
    %v8258 = vld [vmem:[#allocation8 + $0xe58] sm:$0xff]
    %v8259 = vld [vmem:[#allocation8 + $0xe60] sm:$0xff]
    %v8260 = vld [vmem:[#allocation8 + $0xe68] sm:$0xff]
    %v8261 = vld [vmem:[#allocation8 + $0xe70] sm:$0xff]
    %v8262 = vld [vmem:[#allocation8 + $0xe78] sm:$0xff]
    %v8263 = vld [vmem:[#allocation8 + $0xe80] sm:$0xff]
    %v8264 = vld [vmem:[#allocation8 + $0xe88] sm:$0xff]
    %v8265 = vld [vmem:[#allocation8 + $0xe90] sm:$0xff]
    %v8266 = vld [vmem:[#allocation8 + $0xe98] sm:$0xff]
    %v8267 = vld [vmem:[#allocation8 + $0xea0] sm:$0xff]
    %v8268 = vld [vmem:[#allocation8 + $0xea8] sm:$0xff]
    %v8269 = vld [vmem:[#allocation8 + $0xeb0] sm:$0xff]
    %v8270 = vld [vmem:[#allocation8 + $0xeb8] sm:$0xff]
    %v8271 = vld [vmem:[#allocation8 + $0xec0] sm:$0xff]
    %v8272 = vld [vmem:[#allocation8 + $0xec8] sm:$0xff]
    %v8273 = vld [vmem:[#allocation8 + $0xed0] sm:$0xff]
    %v8274 = vld [vmem:[#allocation8 + $0xed8] sm:$0xff]
    %v8275 = vld [vmem:[#allocation8 + $0xee0] sm:$0xff]
    %v8276 = vld [vmem:[#allocation8 + $0xee8] sm:$0xff]
    %v8277 = vld [vmem:[#allocation8 + $0xef0] sm:$0xff]
    %v8278 = vld [vmem:[#allocation8 + $0xef8] sm:$0xff]
    %v8279 = vld [vmem:[#allocation8 + $0xf00] sm:$0xff]
    %v8280 = vld [vmem:[#allocation8 + $0xf08] sm:$0xff]
    %v8281 = vld [vmem:[#allocation8 + $0xf10] sm:$0xff]
    %v8282 = vld [vmem:[#allocation8 + $0xf18] sm:$0xff]
    %v8283 = vld [vmem:[#allocation8 + $0xf20] sm:$0xff]
    %v8284 = vld [vmem:[#allocation8 + $0xf28] sm:$0xff]
    %v8285 = vld [vmem:[#allocation8 + $0xf30] sm:$0xff]
    %v8286 = vld [vmem:[#allocation8 + $0xf38] sm:$0xff]
    %v8287 = vld [vmem:[#allocation8 + $0xf40] sm:$0xff]
    %v8288 = vld [vmem:[#allocation8 + $0xf48] sm:$0xff]
    %v8289 = vld [vmem:[#allocation8 + $0xf50] sm:$0xff]
    %v8290 = vld [vmem:[#allocation8 + $0xf58] sm:$0xff]
    %v8291 = vld [vmem:[#allocation8 + $0xf60] sm:$0xff]
    %v8292 = vld [vmem:[#allocation8 + $0xf68] sm:$0xff]
    %v8293 = vld [vmem:[#allocation8 + $0xf70] sm:$0xff]
    %v8294 = vld [vmem:[#allocation8 + $0xf78] sm:$0xff]
    %v8295 = vld [vmem:[#allocation8 + $0xf80] sm:$0xff]
    %v8296 = vld [vmem:[#allocation8 + $0xf88] sm:$0xff]
    %v8297 = vld [vmem:[#allocation8 + $0xf90] sm:$0xff]
    %v8298 = vld [vmem:[#allocation8 + $0xf98] sm:$0xff]
    %v8299 = vld [vmem:[#allocation8 + $0xfa0] sm:$0xff]
    %v8300 = vld [vmem:[#allocation8 + $0xfa8] sm:$0xff]
    %v8301 = vld [vmem:[#allocation8 + $0xfb0] sm:$0xff]
    %v8302 = vld [vmem:[#allocation8 + $0xfb8] sm:$0xff]
    %v8303 = vld [vmem:[#allocation8 + $0xfc0] sm:$0xff]
    %v8304 = vld [vmem:[#allocation8 + $0xfc8] sm:$0xff]
    %v8305 = vld [vmem:[#allocation8 + $0xfd0] sm:$0xff]
    %v8306 = vld [vmem:[#allocation8 + $0xfd8] sm:$0xff]
    %v8307 = vld [vmem:[#allocation8 + $0xfe0] sm:$0xff]
    %v8308 = vld [vmem:[#allocation8 + $0xfe8] sm:$0xff]
    %v8309 = vld [vmem:[#allocation8 + $0xff0] sm:$0xff]
    %v8310 = vld [vmem:[#allocation8 + $0xff8] sm:$0xff]
    %v8311 = vld [vmem:[#allocation10] sm:$0xff]
    %v8313 = vlaneseq
    %v8314 = vshrl.u32 %v8313, 7
    %v8315 = vsub.s32 0, %v8314
    %v8316 = vrot.slane %v8311, %v8315
    %v8317 = vlaneseq
    %v8318 = vshrl.u32 %v8317, 7
    %v8319 = vsub.s32 1, %v8318
    %v8320 = vrot.slane %v8311, %v8319
    %v8321 = vlaneseq
    %v8322 = vshrl.u32 %v8321, 7
    %v8323 = vsub.s32 2, %v8322
    %v8324 = vrot.slane %v8311, %v8323
    %v8325 = vlaneseq
    %v8326 = vshrl.u32 %v8325, 7
    %v8327 = vsub.s32 3, %v8326
    %v8328 = vrot.slane %v8311, %v8327
    %v8329 = vlaneseq
    %v8330 = vshrl.u32 %v8329, 7
    %v8331 = vsub.s32 4, %v8330
    %v8332 = vrot.slane %v8311, %v8331
    %v8333 = vlaneseq
    %v8334 = vshrl.u32 %v8333, 7
    %v8335 = vsub.s32 5, %v8334
    %v8336 = vrot.slane %v8311, %v8335
    %v8337 = vlaneseq
    %v8338 = vshrl.u32 %v8337, 7
    %v8339 = vsub.s32 6, %v8338
    %v8340 = vrot.slane %v8311, %v8339
    %v8341 = vlaneseq
    %v8342 = vshrl.u32 %v8341, 7
    %v8343 = vsub.s32 7, %v8342
    %v8344 = vrot.slane %v8311, %v8343
    %v8865 = vunpack.c.l.b16 %v7799
    %v8866 = vunpack.c.h.b16 %v7799
    %v8867 = vunpack.c.l.b16 %v7800
    %v8868 = vunpack.c.h.b16 %v7800
    %v8869 = vunpack.c.l.b16 %v7801
    %v8870 = vunpack.c.h.b16 %v7801
    %v8871 = vunpack.c.l.b16 %v7802
    %v8872 = vunpack.c.h.b16 %v7802
    %v8873 = vunpack.c.l.b16 %v7803
    %v8874 = vunpack.c.h.b16 %v7803
    %v8875 = vunpack.c.l.b16 %v7804
    %v8876 = vunpack.c.h.b16 %v7804
    %v8877 = vunpack.c.l.b16 %v7805
    %v8878 = vunpack.c.h.b16 %v7805
    %v8879 = vunpack.c.l.b16 %v7806
    %v8880 = vunpack.c.h.b16 %v7806
    %v8881 = vunpack.c.l.b16 %v7807
    %v8882 = vunpack.c.h.b16 %v7807
    %v8883 = vunpack.c.l.b16 %v7808
    %v8884 = vunpack.c.h.b16 %v7808
    %v8885 = vunpack.c.l.b16 %v7809
    %v8886 = vunpack.c.h.b16 %v7809
    %v8887 = vunpack.c.l.b16 %v7810
    %v8888 = vunpack.c.h.b16 %v7810
    %v8889 = vunpack.c.l.b16 %v7811
    %v8890 = vunpack.c.h.b16 %v7811
    %v8891 = vunpack.c.l.b16 %v7812
    %v8892 = vunpack.c.h.b16 %v7812
    %v8893 = vunpack.c.l.b16 %v7813
    %v8894 = vunpack.c.h.b16 %v7813
    %v8895 = vunpack.c.l.b16 %v7814
    %v8896 = vunpack.c.h.b16 %v7814
    %v8897 = vunpack.c.l.b16 %v7815
    %v8898 = vunpack.c.h.b16 %v7815
    %v8899 = vunpack.c.l.b16 %v7816
    %v8900 = vunpack.c.h.b16 %v7816
    %v8901 = vunpack.c.l.b16 %v7817
    %v8902 = vunpack.c.h.b16 %v7817
    %v8903 = vunpack.c.l.b16 %v7818
    %v8904 = vunpack.c.h.b16 %v7818
    %v8905 = vunpack.c.l.b16 %v7819
    %v8906 = vunpack.c.h.b16 %v7819
    %v8907 = vunpack.c.l.b16 %v7820
    %v8908 = vunpack.c.h.b16 %v7820
    %v8909 = vunpack.c.l.b16 %v7821
    %v8910 = vunpack.c.h.b16 %v7821
    %v8911 = vunpack.c.l.b16 %v7822
    %v8912 = vunpack.c.h.b16 %v7822
    %v8913 = vunpack.c.l.b16 %v7823
    %v8914 = vunpack.c.h.b16 %v7823
    %v8915 = vunpack.c.l.b16 %v7824
    %v8916 = vunpack.c.h.b16 %v7824
    %v8917 = vunpack.c.l.b16 %v7825
    %v8918 = vunpack.c.h.b16 %v7825
    %v8919 = vunpack.c.l.b16 %v7826
    %v8920 = vunpack.c.h.b16 %v7826
    %v8921 = vunpack.c.l.b16 %v7827
    %v8922 = vunpack.c.h.b16 %v7827
    %v8923 = vunpack.c.l.b16 %v7828
    %v8924 = vunpack.c.h.b16 %v7828
    %v8925 = vunpack.c.l.b16 %v7829
    %v8926 = vunpack.c.h.b16 %v7829
    %v8927 = vunpack.c.l.b16 %v7830
    %v8928 = vunpack.c.h.b16 %v7830
    %v8929 = vunpack.c.l.b16 %v7831
    %v8930 = vunpack.c.h.b16 %v7831
    %v8931 = vunpack.c.l.b16 %v7832
    %v8932 = vunpack.c.h.b16 %v7832
    %v8933 = vunpack.c.l.b16 %v7833
    %v8934 = vunpack.c.h.b16 %v7833
    %v8935 = vunpack.c.l.b16 %v7834
    %v8936 = vunpack.c.h.b16 %v7834
    %v8937 = vunpack.c.l.b16 %v7835
    %v8938 = vunpack.c.h.b16 %v7835
    %v8939 = vunpack.c.l.b16 %v7836
    %v8940 = vunpack.c.h.b16 %v7836
    %v8941 = vunpack.c.l.b16 %v7837
    %v8942 = vunpack.c.h.b16 %v7837
    %v8943 = vunpack.c.l.b16 %v7838
    %v8944 = vunpack.c.h.b16 %v7838
    %v8945 = vunpack.c.l.b16 %v7839
    %v8946 = vunpack.c.h.b16 %v7839
    %v8947 = vunpack.c.l.b16 %v7840
    %v8948 = vunpack.c.h.b16 %v7840
    %v8949 = vunpack.c.l.b16 %v7841
    %v8950 = vunpack.c.h.b16 %v7841
    %v8951 = vunpack.c.l.b16 %v7842
    %v8952 = vunpack.c.h.b16 %v7842
    %v8953 = vunpack.c.l.b16 %v7843
    %v8954 = vunpack.c.h.b16 %v7843
    %v8955 = vunpack.c.l.b16 %v7844
    %v8956 = vunpack.c.h.b16 %v7844
    %v8957 = vunpack.c.l.b16 %v7845
    %v8958 = vunpack.c.h.b16 %v7845
    %v8959 = vunpack.c.l.b16 %v7846
    %v8960 = vunpack.c.h.b16 %v7846
    %v8961 = vunpack.c.l.b16 %v7847
    %v8962 = vunpack.c.h.b16 %v7847
    %v8963 = vunpack.c.l.b16 %v7848
    %v8964 = vunpack.c.h.b16 %v7848
    %v8965 = vunpack.c.l.b16 %v7849
    %v8966 = vunpack.c.h.b16 %v7849
    %v8967 = vunpack.c.l.b16 %v7850
    %v8968 = vunpack.c.h.b16 %v7850
    %v8969 = vunpack.c.l.b16 %v7851
    %v8970 = vunpack.c.h.b16 %v7851
    %v8971 = vunpack.c.l.b16 %v7852
    %v8972 = vunpack.c.h.b16 %v7852
    %v8973 = vunpack.c.l.b16 %v7853
    %v8974 = vunpack.c.h.b16 %v7853
    %v8975 = vunpack.c.l.b16 %v7854
    %v8976 = vunpack.c.h.b16 %v7854
    %v8977 = vunpack.c.l.b16 %v7855
    %v8978 = vunpack.c.h.b16 %v7855
    %v8979 = vunpack.c.l.b16 %v7856
    %v8980 = vunpack.c.h.b16 %v7856
    %v8981 = vunpack.c.l.b16 %v7857
    %v8982 = vunpack.c.h.b16 %v7857
    %v8983 = vunpack.c.l.b16 %v7858
    %v8984 = vunpack.c.h.b16 %v7858
    %v8985 = vunpack.c.l.b16 %v7859
    %v8986 = vunpack.c.h.b16 %v7859
    %v8987 = vunpack.c.l.b16 %v7860
    %v8988 = vunpack.c.h.b16 %v7860
    %v8989 = vunpack.c.l.b16 %v7861
    %v8990 = vunpack.c.h.b16 %v7861
    %v8991 = vunpack.c.l.b16 %v7862
    %v8992 = vunpack.c.h.b16 %v7862
    %v8993 = vunpack.c.l.b16 %v7863
    %v8994 = vunpack.c.h.b16 %v7863
    %v8995 = vunpack.c.l.b16 %v7864
    %v8996 = vunpack.c.h.b16 %v7864
    %v8997 = vunpack.c.l.b16 %v7865
    %v8998 = vunpack.c.h.b16 %v7865
    %v8999 = vunpack.c.l.b16 %v7866
    %v9000 = vunpack.c.h.b16 %v7866
    %v9001 = vunpack.c.l.b16 %v7867
    %v9002 = vunpack.c.h.b16 %v7867
    %v9003 = vunpack.c.l.b16 %v7868
    %v9004 = vunpack.c.h.b16 %v7868
    %v9005 = vunpack.c.l.b16 %v7869
    %v9006 = vunpack.c.h.b16 %v7869
    %v9007 = vunpack.c.l.b16 %v7870
    %v9008 = vunpack.c.h.b16 %v7870
    %v9009 = vunpack.c.l.b16 %v7871
    %v9010 = vunpack.c.h.b16 %v7871
    %v9011 = vunpack.c.l.b16 %v7872
    %v9012 = vunpack.c.h.b16 %v7872
    %v9013 = vunpack.c.l.b16 %v7873
    %v9014 = vunpack.c.h.b16 %v7873
    %v9015 = vunpack.c.l.b16 %v7874
    %v9016 = vunpack.c.h.b16 %v7874
    %v9017 = vunpack.c.l.b16 %v7875
    %v9018 = vunpack.c.h.b16 %v7875
    %v9019 = vunpack.c.l.b16 %v7876
    %v9020 = vunpack.c.h.b16 %v7876
    %v9021 = vunpack.c.l.b16 %v7877
    %v9022 = vunpack.c.h.b16 %v7877
    %v9023 = vunpack.c.l.b16 %v7878
    %v9024 = vunpack.c.h.b16 %v7878
    %v9025 = vunpack.c.l.b16 %v7879
    %v9026 = vunpack.c.h.b16 %v7879
    %v9027 = vunpack.c.l.b16 %v7880
    %v9028 = vunpack.c.h.b16 %v7880
    %v9029 = vunpack.c.l.b16 %v7881
    %v9030 = vunpack.c.h.b16 %v7881
    %v9031 = vunpack.c.l.b16 %v7882
    %v9032 = vunpack.c.h.b16 %v7882
    %v9033 = vunpack.c.l.b16 %v7883
    %v9034 = vunpack.c.h.b16 %v7883
    %v9035 = vunpack.c.l.b16 %v7884
    %v9036 = vunpack.c.h.b16 %v7884
    %v9037 = vunpack.c.l.b16 %v7885
    %v9038 = vunpack.c.h.b16 %v7885
    %v9039 = vunpack.c.l.b16 %v7886
    %v9040 = vunpack.c.h.b16 %v7886
    %v9041 = vunpack.c.l.b16 %v7887
    %v9042 = vunpack.c.h.b16 %v7887
    %v9043 = vunpack.c.l.b16 %v7888
    %v9044 = vunpack.c.h.b16 %v7888
    %v9045 = vunpack.c.l.b16 %v7889
    %v9046 = vunpack.c.h.b16 %v7889
    %v9047 = vunpack.c.l.b16 %v7890
    %v9048 = vunpack.c.h.b16 %v7890
    %v9049 = vunpack.c.l.b16 %v7891
    %v9050 = vunpack.c.h.b16 %v7891
    %v9051 = vunpack.c.l.b16 %v7892
    %v9052 = vunpack.c.h.b16 %v7892
    %v9053 = vunpack.c.l.b16 %v7893
    %v9054 = vunpack.c.h.b16 %v7893
    %v9055 = vunpack.c.l.b16 %v7894
    %v9056 = vunpack.c.h.b16 %v7894
    %v9057 = vunpack.c.l.b16 %v7895
    %v9058 = vunpack.c.h.b16 %v7895
    %v9059 = vunpack.c.l.b16 %v7896
    %v9060 = vunpack.c.h.b16 %v7896
    %v9061 = vunpack.c.l.b16 %v7897
    %v9062 = vunpack.c.h.b16 %v7897
    %v9063 = vunpack.c.l.b16 %v7898
    %v9064 = vunpack.c.h.b16 %v7898
    %v9065 = vunpack.c.l.b16 %v7899
    %v9066 = vunpack.c.h.b16 %v7899
    %v9067 = vunpack.c.l.b16 %v7900
    %v9068 = vunpack.c.h.b16 %v7900
    %v9069 = vunpack.c.l.b16 %v7901
    %v9070 = vunpack.c.h.b16 %v7901
    %v9071 = vunpack.c.l.b16 %v7902
    %v9072 = vunpack.c.h.b16 %v7902
    %v9073 = vunpack.c.l.b16 %v7903
    %v9074 = vunpack.c.h.b16 %v7903
    %v9075 = vunpack.c.l.b16 %v7904
    %v9076 = vunpack.c.h.b16 %v7904
    %v9077 = vunpack.c.l.b16 %v7905
    %v9078 = vunpack.c.h.b16 %v7905
    %v9079 = vunpack.c.l.b16 %v7906
    %v9080 = vunpack.c.h.b16 %v7906
    %v9081 = vunpack.c.l.b16 %v7907
    %v9082 = vunpack.c.h.b16 %v7907
    %v9083 = vunpack.c.l.b16 %v7908
    %v9084 = vunpack.c.h.b16 %v7908
    %v9085 = vunpack.c.l.b16 %v7909
    %v9086 = vunpack.c.h.b16 %v7909
    %v9087 = vunpack.c.l.b16 %v7910
    %v9088 = vunpack.c.h.b16 %v7910
    %v9089 = vunpack.c.l.b16 %v7911
    %v9090 = vunpack.c.h.b16 %v7911
    %v9091 = vunpack.c.l.b16 %v7912
    %v9092 = vunpack.c.h.b16 %v7912
    %v9093 = vunpack.c.l.b16 %v7913
    %v9094 = vunpack.c.h.b16 %v7913
    %v9095 = vunpack.c.l.b16 %v7914
    %v9096 = vunpack.c.h.b16 %v7914
    %v9097 = vunpack.c.l.b16 %v7915
    %v9098 = vunpack.c.h.b16 %v7915
    %v9099 = vunpack.c.l.b16 %v7916
    %v9100 = vunpack.c.h.b16 %v7916
    %v9101 = vunpack.c.l.b16 %v7917
    %v9102 = vunpack.c.h.b16 %v7917
    %v9103 = vunpack.c.l.b16 %v7918
    %v9104 = vunpack.c.h.b16 %v7918
    %v9105 = vunpack.c.l.b16 %v7919
    %v9106 = vunpack.c.h.b16 %v7919
    %v9107 = vunpack.c.l.b16 %v7920
    %v9108 = vunpack.c.h.b16 %v7920
    %v9109 = vunpack.c.l.b16 %v7921
    %v9110 = vunpack.c.h.b16 %v7921
    %v9111 = vunpack.c.l.b16 %v7922
    %v9112 = vunpack.c.h.b16 %v7922
    %v9113 = vunpack.c.l.b16 %v7923
    %v9114 = vunpack.c.h.b16 %v7923
    %v9115 = vunpack.c.l.b16 %v7924
    %v9116 = vunpack.c.h.b16 %v7924
    %v9117 = vunpack.c.l.b16 %v7925
    %v9118 = vunpack.c.h.b16 %v7925
    %v9119 = vunpack.c.l.b16 %v7926
    %v9120 = vunpack.c.h.b16 %v7926
    %v9121 = vunpack.c.l.b16 %v7927
    %v9122 = vunpack.c.h.b16 %v7927
    %v9123 = vunpack.c.l.b16 %v7928
    %v9124 = vunpack.c.h.b16 %v7928
    %v9125 = vunpack.c.l.b16 %v7929
    %v9126 = vunpack.c.h.b16 %v7929
    %v9127 = vunpack.c.l.b16 %v7930
    %v9128 = vunpack.c.h.b16 %v7930
    %v9129 = vunpack.c.l.b16 %v7931
    %v9130 = vunpack.c.h.b16 %v7931
    %v9131 = vunpack.c.l.b16 %v7932
    %v9132 = vunpack.c.h.b16 %v7932
    %v9133 = vunpack.c.l.b16 %v7933
    %v9134 = vunpack.c.h.b16 %v7933
    %v9135 = vunpack.c.l.b16 %v7934
    %v9136 = vunpack.c.h.b16 %v7934
    %v9137 = vunpack.c.l.b16 %v7935
    %v9138 = vunpack.c.h.b16 %v7935
    %v9139 = vunpack.c.l.b16 %v7936
    %v9140 = vunpack.c.h.b16 %v7936
    %v9141 = vunpack.c.l.b16 %v7937
    %v9142 = vunpack.c.h.b16 %v7937
    %v9143 = vunpack.c.l.b16 %v7938
    %v9144 = vunpack.c.h.b16 %v7938
    %v9145 = vunpack.c.l.b16 %v7939
    %v9146 = vunpack.c.h.b16 %v7939
    %v9147 = vunpack.c.l.b16 %v7940
    %v9148 = vunpack.c.h.b16 %v7940
    %v9149 = vunpack.c.l.b16 %v7941
    %v9150 = vunpack.c.h.b16 %v7941
    %v9151 = vunpack.c.l.b16 %v7942
    %v9152 = vunpack.c.h.b16 %v7942
    %v9153 = vunpack.c.l.b16 %v7943
    %v9154 = vunpack.c.h.b16 %v7943
    %v9155 = vunpack.c.l.b16 %v7944
    %v9156 = vunpack.c.h.b16 %v7944
    %v9157 = vunpack.c.l.b16 %v7945
    %v9158 = vunpack.c.h.b16 %v7945
    %v9159 = vunpack.c.l.b16 %v7946
    %v9160 = vunpack.c.h.b16 %v7946
    %v9161 = vunpack.c.l.b16 %v7947
    %v9162 = vunpack.c.h.b16 %v7947
    %v9163 = vunpack.c.l.b16 %v7948
    %v9164 = vunpack.c.h.b16 %v7948
    %v9165 = vunpack.c.l.b16 %v7949
    %v9166 = vunpack.c.h.b16 %v7949
    %v9167 = vunpack.c.l.b16 %v7950
    %v9168 = vunpack.c.h.b16 %v7950
    %v9169 = vunpack.c.l.b16 %v7951
    %v9170 = vunpack.c.h.b16 %v7951
    %v9171 = vunpack.c.l.b16 %v7952
    %v9172 = vunpack.c.h.b16 %v7952
    %v9173 = vunpack.c.l.b16 %v7953
    %v9174 = vunpack.c.h.b16 %v7953
    %v9175 = vunpack.c.l.b16 %v7954
    %v9176 = vunpack.c.h.b16 %v7954
    %v9177 = vunpack.c.l.b16 %v7955
    %v9178 = vunpack.c.h.b16 %v7955
    %v9179 = vunpack.c.l.b16 %v7956
    %v9180 = vunpack.c.h.b16 %v7956
    %v9181 = vunpack.c.l.b16 %v7957
    %v9182 = vunpack.c.h.b16 %v7957
    %v9183 = vunpack.c.l.b16 %v7958
    %v9184 = vunpack.c.h.b16 %v7958
    %v9185 = vunpack.c.l.b16 %v7959
    %v9186 = vunpack.c.h.b16 %v7959
    %v9187 = vunpack.c.l.b16 %v7960
    %v9188 = vunpack.c.h.b16 %v7960
    %v9189 = vunpack.c.l.b16 %v7961
    %v9190 = vunpack.c.h.b16 %v7961
    %v9191 = vunpack.c.l.b16 %v7962
    %v9192 = vunpack.c.h.b16 %v7962
    %v9193 = vunpack.c.l.b16 %v7963
    %v9194 = vunpack.c.h.b16 %v7963
    %v9195 = vunpack.c.l.b16 %v7964
    %v9196 = vunpack.c.h.b16 %v7964
    %v9197 = vunpack.c.l.b16 %v7965
    %v9198 = vunpack.c.h.b16 %v7965
    %v9199 = vunpack.c.l.b16 %v7966
    %v9200 = vunpack.c.h.b16 %v7966
    %v9201 = vunpack.c.l.b16 %v7967
    %v9202 = vunpack.c.h.b16 %v7967
    %v9203 = vunpack.c.l.b16 %v7968
    %v9204 = vunpack.c.h.b16 %v7968
    %v9205 = vunpack.c.l.b16 %v7969
    %v9206 = vunpack.c.h.b16 %v7969
    %v9207 = vunpack.c.l.b16 %v7970
    %v9208 = vunpack.c.h.b16 %v7970
    %v9209 = vunpack.c.l.b16 %v7971
    %v9210 = vunpack.c.h.b16 %v7971
    %v9211 = vunpack.c.l.b16 %v7972
    %v9212 = vunpack.c.h.b16 %v7972
    %v9213 = vunpack.c.l.b16 %v7973
    %v9214 = vunpack.c.h.b16 %v7973
    %v9215 = vunpack.c.l.b16 %v7974
    %v9216 = vunpack.c.h.b16 %v7974
    %v9217 = vunpack.c.l.b16 %v7975
    %v9218 = vunpack.c.h.b16 %v7975
    %v9219 = vunpack.c.l.b16 %v7976
    %v9220 = vunpack.c.h.b16 %v7976
    %v9221 = vunpack.c.l.b16 %v7977
    %v9222 = vunpack.c.h.b16 %v7977
    %v9223 = vunpack.c.l.b16 %v7978
    %v9224 = vunpack.c.h.b16 %v7978
    %v9225 = vunpack.c.l.b16 %v7979
    %v9226 = vunpack.c.h.b16 %v7979
    %v9227 = vunpack.c.l.b16 %v7980
    %v9228 = vunpack.c.h.b16 %v7980
    %v9229 = vunpack.c.l.b16 %v7981
    %v9230 = vunpack.c.h.b16 %v7981
    %v9231 = vunpack.c.l.b16 %v7982
    %v9232 = vunpack.c.h.b16 %v7982
    %v9233 = vunpack.c.l.b16 %v7983
    %v9234 = vunpack.c.h.b16 %v7983
    %v9235 = vunpack.c.l.b16 %v7984
    %v9236 = vunpack.c.h.b16 %v7984
    %v9237 = vunpack.c.l.b16 %v7985
    %v9238 = vunpack.c.h.b16 %v7985
    %v9239 = vunpack.c.l.b16 %v7986
    %v9240 = vunpack.c.h.b16 %v7986
    %v9241 = vunpack.c.l.b16 %v7987
    %v9242 = vunpack.c.h.b16 %v7987
    %v9243 = vunpack.c.l.b16 %v7988
    %v9244 = vunpack.c.h.b16 %v7988
    %v9245 = vunpack.c.l.b16 %v7989
    %v9246 = vunpack.c.h.b16 %v7989
    %v9247 = vunpack.c.l.b16 %v7990
    %v9248 = vunpack.c.h.b16 %v7990
    %v9249 = vunpack.c.l.b16 %v7991
    %v9250 = vunpack.c.h.b16 %v7991
    %v9251 = vunpack.c.l.b16 %v7992
    %v9252 = vunpack.c.h.b16 %v7992
    %v9253 = vunpack.c.l.b16 %v7993
    %v9254 = vunpack.c.h.b16 %v7993
    %v9255 = vunpack.c.l.b16 %v7994
    %v9256 = vunpack.c.h.b16 %v7994
    %v9257 = vunpack.c.l.b16 %v7995
    %v9258 = vunpack.c.h.b16 %v7995
    %v9259 = vunpack.c.l.b16 %v7996
    %v9260 = vunpack.c.h.b16 %v7996
    %v9261 = vunpack.c.l.b16 %v7997
    %v9262 = vunpack.c.h.b16 %v7997
    %v9263 = vunpack.c.l.b16 %v7998
    %v9264 = vunpack.c.h.b16 %v7998
    %v9265 = vunpack.c.l.b16 %v7999
    %v9266 = vunpack.c.h.b16 %v7999
    %v9267 = vunpack.c.l.b16 %v8000
    %v9268 = vunpack.c.h.b16 %v8000
    %v9269 = vunpack.c.l.b16 %v8001
    %v9270 = vunpack.c.h.b16 %v8001
    %v9271 = vunpack.c.l.b16 %v8002
    %v9272 = vunpack.c.h.b16 %v8002
    %v9273 = vunpack.c.l.b16 %v8003
    %v9274 = vunpack.c.h.b16 %v8003
    %v9275 = vunpack.c.l.b16 %v8004
    %v9276 = vunpack.c.h.b16 %v8004
    %v9277 = vunpack.c.l.b16 %v8005
    %v9278 = vunpack.c.h.b16 %v8005
    %v9279 = vunpack.c.l.b16 %v8006
    %v9280 = vunpack.c.h.b16 %v8006
    %v9281 = vunpack.c.l.b16 %v8007
    %v9282 = vunpack.c.h.b16 %v8007
    %v9283 = vunpack.c.l.b16 %v8008
    %v9284 = vunpack.c.h.b16 %v8008
    %v9285 = vunpack.c.l.b16 %v8009
    %v9286 = vunpack.c.h.b16 %v8009
    %v9287 = vunpack.c.l.b16 %v8010
    %v9288 = vunpack.c.h.b16 %v8010
    %v9289 = vunpack.c.l.b16 %v8011
    %v9290 = vunpack.c.h.b16 %v8011
    %v9291 = vunpack.c.l.b16 %v8012
    %v9292 = vunpack.c.h.b16 %v8012
    %v9293 = vunpack.c.l.b16 %v8013
    %v9294 = vunpack.c.h.b16 %v8013
    %v9295 = vunpack.c.l.b16 %v8014
    %v9296 = vunpack.c.h.b16 %v8014
    %v9297 = vunpack.c.l.b16 %v8015
    %v9298 = vunpack.c.h.b16 %v8015
    %v9299 = vunpack.c.l.b16 %v8016
    %v9300 = vunpack.c.h.b16 %v8016
    %v9301 = vunpack.c.l.b16 %v8017
    %v9302 = vunpack.c.h.b16 %v8017
    %v9303 = vunpack.c.l.b16 %v8018
    %v9304 = vunpack.c.h.b16 %v8018
    %v9305 = vunpack.c.l.b16 %v8019
    %v9306 = vunpack.c.h.b16 %v8019
    %v9307 = vunpack.c.l.b16 %v8020
    %v9308 = vunpack.c.h.b16 %v8020
    %v9309 = vunpack.c.l.b16 %v8021
    %v9310 = vunpack.c.h.b16 %v8021
    %v9311 = vunpack.c.l.b16 %v8022
    %v9312 = vunpack.c.h.b16 %v8022
    %v9313 = vunpack.c.l.b16 %v8023
    %v9314 = vunpack.c.h.b16 %v8023
    %v9315 = vunpack.c.l.b16 %v8024
    %v9316 = vunpack.c.h.b16 %v8024
    %v9317 = vunpack.c.l.b16 %v8025
    %v9318 = vunpack.c.h.b16 %v8025
    %v9319 = vunpack.c.l.b16 %v8026
    %v9320 = vunpack.c.h.b16 %v8026
    %v9321 = vunpack.c.l.b16 %v8027
    %v9322 = vunpack.c.h.b16 %v8027
    %v9323 = vunpack.c.l.b16 %v8028
    %v9324 = vunpack.c.h.b16 %v8028
    %v9325 = vunpack.c.l.b16 %v8029
    %v9326 = vunpack.c.h.b16 %v8029
    %v9327 = vunpack.c.l.b16 %v8030
    %v9328 = vunpack.c.h.b16 %v8030
    %v9329 = vunpack.c.l.b16 %v8031
    %v9330 = vunpack.c.h.b16 %v8031
    %v9331 = vunpack.c.l.b16 %v8032
    %v9332 = vunpack.c.h.b16 %v8032
    %v9333 = vunpack.c.l.b16 %v8033
    %v9334 = vunpack.c.h.b16 %v8033
    %v9335 = vunpack.c.l.b16 %v8034
    %v9336 = vunpack.c.h.b16 %v8034
    %v9337 = vunpack.c.l.b16 %v8035
    %v9338 = vunpack.c.h.b16 %v8035
    %v9339 = vunpack.c.l.b16 %v8036
    %v9340 = vunpack.c.h.b16 %v8036
    %v9341 = vunpack.c.l.b16 %v8037
    %v9342 = vunpack.c.h.b16 %v8037
    %v9343 = vunpack.c.l.b16 %v8038
    %v9344 = vunpack.c.h.b16 %v8038
    %v9345 = vunpack.c.l.b16 %v8039
    %v9346 = vunpack.c.h.b16 %v8039
    %v9347 = vunpack.c.l.b16 %v8040
    %v9348 = vunpack.c.h.b16 %v8040
    %v9349 = vunpack.c.l.b16 %v8041
    %v9350 = vunpack.c.h.b16 %v8041
    %v9351 = vunpack.c.l.b16 %v8042
    %v9352 = vunpack.c.h.b16 %v8042
    %v9353 = vunpack.c.l.b16 %v8043
    %v9354 = vunpack.c.h.b16 %v8043
    %v9355 = vunpack.c.l.b16 %v8044
    %v9356 = vunpack.c.h.b16 %v8044
    %v9357 = vunpack.c.l.b16 %v8045
    %v9358 = vunpack.c.h.b16 %v8045
    %v9359 = vunpack.c.l.b16 %v8046
    %v9360 = vunpack.c.h.b16 %v8046
    %v9361 = vunpack.c.l.b16 %v8047
    %v9362 = vunpack.c.h.b16 %v8047
    %v9363 = vunpack.c.l.b16 %v8048
    %v9364 = vunpack.c.h.b16 %v8048
    %v9365 = vunpack.c.l.b16 %v8049
    %v9366 = vunpack.c.h.b16 %v8049
    %v9367 = vunpack.c.l.b16 %v8050
    %v9368 = vunpack.c.h.b16 %v8050
    %v9369 = vunpack.c.l.b16 %v8051
    %v9370 = vunpack.c.h.b16 %v8051
    %v9371 = vunpack.c.l.b16 %v8052
    %v9372 = vunpack.c.h.b16 %v8052
    %v9373 = vunpack.c.l.b16 %v8053
    %v9374 = vunpack.c.h.b16 %v8053
    %v9375 = vunpack.c.l.b16 %v8054
    %v9376 = vunpack.c.h.b16 %v8054
    %v9377 = vunpack.c.l.b16 %v8055
    %v9378 = vunpack.c.h.b16 %v8055
    %v9379 = vunpack.c.l.b16 %v8056
    %v9380 = vunpack.c.h.b16 %v8056
    %v9381 = vunpack.c.l.b16 %v8057
    %v9382 = vunpack.c.h.b16 %v8057
    %v9383 = vunpack.c.l.b16 %v8058
    %v9384 = vunpack.c.h.b16 %v8058
    %v9385 = vunpack.c.l.b16 %v8059
    %v9386 = vunpack.c.h.b16 %v8059
    %v9387 = vunpack.c.l.b16 %v8060
    %v9388 = vunpack.c.h.b16 %v8060
    %v9389 = vunpack.c.l.b16 %v8061
    %v9390 = vunpack.c.h.b16 %v8061
    %v9391 = vunpack.c.l.b16 %v8062
    %v9392 = vunpack.c.h.b16 %v8062
    %v9393 = vunpack.c.l.b16 %v8063
    %v9394 = vunpack.c.h.b16 %v8063
    %v9395 = vunpack.c.l.b16 %v8064
    %v9396 = vunpack.c.h.b16 %v8064
    %v9397 = vunpack.c.l.b16 %v8065
    %v9398 = vunpack.c.h.b16 %v8065
    %v9399 = vunpack.c.l.b16 %v8066
    %v9400 = vunpack.c.h.b16 %v8066
    %v9401 = vunpack.c.l.b16 %v8067
    %v9402 = vunpack.c.h.b16 %v8067
    %v9403 = vunpack.c.l.b16 %v8068
    %v9404 = vunpack.c.h.b16 %v8068
    %v9405 = vunpack.c.l.b16 %v8069
    %v9406 = vunpack.c.h.b16 %v8069
    %v9407 = vunpack.c.l.b16 %v8070
    %v9408 = vunpack.c.h.b16 %v8070
    %v9409 = vunpack.c.l.b16 %v8071
    %v9410 = vunpack.c.h.b16 %v8071
    %v9411 = vunpack.c.l.b16 %v8072
    %v9412 = vunpack.c.h.b16 %v8072
    %v9413 = vunpack.c.l.b16 %v8073
    %v9414 = vunpack.c.h.b16 %v8073
    %v9415 = vunpack.c.l.b16 %v8074
    %v9416 = vunpack.c.h.b16 %v8074
    %v9417 = vunpack.c.l.b16 %v8075
    %v9418 = vunpack.c.h.b16 %v8075
    %v9419 = vunpack.c.l.b16 %v8076
    %v9420 = vunpack.c.h.b16 %v8076
    %v9421 = vunpack.c.l.b16 %v8077
    %v9422 = vunpack.c.h.b16 %v8077
    %v9423 = vunpack.c.l.b16 %v8078
    %v9424 = vunpack.c.h.b16 %v8078
    %v9425 = vunpack.c.l.b16 %v8079
    %v9426 = vunpack.c.h.b16 %v8079
    %v9427 = vunpack.c.l.b16 %v8080
    %v9428 = vunpack.c.h.b16 %v8080
    %v9429 = vunpack.c.l.b16 %v8081
    %v9430 = vunpack.c.h.b16 %v8081
    %v9431 = vunpack.c.l.b16 %v8082
    %v9432 = vunpack.c.h.b16 %v8082
    %v9433 = vunpack.c.l.b16 %v8083
    %v9434 = vunpack.c.h.b16 %v8083
    %v9435 = vunpack.c.l.b16 %v8084
    %v9436 = vunpack.c.h.b16 %v8084
    %v9437 = vunpack.c.l.b16 %v8085
    %v9438 = vunpack.c.h.b16 %v8085
    %v9439 = vunpack.c.l.b16 %v8086
    %v9440 = vunpack.c.h.b16 %v8086
    %v9441 = vunpack.c.l.b16 %v8087
    %v9442 = vunpack.c.h.b16 %v8087
    %v9443 = vunpack.c.l.b16 %v8088
    %v9444 = vunpack.c.h.b16 %v8088
    %v9445 = vunpack.c.l.b16 %v8089
    %v9446 = vunpack.c.h.b16 %v8089
    %v9447 = vunpack.c.l.b16 %v8090
    %v9448 = vunpack.c.h.b16 %v8090
    %v9449 = vunpack.c.l.b16 %v8091
    %v9450 = vunpack.c.h.b16 %v8091
    %v9451 = vunpack.c.l.b16 %v8092
    %v9452 = vunpack.c.h.b16 %v8092
    %v9453 = vunpack.c.l.b16 %v8093
    %v9454 = vunpack.c.h.b16 %v8093
    %v9455 = vunpack.c.l.b16 %v8094
    %v9456 = vunpack.c.h.b16 %v8094
    %v9457 = vunpack.c.l.b16 %v8095
    %v9458 = vunpack.c.h.b16 %v8095
    %v9459 = vunpack.c.l.b16 %v8096
    %v9460 = vunpack.c.h.b16 %v8096
    %v9461 = vunpack.c.l.b16 %v8097
    %v9462 = vunpack.c.h.b16 %v8097
    %v9463 = vunpack.c.l.b16 %v8098
    %v9464 = vunpack.c.h.b16 %v8098
    %v9465 = vunpack.c.l.b16 %v8099
    %v9466 = vunpack.c.h.b16 %v8099
    %v9467 = vunpack.c.l.b16 %v8100
    %v9468 = vunpack.c.h.b16 %v8100
    %v9469 = vunpack.c.l.b16 %v8101
    %v9470 = vunpack.c.h.b16 %v8101
    %v9471 = vunpack.c.l.b16 %v8102
    %v9472 = vunpack.c.h.b16 %v8102
    %v9473 = vunpack.c.l.b16 %v8103
    %v9474 = vunpack.c.h.b16 %v8103
    %v9475 = vunpack.c.l.b16 %v8104
    %v9476 = vunpack.c.h.b16 %v8104
    %v9477 = vunpack.c.l.b16 %v8105
    %v9478 = vunpack.c.h.b16 %v8105
    %v9479 = vunpack.c.l.b16 %v8106
    %v9480 = vunpack.c.h.b16 %v8106
    %v9481 = vunpack.c.l.b16 %v8107
    %v9482 = vunpack.c.h.b16 %v8107
    %v9483 = vunpack.c.l.b16 %v8108
    %v9484 = vunpack.c.h.b16 %v8108
    %v9485 = vunpack.c.l.b16 %v8109
    %v9486 = vunpack.c.h.b16 %v8109
    %v9487 = vunpack.c.l.b16 %v8110
    %v9488 = vunpack.c.h.b16 %v8110
    %v9489 = vunpack.c.l.b16 %v8111
    %v9490 = vunpack.c.h.b16 %v8111
    %v9491 = vunpack.c.l.b16 %v8112
    %v9492 = vunpack.c.h.b16 %v8112
    %v9493 = vunpack.c.l.b16 %v8113
    %v9494 = vunpack.c.h.b16 %v8113
    %v9495 = vunpack.c.l.b16 %v8114
    %v9496 = vunpack.c.h.b16 %v8114
    %v9497 = vunpack.c.l.b16 %v8115
    %v9498 = vunpack.c.h.b16 %v8115
    %v9499 = vunpack.c.l.b16 %v8116
    %v9500 = vunpack.c.h.b16 %v8116
    %v9501 = vunpack.c.l.b16 %v8117
    %v9502 = vunpack.c.h.b16 %v8117
    %v9503 = vunpack.c.l.b16 %v8118
    %v9504 = vunpack.c.h.b16 %v8118
    %v9505 = vunpack.c.l.b16 %v8119
    %v9506 = vunpack.c.h.b16 %v8119
    %v9507 = vunpack.c.l.b16 %v8120
    %v9508 = vunpack.c.h.b16 %v8120
    %v9509 = vunpack.c.l.b16 %v8121
    %v9510 = vunpack.c.h.b16 %v8121
    %v9511 = vunpack.c.l.b16 %v8122
    %v9512 = vunpack.c.h.b16 %v8122
    %v9513 = vunpack.c.l.b16 %v8123
    %v9514 = vunpack.c.h.b16 %v8123
    %v9515 = vunpack.c.l.b16 %v8124
    %v9516 = vunpack.c.h.b16 %v8124
    %v9517 = vunpack.c.l.b16 %v8125
    %v9518 = vunpack.c.h.b16 %v8125
    %v9519 = vunpack.c.l.b16 %v8126
    %v9520 = vunpack.c.h.b16 %v8126
    %v9521 = vunpack.c.l.b16 %v8127
    %v9522 = vunpack.c.h.b16 %v8127
    %v9523 = vunpack.c.l.b16 %v8128
    %v9524 = vunpack.c.h.b16 %v8128
    %v9525 = vunpack.c.l.b16 %v8129
    %v9526 = vunpack.c.h.b16 %v8129
    %v9527 = vunpack.c.l.b16 %v8130
    %v9528 = vunpack.c.h.b16 %v8130
    %v9529 = vunpack.c.l.b16 %v8131
    %v9530 = vunpack.c.h.b16 %v8131
    %v9531 = vunpack.c.l.b16 %v8132
    %v9532 = vunpack.c.h.b16 %v8132
    %v9533 = vunpack.c.l.b16 %v8133
    %v9534 = vunpack.c.h.b16 %v8133
    %v9535 = vunpack.c.l.b16 %v8134
    %v9536 = vunpack.c.h.b16 %v8134
    %v9537 = vunpack.c.l.b16 %v8135
    %v9538 = vunpack.c.h.b16 %v8135
    %v9539 = vunpack.c.l.b16 %v8136
    %v9540 = vunpack.c.h.b16 %v8136
    %v9541 = vunpack.c.l.b16 %v8137
    %v9542 = vunpack.c.h.b16 %v8137
    %v9543 = vunpack.c.l.b16 %v8138
    %v9544 = vunpack.c.h.b16 %v8138
    %v9545 = vunpack.c.l.b16 %v8139
    %v9546 = vunpack.c.h.b16 %v8139
    %v9547 = vunpack.c.l.b16 %v8140
    %v9548 = vunpack.c.h.b16 %v8140
    %v9549 = vunpack.c.l.b16 %v8141
    %v9550 = vunpack.c.h.b16 %v8141
    %v9551 = vunpack.c.l.b16 %v8142
    %v9552 = vunpack.c.h.b16 %v8142
    %v9553 = vunpack.c.l.b16 %v8143
    %v9554 = vunpack.c.h.b16 %v8143
    %v9555 = vunpack.c.l.b16 %v8144
    %v9556 = vunpack.c.h.b16 %v8144
    %v9557 = vunpack.c.l.b16 %v8145
    %v9558 = vunpack.c.h.b16 %v8145
    %v9559 = vunpack.c.l.b16 %v8146
    %v9560 = vunpack.c.h.b16 %v8146
    %v9561 = vunpack.c.l.b16 %v8147
    %v9562 = vunpack.c.h.b16 %v8147
    %v9563 = vunpack.c.l.b16 %v8148
    %v9564 = vunpack.c.h.b16 %v8148
    %v9565 = vunpack.c.l.b16 %v8149
    %v9566 = vunpack.c.h.b16 %v8149
    %v9567 = vunpack.c.l.b16 %v8150
    %v9568 = vunpack.c.h.b16 %v8150
    %v9569 = vunpack.c.l.b16 %v8151
    %v9570 = vunpack.c.h.b16 %v8151
    %v9571 = vunpack.c.l.b16 %v8152
    %v9572 = vunpack.c.h.b16 %v8152
    %v9573 = vunpack.c.l.b16 %v8153
    %v9574 = vunpack.c.h.b16 %v8153
    %v9575 = vunpack.c.l.b16 %v8154
    %v9576 = vunpack.c.h.b16 %v8154
    %v9577 = vunpack.c.l.b16 %v8155
    %v9578 = vunpack.c.h.b16 %v8155
    %v9579 = vunpack.c.l.b16 %v8156
    %v9580 = vunpack.c.h.b16 %v8156
    %v9581 = vunpack.c.l.b16 %v8157
    %v9582 = vunpack.c.h.b16 %v8157
    %v9583 = vunpack.c.l.b16 %v8158
    %v9584 = vunpack.c.h.b16 %v8158
    %v9585 = vunpack.c.l.b16 %v8159
    %v9586 = vunpack.c.h.b16 %v8159
    %v9587 = vunpack.c.l.b16 %v8160
    %v9588 = vunpack.c.h.b16 %v8160
    %v9589 = vunpack.c.l.b16 %v8161
    %v9590 = vunpack.c.h.b16 %v8161
    %v9591 = vunpack.c.l.b16 %v8162
    %v9592 = vunpack.c.h.b16 %v8162
    %v9593 = vunpack.c.l.b16 %v8163
    %v9594 = vunpack.c.h.b16 %v8163
    %v9595 = vunpack.c.l.b16 %v8164
    %v9596 = vunpack.c.h.b16 %v8164
    %v9597 = vunpack.c.l.b16 %v8165
    %v9598 = vunpack.c.h.b16 %v8165
    %v9599 = vunpack.c.l.b16 %v8166
    %v9600 = vunpack.c.h.b16 %v8166
    %v9601 = vunpack.c.l.b16 %v8167
    %v9602 = vunpack.c.h.b16 %v8167
    %v9603 = vunpack.c.l.b16 %v8168
    %v9604 = vunpack.c.h.b16 %v8168
    %v9605 = vunpack.c.l.b16 %v8169
    %v9606 = vunpack.c.h.b16 %v8169
    %v9607 = vunpack.c.l.b16 %v8170
    %v9608 = vunpack.c.h.b16 %v8170
    %v9609 = vunpack.c.l.b16 %v8171
    %v9610 = vunpack.c.h.b16 %v8171
    %v9611 = vunpack.c.l.b16 %v8172
    %v9612 = vunpack.c.h.b16 %v8172
    %v9613 = vunpack.c.l.b16 %v8173
    %v9614 = vunpack.c.h.b16 %v8173
    %v9615 = vunpack.c.l.b16 %v8174
    %v9616 = vunpack.c.h.b16 %v8174
    %v9617 = vunpack.c.l.b16 %v8175
    %v9618 = vunpack.c.h.b16 %v8175
    %v9619 = vunpack.c.l.b16 %v8176
    %v9620 = vunpack.c.h.b16 %v8176
    %v9621 = vunpack.c.l.b16 %v8177
    %v9622 = vunpack.c.h.b16 %v8177
    %v9623 = vunpack.c.l.b16 %v8178
    %v9624 = vunpack.c.h.b16 %v8178
    %v9625 = vunpack.c.l.b16 %v8179
    %v9626 = vunpack.c.h.b16 %v8179
    %v9627 = vunpack.c.l.b16 %v8180
    %v9628 = vunpack.c.h.b16 %v8180
    %v9629 = vunpack.c.l.b16 %v8181
    %v9630 = vunpack.c.h.b16 %v8181
    %v9631 = vunpack.c.l.b16 %v8182
    %v9632 = vunpack.c.h.b16 %v8182
    %v9633 = vunpack.c.l.b16 %v8183
    %v9634 = vunpack.c.h.b16 %v8183
    %v9635 = vunpack.c.l.b16 %v8184
    %v9636 = vunpack.c.h.b16 %v8184
    %v9637 = vunpack.c.l.b16 %v8185
    %v9638 = vunpack.c.h.b16 %v8185
    %v9639 = vunpack.c.l.b16 %v8186
    %v9640 = vunpack.c.h.b16 %v8186
    %v9641 = vunpack.c.l.b16 %v8187
    %v9642 = vunpack.c.h.b16 %v8187
    %v9643 = vunpack.c.l.b16 %v8188
    %v9644 = vunpack.c.h.b16 %v8188
    %v9645 = vunpack.c.l.b16 %v8189
    %v9646 = vunpack.c.h.b16 %v8189
    %v9647 = vunpack.c.l.b16 %v8190
    %v9648 = vunpack.c.h.b16 %v8190
    %v9649 = vunpack.c.l.b16 %v8191
    %v9650 = vunpack.c.h.b16 %v8191
    %v9651 = vunpack.c.l.b16 %v8192
    %v9652 = vunpack.c.h.b16 %v8192
    %v9653 = vunpack.c.l.b16 %v8193
    %v9654 = vunpack.c.h.b16 %v8193
    %v9655 = vunpack.c.l.b16 %v8194
    %v9656 = vunpack.c.h.b16 %v8194
    %v9657 = vunpack.c.l.b16 %v8195
    %v9658 = vunpack.c.h.b16 %v8195
    %v9659 = vunpack.c.l.b16 %v8196
    %v9660 = vunpack.c.h.b16 %v8196
    %v9661 = vunpack.c.l.b16 %v8197
    %v9662 = vunpack.c.h.b16 %v8197
    %v9663 = vunpack.c.l.b16 %v8198
    %v9664 = vunpack.c.h.b16 %v8198
    %v9665 = vunpack.c.l.b16 %v8199
    %v9666 = vunpack.c.h.b16 %v8199
    %v9667 = vunpack.c.l.b16 %v8200
    %v9668 = vunpack.c.h.b16 %v8200
    %v9669 = vunpack.c.l.b16 %v8201
    %v9670 = vunpack.c.h.b16 %v8201
    %v9671 = vunpack.c.l.b16 %v8202
    %v9672 = vunpack.c.h.b16 %v8202
    %v9673 = vunpack.c.l.b16 %v8203
    %v9674 = vunpack.c.h.b16 %v8203
    %v9675 = vunpack.c.l.b16 %v8204
    %v9676 = vunpack.c.h.b16 %v8204
    %v9677 = vunpack.c.l.b16 %v8205
    %v9678 = vunpack.c.h.b16 %v8205
    %v9679 = vunpack.c.l.b16 %v8206
    %v9680 = vunpack.c.h.b16 %v8206
    %v9681 = vunpack.c.l.b16 %v8207
    %v9682 = vunpack.c.h.b16 %v8207
    %v9683 = vunpack.c.l.b16 %v8208
    %v9684 = vunpack.c.h.b16 %v8208
    %v9685 = vunpack.c.l.b16 %v8209
    %v9686 = vunpack.c.h.b16 %v8209
    %v9687 = vunpack.c.l.b16 %v8210
    %v9688 = vunpack.c.h.b16 %v8210
    %v9689 = vunpack.c.l.b16 %v8211
    %v9690 = vunpack.c.h.b16 %v8211
    %v9691 = vunpack.c.l.b16 %v8212
    %v9692 = vunpack.c.h.b16 %v8212
    %v9693 = vunpack.c.l.b16 %v8213
    %v9694 = vunpack.c.h.b16 %v8213
    %v9695 = vunpack.c.l.b16 %v8214
    %v9696 = vunpack.c.h.b16 %v8214
    %v9697 = vunpack.c.l.b16 %v8215
    %v9698 = vunpack.c.h.b16 %v8215
    %v9699 = vunpack.c.l.b16 %v8216
    %v9700 = vunpack.c.h.b16 %v8216
    %v9701 = vunpack.c.l.b16 %v8217
    %v9702 = vunpack.c.h.b16 %v8217
    %v9703 = vunpack.c.l.b16 %v8218
    %v9704 = vunpack.c.h.b16 %v8218
    %v9705 = vunpack.c.l.b16 %v8219
    %v9706 = vunpack.c.h.b16 %v8219
    %v9707 = vunpack.c.l.b16 %v8220
    %v9708 = vunpack.c.h.b16 %v8220
    %v9709 = vunpack.c.l.b16 %v8221
    %v9710 = vunpack.c.h.b16 %v8221
    %v9711 = vunpack.c.l.b16 %v8222
    %v9712 = vunpack.c.h.b16 %v8222
    %v9713 = vunpack.c.l.b16 %v8223
    %v9714 = vunpack.c.h.b16 %v8223
    %v9715 = vunpack.c.l.b16 %v8224
    %v9716 = vunpack.c.h.b16 %v8224
    %v9717 = vunpack.c.l.b16 %v8225
    %v9718 = vunpack.c.h.b16 %v8225
    %v9719 = vunpack.c.l.b16 %v8226
    %v9720 = vunpack.c.h.b16 %v8226
    %v9721 = vunpack.c.l.b16 %v8227
    %v9722 = vunpack.c.h.b16 %v8227
    %v9723 = vunpack.c.l.b16 %v8228
    %v9724 = vunpack.c.h.b16 %v8228
    %v9725 = vunpack.c.l.b16 %v8229
    %v9726 = vunpack.c.h.b16 %v8229
    %v9727 = vunpack.c.l.b16 %v8230
    %v9728 = vunpack.c.h.b16 %v8230
    %v9729 = vunpack.c.l.b16 %v8231
    %v9730 = vunpack.c.h.b16 %v8231
    %v9731 = vunpack.c.l.b16 %v8232
    %v9732 = vunpack.c.h.b16 %v8232
    %v9733 = vunpack.c.l.b16 %v8233
    %v9734 = vunpack.c.h.b16 %v8233
    %v9735 = vunpack.c.l.b16 %v8234
    %v9736 = vunpack.c.h.b16 %v8234
    %v9737 = vunpack.c.l.b16 %v8235
    %v9738 = vunpack.c.h.b16 %v8235
    %v9739 = vunpack.c.l.b16 %v8236
    %v9740 = vunpack.c.h.b16 %v8236
    %v9741 = vunpack.c.l.b16 %v8237
    %v9742 = vunpack.c.h.b16 %v8237
    %v9743 = vunpack.c.l.b16 %v8238
    %v9744 = vunpack.c.h.b16 %v8238
    %v9745 = vunpack.c.l.b16 %v8239
    %v9746 = vunpack.c.h.b16 %v8239
    %v9747 = vunpack.c.l.b16 %v8240
    %v9748 = vunpack.c.h.b16 %v8240
    %v9749 = vunpack.c.l.b16 %v8241
    %v9750 = vunpack.c.h.b16 %v8241
    %v9751 = vunpack.c.l.b16 %v8242
    %v9752 = vunpack.c.h.b16 %v8242
    %v9753 = vunpack.c.l.b16 %v8243
    %v9754 = vunpack.c.h.b16 %v8243
    %v9755 = vunpack.c.l.b16 %v8244
    %v9756 = vunpack.c.h.b16 %v8244
    %v9757 = vunpack.c.l.b16 %v8245
    %v9758 = vunpack.c.h.b16 %v8245
    %v9759 = vunpack.c.l.b16 %v8246
    %v9760 = vunpack.c.h.b16 %v8246
    %v9761 = vunpack.c.l.b16 %v8247
    %v9762 = vunpack.c.h.b16 %v8247
    %v9763 = vunpack.c.l.b16 %v8248
    %v9764 = vunpack.c.h.b16 %v8248
    %v9765 = vunpack.c.l.b16 %v8249
    %v9766 = vunpack.c.h.b16 %v8249
    %v9767 = vunpack.c.l.b16 %v8250
    %v9768 = vunpack.c.h.b16 %v8250
    %v9769 = vunpack.c.l.b16 %v8251
    %v9770 = vunpack.c.h.b16 %v8251
    %v9771 = vunpack.c.l.b16 %v8252
    %v9772 = vunpack.c.h.b16 %v8252
    %v9773 = vunpack.c.l.b16 %v8253
    %v9774 = vunpack.c.h.b16 %v8253
    %v9775 = vunpack.c.l.b16 %v8254
    %v9776 = vunpack.c.h.b16 %v8254
    %v9777 = vunpack.c.l.b16 %v8255
    %v9778 = vunpack.c.h.b16 %v8255
    %v9779 = vunpack.c.l.b16 %v8256
    %v9780 = vunpack.c.h.b16 %v8256
    %v9781 = vunpack.c.l.b16 %v8257
    %v9782 = vunpack.c.h.b16 %v8257
    %v9783 = vunpack.c.l.b16 %v8258
    %v9784 = vunpack.c.h.b16 %v8258
    %v9785 = vunpack.c.l.b16 %v8259
    %v9786 = vunpack.c.h.b16 %v8259
    %v9787 = vunpack.c.l.b16 %v8260
    %v9788 = vunpack.c.h.b16 %v8260
    %v9789 = vunpack.c.l.b16 %v8261
    %v9790 = vunpack.c.h.b16 %v8261
    %v9791 = vunpack.c.l.b16 %v8262
    %v9792 = vunpack.c.h.b16 %v8262
    %v9793 = vunpack.c.l.b16 %v8263
    %v9794 = vunpack.c.h.b16 %v8263
    %v9795 = vunpack.c.l.b16 %v8264
    %v9796 = vunpack.c.h.b16 %v8264
    %v9797 = vunpack.c.l.b16 %v8265
    %v9798 = vunpack.c.h.b16 %v8265
    %v9799 = vunpack.c.l.b16 %v8266
    %v9800 = vunpack.c.h.b16 %v8266
    %v9801 = vunpack.c.l.b16 %v8267
    %v9802 = vunpack.c.h.b16 %v8267
    %v9803 = vunpack.c.l.b16 %v8268
    %v9804 = vunpack.c.h.b16 %v8268
    %v9805 = vunpack.c.l.b16 %v8269
    %v9806 = vunpack.c.h.b16 %v8269
    %v9807 = vunpack.c.l.b16 %v8270
    %v9808 = vunpack.c.h.b16 %v8270
    %v9809 = vunpack.c.l.b16 %v8271
    %v9810 = vunpack.c.h.b16 %v8271
    %v9811 = vunpack.c.l.b16 %v8272
    %v9812 = vunpack.c.h.b16 %v8272
    %v9813 = vunpack.c.l.b16 %v8273
    %v9814 = vunpack.c.h.b16 %v8273
    %v9815 = vunpack.c.l.b16 %v8274
    %v9816 = vunpack.c.h.b16 %v8274
    %v9817 = vunpack.c.l.b16 %v8275
    %v9818 = vunpack.c.h.b16 %v8275
    %v9819 = vunpack.c.l.b16 %v8276
    %v9820 = vunpack.c.h.b16 %v8276
    %v9821 = vunpack.c.l.b16 %v8277
    %v9822 = vunpack.c.h.b16 %v8277
    %v9823 = vunpack.c.l.b16 %v8278
    %v9824 = vunpack.c.h.b16 %v8278
    %v9825 = vunpack.c.l.b16 %v8279
    %v9826 = vunpack.c.h.b16 %v8279
    %v9827 = vunpack.c.l.b16 %v8280
    %v9828 = vunpack.c.h.b16 %v8280
    %v9829 = vunpack.c.l.b16 %v8281
    %v9830 = vunpack.c.h.b16 %v8281
    %v9831 = vunpack.c.l.b16 %v8282
    %v9832 = vunpack.c.h.b16 %v8282
    %v9833 = vunpack.c.l.b16 %v8283
    %v9834 = vunpack.c.h.b16 %v8283
    %v9835 = vunpack.c.l.b16 %v8284
    %v9836 = vunpack.c.h.b16 %v8284
    %v9837 = vunpack.c.l.b16 %v8285
    %v9838 = vunpack.c.h.b16 %v8285
    %v9839 = vunpack.c.l.b16 %v8286
    %v9840 = vunpack.c.h.b16 %v8286
    %v9841 = vunpack.c.l.b16 %v8287
    %v9842 = vunpack.c.h.b16 %v8287
    %v9843 = vunpack.c.l.b16 %v8288
    %v9844 = vunpack.c.h.b16 %v8288
    %v9845 = vunpack.c.l.b16 %v8289
    %v9846 = vunpack.c.h.b16 %v8289
    %v9847 = vunpack.c.l.b16 %v8290
    %v9848 = vunpack.c.h.b16 %v8290
    %v9849 = vunpack.c.l.b16 %v8291
    %v9850 = vunpack.c.h.b16 %v8291
    %v9851 = vunpack.c.l.b16 %v8292
    %v9852 = vunpack.c.h.b16 %v8292
    %v9853 = vunpack.c.l.b16 %v8293
    %v9854 = vunpack.c.h.b16 %v8293
    %v9855 = vunpack.c.l.b16 %v8294
    %v9856 = vunpack.c.h.b16 %v8294
    %v9857 = vunpack.c.l.b16 %v8295
    %v9858 = vunpack.c.h.b16 %v8295
    %v9859 = vunpack.c.l.b16 %v8296
    %v9860 = vunpack.c.h.b16 %v8296
    %v9861 = vunpack.c.l.b16 %v8297
    %v9862 = vunpack.c.h.b16 %v8297
    %v9863 = vunpack.c.l.b16 %v8298
    %v9864 = vunpack.c.h.b16 %v8298
    %v9865 = vunpack.c.l.b16 %v8299
    %v9866 = vunpack.c.h.b16 %v8299
    %v9867 = vunpack.c.l.b16 %v8300
    %v9868 = vunpack.c.h.b16 %v8300
    %v9869 = vunpack.c.l.b16 %v8301
    %v9870 = vunpack.c.h.b16 %v8301
    %v9871 = vunpack.c.l.b16 %v8302
    %v9872 = vunpack.c.h.b16 %v8302
    %v9873 = vunpack.c.l.b16 %v8303
    %v9874 = vunpack.c.h.b16 %v8303
    %v9875 = vunpack.c.l.b16 %v8304
    %v9876 = vunpack.c.h.b16 %v8304
    %v9877 = vunpack.c.l.b16 %v8305
    %v9878 = vunpack.c.h.b16 %v8305
    %v9879 = vunpack.c.l.b16 %v8306
    %v9880 = vunpack.c.h.b16 %v8306
    %v9881 = vunpack.c.l.b16 %v8307
    %v9882 = vunpack.c.h.b16 %v8307
    %v9883 = vunpack.c.l.b16 %v8308
    %v9884 = vunpack.c.h.b16 %v8308
    %v9885 = vunpack.c.l.b16 %v8309
    %v9886 = vunpack.c.h.b16 %v8309
    %v9887 = vunpack.c.l.b16 %v8310
    %v9888 = vunpack.c.h.b16 %v8310
    %v9889 = vpack.c.b16 %v8873, %v8865
    %v9890 = vpack.c.b16 %v8874, %v8866
    %v9891 = vpack.c.b16 %v8875, %v8867
    %v9892 = vpack.c.b16 %v8876, %v8868
    %v9893 = vpack.c.b16 %v8877, %v8869
    %v9894 = vpack.c.b16 %v8878, %v8870
    %v9895 = vpack.c.b16 %v8879, %v8871
    %v9896 = vpack.c.b16 %v8880, %v8872
    %v9897 = vpack.c.b16 %v8889, %v8881
    %v9898 = vpack.c.b16 %v8890, %v8882
    %v9899 = vpack.c.b16 %v8891, %v8883
    %v9900 = vpack.c.b16 %v8892, %v8884
    %v9901 = vpack.c.b16 %v8893, %v8885
    %v9902 = vpack.c.b16 %v8894, %v8886
    %v9903 = vpack.c.b16 %v8895, %v8887
    %v9904 = vpack.c.b16 %v8896, %v8888
    %v9905 = vpack.c.b16 %v8905, %v8897
    %v9906 = vpack.c.b16 %v8906, %v8898
    %v9907 = vpack.c.b16 %v8907, %v8899
    %v9908 = vpack.c.b16 %v8908, %v8900
    %v9909 = vpack.c.b16 %v8909, %v8901
    %v9910 = vpack.c.b16 %v8910, %v8902
    %v9911 = vpack.c.b16 %v8911, %v8903
    %v9912 = vpack.c.b16 %v8912, %v8904
    %v9913 = vpack.c.b16 %v8921, %v8913
    %v9914 = vpack.c.b16 %v8922, %v8914
    %v9915 = vpack.c.b16 %v8923, %v8915
    %v9916 = vpack.c.b16 %v8924, %v8916
    %v9917 = vpack.c.b16 %v8925, %v8917
    %v9918 = vpack.c.b16 %v8926, %v8918
    %v9919 = vpack.c.b16 %v8927, %v8919
    %v9920 = vpack.c.b16 %v8928, %v8920
    %v9921 = vpack.c.b16 %v8937, %v8929
    %v9922 = vpack.c.b16 %v8938, %v8930
    %v9923 = vpack.c.b16 %v8939, %v8931
    %v9924 = vpack.c.b16 %v8940, %v8932
    %v9925 = vpack.c.b16 %v8941, %v8933
    %v9926 = vpack.c.b16 %v8942, %v8934
    %v9927 = vpack.c.b16 %v8943, %v8935
    %v9928 = vpack.c.b16 %v8944, %v8936
    %v9929 = vpack.c.b16 %v8953, %v8945
    %v9930 = vpack.c.b16 %v8954, %v8946
    %v9931 = vpack.c.b16 %v8955, %v8947
    %v9932 = vpack.c.b16 %v8956, %v8948
    %v9933 = vpack.c.b16 %v8957, %v8949
    %v9934 = vpack.c.b16 %v8958, %v8950
    %v9935 = vpack.c.b16 %v8959, %v8951
    %v9936 = vpack.c.b16 %v8960, %v8952
    %v9937 = vpack.c.b16 %v8969, %v8961
    %v9938 = vpack.c.b16 %v8970, %v8962
    %v9939 = vpack.c.b16 %v8971, %v8963
    %v9940 = vpack.c.b16 %v8972, %v8964
    %v9941 = vpack.c.b16 %v8973, %v8965
    %v9942 = vpack.c.b16 %v8974, %v8966
    %v9943 = vpack.c.b16 %v8975, %v8967
    %v9944 = vpack.c.b16 %v8976, %v8968
    %v9945 = vpack.c.b16 %v8985, %v8977
    %v9946 = vpack.c.b16 %v8986, %v8978
    %v9947 = vpack.c.b16 %v8987, %v8979
    %v9948 = vpack.c.b16 %v8988, %v8980
    %v9949 = vpack.c.b16 %v8989, %v8981
    %v9950 = vpack.c.b16 %v8990, %v8982
    %v9951 = vpack.c.b16 %v8991, %v8983
    %v9952 = vpack.c.b16 %v8992, %v8984
    %v9953 = vpack.c.b16 %v9001, %v8993
    %v9954 = vpack.c.b16 %v9002, %v8994
    %v9955 = vpack.c.b16 %v9003, %v8995
    %v9956 = vpack.c.b16 %v9004, %v8996
    %v9957 = vpack.c.b16 %v9005, %v8997
    %v9958 = vpack.c.b16 %v9006, %v8998
    %v9959 = vpack.c.b16 %v9007, %v8999
    %v9960 = vpack.c.b16 %v9008, %v9000
    %v9961 = vpack.c.b16 %v9017, %v9009
    %v9962 = vpack.c.b16 %v9018, %v9010
    %v9963 = vpack.c.b16 %v9019, %v9011
    %v9964 = vpack.c.b16 %v9020, %v9012
    %v9965 = vpack.c.b16 %v9021, %v9013
    %v9966 = vpack.c.b16 %v9022, %v9014
    %v9967 = vpack.c.b16 %v9023, %v9015
    %v9968 = vpack.c.b16 %v9024, %v9016
    %v9969 = vpack.c.b16 %v9033, %v9025
    %v9970 = vpack.c.b16 %v9034, %v9026
    %v9971 = vpack.c.b16 %v9035, %v9027
    %v9972 = vpack.c.b16 %v9036, %v9028
    %v9973 = vpack.c.b16 %v9037, %v9029
    %v9974 = vpack.c.b16 %v9038, %v9030
    %v9975 = vpack.c.b16 %v9039, %v9031
    %v9976 = vpack.c.b16 %v9040, %v9032
    %v9977 = vpack.c.b16 %v9049, %v9041
    %v9978 = vpack.c.b16 %v9050, %v9042
    %v9979 = vpack.c.b16 %v9051, %v9043
    %v9980 = vpack.c.b16 %v9052, %v9044
    %v9981 = vpack.c.b16 %v9053, %v9045
    %v9982 = vpack.c.b16 %v9054, %v9046
    %v9983 = vpack.c.b16 %v9055, %v9047
    %v9984 = vpack.c.b16 %v9056, %v9048
    %v9985 = vpack.c.b16 %v9065, %v9057
    %v9986 = vpack.c.b16 %v9066, %v9058
    %v9987 = vpack.c.b16 %v9067, %v9059
    %v9988 = vpack.c.b16 %v9068, %v9060
    %v9989 = vpack.c.b16 %v9069, %v9061
    %v9990 = vpack.c.b16 %v9070, %v9062
    %v9991 = vpack.c.b16 %v9071, %v9063
    %v9992 = vpack.c.b16 %v9072, %v9064
    %v9993 = vpack.c.b16 %v9081, %v9073
    %v9994 = vpack.c.b16 %v9082, %v9074
    %v9995 = vpack.c.b16 %v9083, %v9075
    %v9996 = vpack.c.b16 %v9084, %v9076
    %v9997 = vpack.c.b16 %v9085, %v9077
    %v9998 = vpack.c.b16 %v9086, %v9078
    %v9999 = vpack.c.b16 %v9087, %v9079
    %v10000 = vpack.c.b16 %v9088, %v9080
    %v10001 = vpack.c.b16 %v9097, %v9089
    %v10002 = vpack.c.b16 %v9098, %v9090
    %v10003 = vpack.c.b16 %v9099, %v9091
    %v10004 = vpack.c.b16 %v9100, %v9092
    %v10005 = vpack.c.b16 %v9101, %v9093
    %v10006 = vpack.c.b16 %v9102, %v9094
    %v10007 = vpack.c.b16 %v9103, %v9095
    %v10008 = vpack.c.b16 %v9104, %v9096
    %v10009 = vpack.c.b16 %v9113, %v9105
    %v10010 = vpack.c.b16 %v9114, %v9106
    %v10011 = vpack.c.b16 %v9115, %v9107
    %v10012 = vpack.c.b16 %v9116, %v9108
    %v10013 = vpack.c.b16 %v9117, %v9109
    %v10014 = vpack.c.b16 %v9118, %v9110
    %v10015 = vpack.c.b16 %v9119, %v9111
    %v10016 = vpack.c.b16 %v9120, %v9112
    %v10017 = vpack.c.b16 %v9129, %v9121
    %v10018 = vpack.c.b16 %v9130, %v9122
    %v10019 = vpack.c.b16 %v9131, %v9123
    %v10020 = vpack.c.b16 %v9132, %v9124
    %v10021 = vpack.c.b16 %v9133, %v9125
    %v10022 = vpack.c.b16 %v9134, %v9126
    %v10023 = vpack.c.b16 %v9135, %v9127
    %v10024 = vpack.c.b16 %v9136, %v9128
    %v10025 = vpack.c.b16 %v9145, %v9137
    %v10026 = vpack.c.b16 %v9146, %v9138
    %v10027 = vpack.c.b16 %v9147, %v9139
    %v10028 = vpack.c.b16 %v9148, %v9140
    %v10029 = vpack.c.b16 %v9149, %v9141
    %v10030 = vpack.c.b16 %v9150, %v9142
    %v10031 = vpack.c.b16 %v9151, %v9143
    %v10032 = vpack.c.b16 %v9152, %v9144
    %v10033 = vpack.c.b16 %v9161, %v9153
    %v10034 = vpack.c.b16 %v9162, %v9154
    %v10035 = vpack.c.b16 %v9163, %v9155
    %v10036 = vpack.c.b16 %v9164, %v9156
    %v10037 = vpack.c.b16 %v9165, %v9157
    %v10038 = vpack.c.b16 %v9166, %v9158
    %v10039 = vpack.c.b16 %v9167, %v9159
    %v10040 = vpack.c.b16 %v9168, %v9160
    %v10041 = vpack.c.b16 %v9177, %v9169
    %v10042 = vpack.c.b16 %v9178, %v9170
    %v10043 = vpack.c.b16 %v9179, %v9171
    %v10044 = vpack.c.b16 %v9180, %v9172
    %v10045 = vpack.c.b16 %v9181, %v9173
    %v10046 = vpack.c.b16 %v9182, %v9174
    %v10047 = vpack.c.b16 %v9183, %v9175
    %v10048 = vpack.c.b16 %v9184, %v9176
    %v10049 = vpack.c.b16 %v9193, %v9185
    %v10050 = vpack.c.b16 %v9194, %v9186
    %v10051 = vpack.c.b16 %v9195, %v9187
    %v10052 = vpack.c.b16 %v9196, %v9188
    %v10053 = vpack.c.b16 %v9197, %v9189
    %v10054 = vpack.c.b16 %v9198, %v9190
    %v10055 = vpack.c.b16 %v9199, %v9191
    %v10056 = vpack.c.b16 %v9200, %v9192
    %v10057 = vpack.c.b16 %v9209, %v9201
    %v10058 = vpack.c.b16 %v9210, %v9202
    %v10059 = vpack.c.b16 %v9211, %v9203
    %v10060 = vpack.c.b16 %v9212, %v9204
    %v10061 = vpack.c.b16 %v9213, %v9205
    %v10062 = vpack.c.b16 %v9214, %v9206
    %v10063 = vpack.c.b16 %v9215, %v9207
    %v10064 = vpack.c.b16 %v9216, %v9208
    %v10065 = vpack.c.b16 %v9225, %v9217
    %v10066 = vpack.c.b16 %v9226, %v9218
    %v10067 = vpack.c.b16 %v9227, %v9219
    %v10068 = vpack.c.b16 %v9228, %v9220
    %v10069 = vpack.c.b16 %v9229, %v9221
    %v10070 = vpack.c.b16 %v9230, %v9222
    %v10071 = vpack.c.b16 %v9231, %v9223
    %v10072 = vpack.c.b16 %v9232, %v9224
    %v10073 = vpack.c.b16 %v9241, %v9233
    %v10074 = vpack.c.b16 %v9242, %v9234
    %v10075 = vpack.c.b16 %v9243, %v9235
    %v10076 = vpack.c.b16 %v9244, %v9236
    %v10077 = vpack.c.b16 %v9245, %v9237
    %v10078 = vpack.c.b16 %v9246, %v9238
    %v10079 = vpack.c.b16 %v9247, %v9239
    %v10080 = vpack.c.b16 %v9248, %v9240
    %v10081 = vpack.c.b16 %v9257, %v9249
    %v10082 = vpack.c.b16 %v9258, %v9250
    %v10083 = vpack.c.b16 %v9259, %v9251
    %v10084 = vpack.c.b16 %v9260, %v9252
    %v10085 = vpack.c.b16 %v9261, %v9253
    %v10086 = vpack.c.b16 %v9262, %v9254
    %v10087 = vpack.c.b16 %v9263, %v9255
    %v10088 = vpack.c.b16 %v9264, %v9256
    %v10089 = vpack.c.b16 %v9273, %v9265
    %v10090 = vpack.c.b16 %v9274, %v9266
    %v10091 = vpack.c.b16 %v9275, %v9267
    %v10092 = vpack.c.b16 %v9276, %v9268
    %v10093 = vpack.c.b16 %v9277, %v9269
    %v10094 = vpack.c.b16 %v9278, %v9270
    %v10095 = vpack.c.b16 %v9279, %v9271
    %v10096 = vpack.c.b16 %v9280, %v9272
    %v10097 = vpack.c.b16 %v9289, %v9281
    %v10098 = vpack.c.b16 %v9290, %v9282
    %v10099 = vpack.c.b16 %v9291, %v9283
    %v10100 = vpack.c.b16 %v9292, %v9284
    %v10101 = vpack.c.b16 %v9293, %v9285
    %v10102 = vpack.c.b16 %v9294, %v9286
    %v10103 = vpack.c.b16 %v9295, %v9287
    %v10104 = vpack.c.b16 %v9296, %v9288
    %v10105 = vpack.c.b16 %v9305, %v9297
    %v10106 = vpack.c.b16 %v9306, %v9298
    %v10107 = vpack.c.b16 %v9307, %v9299
    %v10108 = vpack.c.b16 %v9308, %v9300
    %v10109 = vpack.c.b16 %v9309, %v9301
    %v10110 = vpack.c.b16 %v9310, %v9302
    %v10111 = vpack.c.b16 %v9311, %v9303
    %v10112 = vpack.c.b16 %v9312, %v9304
    %v10113 = vpack.c.b16 %v9321, %v9313
    %v10114 = vpack.c.b16 %v9322, %v9314
    %v10115 = vpack.c.b16 %v9323, %v9315
    %v10116 = vpack.c.b16 %v9324, %v9316
    %v10117 = vpack.c.b16 %v9325, %v9317
    %v10118 = vpack.c.b16 %v9326, %v9318
    %v10119 = vpack.c.b16 %v9327, %v9319
    %v10120 = vpack.c.b16 %v9328, %v9320
    %v10121 = vpack.c.b16 %v9337, %v9329
    %v10122 = vpack.c.b16 %v9338, %v9330
    %v10123 = vpack.c.b16 %v9339, %v9331
    %v10124 = vpack.c.b16 %v9340, %v9332
    %v10125 = vpack.c.b16 %v9341, %v9333
    %v10126 = vpack.c.b16 %v9342, %v9334
    %v10127 = vpack.c.b16 %v9343, %v9335
    %v10128 = vpack.c.b16 %v9344, %v9336
    %v10129 = vpack.c.b16 %v9353, %v9345
    %v10130 = vpack.c.b16 %v9354, %v9346
    %v10131 = vpack.c.b16 %v9355, %v9347
    %v10132 = vpack.c.b16 %v9356, %v9348
    %v10133 = vpack.c.b16 %v9357, %v9349
    %v10134 = vpack.c.b16 %v9358, %v9350
    %v10135 = vpack.c.b16 %v9359, %v9351
    %v10136 = vpack.c.b16 %v9360, %v9352
    %v10137 = vpack.c.b16 %v9369, %v9361
    %v10138 = vpack.c.b16 %v9370, %v9362
    %v10139 = vpack.c.b16 %v9371, %v9363
    %v10140 = vpack.c.b16 %v9372, %v9364
    %v10141 = vpack.c.b16 %v9373, %v9365
    %v10142 = vpack.c.b16 %v9374, %v9366
    %v10143 = vpack.c.b16 %v9375, %v9367
    %v10144 = vpack.c.b16 %v9376, %v9368
    %v10145 = vpack.c.b16 %v9385, %v9377
    %v10146 = vpack.c.b16 %v9386, %v9378
    %v10147 = vpack.c.b16 %v9387, %v9379
    %v10148 = vpack.c.b16 %v9388, %v9380
    %v10149 = vpack.c.b16 %v9389, %v9381
    %v10150 = vpack.c.b16 %v9390, %v9382
    %v10151 = vpack.c.b16 %v9391, %v9383
    %v10152 = vpack.c.b16 %v9392, %v9384
    %v10153 = vpack.c.b16 %v9401, %v9393
    %v10154 = vpack.c.b16 %v9402, %v9394
    %v10155 = vpack.c.b16 %v9403, %v9395
    %v10156 = vpack.c.b16 %v9404, %v9396
    %v10157 = vpack.c.b16 %v9405, %v9397
    %v10158 = vpack.c.b16 %v9406, %v9398
    %v10159 = vpack.c.b16 %v9407, %v9399
    %v10160 = vpack.c.b16 %v9408, %v9400
    %v10161 = vpack.c.b16 %v9417, %v9409
    %v10162 = vpack.c.b16 %v9418, %v9410
    %v10163 = vpack.c.b16 %v9419, %v9411
    %v10164 = vpack.c.b16 %v9420, %v9412
    %v10165 = vpack.c.b16 %v9421, %v9413
    %v10166 = vpack.c.b16 %v9422, %v9414
    %v10167 = vpack.c.b16 %v9423, %v9415
    %v10168 = vpack.c.b16 %v9424, %v9416
    %v10169 = vpack.c.b16 %v9433, %v9425
    %v10170 = vpack.c.b16 %v9434, %v9426
    %v10171 = vpack.c.b16 %v9435, %v9427
    %v10172 = vpack.c.b16 %v9436, %v9428
    %v10173 = vpack.c.b16 %v9437, %v9429
    %v10174 = vpack.c.b16 %v9438, %v9430
    %v10175 = vpack.c.b16 %v9439, %v9431
    %v10176 = vpack.c.b16 %v9440, %v9432
    %v10177 = vpack.c.b16 %v9449, %v9441
    %v10178 = vpack.c.b16 %v9450, %v9442
    %v10179 = vpack.c.b16 %v9451, %v9443
    %v10180 = vpack.c.b16 %v9452, %v9444
    %v10181 = vpack.c.b16 %v9453, %v9445
    %v10182 = vpack.c.b16 %v9454, %v9446
    %v10183 = vpack.c.b16 %v9455, %v9447
    %v10184 = vpack.c.b16 %v9456, %v9448
    %v10185 = vpack.c.b16 %v9465, %v9457
    %v10186 = vpack.c.b16 %v9466, %v9458
    %v10187 = vpack.c.b16 %v9467, %v9459
    %v10188 = vpack.c.b16 %v9468, %v9460
    %v10189 = vpack.c.b16 %v9469, %v9461
    %v10190 = vpack.c.b16 %v9470, %v9462
    %v10191 = vpack.c.b16 %v9471, %v9463
    %v10192 = vpack.c.b16 %v9472, %v9464
    %v10193 = vpack.c.b16 %v9481, %v9473
    %v10194 = vpack.c.b16 %v9482, %v9474
    %v10195 = vpack.c.b16 %v9483, %v9475
    %v10196 = vpack.c.b16 %v9484, %v9476
    %v10197 = vpack.c.b16 %v9485, %v9477
    %v10198 = vpack.c.b16 %v9486, %v9478
    %v10199 = vpack.c.b16 %v9487, %v9479
    %v10200 = vpack.c.b16 %v9488, %v9480
    %v10201 = vpack.c.b16 %v9497, %v9489
    %v10202 = vpack.c.b16 %v9498, %v9490
    %v10203 = vpack.c.b16 %v9499, %v9491
    %v10204 = vpack.c.b16 %v9500, %v9492
    %v10205 = vpack.c.b16 %v9501, %v9493
    %v10206 = vpack.c.b16 %v9502, %v9494
    %v10207 = vpack.c.b16 %v9503, %v9495
    %v10208 = vpack.c.b16 %v9504, %v9496
    %v10209 = vpack.c.b16 %v9513, %v9505
    %v10210 = vpack.c.b16 %v9514, %v9506
    %v10211 = vpack.c.b16 %v9515, %v9507
    %v10212 = vpack.c.b16 %v9516, %v9508
    %v10213 = vpack.c.b16 %v9517, %v9509
    %v10214 = vpack.c.b16 %v9518, %v9510
    %v10215 = vpack.c.b16 %v9519, %v9511
    %v10216 = vpack.c.b16 %v9520, %v9512
    %v10217 = vpack.c.b16 %v9529, %v9521
    %v10218 = vpack.c.b16 %v9530, %v9522
    %v10219 = vpack.c.b16 %v9531, %v9523
    %v10220 = vpack.c.b16 %v9532, %v9524
    %v10221 = vpack.c.b16 %v9533, %v9525
    %v10222 = vpack.c.b16 %v9534, %v9526
    %v10223 = vpack.c.b16 %v9535, %v9527
    %v10224 = vpack.c.b16 %v9536, %v9528
    %v10225 = vpack.c.b16 %v9545, %v9537
    %v10226 = vpack.c.b16 %v9546, %v9538
    %v10227 = vpack.c.b16 %v9547, %v9539
    %v10228 = vpack.c.b16 %v9548, %v9540
    %v10229 = vpack.c.b16 %v9549, %v9541
    %v10230 = vpack.c.b16 %v9550, %v9542
    %v10231 = vpack.c.b16 %v9551, %v9543
    %v10232 = vpack.c.b16 %v9552, %v9544
    %v10233 = vpack.c.b16 %v9561, %v9553
    %v10234 = vpack.c.b16 %v9562, %v9554
    %v10235 = vpack.c.b16 %v9563, %v9555
    %v10236 = vpack.c.b16 %v9564, %v9556
    %v10237 = vpack.c.b16 %v9565, %v9557
    %v10238 = vpack.c.b16 %v9566, %v9558
    %v10239 = vpack.c.b16 %v9567, %v9559
    %v10240 = vpack.c.b16 %v9568, %v9560
    %v10241 = vpack.c.b16 %v9577, %v9569
    %v10242 = vpack.c.b16 %v9578, %v9570
    %v10243 = vpack.c.b16 %v9579, %v9571
    %v10244 = vpack.c.b16 %v9580, %v9572
    %v10245 = vpack.c.b16 %v9581, %v9573
    %v10246 = vpack.c.b16 %v9582, %v9574
    %v10247 = vpack.c.b16 %v9583, %v9575
    %v10248 = vpack.c.b16 %v9584, %v9576
    %v10249 = vpack.c.b16 %v9593, %v9585
    %v10250 = vpack.c.b16 %v9594, %v9586
    %v10251 = vpack.c.b16 %v9595, %v9587
    %v10252 = vpack.c.b16 %v9596, %v9588
    %v10253 = vpack.c.b16 %v9597, %v9589
    %v10254 = vpack.c.b16 %v9598, %v9590
    %v10255 = vpack.c.b16 %v9599, %v9591
    %v10256 = vpack.c.b16 %v9600, %v9592
    %v10257 = vpack.c.b16 %v9609, %v9601
    %v10258 = vpack.c.b16 %v9610, %v9602
    %v10259 = vpack.c.b16 %v9611, %v9603
    %v10260 = vpack.c.b16 %v9612, %v9604
    %v10261 = vpack.c.b16 %v9613, %v9605
    %v10262 = vpack.c.b16 %v9614, %v9606
    %v10263 = vpack.c.b16 %v9615, %v9607
    %v10264 = vpack.c.b16 %v9616, %v9608
    %v10265 = vpack.c.b16 %v9625, %v9617
    %v10266 = vpack.c.b16 %v9626, %v9618
    %v10267 = vpack.c.b16 %v9627, %v9619
    %v10268 = vpack.c.b16 %v9628, %v9620
    %v10269 = vpack.c.b16 %v9629, %v9621
    %v10270 = vpack.c.b16 %v9630, %v9622
    %v10271 = vpack.c.b16 %v9631, %v9623
    %v10272 = vpack.c.b16 %v9632, %v9624
    %v10273 = vpack.c.b16 %v9641, %v9633
    %v10274 = vpack.c.b16 %v9642, %v9634
    %v10275 = vpack.c.b16 %v9643, %v9635
    %v10276 = vpack.c.b16 %v9644, %v9636
    %v10277 = vpack.c.b16 %v9645, %v9637
    %v10278 = vpack.c.b16 %v9646, %v9638
    %v10279 = vpack.c.b16 %v9647, %v9639
    %v10280 = vpack.c.b16 %v9648, %v9640
    %v10281 = vpack.c.b16 %v9657, %v9649
    %v10282 = vpack.c.b16 %v9658, %v9650
    %v10283 = vpack.c.b16 %v9659, %v9651
    %v10284 = vpack.c.b16 %v9660, %v9652
    %v10285 = vpack.c.b16 %v9661, %v9653
    %v10286 = vpack.c.b16 %v9662, %v9654
    %v10287 = vpack.c.b16 %v9663, %v9655
    %v10288 = vpack.c.b16 %v9664, %v9656
    %v10289 = vpack.c.b16 %v9673, %v9665
    %v10290 = vpack.c.b16 %v9674, %v9666
    %v10291 = vpack.c.b16 %v9675, %v9667
    %v10292 = vpack.c.b16 %v9676, %v9668
    %v10293 = vpack.c.b16 %v9677, %v9669
    %v10294 = vpack.c.b16 %v9678, %v9670
    %v10295 = vpack.c.b16 %v9679, %v9671
    %v10296 = vpack.c.b16 %v9680, %v9672
    %v10297 = vpack.c.b16 %v9689, %v9681
    %v10298 = vpack.c.b16 %v9690, %v9682
    %v10299 = vpack.c.b16 %v9691, %v9683
    %v10300 = vpack.c.b16 %v9692, %v9684
    %v10301 = vpack.c.b16 %v9693, %v9685
    %v10302 = vpack.c.b16 %v9694, %v9686
    %v10303 = vpack.c.b16 %v9695, %v9687
    %v10304 = vpack.c.b16 %v9696, %v9688
    %v10305 = vpack.c.b16 %v9705, %v9697
    %v10306 = vpack.c.b16 %v9706, %v9698
    %v10307 = vpack.c.b16 %v9707, %v9699
    %v10308 = vpack.c.b16 %v9708, %v9700
    %v10309 = vpack.c.b16 %v9709, %v9701
    %v10310 = vpack.c.b16 %v9710, %v9702
    %v10311 = vpack.c.b16 %v9711, %v9703
    %v10312 = vpack.c.b16 %v9712, %v9704
    %v10313 = vpack.c.b16 %v9721, %v9713
    %v10314 = vpack.c.b16 %v9722, %v9714
    %v10315 = vpack.c.b16 %v9723, %v9715
    %v10316 = vpack.c.b16 %v9724, %v9716
    %v10317 = vpack.c.b16 %v9725, %v9717
    %v10318 = vpack.c.b16 %v9726, %v9718
    %v10319 = vpack.c.b16 %v9727, %v9719
    %v10320 = vpack.c.b16 %v9728, %v9720
    %v10321 = vpack.c.b16 %v9737, %v9729
    %v10322 = vpack.c.b16 %v9738, %v9730
    %v10323 = vpack.c.b16 %v9739, %v9731
    %v10324 = vpack.c.b16 %v9740, %v9732
    %v10325 = vpack.c.b16 %v9741, %v9733
    %v10326 = vpack.c.b16 %v9742, %v9734
    %v10327 = vpack.c.b16 %v9743, %v9735
    %v10328 = vpack.c.b16 %v9744, %v9736
    %v10329 = vpack.c.b16 %v9753, %v9745
    %v10330 = vpack.c.b16 %v9754, %v9746
    %v10331 = vpack.c.b16 %v9755, %v9747
    %v10332 = vpack.c.b16 %v9756, %v9748
    %v10333 = vpack.c.b16 %v9757, %v9749
    %v10334 = vpack.c.b16 %v9758, %v9750
    %v10335 = vpack.c.b16 %v9759, %v9751
    %v10336 = vpack.c.b16 %v9760, %v9752
    %v10337 = vpack.c.b16 %v9769, %v9761
    %v10338 = vpack.c.b16 %v9770, %v9762
    %v10339 = vpack.c.b16 %v9771, %v9763
    %v10340 = vpack.c.b16 %v9772, %v9764
    %v10341 = vpack.c.b16 %v9773, %v9765
    %v10342 = vpack.c.b16 %v9774, %v9766
    %v10343 = vpack.c.b16 %v9775, %v9767
    %v10344 = vpack.c.b16 %v9776, %v9768
    %v10345 = vpack.c.b16 %v9785, %v9777
    %v10346 = vpack.c.b16 %v9786, %v9778
    %v10347 = vpack.c.b16 %v9787, %v9779
    %v10348 = vpack.c.b16 %v9788, %v9780
    %v10349 = vpack.c.b16 %v9789, %v9781
    %v10350 = vpack.c.b16 %v9790, %v9782
    %v10351 = vpack.c.b16 %v9791, %v9783
    %v10352 = vpack.c.b16 %v9792, %v9784
    %v10353 = vpack.c.b16 %v9801, %v9793
    %v10354 = vpack.c.b16 %v9802, %v9794
    %v10355 = vpack.c.b16 %v9803, %v9795
    %v10356 = vpack.c.b16 %v9804, %v9796
    %v10357 = vpack.c.b16 %v9805, %v9797
    %v10358 = vpack.c.b16 %v9806, %v9798
    %v10359 = vpack.c.b16 %v9807, %v9799
    %v10360 = vpack.c.b16 %v9808, %v9800
    %v10361 = vpack.c.b16 %v9817, %v9809
    %v10362 = vpack.c.b16 %v9818, %v9810
    %v10363 = vpack.c.b16 %v9819, %v9811
    %v10364 = vpack.c.b16 %v9820, %v9812
    %v10365 = vpack.c.b16 %v9821, %v9813
    %v10366 = vpack.c.b16 %v9822, %v9814
    %v10367 = vpack.c.b16 %v9823, %v9815
    %v10368 = vpack.c.b16 %v9824, %v9816
    %v10369 = vpack.c.b16 %v9833, %v9825
    %v10370 = vpack.c.b16 %v9834, %v9826
    %v10371 = vpack.c.b16 %v9835, %v9827
    %v10372 = vpack.c.b16 %v9836, %v9828
    %v10373 = vpack.c.b16 %v9837, %v9829
    %v10374 = vpack.c.b16 %v9838, %v9830
    %v10375 = vpack.c.b16 %v9839, %v9831
    %v10376 = vpack.c.b16 %v9840, %v9832
    %v10377 = vpack.c.b16 %v9849, %v9841
    %v10378 = vpack.c.b16 %v9850, %v9842
    %v10379 = vpack.c.b16 %v9851, %v9843
    %v10380 = vpack.c.b16 %v9852, %v9844
    %v10381 = vpack.c.b16 %v9853, %v9845
    %v10382 = vpack.c.b16 %v9854, %v9846
    %v10383 = vpack.c.b16 %v9855, %v9847
    %v10384 = vpack.c.b16 %v9856, %v9848
    %v10385 = vpack.c.b16 %v9865, %v9857
    %v10386 = vpack.c.b16 %v9866, %v9858
    %v10387 = vpack.c.b16 %v9867, %v9859
    %v10388 = vpack.c.b16 %v9868, %v9860
    %v10389 = vpack.c.b16 %v9869, %v9861
    %v10390 = vpack.c.b16 %v9870, %v9862
    %v10391 = vpack.c.b16 %v9871, %v9863
    %v10392 = vpack.c.b16 %v9872, %v9864
    %v10393 = vpack.c.b16 %v9881, %v9873
    %v10394 = vpack.c.b16 %v9882, %v9874
    %v10395 = vpack.c.b16 %v9883, %v9875
    %v10396 = vpack.c.b16 %v9884, %v9876
    %v10397 = vpack.c.b16 %v9885, %v9877
    %v10398 = vpack.c.b16 %v9886, %v9878
    %v10399 = vpack.c.b16 %v9887, %v9879
    %v10400 = vpack.c.b16 %v9888, %v9880
    %10913 = vmatprep.subr.bf16.mxu0 %v9890
    %10914 = vmatpush1.bf16.msra.mxu0 %v9889
    %10915 = vmatprep.subr.bf16.mxu0 %v9898
    %10916 = vmatpush1.bf16.msra.mxu0 %v9897
    %10917 = vmatprep.subr.bf16.mxu0 %v9906
    %10918 = vmatpush1.bf16.msra.mxu0 %v9905
    %10919 = vmatprep.subr.bf16.mxu0 %v9914
    %10920 = vmatpush1.bf16.msra.mxu0 %v9913
    %10921 = vmatprep.subr.bf16.mxu0 %v9922
    %10922 = vmatpush1.bf16.msra.mxu0 %v9921
    %10923 = vmatprep.subr.bf16.mxu0 %v9930
    %10924 = vmatpush1.bf16.msra.mxu0 %v9929
    %10925 = vmatprep.subr.bf16.mxu0 %v9938
    %10926 = vmatpush1.bf16.msra.mxu0 %v9937
    %10927 = vmatprep.subr.bf16.mxu0 %v9946
    %10928 = vmatpush1.bf16.msra.mxu0 %v9945
    %10929 = vmatprep.subr.bf16.mxu0 %v9954
    %10930 = vmatpush1.bf16.msra.mxu0 %v9953
    %10931 = vmatprep.subr.bf16.mxu0 %v9962
    %10932 = vmatpush1.bf16.msra.mxu0 %v9961
    %10933 = vmatprep.subr.bf16.mxu0 %v9970
    %10934 = vmatpush1.bf16.msra.mxu0 %v9969
    %10935 = vmatprep.subr.bf16.mxu0 %v9978
    %10936 = vmatpush1.bf16.msra.mxu0 %v9977
    %10937 = vmatprep.subr.bf16.mxu0 %v9986
    %10938 = vmatpush1.bf16.msra.mxu0 %v9985
    %10939 = vmatprep.subr.bf16.mxu0 %v9994
    %10940 = vmatpush1.bf16.msra.mxu0 %v9993
    %10941 = vmatprep.subr.bf16.mxu0 %v10002
    %10942 = vmatpush1.bf16.msra.mxu0 %v10001
    %10943 = vmatprep.subr.bf16.mxu0 %v10010
    %10944 = vmatpush1.bf16.msra.mxu0 %v10009
    %10945 = vmatprep.mubr.bf16.mxu0 %v7792
    %10946 = vmatmul.mubr.bf16.gmra.mrb[0].mxu0 %v7791
    %v10947 = vpop.f32.mrb[0].mxu0
    %v10948 = vadd.f32 %v8316, %v10947
    %v10949 = vpop.f32.mrb[0].mxu0
    %v10950 = vadd.f32 %v8320, %v10949
    %v10951 = vpop.f32.mrb[0].mxu0
    %v10952 = vadd.f32 %v8316, %v10951
    %v10953 = vpop.f32.mrb[0].mxu0
    %v10954 = vadd.f32 %v8320, %v10953
    %10955 = vdwg.mxu0
    %10956 = vmatprep.subr.bf16.mxu0 %v10018
    %10957 = vmatpush1.bf16.msra.mxu0 %v10017
    %10958 = vmatprep.subr.bf16.mxu0 %v10026
    %10959 = vmatpush1.bf16.msra.mxu0 %v10025
    %10960 = vmatprep.subr.bf16.mxu0 %v10034
    %10961 = vmatpush1.bf16.msra.mxu0 %v10033
    %10962 = vmatprep.subr.bf16.mxu0 %v10042
    %10963 = vmatpush1.bf16.msra.mxu0 %v10041
    %10964 = vmatprep.subr.bf16.mxu0 %v10050
    %10965 = vmatpush1.bf16.msra.mxu0 %v10049
    %10966 = vmatprep.subr.bf16.mxu0 %v10058
    %10967 = vmatpush1.bf16.msra.mxu0 %v10057
    %10968 = vmatprep.subr.bf16.mxu0 %v10066
    %10969 = vmatpush1.bf16.msra.mxu0 %v10065
    %10970 = vmatprep.subr.bf16.mxu0 %v10074
    %10971 = vmatpush1.bf16.msra.mxu0 %v10073
    %10972 = vmatprep.subr.bf16.mxu0 %v10082
    %10973 = vmatpush1.bf16.msra.mxu0 %v10081
    %10974 = vmatprep.subr.bf16.mxu0 %v10090
    %10975 = vmatpush1.bf16.msra.mxu0 %v10089
    %10976 = vmatprep.subr.bf16.mxu0 %v10098
    %10977 = vmatpush1.bf16.msra.mxu0 %v10097
    %10978 = vmatprep.subr.bf16.mxu0 %v10106
    %10979 = vmatpush1.bf16.msra.mxu0 %v10105
    %10980 = vmatprep.subr.bf16.mxu0 %v10114
    %10981 = vmatpush1.bf16.msra.mxu0 %v10113
    %10982 = vmatprep.subr.bf16.mxu0 %v10122
    %10983 = vmatpush1.bf16.msra.mxu0 %v10121
    %10984 = vmatprep.subr.bf16.mxu0 %v10130
    %10985 = vmatpush1.bf16.msra.mxu0 %v10129
    %10986 = vmatprep.subr.bf16.mxu0 %v10138
    %10987 = vmatpush1.bf16.msra.mxu0 %v10137
    %10988 = vmatprep.mubr.bf16.mxu0 %v7794
    %10989 = vmatmul.mubr.bf16.gmra.mrb[0].mxu0 %v7793
    %v10990 = vpop.f32.mrb[0].mxu0
    %v10991 = vadd.f32 %v10948, %v10990
    %v10992 = vpop.f32.mrb[0].mxu0
    %v10993 = vadd.f32 %v10950, %v10992
    %v10994 = vpop.f32.mrb[0].mxu0
    %v10995 = vadd.f32 %v10952, %v10994
    %v10996 = vpop.f32.mrb[0].mxu0
    %v10997 = vadd.f32 %v10954, %v10996
    %10998 = vdwg.mxu0
    %10999 = vmatprep.subr.bf16.mxu0 %v10146
    %11000 = vmatpush1.bf16.msra.mxu0 %v10145
    %11001 = vmatprep.subr.bf16.mxu0 %v10154
    %11002 = vmatpush1.bf16.msra.mxu0 %v10153
    %11003 = vmatprep.subr.bf16.mxu0 %v10162
    %11004 = vmatpush1.bf16.msra.mxu0 %v10161
    %11005 = vmatprep.subr.bf16.mxu0 %v10170
    %11006 = vmatpush1.bf16.msra.mxu0 %v10169
    %11007 = vmatprep.subr.bf16.mxu0 %v10178
    %11008 = vmatpush1.bf16.msra.mxu0 %v10177
    %11009 = vmatprep.subr.bf16.mxu0 %v10186
    %11010 = vmatpush1.bf16.msra.mxu0 %v10185
    %11011 = vmatprep.subr.bf16.mxu0 %v10194
    %11012 = vmatpush1.bf16.msra.mxu0 %v10193
    %11013 = vmatprep.subr.bf16.mxu0 %v10202
    %11014 = vmatpush1.bf16.msra.mxu0 %v10201
    %11015 = vmatprep.subr.bf16.mxu0 %v10210
    %11016 = vmatpush1.bf16.msra.mxu0 %v10209
    %11017 = vmatprep.subr.bf16.mxu0 %v10218
    %11018 = vmatpush1.bf16.msra.mxu0 %v10217
    %11019 = vmatprep.subr.bf16.mxu0 %v10226
    %11020 = vmatpush1.bf16.msra.mxu0 %v10225
    %11021 = vmatprep.subr.bf16.mxu0 %v10234
    %11022 = vmatpush1.bf16.msra.mxu0 %v10233
    %11023 = vmatprep.subr.bf16.mxu0 %v10242
    %11024 = vmatpush1.bf16.msra.mxu0 %v10241
    %11025 = vmatprep.subr.bf16.mxu0 %v10250
    %11026 = vmatpush1.bf16.msra.mxu0 %v10249
    %11027 = vmatprep.subr.bf16.mxu0 %v10258
    %11028 = vmatpush1.bf16.msra.mxu0 %v10257
    %11029 = vmatprep.subr.bf16.mxu0 %v10266
    %11030 = vmatpush1.bf16.msra.mxu0 %v10265
    %11031 = vmatprep.mubr.bf16.mxu0 %v7796
    %11032 = vmatmul.mubr.bf16.gmra.mrb[0].mxu0 %v7795
    %v11033 = vpop.f32.mrb[0].mxu0
    %v11034 = vadd.f32 %v10991, %v11033
    %v11035 = vpop.f32.mrb[0].mxu0
    %v11036 = vadd.f32 %v10993, %v11035
    %v11037 = vpop.f32.mrb[0].mxu0
    %v11038 = vadd.f32 %v10995, %v11037
    %v11039 = vpop.f32.mrb[0].mxu0
    %v11040 = vadd.f32 %v10997, %v11039
    %11041 = vdwg.mxu0
    %11042 = vmatprep.subr.bf16.mxu0 %v10274
    %11043 = vmatpush1.bf16.msra.mxu0 %v10273
    %11044 = vmatprep.subr.bf16.mxu0 %v10282
    %11045 = vmatpush1.bf16.msra.mxu0 %v10281
    %11046 = vmatprep.subr.bf16.mxu0 %v10290
    %11047 = vmatpush1.bf16.msra.mxu0 %v10289
    %11048 = vmatprep.subr.bf16.mxu0 %v10298
    %11049 = vmatpush1.bf16.msra.mxu0 %v10297
    %11050 = vmatprep.subr.bf16.mxu0 %v10306
    %11051 = vmatpush1.bf16.msra.mxu0 %v10305
    %11052 = vmatprep.subr.bf16.mxu0 %v10314
    %11053 = vmatpush1.bf16.msra.mxu0 %v10313
    %11054 = vmatprep.subr.bf16.mxu0 %v10322
    %11055 = vmatpush1.bf16.msra.mxu0 %v10321
    %11056 = vmatprep.subr.bf16.mxu0 %v10330
    %11057 = vmatpush1.bf16.msra.mxu0 %v10329
    %11058 = vmatprep.subr.bf16.mxu0 %v10338
    %11059 = vmatpush1.bf16.msra.mxu0 %v10337
    %11060 = vmatprep.subr.bf16.mxu0 %v10346
    %11061 = vmatpush1.bf16.msra.mxu0 %v10345
    %11062 = vmatprep.subr.bf16.mxu0 %v10354
    %11063 = vmatpush1.bf16.msra.mxu0 %v10353
    %11064 = vmatprep.subr.bf16.mxu0 %v10362
    %11065 = vmatpush1.bf16.msra.mxu0 %v10361
    %11066 = vmatprep.subr.bf16.mxu0 %v10370
    %11067 = vmatpush1.bf16.msra.mxu0 %v10369
    %11068 = vmatprep.subr.bf16.mxu0 %v10378
    %11069 = vmatpush1.bf16.msra.mxu0 %v10377
    %11070 = vmatprep.subr.bf16.mxu0 %v10386
    %11071 = vmatpush1.bf16.msra.mxu0 %v10385
    %11072 = vmatprep.subr.bf16.mxu0 %v10394
    %11073 = vmatpush1.bf16.msra.mxu0 %v10393
    %11074 = vmatprep.mubr.bf16.mxu0 %v7798
    %11075 = vmatmul.mubr.bf16.gmra.mrb[0].mxu0 %v7797
    %v11076 = vpop.f32.mrb[0].mxu0
    %v11077 = vadd.f32 %v11034, %v11076
    %v11078 = vpop.f32.mrb[0].mxu0
    %v11079 = vadd.f32 %v11036, %v11078
    %v11080 = vpop.f32.mrb[0].mxu0
    %v11081 = vadd.f32 %v11038, %v11080
    %v11082 = vpop.f32.mrb[0].mxu0
    %v11083 = vadd.f32 %v11040, %v11082
    %11084 = vdwg.mxu0
    %11085 = vmatprep.subr.bf16.mxu0 %v9892
    %11086 = vmatpush1.bf16.msra.mxu0 %v9891
    %11087 = vmatprep.subr.bf16.mxu0 %v9900
    %11088 = vmatpush1.bf16.msra.mxu0 %v9899
    %11089 = vmatprep.subr.bf16.mxu0 %v9908
    %11090 = vmatpush1.bf16.msra.mxu0 %v9907
    %11091 = vmatprep.subr.bf16.mxu0 %v9916
    %11092 = vmatpush1.bf16.msra.mxu0 %v9915
    %11093 = vmatprep.subr.bf16.mxu0 %v9924
    %11094 = vmatpush1.bf16.msra.mxu0 %v9923
    %11095 = vmatprep.subr.bf16.mxu0 %v9932
    %11096 = vmatpush1.bf16.msra.mxu0 %v9931
    %11097 = vmatprep.subr.bf16.mxu0 %v9940
    %11098 = vmatpush1.bf16.msra.mxu0 %v9939
    %11099 = vmatprep.subr.bf16.mxu0 %v9948
    %11100 = vmatpush1.bf16.msra.mxu0 %v9947
    %11101 = vmatprep.subr.bf16.mxu0 %v9956
    %11102 = vmatpush1.bf16.msra.mxu0 %v9955
    %11103 = vmatprep.subr.bf16.mxu0 %v9964
    %11104 = vmatpush1.bf16.msra.mxu0 %v9963
    %11105 = vmatprep.subr.bf16.mxu0 %v9972
    %11106 = vmatpush1.bf16.msra.mxu0 %v9971
    %11107 = vmatprep.subr.bf16.mxu0 %v9980
    %11108 = vmatpush1.bf16.msra.mxu0 %v9979
    %11109 = vmatprep.subr.bf16.mxu0 %v9988
    %11110 = vmatpush1.bf16.msra.mxu0 %v9987
    %11111 = vmatprep.subr.bf16.mxu0 %v9996
    %11112 = vmatpush1.bf16.msra.mxu0 %v9995
    %11113 = vmatprep.subr.bf16.mxu0 %v10004
    %11114 = vmatpush1.bf16.msra.mxu0 %v10003
    %11115 = vmatprep.subr.bf16.mxu0 %v10012
    %11116 = vmatpush1.bf16.msra.mxu0 %v10011
    %11117 = vmatprep.mubr.bf16.mxu0 %v7792
    %11118 = vmatmul.mubr.bf16.gmra.mrb[0].mxu0 %v7791
    %v11119 = vpop.f32.mrb[0].mxu0
    %v11120 = vadd.f32 %v8324, %v11119
    %v11121 = vpop.f32.mrb[0].mxu0
    %v11122 = vadd.f32 %v8328, %v11121
    %v11123 = vpop.f32.mrb[0].mxu0
    %v11124 = vadd.f32 %v8324, %v11123
    %v11125 = vpop.f32.mrb[0].mxu0
    %v11126 = vadd.f32 %v8328, %v11125
    %11127 = vdwg.mxu0
    %11128 = vmatprep.subr.bf16.mxu0 %v10020
    %11129 = vmatpush1.bf16.msra.mxu0 %v10019
    %11130 = vmatprep.subr.bf16.mxu0 %v10028
    %11131 = vmatpush1.bf16.msra.mxu0 %v10027
    %11132 = vmatprep.subr.bf16.mxu0 %v10036
    %11133 = vmatpush1.bf16.msra.mxu0 %v10035
    %11134 = vmatprep.subr.bf16.mxu0 %v10044
    %11135 = vmatpush1.bf16.msra.mxu0 %v10043
    %11136 = vmatprep.subr.bf16.mxu0 %v10052
    %11137 = vmatpush1.bf16.msra.mxu0 %v10051
    %11138 = vmatprep.subr.bf16.mxu0 %v10060
    %11139 = vmatpush1.bf16.msra.mxu0 %v10059
    %11140 = vmatprep.subr.bf16.mxu0 %v10068
    %11141 = vmatpush1.bf16.msra.mxu0 %v10067
    %11142 = vmatprep.subr.bf16.mxu0 %v10076
    %11143 = vmatpush1.bf16.msra.mxu0 %v10075
    %11144 = vmatprep.subr.bf16.mxu0 %v10084
    %11145 = vmatpush1.bf16.msra.mxu0 %v10083
    %11146 = vmatprep.subr.bf16.mxu0 %v10092
    %11147 = vmatpush1.bf16.msra.mxu0 %v10091
    %11148 = vmatprep.subr.bf16.mxu0 %v10100
    %11149 = vmatpush1.bf16.msra.mxu0 %v10099
    %11150 = vmatprep.subr.bf16.mxu0 %v10108
    %11151 = vmatpush1.bf16.msra.mxu0 %v10107
    %11152 = vmatprep.subr.bf16.mxu0 %v10116
    %11153 = vmatpush1.bf16.msra.mxu0 %v10115
    %11154 = vmatprep.subr.bf16.mxu0 %v10124
    %11155 = vmatpush1.bf16.msra.mxu0 %v10123
    %11156 = vmatprep.subr.bf16.mxu0 %v10132
    %11157 = vmatpush1.bf16.msra.mxu0 %v10131
    %11158 = vmatprep.subr.bf16.mxu0 %v10140
    %11159 = vmatpush1.bf16.msra.mxu0 %v10139
    %11160 = vmatprep.mubr.bf16.mxu0 %v7794
    %11161 = vmatmul.mubr.bf16.gmra.mrb[0].mxu0 %v7793
    %v11162 = vpop.f32.mrb[0].mxu0
    %v11163 = vadd.f32 %v11120, %v11162
    %v11164 = vpop.f32.mrb[0].mxu0
    %v11165 = vadd.f32 %v11122, %v11164
    %v11166 = vpop.f32.mrb[0].mxu0
    %v11167 = vadd.f32 %v11124, %v11166
    %v11168 = vpop.f32.mrb[0].mxu0
    %v11169 = vadd.f32 %v11126, %v11168
    %11170 = vdwg.mxu0
    %11171 = vmatprep.subr.bf16.mxu0 %v10148
    %11172 = vmatpush1.bf16.msra.mxu0 %v10147
    %11173 = vmatprep.subr.bf16.mxu0 %v10156
    %11174 = vmatpush1.bf16.msra.mxu0 %v10155
    %11175 = vmatprep.subr.bf16.mxu0 %v10164
    %11176 = vmatpush1.bf16.msra.mxu0 %v10163
    %11177 = vmatprep.subr.bf16.mxu0 %v10172
    %11178 = vmatpush1.bf16.msra.mxu0 %v10171
    %11179 = vmatprep.subr.bf16.mxu0 %v10180
    %11180 = vmatpush1.bf16.msra.mxu0 %v10179
    %11181 = vmatprep.subr.bf16.mxu0 %v10188
    %11182 = vmatpush1.bf16.msra.mxu0 %v10187
    %11183 = vmatprep.subr.bf16.mxu0 %v10196
    %11184 = vmatpush1.bf16.msra.mxu0 %v10195
    %11185 = vmatprep.subr.bf16.mxu0 %v10204
    %11186 = vmatpush1.bf16.msra.mxu0 %v10203
    %11187 = vmatprep.subr.bf16.mxu0 %v10212
    %11188 = vmatpush1.bf16.msra.mxu0 %v10211
    %11189 = vmatprep.subr.bf16.mxu0 %v10220
    %11190 = vmatpush1.bf16.msra.mxu0 %v10219
    %11191 = vmatprep.subr.bf16.mxu0 %v10228
    %11192 = vmatpush1.bf16.msra.mxu0 %v10227
    %11193 = vmatprep.subr.bf16.mxu0 %v10236
    %11194 = vmatpush1.bf16.msra.mxu0 %v10235
    %11195 = vmatprep.subr.bf16.mxu0 %v10244
    %11196 = vmatpush1.bf16.msra.mxu0 %v10243
    %11197 = vmatprep.subr.bf16.mxu0 %v10252
    %11198 = vmatpush1.bf16.msra.mxu0 %v10251
    %11199 = vmatprep.subr.bf16.mxu0 %v10260
    %11200 = vmatpush1.bf16.msra.mxu0 %v10259
    %11201 = vmatprep.subr.bf16.mxu0 %v10268
    %11202 = vmatpush1.bf16.msra.mxu0 %v10267
    %11203 = vmatprep.mubr.bf16.mxu0 %v7796
    %11204 = vmatmul.mubr.bf16.gmra.mrb[0].mxu0 %v7795
    %v11205 = vpop.f32.mrb[0].mxu0
    %v11206 = vadd.f32 %v11163, %v11205
    %v11207 = vpop.f32.mrb[0].mxu0
    %v11208 = vadd.f32 %v11165, %v11207
    %v11209 = vpop.f32.mrb[0].mxu0
    %v11210 = vadd.f32 %v11167, %v11209
    %v11211 = vpop.f32.mrb[0].mxu0
    %v11212 = vadd.f32 %v11169, %v11211
    %11213 = vdwg.mxu0
    %11214 = vmatprep.subr.bf16.mxu0 %v10276
    %11215 = vmatpush1.bf16.msra.mxu0 %v10275
    %11216 = vmatprep.subr.bf16.mxu0 %v10284
    %11217 = vmatpush1.bf16.msra.mxu0 %v10283
    %11218 = vmatprep.subr.bf16.mxu0 %v10292
    %11219 = vmatpush1.bf16.msra.mxu0 %v10291
    %11220 = vmatprep.subr.bf16.mxu0 %v10300
    %11221 = vmatpush1.bf16.msra.mxu0 %v10299
    %11222 = vmatprep.subr.bf16.mxu0 %v10308
    %11223 = vmatpush1.bf16.msra.mxu0 %v10307
    %11224 = vmatprep.subr.bf16.mxu0 %v10316
    %11225 = vmatpush1.bf16.msra.mxu0 %v10315
    %11226 = vmatprep.subr.bf16.mxu0 %v10324
    %11227 = vmatpush1.bf16.msra.mxu0 %v10323
    %11228 = vmatprep.subr.bf16.mxu0 %v10332
    %11229 = vmatpush1.bf16.msra.mxu0 %v10331
    %11230 = vmatprep.subr.bf16.mxu0 %v10340
    %11231 = vmatpush1.bf16.msra.mxu0 %v10339
    %11232 = vmatprep.subr.bf16.mxu0 %v10348
    %11233 = vmatpush1.bf16.msra.mxu0 %v10347
    %11234 = vmatprep.subr.bf16.mxu0 %v10356
    %11235 = vmatpush1.bf16.msra.mxu0 %v10355
    %11236 = vmatprep.subr.bf16.mxu0 %v10364
    %11237 = vmatpush1.bf16.msra.mxu0 %v10363
    %11238 = vmatprep.subr.bf16.mxu0 %v10372
    %11239 = vmatpush1.bf16.msra.mxu0 %v10371
    %11240 = vmatprep.subr.bf16.mxu0 %v10380
    %11241 = vmatpush1.bf16.msra.mxu0 %v10379
    %11242 = vmatprep.subr.bf16.mxu0 %v10388
    %11243 = vmatpush1.bf16.msra.mxu0 %v10387
    %11244 = vmatprep.subr.bf16.mxu0 %v10396
    %11245 = vmatpush1.bf16.msra.mxu0 %v10395
    %11246 = vmatprep.mubr.bf16.mxu0 %v7798
    %11247 = vmatmul.mubr.bf16.gmra.mrb[0].mxu0 %v7797
    %v11248 = vpop.f32.mrb[0].mxu0
    %v11249 = vadd.f32 %v11206, %v11248
    %v11250 = vpop.f32.mrb[0].mxu0
    %v11251 = vadd.f32 %v11208, %v11250
    %v11252 = vpop.f32.mrb[0].mxu0
    %v11253 = vadd.f32 %v11210, %v11252
    %v11254 = vpop.f32.mrb[0].mxu0
    %v11255 = vadd.f32 %v11212, %v11254
    %11256 = vdwg.mxu0
    %11257 = vmatprep.subr.bf16.mxu0 %v9894
    %11258 = vmatpush1.bf16.msra.mxu0 %v9893
    %11259 = vmatprep.subr.bf16.mxu0 %v9902
    %11260 = vmatpush1.bf16.msra.mxu0 %v9901
    %11261 = vmatprep.subr.bf16.mxu0 %v9910
    %11262 = vmatpush1.bf16.msra.mxu0 %v9909
    %11263 = vmatprep.subr.bf16.mxu0 %v9918
    %11264 = vmatpush1.bf16.msra.mxu0 %v9917
    %11265 = vmatprep.subr.bf16.mxu0 %v9926
    %11266 = vmatpush1.bf16.msra.mxu0 %v9925
    %11267 = vmatprep.subr.bf16.mxu0 %v9934
    %11268 = vmatpush1.bf16.msra.mxu0 %v9933
    %11269 = vmatprep.subr.bf16.mxu0 %v9942
    %11270 = vmatpush1.bf16.msra.mxu0 %v9941
    %11271 = vmatprep.subr.bf16.mxu0 %v9950
    %11272 = vmatpush1.bf16.msra.mxu0 %v9949
    %11273 = vmatprep.subr.bf16.mxu0 %v9958
    %11274 = vmatpush1.bf16.msra.mxu0 %v9957
    %11275 = vmatprep.subr.bf16.mxu0 %v9966
    %11276 = vmatpush1.bf16.msra.mxu0 %v9965
    %11277 = vmatprep.subr.bf16.mxu0 %v9974
    %11278 = vmatpush1.bf16.msra.mxu0 %v9973
    %11279 = vmatprep.subr.bf16.mxu0 %v9982
    %11280 = vmatpush1.bf16.msra.mxu0 %v9981
    %11281 = vmatprep.subr.bf16.mxu0 %v9990
    %11282 = vmatpush1.bf16.msra.mxu0 %v9989
    %11283 = vmatprep.subr.bf16.mxu0 %v9998
    %11284 = vmatpush1.bf16.msra.mxu0 %v9997
    %11285 = vmatprep.subr.bf16.mxu0 %v10006
    %11286 = vmatpush1.bf16.msra.mxu0 %v10005
    %11287 = vmatprep.subr.bf16.mxu0 %v10014
    %11288 = vmatpush1.bf16.msra.mxu0 %v10013
    %11289 = vmatprep.mubr.bf16.mxu0 %v7792
    %11290 = vmatmul.mubr.bf16.gmra.mrb[0].mxu0 %v7791
    %v11291 = vpop.f32.mrb[0].mxu0
    %v11292 = vadd.f32 %v8332, %v11291
    %v11293 = vpop.f32.mrb[0].mxu0
    %v11294 = vadd.f32 %v8336, %v11293
    %v11295 = vpop.f32.mrb[0].mxu0
    %v11296 = vadd.f32 %v8332, %v11295
    %v11297 = vpop.f32.mrb[0].mxu0
    %v11298 = vadd.f32 %v8336, %v11297
    %11299 = vdwg.mxu0
    %11300 = vmatprep.subr.bf16.mxu0 %v10022
    %11301 = vmatpush1.bf16.msra.mxu0 %v10021
    %11302 = vmatprep.subr.bf16.mxu0 %v10030
    %11303 = vmatpush1.bf16.msra.mxu0 %v10029
    %11304 = vmatprep.subr.bf16.mxu0 %v10038
    %11305 = vmatpush1.bf16.msra.mxu0 %v10037
    %11306 = vmatprep.subr.bf16.mxu0 %v10046
    %11307 = vmatpush1.bf16.msra.mxu0 %v10045
    %11308 = vmatprep.subr.bf16.mxu0 %v10054
    %11309 = vmatpush1.bf16.msra.mxu0 %v10053
    %11310 = vmatprep.subr.bf16.mxu0 %v10062
    %11311 = vmatpush1.bf16.msra.mxu0 %v10061
    %11312 = vmatprep.subr.bf16.mxu0 %v10070
    %11313 = vmatpush1.bf16.msra.mxu0 %v10069
    %11314 = vmatprep.subr.bf16.mxu0 %v10078
    %11315 = vmatpush1.bf16.msra.mxu0 %v10077
    %11316 = vmatprep.subr.bf16.mxu0 %v10086
    %11317 = vmatpush1.bf16.msra.mxu0 %v10085
    %11318 = vmatprep.subr.bf16.mxu0 %v10094
    %11319 = vmatpush1.bf16.msra.mxu0 %v10093
    %11320 = vmatprep.subr.bf16.mxu0 %v10102
    %11321 = vmatpush1.bf16.msra.mxu0 %v10101
    %11322 = vmatprep.subr.bf16.mxu0 %v10110
    %11323 = vmatpush1.bf16.msra.mxu0 %v10109
    %11324 = vmatprep.subr.bf16.mxu0 %v10118
    %11325 = vmatpush1.bf16.msra.mxu0 %v10117
    %11326 = vmatprep.subr.bf16.mxu0 %v10126
    %11327 = vmatpush1.bf16.msra.mxu0 %v10125
    %11328 = vmatprep.subr.bf16.mxu0 %v10134
    %11329 = vmatpush1.bf16.msra.mxu0 %v10133
    %11330 = vmatprep.subr.bf16.mxu0 %v10142
    %11331 = vmatpush1.bf16.msra.mxu0 %v10141
    %11332 = vmatprep.mubr.bf16.mxu0 %v7794
    %11333 = vmatmul.mubr.bf16.gmra.mrb[0].mxu0 %v7793
    %v11334 = vpop.f32.mrb[0].mxu0
    %v11335 = vadd.f32 %v11292, %v11334
    %v11336 = vpop.f32.mrb[0].mxu0
    %v11337 = vadd.f32 %v11294, %v11336
    %v11338 = vpop.f32.mrb[0].mxu0
    %v11339 = vadd.f32 %v11296, %v11338
    %v11340 = vpop.f32.mrb[0].mxu0
    %v11341 = vadd.f32 %v11298, %v11340
    %11342 = vdwg.mxu0
    %11343 = vmatprep.subr.bf16.mxu0 %v10150
    %11344 = vmatpush1.bf16.msra.mxu0 %v10149
    %11345 = vmatprep.subr.bf16.mxu0 %v10158
    %11346 = vmatpush1.bf16.msra.mxu0 %v10157
    %11347 = vmatprep.subr.bf16.mxu0 %v10166
    %11348 = vmatpush1.bf16.msra.mxu0 %v10165
    %11349 = vmatprep.subr.bf16.mxu0 %v10174
    %11350 = vmatpush1.bf16.msra.mxu0 %v10173
    %11351 = vmatprep.subr.bf16.mxu0 %v10182
    %11352 = vmatpush1.bf16.msra.mxu0 %v10181
    %11353 = vmatprep.subr.bf16.mxu0 %v10190
    %11354 = vmatpush1.bf16.msra.mxu0 %v10189
    %11355 = vmatprep.subr.bf16.mxu0 %v10198
    %11356 = vmatpush1.bf16.msra.mxu0 %v10197
    %11357 = vmatprep.subr.bf16.mxu0 %v10206
    %11358 = vmatpush1.bf16.msra.mxu0 %v10205
    %11359 = vmatprep.subr.bf16.mxu0 %v10214
    %11360 = vmatpush1.bf16.msra.mxu0 %v10213
    %11361 = vmatprep.subr.bf16.mxu0 %v10222
    %11362 = vmatpush1.bf16.msra.mxu0 %v10221
    %11363 = vmatprep.subr.bf16.mxu0 %v10230
    %11364 = vmatpush1.bf16.msra.mxu0 %v10229
    %11365 = vmatprep.subr.bf16.mxu0 %v10238
    %11366 = vmatpush1.bf16.msra.mxu0 %v10237
    %11367 = vmatprep.subr.bf16.mxu0 %v10246
    %11368 = vmatpush1.bf16.msra.mxu0 %v10245
    %11369 = vmatprep.subr.bf16.mxu0 %v10254
    %11370 = vmatpush1.bf16.msra.mxu0 %v10253
    %11371 = vmatprep.subr.bf16.mxu0 %v10262
    %11372 = vmatpush1.bf16.msra.mxu0 %v10261
    %11373 = vmatprep.subr.bf16.mxu0 %v10270
    %11374 = vmatpush1.bf16.msra.mxu0 %v10269
    %11375 = vmatprep.mubr.bf16.mxu0 %v7796
    %11376 = vmatmul.mubr.bf16.gmra.mrb[0].mxu0 %v7795
    %v11377 = vpop.f32.mrb[0].mxu0
    %v11378 = vadd.f32 %v11335, %v11377
    %v11379 = vpop.f32.mrb[0].mxu0
    %v11380 = vadd.f32 %v11337, %v11379
    %v11381 = vpop.f32.mrb[0].mxu0
    %v11382 = vadd.f32 %v11339, %v11381
    %v11383 = vpop.f32.mrb[0].mxu0
    %v11384 = vadd.f32 %v11341, %v11383
    %11385 = vdwg.mxu0
    %11386 = vmatprep.subr.bf16.mxu0 %v10278
    %11387 = vmatpush1.bf16.msra.mxu0 %v10277
    %11388 = vmatprep.subr.bf16.mxu0 %v10286
    %11389 = vmatpush1.bf16.msra.mxu0 %v10285
    %11390 = vmatprep.subr.bf16.mxu0 %v10294
    %11391 = vmatpush1.bf16.msra.mxu0 %v10293
    %11392 = vmatprep.subr.bf16.mxu0 %v10302
    %11393 = vmatpush1.bf16.msra.mxu0 %v10301
    %11394 = vmatprep.subr.bf16.mxu0 %v10310
    %11395 = vmatpush1.bf16.msra.mxu0 %v10309
    %11396 = vmatprep.subr.bf16.mxu0 %v10318
    %11397 = vmatpush1.bf16.msra.mxu0 %v10317
    %11398 = vmatprep.subr.bf16.mxu0 %v10326
    %11399 = vmatpush1.bf16.msra.mxu0 %v10325
    %11400 = vmatprep.subr.bf16.mxu0 %v10334
    %11401 = vmatpush1.bf16.msra.mxu0 %v10333
    %11402 = vmatprep.subr.bf16.mxu0 %v10342
    %11403 = vmatpush1.bf16.msra.mxu0 %v10341
    %11404 = vmatprep.subr.bf16.mxu0 %v10350
    %11405 = vmatpush1.bf16.msra.mxu0 %v10349
    %11406 = vmatprep.subr.bf16.mxu0 %v10358
    %11407 = vmatpush1.bf16.msra.mxu0 %v10357
    %11408 = vmatprep.subr.bf16.mxu0 %v10366
    %11409 = vmatpush1.bf16.msra.mxu0 %v10365
    %11410 = vmatprep.subr.bf16.mxu0 %v10374
    %11411 = vmatpush1.bf16.msra.mxu0 %v10373
    %11412 = vmatprep.subr.bf16.mxu0 %v10382
    %11413 = vmatpush1.bf16.msra.mxu0 %v10381
    %11414 = vmatprep.subr.bf16.mxu0 %v10390
    %11415 = vmatpush1.bf16.msra.mxu0 %v10389
    %11416 = vmatprep.subr.bf16.mxu0 %v10398
    %11417 = vmatpush1.bf16.msra.mxu0 %v10397
    %11418 = vmatprep.mubr.bf16.mxu0 %v7798
    %11419 = vmatmul.mubr.bf16.gmra.mrb[0].mxu0 %v7797
    %v11420 = vpop.f32.mrb[0].mxu0
    %v11421 = vadd.f32 %v11378, %v11420
    %v11422 = vpop.f32.mrb[0].mxu0
    %v11423 = vadd.f32 %v11380, %v11422
    %v11424 = vpop.f32.mrb[0].mxu0
    %v11425 = vadd.f32 %v11382, %v11424
    %v11426 = vpop.f32.mrb[0].mxu0
    %v11427 = vadd.f32 %v11384, %v11426
    %11428 = vdwg.mxu0
    %11429 = vmatprep.subr.bf16.mxu0 %v9896
    %11430 = vmatpush1.bf16.msra.mxu0 %v9895
    %11431 = vmatprep.subr.bf16.mxu0 %v9904
    %11432 = vmatpush1.bf16.msra.mxu0 %v9903
    %11433 = vmatprep.subr.bf16.mxu0 %v9912
    %11434 = vmatpush1.bf16.msra.mxu0 %v9911
    %11435 = vmatprep.subr.bf16.mxu0 %v9920
    %11436 = vmatpush1.bf16.msra.mxu0 %v9919
    %11437 = vmatprep.subr.bf16.mxu0 %v9928
    %11438 = vmatpush1.bf16.msra.mxu0 %v9927
    %11439 = vmatprep.subr.bf16.mxu0 %v9936
    %11440 = vmatpush1.bf16.msra.mxu0 %v9935
    %11441 = vmatprep.subr.bf16.mxu0 %v9944
    %11442 = vmatpush1.bf16.msra.mxu0 %v9943
    %11443 = vmatprep.subr.bf16.mxu0 %v9952
    %11444 = vmatpush1.bf16.msra.mxu0 %v9951
    %11445 = vmatprep.subr.bf16.mxu0 %v9960
    %11446 = vmatpush1.bf16.msra.mxu0 %v9959
    %11447 = vmatprep.subr.bf16.mxu0 %v9968
    %11448 = vmatpush1.bf16.msra.mxu0 %v9967
    %11449 = vmatprep.subr.bf16.mxu0 %v9976
    %11450 = vmatpush1.bf16.msra.mxu0 %v9975
    %11451 = vmatprep.subr.bf16.mxu0 %v9984
    %11452 = vmatpush1.bf16.msra.mxu0 %v9983
    %11453 = vmatprep.subr.bf16.mxu0 %v9992
    %11454 = vmatpush1.bf16.msra.mxu0 %v9991
    %11455 = vmatprep.subr.bf16.mxu0 %v10000
    %11456 = vmatpush1.bf16.msra.mxu0 %v9999
    %11457 = vmatprep.subr.bf16.mxu0 %v10008
    %11458 = vmatpush1.bf16.msra.mxu0 %v10007
    %11459 = vmatprep.subr.bf16.mxu0 %v10016
    %11460 = vmatpush1.bf16.msra.mxu0 %v10015
    %11461 = vmatprep.mubr.bf16.mxu0 %v7792
    %11462 = vmatmul.mubr.bf16.gmra.mrb[0].mxu0 %v7791
    %v11463 = vpop.f32.mrb[0].mxu0
    %v11464 = vadd.f32 %v8340, %v11463
    %v11465 = vpop.f32.mrb[0].mxu0
    %v11466 = vadd.f32 %v8344, %v11465
    %v11467 = vpop.f32.mrb[0].mxu0
    %v11468 = vadd.f32 %v8340, %v11467
    %v11469 = vpop.f32.mrb[0].mxu0
    %v11470 = vadd.f32 %v8344, %v11469
    %11471 = vdwg.mxu0
    %11472 = vmatprep.subr.bf16.mxu0 %v10024
    %11473 = vmatpush1.bf16.msra.mxu0 %v10023
    %11474 = vmatprep.subr.bf16.mxu0 %v10032
    %11475 = vmatpush1.bf16.msra.mxu0 %v10031
    %11476 = vmatprep.subr.bf16.mxu0 %v10040
    %11477 = vmatpush1.bf16.msra.mxu0 %v10039
    %11478 = vmatprep.subr.bf16.mxu0 %v10048
    %11479 = vmatpush1.bf16.msra.mxu0 %v10047
    %11480 = vmatprep.subr.bf16.mxu0 %v10056
    %11481 = vmatpush1.bf16.msra.mxu0 %v10055
    %11482 = vmatprep.subr.bf16.mxu0 %v10064
    %11483 = vmatpush1.bf16.msra.mxu0 %v10063
    %11484 = vmatprep.subr.bf16.mxu0 %v10072
    %11485 = vmatpush1.bf16.msra.mxu0 %v10071
    %11486 = vmatprep.subr.bf16.mxu0 %v10080
    %11487 = vmatpush1.bf16.msra.mxu0 %v10079
    %11488 = vmatprep.subr.bf16.mxu0 %v10088
    %11489 = vmatpush1.bf16.msra.mxu0 %v10087
    %11490 = vmatprep.subr.bf16.mxu0 %v10096
    %11491 = vmatpush1.bf16.msra.mxu0 %v10095
    %11492 = vmatprep.subr.bf16.mxu0 %v10104
    %11493 = vmatpush1.bf16.msra.mxu0 %v10103
    %11494 = vmatprep.subr.bf16.mxu0 %v10112
    %11495 = vmatpush1.bf16.msra.mxu0 %v10111
    %11496 = vmatprep.subr.bf16.mxu0 %v10120
    %11497 = vmatpush1.bf16.msra.mxu0 %v10119
    %11498 = vmatprep.subr.bf16.mxu0 %v10128
    %11499 = vmatpush1.bf16.msra.mxu0 %v10127
    %11500 = vmatprep.subr.bf16.mxu0 %v10136
    %11501 = vmatpush1.bf16.msra.mxu0 %v10135
    %11502 = vmatprep.subr.bf16.mxu0 %v10144
    %11503 = vmatpush1.bf16.msra.mxu0 %v10143
    %11504 = vmatprep.mubr.bf16.mxu0 %v7794
    %11505 = vmatmul.mubr.bf16.gmra.mrb[0].mxu0 %v7793
    %v11506 = vpop.f32.mrb[0].mxu0
    %v11507 = vadd.f32 %v11464, %v11506
    %v11508 = vpop.f32.mrb[0].mxu0
    %v11509 = vadd.f32 %v11466, %v11508
    %v11510 = vpop.f32.mrb[0].mxu0
    %v11511 = vadd.f32 %v11468, %v11510
    %v11512 = vpop.f32.mrb[0].mxu0
    %v11513 = vadd.f32 %v11470, %v11512
    %11514 = vdwg.mxu0
    %11515 = vmatprep.subr.bf16.mxu0 %v10152
    %11516 = vmatpush1.bf16.msra.mxu0 %v10151
    %11517 = vmatprep.subr.bf16.mxu0 %v10160
    %11518 = vmatpush1.bf16.msra.mxu0 %v10159
    %11519 = vmatprep.subr.bf16.mxu0 %v10168
    %11520 = vmatpush1.bf16.msra.mxu0 %v10167
    %11521 = vmatprep.subr.bf16.mxu0 %v10176
    %11522 = vmatpush1.bf16.msra.mxu0 %v10175
    %11523 = vmatprep.subr.bf16.mxu0 %v10184
    %11524 = vmatpush1.bf16.msra.mxu0 %v10183
    %11525 = vmatprep.subr.bf16.mxu0 %v10192
    %11526 = vmatpush1.bf16.msra.mxu0 %v10191
    %11527 = vmatprep.subr.bf16.mxu0 %v10200
    %11528 = vmatpush1.bf16.msra.mxu0 %v10199
    %11529 = vmatprep.subr.bf16.mxu0 %v10208
    %11530 = vmatpush1.bf16.msra.mxu0 %v10207
    %11531 = vmatprep.subr.bf16.mxu0 %v10216
    %11532 = vmatpush1.bf16.msra.mxu0 %v10215
    %11533 = vmatprep.subr.bf16.mxu0 %v10224
    %11534 = vmatpush1.bf16.msra.mxu0 %v10223
    %11535 = vmatprep.subr.bf16.mxu0 %v10232
    %11536 = vmatpush1.bf16.msra.mxu0 %v10231
    %11537 = vmatprep.subr.bf16.mxu0 %v10240
    %11538 = vmatpush1.bf16.msra.mxu0 %v10239
    %11539 = vmatprep.subr.bf16.mxu0 %v10248
    %11540 = vmatpush1.bf16.msra.mxu0 %v10247
    %11541 = vmatprep.subr.bf16.mxu0 %v10256
    %11542 = vmatpush1.bf16.msra.mxu0 %v10255
    %11543 = vmatprep.subr.bf16.mxu0 %v10264
    %11544 = vmatpush1.bf16.msra.mxu0 %v10263
    %11545 = vmatprep.subr.bf16.mxu0 %v10272
    %11546 = vmatpush1.bf16.msra.mxu0 %v10271
    %11547 = vmatprep.mubr.bf16.mxu0 %v7796
    %11548 = vmatmul.mubr.bf16.gmra.mrb[0].mxu0 %v7795
    %v11549 = vpop.f32.mrb[0].mxu0
    %v11550 = vadd.f32 %v11507, %v11549
    %v11551 = vpop.f32.mrb[0].mxu0
    %v11552 = vadd.f32 %v11509, %v11551
    %v11553 = vpop.f32.mrb[0].mxu0
    %v11554 = vadd.f32 %v11511, %v11553
    %v11555 = vpop.f32.mrb[0].mxu0
    %v11556 = vadd.f32 %v11513, %v11555
    %11557 = vdwg.mxu0
    %11558 = vmatprep.subr.bf16.mxu0 %v10280
    %11559 = vmatpush1.bf16.msra.mxu0 %v10279
    %11560 = vmatprep.subr.bf16.mxu0 %v10288
    %11561 = vmatpush1.bf16.msra.mxu0 %v10287
    %11562 = vmatprep.subr.bf16.mxu0 %v10296
    %11563 = vmatpush1.bf16.msra.mxu0 %v10295
    %11564 = vmatprep.subr.bf16.mxu0 %v10304
    %11565 = vmatpush1.bf16.msra.mxu0 %v10303
    %11566 = vmatprep.subr.bf16.mxu0 %v10312
    %11567 = vmatpush1.bf16.msra.mxu0 %v10311
    %11568 = vmatprep.subr.bf16.mxu0 %v10320
    %11569 = vmatpush1.bf16.msra.mxu0 %v10319
    %11570 = vmatprep.subr.bf16.mxu0 %v10328
    %11571 = vmatpush1.bf16.msra.mxu0 %v10327
    %11572 = vmatprep.subr.bf16.mxu0 %v10336
    %11573 = vmatpush1.bf16.msra.mxu0 %v10335
    %11574 = vmatprep.subr.bf16.mxu0 %v10344
    %11575 = vmatpush1.bf16.msra.mxu0 %v10343
    %11576 = vmatprep.subr.bf16.mxu0 %v10352
    %11577 = vmatpush1.bf16.msra.mxu0 %v10351
    %11578 = vmatprep.subr.bf16.mxu0 %v10360
    %11579 = vmatpush1.bf16.msra.mxu0 %v10359
    %11580 = vmatprep.subr.bf16.mxu0 %v10368
    %11581 = vmatpush1.bf16.msra.mxu0 %v10367
    %11582 = vmatprep.subr.bf16.mxu0 %v10376
    %11583 = vmatpush1.bf16.msra.mxu0 %v10375
    %11584 = vmatprep.subr.bf16.mxu0 %v10384
    %11585 = vmatpush1.bf16.msra.mxu0 %v10383
    %11586 = vmatprep.subr.bf16.mxu0 %v10392
    %11587 = vmatpush1.bf16.msra.mxu0 %v10391
    %11588 = vmatprep.subr.bf16.mxu0 %v10400
    %11589 = vmatpush1.bf16.msra.mxu0 %v10399
    %11590 = vmatprep.mubr.bf16.mxu0 %v7798
    %11591 = vmatmul.mubr.bf16.gmra.mrb[0].mxu0 %v7797
    %v11592 = vpop.f32.mrb[0].mxu0
    %v11593 = vadd.f32 %v11550, %v11592
    %v11594 = vpop.f32.mrb[0].mxu0
    %v11595 = vadd.f32 %v11552, %v11594
    %v11596 = vpop.f32.mrb[0].mxu0
    %v11597 = vadd.f32 %v11554, %v11596
    %v11598 = vpop.f32.mrb[0].mxu0
    %v11599 = vadd.f32 %v11556, %v11598
    %11600 = vdwg.mxu0
    %v11601 = vmax.f32 %v11077, 0.0
    %v11602 = vmax.f32 %v11079, 0.0
    %v11603 = vmax.f32 %v11249, 0.0
    %v11604 = vmax.f32 %v11251, 0.0
    %v11605 = vmax.f32 %v11421, 0.0
    %v11606 = vmax.f32 %v11423, 0.0
    %v11607 = vmax.f32 %v11593, 0.0
    %v11608 = vmax.f32 %v11595, 0.0
    %v11609 = vmax.f32 %v11081, 0.0
    %v11610 = vmax.f32 %v11083, 0.0
    %v11611 = vmax.f32 %v11253, 0.0
    %v11612 = vmax.f32 %v11255, 0.0
    %v11613 = vmax.f32 %v11425, 0.0
    %v11614 = vmax.f32 %v11427, 0.0
    %v11615 = vmax.f32 %v11597, 0.0
    %v11616 = vmax.f32 %v11599, 0.0
    %v11617 = vpack.c.bf16 %v11609, %v11601
    %v11618 = vpack.c.bf16 %v11610, %v11602
    %v11619 = vpack.c.bf16 %v11611, %v11603
    %v11620 = vpack.c.bf16 %v11612, %v11604
    %v11621 = vpack.c.bf16 %v11613, %v11605
    %v11622 = vpack.c.bf16 %v11614, %v11606
    %v11623 = vpack.c.bf16 %v11615, %v11607
    %v11624 = vpack.c.bf16 %v11616, %v11608
    %v11625 = vld [vmem:[#allocation11] sm:$0xf]
    %v11626 = vld [vmem:[#allocation11 + $0x4] sm:$0xf]
    %v11627 = vld [vmem:[#allocation11 + $0x8] sm:$0xf]
    %v11628 = vld [vmem:[#allocation11 + $0xc] sm:$0xf]
    %v11629 = vld [vmem:[#allocation11 + $0x10] sm:$0xf]
    %v11630 = vld [vmem:[#allocation11 + $0x14] sm:$0xf]
    %v11631 = vld [vmem:[#allocation11 + $0x18] sm:$0xf]
    %v11632 = vld [vmem:[#allocation11 + $0x1c] sm:$0xf]
    %v11633 = vld [vmem:[#allocation11 + $0x20] sm:$0xf]
    %v11634 = vld [vmem:[#allocation11 + $0x24] sm:$0xf]
    %v11635 = vld [vmem:[#allocation11 + $0x28] sm:$0xf]
    %v11636 = vld [vmem:[#allocation11 + $0x2c] sm:$0xf]
    %v11637 = vld [vmem:[#allocation11 + $0x30] sm:$0xf]
    %v11638 = vld [vmem:[#allocation11 + $0x34] sm:$0xf]
    %v11639 = vld [vmem:[#allocation11 + $0x38] sm:$0xf]
    %v11640 = vld [vmem:[#allocation11 + $0x3c] sm:$0xf]
    %v11641 = vld [vmem:[#allocation11 + $0x40] sm:$0xf]
    %v11642 = vld [vmem:[#allocation11 + $0x44] sm:$0xf]
    %v11643 = vld [vmem:[#allocation11 + $0x48] sm:$0xf]
    %v11644 = vld [vmem:[#allocation11 + $0x4c] sm:$0xf]
    %v11645 = vld [vmem:[#allocation11 + $0x50] sm:$0xf]
    %v11646 = vld [vmem:[#allocation11 + $0x54] sm:$0xf]
    %v11647 = vld [vmem:[#allocation11 + $0x58] sm:$0xf]
    %v11648 = vld [vmem:[#allocation11 + $0x5c] sm:$0xf]
    %v11649 = vld [vmem:[#allocation11 + $0x60] sm:$0xf]
    %v11650 = vld [vmem:[#allocation11 + $0x64] sm:$0xf]
    %v11651 = vld [vmem:[#allocation11 + $0x68] sm:$0xf]
    %v11652 = vld [vmem:[#allocation11 + $0x6c] sm:$0xf]
    %v11653 = vld [vmem:[#allocation11 + $0x70] sm:$0xf]
    %v11654 = vld [vmem:[#allocation11 + $0x74] sm:$0xf]
    %v11655 = vld [vmem:[#allocation11 + $0x78] sm:$0xf]
    %v11656 = vld [vmem:[#allocation11 + $0x7c] sm:$0xf]
    %v11657 = vld [vmem:[#allocation11 + $0x80] sm:$0xf]
    %v11658 = vld [vmem:[#allocation11 + $0x84] sm:$0xf]
    %v11659 = vld [vmem:[#allocation11 + $0x88] sm:$0xf]
    %v11660 = vld [vmem:[#allocation11 + $0x8c] sm:$0xf]
    %v11661 = vld [vmem:[#allocation11 + $0x90] sm:$0xf]
    %v11662 = vld [vmem:[#allocation11 + $0x94] sm:$0xf]
    %v11663 = vld [vmem:[#allocation11 + $0x98] sm:$0xf]
    %v11664 = vld [vmem:[#allocation11 + $0x9c] sm:$0xf]
    %v11665 = vld [vmem:[#allocation11 + $0xa0] sm:$0xf]
    %v11666 = vld [vmem:[#allocation11 + $0xa4] sm:$0xf]
    %v11667 = vld [vmem:[#allocation11 + $0xa8] sm:$0xf]
    %v11668 = vld [vmem:[#allocation11 + $0xac] sm:$0xf]
    %v11669 = vld [vmem:[#allocation11 + $0xb0] sm:$0xf]
    %v11670 = vld [vmem:[#allocation11 + $0xb4] sm:$0xf]
    %v11671 = vld [vmem:[#allocation11 + $0xb8] sm:$0xf]
    %v11672 = vld [vmem:[#allocation11 + $0xbc] sm:$0xf]
    %v11673 = vld [vmem:[#allocation11 + $0xc0] sm:$0xf]
    %v11674 = vld [vmem:[#allocation11 + $0xc4] sm:$0xf]
    %v11675 = vld [vmem:[#allocation11 + $0xc8] sm:$0xf]
    %v11676 = vld [vmem:[#allocation11 + $0xcc] sm:$0xf]
    %v11677 = vld [vmem:[#allocation11 + $0xd0] sm:$0xf]
    %v11678 = vld [vmem:[#allocation11 + $0xd4] sm:$0xf]
    %v11679 = vld [vmem:[#allocation11 + $0xd8] sm:$0xf]
    %v11680 = vld [vmem:[#allocation11 + $0xdc] sm:$0xf]
    %v11681 = vld [vmem:[#allocation11 + $0xe0] sm:$0xf]
    %v11682 = vld [vmem:[#allocation11 + $0xe4] sm:$0xf]
    %v11683 = vld [vmem:[#allocation11 + $0xe8] sm:$0xf]
    %v11684 = vld [vmem:[#allocation11 + $0xec] sm:$0xf]
    %v11685 = vld [vmem:[#allocation11 + $0xf0] sm:$0xf]
    %v11686 = vld [vmem:[#allocation11 + $0xf4] sm:$0xf]
    %v11687 = vld [vmem:[#allocation11 + $0xf8] sm:$0xf]
    %v11688 = vld [vmem:[#allocation11 + $0xfc] sm:$0xf]
    %v11689 = vld [vmem:[#allocation11 + $0x100] sm:$0xf]
    %v11690 = vld [vmem:[#allocation11 + $0x104] sm:$0xf]
    %v11691 = vld [vmem:[#allocation11 + $0x108] sm:$0xf]
    %v11692 = vld [vmem:[#allocation11 + $0x10c] sm:$0xf]
    %v11693 = vld [vmem:[#allocation11 + $0x110] sm:$0xf]
    %v11694 = vld [vmem:[#allocation11 + $0x114] sm:$0xf]
    %v11695 = vld [vmem:[#allocation11 + $0x118] sm:$0xf]
    %v11696 = vld [vmem:[#allocation11 + $0x11c] sm:$0xf]
    %v11697 = vld [vmem:[#allocation11 + $0x120] sm:$0xf]
    %v11698 = vld [vmem:[#allocation11 + $0x124] sm:$0xf]
    %v11699 = vld [vmem:[#allocation11 + $0x128] sm:$0xf]
    %v11700 = vld [vmem:[#allocation11 + $0x12c] sm:$0xf]
    %v11701 = vld [vmem:[#allocation11 + $0x130] sm:$0xf]
    %v11702 = vld [vmem:[#allocation11 + $0x134] sm:$0xf]
    %v11703 = vld [vmem:[#allocation11 + $0x138] sm:$0xf]
    %v11704 = vld [vmem:[#allocation11 + $0x13c] sm:$0xf]
    %v11705 = vld [vmem:[#allocation11 + $0x140] sm:$0xf]
    %v11706 = vld [vmem:[#allocation11 + $0x144] sm:$0xf]
    %v11707 = vld [vmem:[#allocation11 + $0x148] sm:$0xf]
    %v11708 = vld [vmem:[#allocation11 + $0x14c] sm:$0xf]
    %v11709 = vld [vmem:[#allocation11 + $0x150] sm:$0xf]
    %v11710 = vld [vmem:[#allocation11 + $0x154] sm:$0xf]
    %v11711 = vld [vmem:[#allocation11 + $0x158] sm:$0xf]
    %v11712 = vld [vmem:[#allocation11 + $0x15c] sm:$0xf]
    %v11713 = vld [vmem:[#allocation11 + $0x160] sm:$0xf]
    %v11714 = vld [vmem:[#allocation11 + $0x164] sm:$0xf]
    %v11715 = vld [vmem:[#allocation11 + $0x168] sm:$0xf]
    %v11716 = vld [vmem:[#allocation11 + $0x16c] sm:$0xf]
    %v11717 = vld [vmem:[#allocation11 + $0x170] sm:$0xf]
    %v11718 = vld [vmem:[#allocation11 + $0x174] sm:$0xf]
    %v11719 = vld [vmem:[#allocation11 + $0x178] sm:$0xf]
    %v11720 = vld [vmem:[#allocation11 + $0x17c] sm:$0xf]
    %v11721 = vld [vmem:[#allocation11 + $0x180] sm:$0xf]
    %v11722 = vld [vmem:[#allocation11 + $0x184] sm:$0xf]
    %v11723 = vld [vmem:[#allocation11 + $0x188] sm:$0xf]
    %v11724 = vld [vmem:[#allocation11 + $0x18c] sm:$0xf]
    %v11725 = vld [vmem:[#allocation11 + $0x190] sm:$0xf]
    %v11726 = vld [vmem:[#allocation11 + $0x194] sm:$0xf]
    %v11727 = vld [vmem:[#allocation11 + $0x198] sm:$0xf]
    %v11728 = vld [vmem:[#allocation11 + $0x19c] sm:$0xf]
    %v11729 = vld [vmem:[#allocation11 + $0x1a0] sm:$0xf]
    %v11730 = vld [vmem:[#allocation11 + $0x1a4] sm:$0xf]
    %v11731 = vld [vmem:[#allocation11 + $0x1a8] sm:$0xf]
    %v11732 = vld [vmem:[#allocation11 + $0x1ac] sm:$0xf]
    %v11733 = vld [vmem:[#allocation11 + $0x1b0] sm:$0xf]
    %v11734 = vld [vmem:[#allocation11 + $0x1b4] sm:$0xf]
    %v11735 = vld [vmem:[#allocation11 + $0x1b8] sm:$0xf]
    %v11736 = vld [vmem:[#allocation11 + $0x1bc] sm:$0xf]
    %v11737 = vld [vmem:[#allocation11 + $0x1c0] sm:$0xf]
    %v11738 = vld [vmem:[#allocation11 + $0x1c4] sm:$0xf]
    %v11739 = vld [vmem:[#allocation11 + $0x1c8] sm:$0xf]
    %v11740 = vld [vmem:[#allocation11 + $0x1cc] sm:$0xf]
    %v11741 = vld [vmem:[#allocation11 + $0x1d0] sm:$0xf]
    %v11742 = vld [vmem:[#allocation11 + $0x1d4] sm:$0xf]
    %v11743 = vld [vmem:[#allocation11 + $0x1d8] sm:$0xf]
    %v11744 = vld [vmem:[#allocation11 + $0x1dc] sm:$0xf]
    %v11745 = vld [vmem:[#allocation11 + $0x1e0] sm:$0xf]
    %v11746 = vld [vmem:[#allocation11 + $0x1e4] sm:$0xf]
    %v11747 = vld [vmem:[#allocation11 + $0x1e8] sm:$0xf]
    %v11748 = vld [vmem:[#allocation11 + $0x1ec] sm:$0xf]
    %v11749 = vld [vmem:[#allocation11 + $0x1f0] sm:$0xf]
    %v11750 = vld [vmem:[#allocation11 + $0x1f4] sm:$0xf]
    %v11751 = vld [vmem:[#allocation11 + $0x1f8] sm:$0xf]
    %v11752 = vld [vmem:[#allocation11 + $0x1fc] sm:$0xf]
    %v11753 = vld [vmem:[#allocation13] sm:$0x1]
    %v11755 = vlaneseq
    %v11756 = vshrl.u32 %v11755, 7
    %v11757 = vsub.s32 0, %v11756
    %v11758 = vrot.slane %v11753, %v11757
    %v11888 = vunpack.c.l.b16 %v11625
    %v11889 = vunpack.c.l.b16 %v11626
    %v11890 = vunpack.c.l.b16 %v11627
    %v11891 = vunpack.c.l.b16 %v11628
    %v11892 = vunpack.c.l.b16 %v11629
    %v11893 = vunpack.c.l.b16 %v11630
    %v11894 = vunpack.c.l.b16 %v11631
    %v11895 = vunpack.c.l.b16 %v11632
    %v11896 = vunpack.c.l.b16 %v11633
    %v11897 = vunpack.c.l.b16 %v11634
    %v11898 = vunpack.c.l.b16 %v11635
    %v11899 = vunpack.c.l.b16 %v11636
    %v11900 = vunpack.c.l.b16 %v11637
    %v11901 = vunpack.c.l.b16 %v11638
    %v11902 = vunpack.c.l.b16 %v11639
    %v11903 = vunpack.c.l.b16 %v11640
    %v11904 = vunpack.c.l.b16 %v11641
    %v11905 = vunpack.c.l.b16 %v11642
    %v11906 = vunpack.c.l.b16 %v11643
    %v11907 = vunpack.c.l.b16 %v11644
    %v11908 = vunpack.c.l.b16 %v11645
    %v11909 = vunpack.c.l.b16 %v11646
    %v11910 = vunpack.c.l.b16 %v11647
    %v11911 = vunpack.c.l.b16 %v11648
    %v11912 = vunpack.c.l.b16 %v11649
    %v11913 = vunpack.c.l.b16 %v11650
    %v11914 = vunpack.c.l.b16 %v11651
    %v11915 = vunpack.c.l.b16 %v11652
    %v11916 = vunpack.c.l.b16 %v11653
    %v11917 = vunpack.c.l.b16 %v11654
    %v11918 = vunpack.c.l.b16 %v11655
    %v11919 = vunpack.c.l.b16 %v11656
    %v11920 = vunpack.c.l.b16 %v11657
    %v11921 = vunpack.c.l.b16 %v11658
    %v11922 = vunpack.c.l.b16 %v11659
    %v11923 = vunpack.c.l.b16 %v11660
    %v11924 = vunpack.c.l.b16 %v11661
    %v11925 = vunpack.c.l.b16 %v11662
    %v11926 = vunpack.c.l.b16 %v11663
    %v11927 = vunpack.c.l.b16 %v11664
    %v11928 = vunpack.c.l.b16 %v11665
    %v11929 = vunpack.c.l.b16 %v11666
    %v11930 = vunpack.c.l.b16 %v11667
    %v11931 = vunpack.c.l.b16 %v11668
    %v11932 = vunpack.c.l.b16 %v11669
    %v11933 = vunpack.c.l.b16 %v11670
    %v11934 = vunpack.c.l.b16 %v11671
    %v11935 = vunpack.c.l.b16 %v11672
    %v11936 = vunpack.c.l.b16 %v11673
    %v11937 = vunpack.c.l.b16 %v11674
    %v11938 = vunpack.c.l.b16 %v11675
    %v11939 = vunpack.c.l.b16 %v11676
    %v11940 = vunpack.c.l.b16 %v11677
    %v11941 = vunpack.c.l.b16 %v11678
    %v11942 = vunpack.c.l.b16 %v11679
    %v11943 = vunpack.c.l.b16 %v11680
    %v11944 = vunpack.c.l.b16 %v11681
    %v11945 = vunpack.c.l.b16 %v11682
    %v11946 = vunpack.c.l.b16 %v11683
    %v11947 = vunpack.c.l.b16 %v11684
    %v11948 = vunpack.c.l.b16 %v11685
    %v11949 = vunpack.c.l.b16 %v11686
    %v11950 = vunpack.c.l.b16 %v11687
    %v11951 = vunpack.c.l.b16 %v11688
    %v11952 = vunpack.c.l.b16 %v11689
    %v11953 = vunpack.c.l.b16 %v11690
    %v11954 = vunpack.c.l.b16 %v11691
    %v11955 = vunpack.c.l.b16 %v11692
    %v11956 = vunpack.c.l.b16 %v11693
    %v11957 = vunpack.c.l.b16 %v11694
    %v11958 = vunpack.c.l.b16 %v11695
    %v11959 = vunpack.c.l.b16 %v11696
    %v11960 = vunpack.c.l.b16 %v11697
    %v11961 = vunpack.c.l.b16 %v11698
    %v11962 = vunpack.c.l.b16 %v11699
    %v11963 = vunpack.c.l.b16 %v11700
    %v11964 = vunpack.c.l.b16 %v11701
    %v11965 = vunpack.c.l.b16 %v11702
    %v11966 = vunpack.c.l.b16 %v11703
    %v11967 = vunpack.c.l.b16 %v11704
    %v11968 = vunpack.c.l.b16 %v11705
    %v11969 = vunpack.c.l.b16 %v11706
    %v11970 = vunpack.c.l.b16 %v11707
    %v11971 = vunpack.c.l.b16 %v11708
    %v11972 = vunpack.c.l.b16 %v11709
    %v11973 = vunpack.c.l.b16 %v11710
    %v11974 = vunpack.c.l.b16 %v11711
    %v11975 = vunpack.c.l.b16 %v11712
    %v11976 = vunpack.c.l.b16 %v11713
    %v11977 = vunpack.c.l.b16 %v11714
    %v11978 = vunpack.c.l.b16 %v11715
    %v11979 = vunpack.c.l.b16 %v11716
    %v11980 = vunpack.c.l.b16 %v11717
    %v11981 = vunpack.c.l.b16 %v11718
    %v11982 = vunpack.c.l.b16 %v11719
    %v11983 = vunpack.c.l.b16 %v11720
    %v11984 = vunpack.c.l.b16 %v11721
    %v11985 = vunpack.c.l.b16 %v11722
    %v11986 = vunpack.c.l.b16 %v11723
    %v11987 = vunpack.c.l.b16 %v11724
    %v11988 = vunpack.c.l.b16 %v11725
    %v11989 = vunpack.c.l.b16 %v11726
    %v11990 = vunpack.c.l.b16 %v11727
    %v11991 = vunpack.c.l.b16 %v11728
    %v11992 = vunpack.c.l.b16 %v11729
    %v11993 = vunpack.c.l.b16 %v11730
    %v11994 = vunpack.c.l.b16 %v11731
    %v11995 = vunpack.c.l.b16 %v11732
    %v11996 = vunpack.c.l.b16 %v11733
    %v11997 = vunpack.c.l.b16 %v11734
    %v11998 = vunpack.c.l.b16 %v11735
    %v11999 = vunpack.c.l.b16 %v11736
    %v12000 = vunpack.c.l.b16 %v11737
    %v12001 = vunpack.c.l.b16 %v11738
    %v12002 = vunpack.c.l.b16 %v11739
    %v12003 = vunpack.c.l.b16 %v11740
    %v12004 = vunpack.c.l.b16 %v11741
    %v12005 = vunpack.c.l.b16 %v11742
    %v12006 = vunpack.c.l.b16 %v11743
    %v12007 = vunpack.c.l.b16 %v11744
    %v12008 = vunpack.c.l.b16 %v11745
    %v12009 = vunpack.c.l.b16 %v11746
    %v12010 = vunpack.c.l.b16 %v11747
    %v12011 = vunpack.c.l.b16 %v11748
    %v12012 = vunpack.c.l.b16 %v11749
    %v12013 = vunpack.c.l.b16 %v11750
    %v12014 = vunpack.c.l.b16 %v11751
    %v12015 = vunpack.c.l.b16 %v11752
    %v12016 = vpack.c.b16 %v11889, %v11888
    %v12017 = vpack.c.b16 %v11891, %v11890
    %v12018 = vpack.c.b16 %v11893, %v11892
    %v12019 = vpack.c.b16 %v11895, %v11894
    %v12020 = vpack.c.b16 %v11897, %v11896
    %v12021 = vpack.c.b16 %v11899, %v11898
    %v12022 = vpack.c.b16 %v11901, %v11900
    %v12023 = vpack.c.b16 %v11903, %v11902
    %v12024 = vpack.c.b16 %v11905, %v11904
    %v12025 = vpack.c.b16 %v11907, %v11906
    %v12026 = vpack.c.b16 %v11909, %v11908
    %v12027 = vpack.c.b16 %v11911, %v11910
    %v12028 = vpack.c.b16 %v11913, %v11912
    %v12029 = vpack.c.b16 %v11915, %v11914
    %v12030 = vpack.c.b16 %v11917, %v11916
    %v12031 = vpack.c.b16 %v11919, %v11918
    %v12032 = vpack.c.b16 %v11921, %v11920
    %v12033 = vpack.c.b16 %v11923, %v11922
    %v12034 = vpack.c.b16 %v11925, %v11924
    %v12035 = vpack.c.b16 %v11927, %v11926
    %v12036 = vpack.c.b16 %v11929, %v11928
    %v12037 = vpack.c.b16 %v11931, %v11930
    %v12038 = vpack.c.b16 %v11933, %v11932
    %v12039 = vpack.c.b16 %v11935, %v11934
    %v12040 = vpack.c.b16 %v11937, %v11936
    %v12041 = vpack.c.b16 %v11939, %v11938
    %v12042 = vpack.c.b16 %v11941, %v11940
    %v12043 = vpack.c.b16 %v11943, %v11942
    %v12044 = vpack.c.b16 %v11945, %v11944
    %v12045 = vpack.c.b16 %v11947, %v11946
    %v12046 = vpack.c.b16 %v11949, %v11948
    %v12047 = vpack.c.b16 %v11951, %v11950
    %v12048 = vpack.c.b16 %v11953, %v11952
    %v12049 = vpack.c.b16 %v11955, %v11954
    %v12050 = vpack.c.b16 %v11957, %v11956
    %v12051 = vpack.c.b16 %v11959, %v11958
    %v12052 = vpack.c.b16 %v11961, %v11960
    %v12053 = vpack.c.b16 %v11963, %v11962
    %v12054 = vpack.c.b16 %v11965, %v11964
    %v12055 = vpack.c.b16 %v11967, %v11966
    %v12056 = vpack.c.b16 %v11969, %v11968
    %v12057 = vpack.c.b16 %v11971, %v11970
    %v12058 = vpack.c.b16 %v11973, %v11972
    %v12059 = vpack.c.b16 %v11975, %v11974
    %v12060 = vpack.c.b16 %v11977, %v11976
    %v12061 = vpack.c.b16 %v11979, %v11978
    %v12062 = vpack.c.b16 %v11981, %v11980
    %v12063 = vpack.c.b16 %v11983, %v11982
    %v12064 = vpack.c.b16 %v11985, %v11984
    %v12065 = vpack.c.b16 %v11987, %v11986
    %v12066 = vpack.c.b16 %v11989, %v11988
    %v12067 = vpack.c.b16 %v11991, %v11990
    %v12068 = vpack.c.b16 %v11993, %v11992
    %v12069 = vpack.c.b16 %v11995, %v11994
    %v12070 = vpack.c.b16 %v11997, %v11996
    %v12071 = vpack.c.b16 %v11999, %v11998
    %v12072 = vpack.c.b16 %v12001, %v12000
    %v12073 = vpack.c.b16 %v12003, %v12002
    %v12074 = vpack.c.b16 %v12005, %v12004
    %v12075 = vpack.c.b16 %v12007, %v12006
    %v12076 = vpack.c.b16 %v12009, %v12008
    %v12077 = vpack.c.b16 %v12011, %v12010
    %v12078 = vpack.c.b16 %v12013, %v12012
    %v12079 = vpack.c.b16 %v12015, %v12014
    %12144 = vmatprep.subr.bf16.mxu0 0
    %12145 = vmatpush1.bf16.msra.mxu0 %v12016
    %12146 = vmatprep.subr.bf16.mxu0 0
    %12147 = vmatpush1.bf16.msra.mxu0 %v12017
    %12148 = vmatprep.subr.bf16.mxu0 0
    %12149 = vmatpush1.bf16.msra.mxu0 %v12018
    %12150 = vmatprep.subr.bf16.mxu0 0
    %12151 = vmatpush1.bf16.msra.mxu0 %v12019
    %12152 = vmatprep.subr.bf16.mxu0 0
    %12153 = vmatpush1.bf16.msra.mxu0 %v12020
    %12154 = vmatprep.subr.bf16.mxu0 0
    %12155 = vmatpush1.bf16.msra.mxu0 %v12021
    %12156 = vmatprep.subr.bf16.mxu0 0
    %12157 = vmatpush1.bf16.msra.mxu0 %v12022
    %12158 = vmatprep.subr.bf16.mxu0 0
    %12159 = vmatpush1.bf16.msra.mxu0 %v12023
    %12160 = vmatprep.subr.bf16.mxu0 0
    %12161 = vmatpush1.bf16.msra.mxu0 %v12024
    %12162 = vmatprep.subr.bf16.mxu0 0
    %12163 = vmatpush1.bf16.msra.mxu0 %v12025
    %12164 = vmatprep.subr.bf16.mxu0 0
    %12165 = vmatpush1.bf16.msra.mxu0 %v12026
    %12166 = vmatprep.subr.bf16.mxu0 0
    %12167 = vmatpush1.bf16.msra.mxu0 %v12027
    %12168 = vmatprep.subr.bf16.mxu0 0
    %12169 = vmatpush1.bf16.msra.mxu0 %v12028
    %12170 = vmatprep.subr.bf16.mxu0 0
    %12171 = vmatpush1.bf16.msra.mxu0 %v12029
    %12172 = vmatprep.subr.bf16.mxu0 0
    %12173 = vmatpush1.bf16.msra.mxu0 %v12030
    %12174 = vmatprep.subr.bf16.mxu0 0
    %12175 = vmatpush1.bf16.msra.mxu0 %v12031
    %12176 = vmatprep.mubr.bf16.mxu0 %v11618
    %12177 = vmatmul.mubr.bf16.gmra.mrb[0].mxu0 %v11617
    %v12178 = vpop.f32.mrb[0].mxu0
    %v12179 = vadd.f32 %v11758, %v12178
    %v12180 = vpop.f32.mrb[0].mxu0
    %v12181 = vpop.f32.mrb[0].mxu0
    %v12182 = vadd.f32 %v11758, %v12181
    %v12183 = vpop.f32.mrb[0].mxu0
    %12184 = vdwg.mxu0
    %12185 = vmatprep.subr.bf16.mxu0 0
    %12186 = vmatpush1.bf16.msra.mxu0 %v12032
    %12187 = vmatprep.subr.bf16.mxu0 0
    %12188 = vmatpush1.bf16.msra.mxu0 %v12033
    %12189 = vmatprep.subr.bf16.mxu0 0
    %12190 = vmatpush1.bf16.msra.mxu0 %v12034
    %12191 = vmatprep.subr.bf16.mxu0 0
    %12192 = vmatpush1.bf16.msra.mxu0 %v12035
    %12193 = vmatprep.subr.bf16.mxu0 0
    %12194 = vmatpush1.bf16.msra.mxu0 %v12036
    %12195 = vmatprep.subr.bf16.mxu0 0
    %12196 = vmatpush1.bf16.msra.mxu0 %v12037
    %12197 = vmatprep.subr.bf16.mxu0 0
    %12198 = vmatpush1.bf16.msra.mxu0 %v12038
    %12199 = vmatprep.subr.bf16.mxu0 0
    %12200 = vmatpush1.bf16.msra.mxu0 %v12039
    %12201 = vmatprep.subr.bf16.mxu0 0
    %12202 = vmatpush1.bf16.msra.mxu0 %v12040
    %12203 = vmatprep.subr.bf16.mxu0 0
    %12204 = vmatpush1.bf16.msra.mxu0 %v12041
    %12205 = vmatprep.subr.bf16.mxu0 0
    %12206 = vmatpush1.bf16.msra.mxu0 %v12042
    %12207 = vmatprep.subr.bf16.mxu0 0
    %12208 = vmatpush1.bf16.msra.mxu0 %v12043
    %12209 = vmatprep.subr.bf16.mxu0 0
    %12210 = vmatpush1.bf16.msra.mxu0 %v12044
    %12211 = vmatprep.subr.bf16.mxu0 0
    %12212 = vmatpush1.bf16.msra.mxu0 %v12045
    %12213 = vmatprep.subr.bf16.mxu0 0
    %12214 = vmatpush1.bf16.msra.mxu0 %v12046
    %12215 = vmatprep.subr.bf16.mxu0 0
    %12216 = vmatpush1.bf16.msra.mxu0 %v12047
    %12217 = vmatprep.mubr.bf16.mxu0 %v11620
    %12218 = vmatmul.mubr.bf16.gmra.mrb[0].mxu0 %v11619
    %v12219 = vpop.f32.mrb[0].mxu0
    %v12220 = vadd.f32 %v12179, %v12219
    %v12221 = vpop.f32.mrb[0].mxu0
    %v12222 = vpop.f32.mrb[0].mxu0
    %v12223 = vadd.f32 %v12182, %v12222
    %v12224 = vpop.f32.mrb[0].mxu0
    %12225 = vdwg.mxu0
    %12226 = vmatprep.subr.bf16.mxu0 0
    %12227 = vmatpush1.bf16.msra.mxu0 %v12048
    %12228 = vmatprep.subr.bf16.mxu0 0
    %12229 = vmatpush1.bf16.msra.mxu0 %v12049
    %12230 = vmatprep.subr.bf16.mxu0 0
    %12231 = vmatpush1.bf16.msra.mxu0 %v12050
    %12232 = vmatprep.subr.bf16.mxu0 0
    %12233 = vmatpush1.bf16.msra.mxu0 %v12051
    %12234 = vmatprep.subr.bf16.mxu0 0
    %12235 = vmatpush1.bf16.msra.mxu0 %v12052
    %12236 = vmatprep.subr.bf16.mxu0 0
    %12237 = vmatpush1.bf16.msra.mxu0 %v12053
    %12238 = vmatprep.subr.bf16.mxu0 0
    %12239 = vmatpush1.bf16.msra.mxu0 %v12054
    %12240 = vmatprep.subr.bf16.mxu0 0
    %12241 = vmatpush1.bf16.msra.mxu0 %v12055
    %12242 = vmatprep.subr.bf16.mxu0 0
    %12243 = vmatpush1.bf16.msra.mxu0 %v12056
    %12244 = vmatprep.subr.bf16.mxu0 0
    %12245 = vmatpush1.bf16.msra.mxu0 %v12057
    %12246 = vmatprep.subr.bf16.mxu0 0
    %12247 = vmatpush1.bf16.msra.mxu0 %v12058
    %12248 = vmatprep.subr.bf16.mxu0 0
    %12249 = vmatpush1.bf16.msra.mxu0 %v12059
    %12250 = vmatprep.subr.bf16.mxu0 0
    %12251 = vmatpush1.bf16.msra.mxu0 %v12060
    %12252 = vmatprep.subr.bf16.mxu0 0
    %12253 = vmatpush1.bf16.msra.mxu0 %v12061
    %12254 = vmatprep.subr.bf16.mxu0 0
    %12255 = vmatpush1.bf16.msra.mxu0 %v12062
    %12256 = vmatprep.subr.bf16.mxu0 0
    %12257 = vmatpush1.bf16.msra.mxu0 %v12063
    %12258 = vmatprep.mubr.bf16.mxu0 %v11622
    %12259 = vmatmul.mubr.bf16.gmra.mrb[0].mxu0 %v11621
    %v12260 = vpop.f32.mrb[0].mxu0
    %v12261 = vadd.f32 %v12220, %v12260
    %v12262 = vpop.f32.mrb[0].mxu0
    %v12263 = vpop.f32.mrb[0].mxu0
    %v12264 = vadd.f32 %v12223, %v12263
    %v12265 = vpop.f32.mrb[0].mxu0
    %12266 = vdwg.mxu0
    %12267 = vmatprep.subr.bf16.mxu0 0
    %12268 = vmatpush1.bf16.msra.mxu0 %v12064
    %12269 = vmatprep.subr.bf16.mxu0 0
    %12270 = vmatpush1.bf16.msra.mxu0 %v12065
    %12271 = vmatprep.subr.bf16.mxu0 0
    %12272 = vmatpush1.bf16.msra.mxu0 %v12066
    %12273 = vmatprep.subr.bf16.mxu0 0
    %12274 = vmatpush1.bf16.msra.mxu0 %v12067
    %12275 = vmatprep.subr.bf16.mxu0 0
    %12276 = vmatpush1.bf16.msra.mxu0 %v12068
    %12277 = vmatprep.subr.bf16.mxu0 0
    %12278 = vmatpush1.bf16.msra.mxu0 %v12069
    %12279 = vmatprep.subr.bf16.mxu0 0
    %12280 = vmatpush1.bf16.msra.mxu0 %v12070
    %12281 = vmatprep.subr.bf16.mxu0 0
    %12282 = vmatpush1.bf16.msra.mxu0 %v12071
    %12283 = vmatprep.subr.bf16.mxu0 0
    %12284 = vmatpush1.bf16.msra.mxu0 %v12072
    %12285 = vmatprep.subr.bf16.mxu0 0
    %12286 = vmatpush1.bf16.msra.mxu0 %v12073
    %12287 = vmatprep.subr.bf16.mxu0 0
    %12288 = vmatpush1.bf16.msra.mxu0 %v12074
    %12289 = vmatprep.subr.bf16.mxu0 0
    %12290 = vmatpush1.bf16.msra.mxu0 %v12075
    %12291 = vmatprep.subr.bf16.mxu0 0
    %12292 = vmatpush1.bf16.msra.mxu0 %v12076
    %12293 = vmatprep.subr.bf16.mxu0 0
    %12294 = vmatpush1.bf16.msra.mxu0 %v12077
    %12295 = vmatprep.subr.bf16.mxu0 0
    %12296 = vmatpush1.bf16.msra.mxu0 %v12078
    %12297 = vmatprep.subr.bf16.mxu0 0
    %12298 = vmatpush1.bf16.msra.mxu0 %v12079
    %12299 = vmatprep.mubr.bf16.mxu0 %v11624
    %12300 = vmatmul.mubr.bf16.gmra.mrb[0].mxu0 %v11623
    %v12301 = vpop.f32.mrb[0].mxu0
    %v12302 = vadd.f32 %v12261, %v12301
    %v12303 = vpop.f32.mrb[0].mxu0
    %v12304 = vpop.f32.mrb[0].mxu0
    %v12305 = vadd.f32 %v12264, %v12304
    %v12306 = vpop.f32.mrb[0].mxu0
    %12307 = vdwg.mxu0
    %12308 = vst [vmem:[#allocation14] sm:$0xff] %v12302
    %12309 = vst [vmem:[#allocation14 + $0x8] sm:$0xff] %v12305
    // Predicated region
    $region58: #{tpu_custom_call.1} parent=1 // pred_check
      _
    $region59: #{tpu_custom_call.1} parent=1 // pred_check_branch
      %12311 = sbr.rel (0) target = $region61
    $region60: #{tpu_custom_call.1} parent=1 // pred_region
      %s12313 = ssub.s32 256, 256
      %12314 = vsyncadd [#allocation4], %s12313
      %s12315 = sshll.u32 [#allocation14], 4
      %s12316 = int_to_ptr.vmem [resolvable:$true] %s12315
      %12321 = dma.vmem_to_hbm [thread:$0]  %s12316, 256, %s7, [#allocation4], 128, 128, 8
    $region61: #{tpu_custom_call.1} parent=1 // pred_fallthru
      _
    // Predicated region
    $region62: #{tpu_custom_call.1} parent=1 // pred_check
      _
    $region63: #{tpu_custom_call.1} parent=1 // pred_check_branch
      %12323 = sbr.rel (0) target = $region65
    $region64: #{tpu_custom_call.1} parent=1 // pred_region
      %12324 = dma.done [#allocation4], 256
    $region65: #{tpu_custom_call.1} parent=1 // pred_fallthru
      _
    %12325 = vsyncpa [#allocation3], 1
    %12326 = vsyncpa [#allocation6], 1
    %12327 = vsyncpa [#allocation9], 1
    %12328 = vsyncpa [#allocation12], 1
    %12329 = vsyncpa [#allocation4], 1

</llo_original>
